<compile_context>
chip_gen: v7x
topology: tpu7x:2x2x1
jax: 0.10.0
libtpu: 0.0.40
codegen_flags: <defaults>
</compile_context>

<pallas_src>
import jax
import jax.numpy as jnp
from jax.experimental import pallas as pl
from jax.experimental.pallas import tpu as pltpu


NUM_ENC = 6
D_IN = 3 + 3 * 2 * NUM_ENC          # 39 (raw positional-encoding width)
D_IN_PAD = 64                       # padded K for the first matmul
FILTER = 128
D_OUT = 4
D_OUT_PAD = 128                     # lane-dense padded output width


def _elu_f32(x):
    # ELU, alpha=1 (matches F.elu default).  Computed in f32; the exp lives on
    # the EUP so only the select/sub land on the VPU.
    return jnp.where(x > 0, x, jnp.exp(jnp.minimum(x, 0.0)) - 1.0)


def nerf_kernel(x_ref,
                w0_ref, b0_ref,
                w1_ref, b1_ref,
                w2_ref, b2_ref,
                w3_ref, b3_ref,
                wo_ref, bo_ref,
                o_ref):
    # x tile is already bf16/padded; weights are bf16; biases are f32.
    h = jnp.dot(x_ref[...], w0_ref[...],
                preferred_element_type=jnp.float32) + b0_ref[...]
    h = _elu_f32(h)
    h = jnp.dot(h.astype(jnp.bfloat16), w1_ref[...],
                preferred_element_type=jnp.float32) + b1_ref[...]
    h = _elu_f32(h)
    h = jnp.dot(h.astype(jnp.bfloat16), w2_ref[...],
                preferred_element_type=jnp.float32) + b2_ref[...]
    h = _elu_f32(h)
    h = jnp.dot(h.astype(jnp.bfloat16), w3_ref[...],
                preferred_element_type=jnp.float32) + b3_ref[...]
    h = _elu_f32(h)
    # Output layer (no activation).  wo/bo are zero-padded to 128 lanes so the
    # store is a full-width unmasked vst; the wrapper slices [:, :4].
    out = jnp.dot(h.astype(jnp.bfloat16), wo_ref[...],
                  preferred_element_type=jnp.float32) + bo_ref[...]
    o_ref[...] = out


def nerf_forward(x, packed_params, *, tile_m=1024):
    """x: [N, 39] float32.  packed_params: output of pack_params()."""
    N, d_in = x.shape
    assert d_in == D_IN
    assert tile_m % 8 == 0

    # Pad features 39 -> 64 and cast to bf16 (halves x DMA bytes).
    x_p = jnp.pad(x, ((0, 0), (0, D_IN_PAD - D_IN))).astype(jnp.bfloat16)
    # Pad rows up to a multiple of the tile.
    n_pad = pl.cdiv(N, tile_m) * tile_m
    if n_pad != N:
        x_p = jnp.pad(x_p, ((0, n_pad - N), (0, 0)))

    full = lambda shape: pl.BlockSpec(shape, lambda i: (0, 0))

    out = pl.pallas_call(
        nerf_kernel,
        out_shape=jax.ShapeDtypeStruct((n_pad, D_OUT_PAD), jnp.float32),
        grid_spec=pltpu.PrefetchScalarGridSpec(
            num_scalar_prefetch=0,
            grid=(n_pad // tile_m,),
            in_specs=[
                pl.BlockSpec((tile_m, D_IN_PAD), lambda i: (i, 0)),   # x tile
                full((D_IN_PAD, FILTER)), full((1, FILTER)),          # input layer
                full((FILTER, FILTER)),   full((1, FILTER)),          # hidden 0
                full((FILTER, FILTER)),   full((1, FILTER)),          # hidden 1
                full((FILTER, FILTER)),   full((1, FILTER)),          # hidden 2
                full((FILTER, D_OUT_PAD)), full((1, D_OUT_PAD)),      # output layer
            ],
            out_specs=pl.BlockSpec((tile_m, D_OUT_PAD), lambda i: (i, 0)),
        ),
        compiler_params=pltpu.CompilerParams(
            dimension_semantics=("parallel",),
            vmem_limit_bytes=48 * 1024 * 1024,
        ),
    )(x_p,
      packed_params["w0"], packed_params["b0"],
      packed_params["w1"], packed_params["b1"],
      packed_params["w2"], packed_params["b2"],
      packed_params["w3"], packed_params["b3"],
      packed_params["wo"], packed_params["bo"])

    return out[:N, :D_OUT]


# ---------------------------------------------------------------------------
# Parameter init (matches the PyTorch module) and packing for the kernel.
# ---------------------------------------------------------------------------

def xavier_uniform(key, fan_in, fan_out):
    # nn.init.xavier_uniform_ on a (fan_out, fan_in) weight, returned
    # transposed as (fan_in, fan_out) so the kernel computes x @ W.
    bound = jnp.sqrt(6.0 / (fan_in + fan_out))
    w = jax.random.uniform(key, (fan_out, fan_in), jnp.float32, -bound, bound)
    return w.T


def init_params(key):
    """Master f32, unpadded parameters (same math as the PyTorch module)."""
    keys = jax.random.split(key, 5)
    return {
        "w0": xavier_uniform(keys[0], D_IN, FILTER),
        "b0": jnp.zeros((1, FILTER), jnp.float32),
        "w1": xavier_uniform(keys[1], FILTER, FILTER),
        "b1": jnp.zeros((1, FILTER), jnp.float32),
        "w2": xavier_uniform(keys[2], FILTER, FILTER),
        "b2": jnp.zeros((1, FILTER), jnp.float32),
        "w3": xavier_uniform(keys[3], FILTER, FILTER),
        "b3": jnp.zeros((1, FILTER), jnp.float32),
        "wo": xavier_uniform(keys[4], FILTER, D_OUT),
        "bo": jnp.zeros((1, D_OUT), jnp.float32),
    }


def pack_params(params):
    """Pad to MXU-friendly shapes and cast weights to bf16 (biases stay f32)."""
    w0 = jnp.pad(params["w0"], ((0, D_IN_PAD - D_IN), (0, 0)))
    wo = jnp.pad(params["wo"], ((0, 0), (0, D_OUT_PAD - D_OUT)))
    bo = jnp.pad(params["bo"], ((0, 0), (0, D_OUT_PAD - D_OUT)))
    return {
        "w0": w0.astype(jnp.bfloat16), "b0": params["b0"],
        "w1": params["w1"].astype(jnp.bfloat16), "b1": params["b1"],
        "w2": params["w2"].astype(jnp.bfloat16), "b2": params["b2"],
        "w3": params["w3"].astype(jnp.bfloat16), "b3": params["b3"],
        "wo": wo.astype(jnp.bfloat16), "bo": bo,
    }


# ---------------------------------------------------------------------------
# References.
# ---------------------------------------------------------------------------

def nerf_reference_f32(x, params):
    """Pure-f32 JAX reference of the PyTorch forward."""
    h = _elu_f32(x @ params["w0"] + params["b0"])
    h = _elu_f32(h @ params["w1"] + params["b1"])
    h = _elu_f32(h @ params["w2"] + params["b2"])
    h = _elu_f32(h @ params["w3"] + params["b3"])
    return h @ params["wo"] + params["bo"]


def nerf_reference_bf16(x, packed):
    """Bit-for-bit (modulo accumulation order) match of the kernel math."""
    def lin(h, w, b):
        return jnp.dot(h.astype(jnp.bfloat16), w,
                       preferred_element_type=jnp.float32) + b
    x_p = jnp.pad(x, ((0, 0), (0, D_IN_PAD - D_IN)))
    h = _elu_f32(lin(x_p, packed["w0"], packed["b0"]))
    h = _elu_f32(lin(h, packed["w1"], packed["b1"]))
    h = _elu_f32(lin(h, packed["w2"], packed["b2"]))
    h = _elu_f32(lin(h, packed["w3"], packed["b3"]))
    out = lin(h, packed["wo"], packed["bo"])
    return out[:, :D_OUT]


if __name__ == "__main__":
    key = jax.random.PRNGKey(0)
    pkey, xkey = jax.random.split(key)
    params = init_params(pkey)
    packed = pack_params(params)

    N = 1000  # batch of sample points; exercises the pad-to-tile path
    x = jax.random.normal(xkey, (N, D_IN), jnp.float32)

    out = nerf_forward(x, packed)
    out = jax.block_until_ready(out)
    assert out.shape == (N, D_OUT)

    # Tight check vs. a reference doing the exact same bf16-operand / f32-acc math.
    ref_bf16 = nerf_reference_bf16(x, packed)
    assert jnp.allclose(out, ref_bf16, atol=2e-3, rtol=2e-3), \
        "mismatch vs bf16-matched reference"

    # Loose sanity check vs. the pure-f32 PyTorch-equivalent forward.
    ref_f32 = nerf_reference_f32(x, params)
    assert jnp.allclose(out, ref_f32, atol=0.25, rtol=0.25), \
        "mismatch vs f32 reference"

    print("KERNEL_OK")
</pallas_src>

<mosaic_0001>
module attributes {stable_mosaic.version = 11 : i64} {
  func.func @nerf_kernel(%arg0: i32, %arg1: memref<1024x64xbf16, #tpu.memory_space<vmem>>, %arg2: memref<64x128xbf16, #tpu.memory_space<vmem>>, %arg3: memref<1x128xf32, #tpu.memory_space<vmem>>, %arg4: memref<128x128xbf16, #tpu.memory_space<vmem>>, %arg5: memref<1x128xf32, #tpu.memory_space<vmem>>, %arg6: memref<128x128xbf16, #tpu.memory_space<vmem>>, %arg7: memref<1x128xf32, #tpu.memory_space<vmem>>, %arg8: memref<128x128xbf16, #tpu.memory_space<vmem>>, %arg9: memref<1x128xf32, #tpu.memory_space<vmem>>, %arg10: memref<128x128xbf16, #tpu.memory_space<vmem>>, %arg11: memref<1x128xf32, #tpu.memory_space<vmem>>, %arg12: memref<1024x128xf32, #tpu.memory_space<vmem>>) attributes {dimension_semantics = [#tpu.dimension_semantics<parallel>], iteration_bounds = array<i64: 1>, scalar_prefetch = 0 : i64, scratch_operands = 0 : i64, tpu.core_type = #tpu.core_type<tc>, window_params = [{transform_indices = @transform_0, window_bounds = array<i64: 1024, 64>}, {pipeline_mode = #tpu.pipeline_mode<synchronous>, transform_indices = @transform_1, window_bounds = array<i64: 64, 128>}, {pipeline_mode = #tpu.pipeline_mode<synchronous>, transform_indices = @transform_2, window_bounds = array<i64: 1, 128>}, {pipeline_mode = #tpu.pipeline_mode<synchronous>, transform_indices = @transform_3, window_bounds = array<i64: 128, 128>}, {pipeline_mode = #tpu.pipeline_mode<synchronous>, transform_indices = @transform_4, window_bounds = array<i64: 1, 128>}, {pipeline_mode = #tpu.pipeline_mode<synchronous>, transform_indices = @transform_5, window_bounds = array<i64: 128, 128>}, {pipeline_mode = #tpu.pipeline_mode<synchronous>, transform_indices = @transform_6, window_bounds = array<i64: 1, 128>}, {pipeline_mode = #tpu.pipeline_mode<synchronous>, transform_indices = @transform_7, window_bounds = array<i64: 128, 128>}, {pipeline_mode = #tpu.pipeline_mode<synchronous>, transform_indices = @transform_8, window_bounds = array<i64: 1, 128>}, {pipeline_mode = #tpu.pipeline_mode<synchronous>, transform_indices = @transform_9, window_bounds = array<i64: 128, 128>}, {pipeline_mode = #tpu.pipeline_mode<synchronous>, transform_indices = @transform_10, window_bounds = array<i64: 1, 128>}, {transform_indices = @transform_11, window_bounds = array<i64: 1024, 128>}]} {
    %c0 = arith.constant 0 : index
    %c0_0 = arith.constant 0 : index
    %0 = vector.load %arg1[%c0, %c0_0] : memref<1024x64xbf16, #tpu.memory_space<vmem>>, vector<1024x64xbf16>
    %c0_1 = arith.constant 0 : index
    %c0_2 = arith.constant 0 : index
    %1 = vector.load %arg2[%c0_1, %c0_2] : memref<64x128xbf16, #tpu.memory_space<vmem>>, vector<64x128xbf16>
    %cst = arith.constant dense<0.000000e+00> : vector<1024x128xf32>
    %2 = tpu.matmul %0, %1, %cst {dimension_numbers = #tpu.dot_dimension_numbers<[1], [0], [0], [1], [0, 0, 1, 1], [], []>} : vector<1024x64xbf16>, vector<64x128xbf16>, vector<1024x128xf32> -> vector<1024x128xf32>
    %c0_3 = arith.constant 0 : index
    %c0_4 = arith.constant 0 : index
    %3 = vector.load %arg3[%c0_3, %c0_4] : memref<1x128xf32, #tpu.memory_space<vmem>>, vector<1x128xf32>
    %4 = vector.broadcast %3 : vector<1x128xf32> to vector<1024x128xf32>
    %5 = arith.addf %2, %4 : vector<1024x128xf32>
    %cst_5 = arith.constant 0.000000e+00 : f32
    %6 = vector.broadcast %cst_5 : f32 to vector<1024x128xf32>
    %7 = arith.cmpf ogt, %5, %6 : vector<1024x128xf32>
    %cst_6 = arith.constant 0.000000e+00 : f32
    %8 = vector.broadcast %cst_6 : f32 to vector<1024x128xf32>
    %9 = arith.minimumf %5, %8 : vector<1024x128xf32>
    %10 = math.exp %9 : vector<1024x128xf32>
    %cst_7 = arith.constant 1.000000e+00 : f32
    %11 = vector.broadcast %cst_7 : f32 to vector<1024x128xf32>
    %12 = arith.subf %10, %11 : vector<1024x128xf32>
    %13 = arith.select %7, %5, %12 : vector<1024x128xi1>, vector<1024x128xf32>
    %14 = arith.truncf %13 : vector<1024x128xf32> to vector<1024x128xbf16>
    %c0_8 = arith.constant 0 : index
    %c0_9 = arith.constant 0 : index
    %15 = vector.load %arg4[%c0_8, %c0_9] : memref<128x128xbf16, #tpu.memory_space<vmem>>, vector<128x128xbf16>
    %cst_10 = arith.constant dense<0.000000e+00> : vector<1024x128xf32>
    %16 = tpu.matmul %14, %15, %cst_10 {dimension_numbers = #tpu.dot_dimension_numbers<[1], [0], [0], [1], [0, 0, 1, 1], [], []>} : vector<1024x128xbf16>, vector<128x128xbf16>, vector<1024x128xf32> -> vector<1024x128xf32>
    %c0_11 = arith.constant 0 : index
    %c0_12 = arith.constant 0 : index
    %17 = vector.load %arg5[%c0_11, %c0_12] : memref<1x128xf32, #tpu.memory_space<vmem>>, vector<1x128xf32>
    %18 = vector.broadcast %17 : vector<1x128xf32> to vector<1024x128xf32>
    %19 = arith.addf %16, %18 : vector<1024x128xf32>
    %cst_13 = arith.constant 0.000000e+00 : f32
    %20 = vector.broadcast %cst_13 : f32 to vector<1024x128xf32>
    %21 = arith.cmpf ogt, %19, %20 : vector<1024x128xf32>
    %cst_14 = arith.constant 0.000000e+00 : f32
    %22 = vector.broadcast %cst_14 : f32 to vector<1024x128xf32>
    %23 = arith.minimumf %19, %22 : vector<1024x128xf32>
    %24 = math.exp %23 : vector<1024x128xf32>
    %cst_15 = arith.constant 1.000000e+00 : f32
    %25 = vector.broadcast %cst_15 : f32 to vector<1024x128xf32>
    %26 = arith.subf %24, %25 : vector<1024x128xf32>
    %27 = arith.select %21, %19, %26 : vector<1024x128xi1>, vector<1024x128xf32>
    %28 = arith.truncf %27 : vector<1024x128xf32> to vector<1024x128xbf16>
    %c0_16 = arith.constant 0 : index
    %c0_17 = arith.constant 0 : index
    %29 = vector.load %arg6[%c0_16, %c0_17] : memref<128x128xbf16, #tpu.memory_space<vmem>>, vector<128x128xbf16>
    %cst_18 = arith.constant dense<0.000000e+00> : vector<1024x128xf32>
    %30 = tpu.matmul %28, %29, %cst_18 {dimension_numbers = #tpu.dot_dimension_numbers<[1], [0], [0], [1], [0, 0, 1, 1], [], []>} : vector<1024x128xbf16>, vector<128x128xbf16>, vector<1024x128xf32> -> vector<1024x128xf32>
    %c0_19 = arith.constant 0 : index
    %c0_20 = arith.constant 0 : index
    %31 = vector.load %arg7[%c0_19, %c0_20] : memref<1x128xf32, #tpu.memory_space<vmem>>, vector<1x128xf32>
    %32 = vector.broadcast %31 : vector<1x128xf32> to vector<1024x128xf32>
    %33 = arith.addf %30, %32 : vector<1024x128xf32>
    %cst_21 = arith.constant 0.000000e+00 : f32
    %34 = vector.broadcast %cst_21 : f32 to vector<1024x128xf32>
    %35 = arith.cmpf ogt, %33, %34 : vector<1024x128xf32>
    %cst_22 = arith.constant 0.000000e+00 : f32
    %36 = vector.broadcast %cst_22 : f32 to vector<1024x128xf32>
    %37 = arith.minimumf %33, %36 : vector<1024x128xf32>
    %38 = math.exp %37 : vector<1024x128xf32>
    %cst_23 = arith.constant 1.000000e+00 : f32
    %39 = vector.broadcast %cst_23 : f32 to vector<1024x128xf32>
    %40 = arith.subf %38, %39 : vector<1024x128xf32>
    %41 = arith.select %35, %33, %40 : vector<1024x128xi1>, vector<1024x128xf32>
    %42 = arith.truncf %41 : vector<1024x128xf32> to vector<1024x128xbf16>
    %c0_24 = arith.constant 0 : index
    %c0_25 = arith.constant 0 : index
    %43 = vector.load %arg8[%c0_24, %c0_25] : memref<128x128xbf16, #tpu.memory_space<vmem>>, vector<128x128xbf16>
    %cst_26 = arith.constant dense<0.000000e+00> : vector<1024x128xf32>
    %44 = tpu.matmul %42, %43, %cst_26 {dimension_numbers = #tpu.dot_dimension_numbers<[1], [0], [0], [1], [0, 0, 1, 1], [], []>} : vector<1024x128xbf16>, vector<128x128xbf16>, vector<1024x128xf32> -> vector<1024x128xf32>
    %c0_27 = arith.constant 0 : index
    %c0_28 = arith.constant 0 : index
    %45 = vector.load %arg9[%c0_27, %c0_28] : memref<1x128xf32, #tpu.memory_space<vmem>>, vector<1x128xf32>
    %46 = vector.broadcast %45 : vector<1x128xf32> to vector<1024x128xf32>
    %47 = arith.addf %44, %46 : vector<1024x128xf32>
    %cst_29 = arith.constant 0.000000e+00 : f32
    %48 = vector.broadcast %cst_29 : f32 to vector<1024x128xf32>
    %49 = arith.cmpf ogt, %47, %48 : vector<1024x128xf32>
    %cst_30 = arith.constant 0.000000e+00 : f32
    %50 = vector.broadcast %cst_30 : f32 to vector<1024x128xf32>
    %51 = arith.minimumf %47, %50 : vector<1024x128xf32>
    %52 = math.exp %51 : vector<1024x128xf32>
    %cst_31 = arith.constant 1.000000e+00 : f32
    %53 = vector.broadcast %cst_31 : f32 to vector<1024x128xf32>
    %54 = arith.subf %52, %53 : vector<1024x128xf32>
    %55 = arith.select %49, %47, %54 : vector<1024x128xi1>, vector<1024x128xf32>
    %56 = arith.truncf %55 : vector<1024x128xf32> to vector<1024x128xbf16>
    %c0_32 = arith.constant 0 : index
    %c0_33 = arith.constant 0 : index
    %57 = vector.load %arg10[%c0_32, %c0_33] : memref<128x128xbf16, #tpu.memory_space<vmem>>, vector<128x128xbf16>
    %cst_34 = arith.constant dense<0.000000e+00> : vector<1024x128xf32>
    %58 = tpu.matmul %56, %57, %cst_34 {dimension_numbers = #tpu.dot_dimension_numbers<[1], [0], [0], [1], [0, 0, 1, 1], [], []>} : vector<1024x128xbf16>, vector<128x128xbf16>, vector<1024x128xf32> -> vector<1024x128xf32>
    %c0_35 = arith.constant 0 : index
    %c0_36 = arith.constant 0 : index
    %59 = vector.load %arg11[%c0_35, %c0_36] : memref<1x128xf32, #tpu.memory_space<vmem>>, vector<1x128xf32>
    %60 = vector.broadcast %59 : vector<1x128xf32> to vector<1024x128xf32>
    %61 = arith.addf %58, %60 : vector<1024x128xf32>
    %c0_37 = arith.constant 0 : index
    %c0_38 = arith.constant 0 : index
    %62 = vector.load %arg12[%c0_37, %c0_38] : memref<1024x128xf32, #tpu.memory_space<vmem>>, vector<1024x128xf32>
    tpu.vector_store %arg12[%c0_37, %c0_38], %61 {strides = array<i32>} : memref<1024x128xf32, #tpu.memory_space<vmem>>, vector<1024x128xf32>,
    return
  }
  func.func @transform_0(%arg0: i32) -> (i32, i32) {
    %c0_i32 = arith.constant 0 : i32
    %c0_i32_0 = arith.constant 0 : i32
    return %arg0, %c0_i32 : i32, i32
  }
  func.func @transform_1(%arg0: i32) -> (i32, i32) {
    %c0_i32 = arith.constant 0 : i32
    %c0_i32_0 = arith.constant 0 : i32
    %c0_i32_1 = arith.constant 0 : i32
    return %c0_i32, %c0_i32_0 : i32, i32
  }
  func.func @transform_2(%arg0: i32) -> (i32, i32) {
    %c0_i32 = arith.constant 0 : i32
    %c0_i32_0 = arith.constant 0 : i32
    %c0_i32_1 = arith.constant 0 : i32
    return %c0_i32, %c0_i32_0 : i32, i32
  }
  func.func @transform_3(%arg0: i32) -> (i32, i32) {
    %c0_i32 = arith.constant 0 : i32
    %c0_i32_0 = arith.constant 0 : i32
    %c0_i32_1 = arith.constant 0 : i32
    return %c0_i32, %c0_i32_0 : i32, i32
  }
  func.func @transform_4(%arg0: i32) -> (i32, i32) {
    %c0_i32 = arith.constant 0 : i32
    %c0_i32_0 = arith.constant 0 : i32
    %c0_i32_1 = arith.constant 0 : i32
    return %c0_i32, %c0_i32_0 : i32, i32
  }
  func.func @transform_5(%arg0: i32) -> (i32, i32) {
    %c0_i32 = arith.constant 0 : i32
    %c0_i32_0 = arith.constant 0 : i32
    %c0_i32_1 = arith.constant 0 : i32
    return %c0_i32, %c0_i32_0 : i32, i32
  }
  func.func @transform_6(%arg0: i32) -> (i32, i32) {
    %c0_i32 = arith.constant 0 : i32
    %c0_i32_0 = arith.constant 0 : i32
    %c0_i32_1 = arith.constant 0 : i32
    return %c0_i32, %c0_i32_0 : i32, i32
  }
  func.func @transform_7(%arg0: i32) -> (i32, i32) {
    %c0_i32 = arith.constant 0 : i32
    %c0_i32_0 = arith.constant 0 : i32
    %c0_i32_1 = arith.constant 0 : i32
    return %c0_i32, %c0_i32_0 : i32, i32
  }
  func.func @transform_8(%arg0: i32) -> (i32, i32) {
    %c0_i32 = arith.constant 0 : i32
    %c0_i32_0 = arith.constant 0 : i32
    %c0_i32_1 = arith.constant 0 : i32
    return %c0_i32, %c0_i32_0 : i32, i32
  }
  func.func @transform_9(%arg0: i32) -> (i32, i32) {
    %c0_i32 = arith.constant 0 : i32
    %c0_i32_0 = arith.constant 0 : i32
    %c0_i32_1 = arith.constant 0 : i32
    return %c0_i32, %c0_i32_0 : i32, i32
  }
  func.func @transform_10(%arg0: i32) -> (i32, i32) {
    %c0_i32 = arith.constant 0 : i32
    %c0_i32_0 = arith.constant 0 : i32
    %c0_i32_1 = arith.constant 0 : i32
    return %c0_i32, %c0_i32_0 : i32, i32
  }
  func.func @transform_11(%arg0: i32) -> (i32, i32) {
    %c0_i32 = arith.constant 0 : i32
    %c0_i32_0 = arith.constant 0 : i32
    return %arg0, %c0_i32 : i32, i32
  }
}

</mosaic_0001>

<llo_original>
// kernel: tpu_custom_call.1
$region0: #{tpu_custom_call.1}
  #allocation0 [shape = 'u32[]', space=smem, size = 0x4, offset = 0x4, fixed_abs, tag = 'smem constant byte address 0x4 - core index']
  #allocation1 [shape = 'u32[144,128]{1,0:T(1,128)}', space=vmem, size = 0x12000, scoped, tag = 'internal scratch']
  %s0 = inlined_call_operand.vmem [shape: bf16[1024,64], index: 0, kind: input, shape index: {}]
  %s1 = inlined_call_operand.vmem [shape: bf16[64,128], index: 1, kind: input, shape index: {}]
  %s2 = inlined_call_operand.vmem [shape: f32[1,128], index: 2, kind: input, shape index: {}]
  %s3 = inlined_call_operand.vmem [shape: bf16[128,128], index: 3, kind: input, shape index: {}]
  %s4 = inlined_call_operand.vmem [shape: f32[1,128], index: 4, kind: input, shape index: {}]
  %s5 = inlined_call_operand.vmem [shape: bf16[128,128], index: 5, kind: input, shape index: {}]
  %s6 = inlined_call_operand.vmem [shape: f32[1,128], index: 6, kind: input, shape index: {}]
  %s7 = inlined_call_operand.vmem [shape: bf16[128,128], index: 7, kind: input, shape index: {}]
  %s8 = inlined_call_operand.vmem [shape: f32[1,128], index: 8, kind: input, shape index: {}]
  %s9 = inlined_call_operand.vmem [shape: bf16[128,128], index: 9, kind: input, shape index: {}]
  %s10 = inlined_call_operand.vmem [shape: f32[1,128], index: 10, kind: input, shape index: {}]
  %s11 = inlined_call_operand.hbm [shape: f32[1024,128], index: 11, kind: output, shape index: {}]
  %s12 = sld [smem:[#allocation0]]
  $region54: #{tpu_custom_call.1} parent=0
    _
  %s14 = ssub.s32 1, %s12
  %s15 = scalar_select 0, %s14, %s12
  $region1: #{tpu_custom_call.1} parent=0
    #allocation2 [shape = 'u8[524288]{0}', space=vmem, size = 0x80000, scoped, tag = 'output window, operand 0, single buffered']
    #allocation3 [shape = 's32[1]{0}', space=sflag, size = 0x4, scoped, tag = 'scoped memory for tpu_custom_call.1']
    %16 = vsyncpa [#allocation3], 0
    // Predicated region
    $region2: #{tpu_custom_call.1} parent=1 // pred_check
      _
    $region3: #{tpu_custom_call.1} parent=1 // pred_check_branch
      %18 = sbr.rel (0) target = $region5
    $region4: #{tpu_custom_call.1} parent=1 // pred_region
      _
    $region5: #{tpu_custom_call.1} parent=1 // pred_fallthru
      _
    // Predicated region
    $region6: #{tpu_custom_call.1} parent=1 // pred_check
      _
    $region7: #{tpu_custom_call.1} parent=1 // pred_check_branch
      %20 = sbr.rel (0) target = $region9
    $region8: #{tpu_custom_call.1} parent=1 // pred_region
      _
    $region9: #{tpu_custom_call.1} parent=1 // pred_fallthru
      _
    // Predicated region
    $region10: #{tpu_custom_call.1} parent=1 // pred_check
      _
    $region11: #{tpu_custom_call.1} parent=1 // pred_check_branch
      %22 = sbr.rel (0) target = $region13
    $region12: #{tpu_custom_call.1} parent=1 // pred_region
      _
    $region13: #{tpu_custom_call.1} parent=1 // pred_fallthru
      _
    // Predicated region
    $region14: #{tpu_custom_call.1} parent=1 // pred_check
      _
    $region15: #{tpu_custom_call.1} parent=1 // pred_check_branch
      %24 = sbr.rel (0) target = $region17
    $region16: #{tpu_custom_call.1} parent=1 // pred_region
      _
    $region17: #{tpu_custom_call.1} parent=1 // pred_fallthru
      _
    // Predicated region
    $region18: #{tpu_custom_call.1} parent=1 // pred_check
      _
    $region19: #{tpu_custom_call.1} parent=1 // pred_check_branch
      %26 = sbr.rel (0) target = $region21
    $region20: #{tpu_custom_call.1} parent=1 // pred_region
      _
    $region21: #{tpu_custom_call.1} parent=1 // pred_fallthru
      _
    // Predicated region
    $region22: #{tpu_custom_call.1} parent=1 // pred_check
      _
    $region23: #{tpu_custom_call.1} parent=1 // pred_check_branch
      %28 = sbr.rel (0) target = $region25
    $region24: #{tpu_custom_call.1} parent=1 // pred_region
      _
    $region25: #{tpu_custom_call.1} parent=1 // pred_fallthru
      _
    // Predicated region
    $region26: #{tpu_custom_call.1} parent=1 // pred_check
      _
    $region27: #{tpu_custom_call.1} parent=1 // pred_check_branch
      %30 = sbr.rel (0) target = $region29
    $region28: #{tpu_custom_call.1} parent=1 // pred_region
      _
    $region29: #{tpu_custom_call.1} parent=1 // pred_fallthru
      _
    // Predicated region
    $region30: #{tpu_custom_call.1} parent=1 // pred_check
      _
    $region31: #{tpu_custom_call.1} parent=1 // pred_check_branch
      %32 = sbr.rel (0) target = $region33
    $region32: #{tpu_custom_call.1} parent=1 // pred_region
      _
    $region33: #{tpu_custom_call.1} parent=1 // pred_fallthru
      _
    // Predicated region
    $region34: #{tpu_custom_call.1} parent=1 // pred_check
      _
    $region35: #{tpu_custom_call.1} parent=1 // pred_check_branch
      %34 = sbr.rel (0) target = $region37
    $region36: #{tpu_custom_call.1} parent=1 // pred_region
      _
    $region37: #{tpu_custom_call.1} parent=1 // pred_fallthru
      _
    // Predicated region
    $region38: #{tpu_custom_call.1} parent=1 // pred_check
      _
    $region39: #{tpu_custom_call.1} parent=1 // pred_check_branch
      %36 = sbr.rel (0) target = $region41
    $region40: #{tpu_custom_call.1} parent=1 // pred_region
      _
    $region41: #{tpu_custom_call.1} parent=1 // pred_fallthru
      _
    // Predicated region
    $region42: #{tpu_custom_call.1} parent=1 // pred_check
      _
    $region43: #{tpu_custom_call.1} parent=1 // pred_check_branch
      %38 = sbr.rel (0) target = $region45
    $region44: #{tpu_custom_call.1} parent=1 // pred_region
      _
    $region45: #{tpu_custom_call.1} parent=1 // pred_fallthru
      _
    %v40 = vld [vmem:[%s0] sm:$0xf]
    %v41 = vld [vmem:[%s0 + $0x4] sm:$0xf]
    %v42 = vld [vmem:[%s0 + $0x8] sm:$0xf]
    %v43 = vld [vmem:[%s0 + $0xc] sm:$0xf]
    %v44 = vld [vmem:[%s0 + $0x10] sm:$0xf]
    %v45 = vld [vmem:[%s0 + $0x14] sm:$0xf]
    %v46 = vld [vmem:[%s0 + $0x18] sm:$0xf]
    %v47 = vld [vmem:[%s0 + $0x1c] sm:$0xf]
    %v48 = vld [vmem:[%s0 + $0x20] sm:$0xf]
    %v49 = vld [vmem:[%s0 + $0x24] sm:$0xf]
    %v50 = vld [vmem:[%s0 + $0x28] sm:$0xf]
    %v51 = vld [vmem:[%s0 + $0x2c] sm:$0xf]
    %v52 = vld [vmem:[%s0 + $0x30] sm:$0xf]
    %v53 = vld [vmem:[%s0 + $0x34] sm:$0xf]
    %v54 = vld [vmem:[%s0 + $0x38] sm:$0xf]
    %v55 = vld [vmem:[%s0 + $0x3c] sm:$0xf]
    %v56 = vld [vmem:[%s0 + $0x40] sm:$0xf]
    %v57 = vld [vmem:[%s0 + $0x44] sm:$0xf]
    %v58 = vld [vmem:[%s0 + $0x48] sm:$0xf]
    %v59 = vld [vmem:[%s0 + $0x4c] sm:$0xf]
    %v60 = vld [vmem:[%s0 + $0x50] sm:$0xf]
    %v61 = vld [vmem:[%s0 + $0x54] sm:$0xf]
    %v62 = vld [vmem:[%s0 + $0x58] sm:$0xf]
    %v63 = vld [vmem:[%s0 + $0x5c] sm:$0xf]
    %v64 = vld [vmem:[%s0 + $0x60] sm:$0xf]
    %v65 = vld [vmem:[%s0 + $0x64] sm:$0xf]
    %v66 = vld [vmem:[%s0 + $0x68] sm:$0xf]
    %v67 = vld [vmem:[%s0 + $0x6c] sm:$0xf]
    %v68 = vld [vmem:[%s0 + $0x70] sm:$0xf]
    %v69 = vld [vmem:[%s0 + $0x74] sm:$0xf]
    %v70 = vld [vmem:[%s0 + $0x78] sm:$0xf]
    %v71 = vld [vmem:[%s0 + $0x7c] sm:$0xf]
    %v72 = vld [vmem:[%s0 + $0x80] sm:$0xf]
    %v73 = vld [vmem:[%s0 + $0x84] sm:$0xf]
    %v74 = vld [vmem:[%s0 + $0x88] sm:$0xf]
    %v75 = vld [vmem:[%s0 + $0x8c] sm:$0xf]
    %v76 = vld [vmem:[%s0 + $0x90] sm:$0xf]
    %v77 = vld [vmem:[%s0 + $0x94] sm:$0xf]
    %v78 = vld [vmem:[%s0 + $0x98] sm:$0xf]
    %v79 = vld [vmem:[%s0 + $0x9c] sm:$0xf]
    %v80 = vld [vmem:[%s0 + $0xa0] sm:$0xf]
    %v81 = vld [vmem:[%s0 + $0xa4] sm:$0xf]
    %v82 = vld [vmem:[%s0 + $0xa8] sm:$0xf]
    %v83 = vld [vmem:[%s0 + $0xac] sm:$0xf]
    %v84 = vld [vmem:[%s0 + $0xb0] sm:$0xf]
    %v85 = vld [vmem:[%s0 + $0xb4] sm:$0xf]
    %v86 = vld [vmem:[%s0 + $0xb8] sm:$0xf]
    %v87 = vld [vmem:[%s0 + $0xbc] sm:$0xf]
    %v88 = vld [vmem:[%s0 + $0xc0] sm:$0xf]
    %v89 = vld [vmem:[%s0 + $0xc4] sm:$0xf]
    %v90 = vld [vmem:[%s0 + $0xc8] sm:$0xf]
    %v91 = vld [vmem:[%s0 + $0xcc] sm:$0xf]
    %v92 = vld [vmem:[%s0 + $0xd0] sm:$0xf]
    %v93 = vld [vmem:[%s0 + $0xd4] sm:$0xf]
    %v94 = vld [vmem:[%s0 + $0xd8] sm:$0xf]
    %v95 = vld [vmem:[%s0 + $0xdc] sm:$0xf]
    %v96 = vld [vmem:[%s0 + $0xe0] sm:$0xf]
    %v97 = vld [vmem:[%s0 + $0xe4] sm:$0xf]
    %v98 = vld [vmem:[%s0 + $0xe8] sm:$0xf]
    %v99 = vld [vmem:[%s0 + $0xec] sm:$0xf]
    %v100 = vld [vmem:[%s0 + $0xf0] sm:$0xf]
    %v101 = vld [vmem:[%s0 + $0xf4] sm:$0xf]
    %v102 = vld [vmem:[%s0 + $0xf8] sm:$0xf]
    %v103 = vld [vmem:[%s0 + $0xfc] sm:$0xf]
    %v104 = vld [vmem:[%s0 + $0x100] sm:$0xf]
    %v105 = vld [vmem:[%s0 + $0x104] sm:$0xf]
    %v106 = vld [vmem:[%s0 + $0x108] sm:$0xf]
    %v107 = vld [vmem:[%s0 + $0x10c] sm:$0xf]
    %v108 = vld [vmem:[%s0 + $0x110] sm:$0xf]
    %v109 = vld [vmem:[%s0 + $0x114] sm:$0xf]
    %v110 = vld [vmem:[%s0 + $0x118] sm:$0xf]
    %v111 = vld [vmem:[%s0 + $0x11c] sm:$0xf]
    %v112 = vld [vmem:[%s0 + $0x120] sm:$0xf]
    %v113 = vld [vmem:[%s0 + $0x124] sm:$0xf]
    %v114 = vld [vmem:[%s0 + $0x128] sm:$0xf]
    %v115 = vld [vmem:[%s0 + $0x12c] sm:$0xf]
    %v116 = vld [vmem:[%s0 + $0x130] sm:$0xf]
    %v117 = vld [vmem:[%s0 + $0x134] sm:$0xf]
    %v118 = vld [vmem:[%s0 + $0x138] sm:$0xf]
    %v119 = vld [vmem:[%s0 + $0x13c] sm:$0xf]
    %v120 = vld [vmem:[%s0 + $0x140] sm:$0xf]
    %v121 = vld [vmem:[%s0 + $0x144] sm:$0xf]
    %v122 = vld [vmem:[%s0 + $0x148] sm:$0xf]
    %v123 = vld [vmem:[%s0 + $0x14c] sm:$0xf]
    %v124 = vld [vmem:[%s0 + $0x150] sm:$0xf]
    %v125 = vld [vmem:[%s0 + $0x154] sm:$0xf]
    %v126 = vld [vmem:[%s0 + $0x158] sm:$0xf]
    %v127 = vld [vmem:[%s0 + $0x15c] sm:$0xf]
    %v128 = vld [vmem:[%s0 + $0x160] sm:$0xf]
    %v129 = vld [vmem:[%s0 + $0x164] sm:$0xf]
    %v130 = vld [vmem:[%s0 + $0x168] sm:$0xf]
    %v131 = vld [vmem:[%s0 + $0x16c] sm:$0xf]
    %v132 = vld [vmem:[%s0 + $0x170] sm:$0xf]
    %v133 = vld [vmem:[%s0 + $0x174] sm:$0xf]
    %v134 = vld [vmem:[%s0 + $0x178] sm:$0xf]
    %v135 = vld [vmem:[%s0 + $0x17c] sm:$0xf]
    %v136 = vld [vmem:[%s0 + $0x180] sm:$0xf]
    %v137 = vld [vmem:[%s0 + $0x184] sm:$0xf]
    %v138 = vld [vmem:[%s0 + $0x188] sm:$0xf]
    %v139 = vld [vmem:[%s0 + $0x18c] sm:$0xf]
    %v140 = vld [vmem:[%s0 + $0x190] sm:$0xf]
    %v141 = vld [vmem:[%s0 + $0x194] sm:$0xf]
    %v142 = vld [vmem:[%s0 + $0x198] sm:$0xf]
    %v143 = vld [vmem:[%s0 + $0x19c] sm:$0xf]
    %v144 = vld [vmem:[%s0 + $0x1a0] sm:$0xf]
    %v145 = vld [vmem:[%s0 + $0x1a4] sm:$0xf]
    %v146 = vld [vmem:[%s0 + $0x1a8] sm:$0xf]
    %v147 = vld [vmem:[%s0 + $0x1ac] sm:$0xf]
    %v148 = vld [vmem:[%s0 + $0x1b0] sm:$0xf]
    %v149 = vld [vmem:[%s0 + $0x1b4] sm:$0xf]
    %v150 = vld [vmem:[%s0 + $0x1b8] sm:$0xf]
    %v151 = vld [vmem:[%s0 + $0x1bc] sm:$0xf]
    %v152 = vld [vmem:[%s0 + $0x1c0] sm:$0xf]
    %v153 = vld [vmem:[%s0 + $0x1c4] sm:$0xf]
    %v154 = vld [vmem:[%s0 + $0x1c8] sm:$0xf]
    %v155 = vld [vmem:[%s0 + $0x1cc] sm:$0xf]
    %v156 = vld [vmem:[%s0 + $0x1d0] sm:$0xf]
    %v157 = vld [vmem:[%s0 + $0x1d4] sm:$0xf]
    %v158 = vld [vmem:[%s0 + $0x1d8] sm:$0xf]
    %v159 = vld [vmem:[%s0 + $0x1dc] sm:$0xf]
    %v160 = vld [vmem:[%s0 + $0x1e0] sm:$0xf]
    %v161 = vld [vmem:[%s0 + $0x1e4] sm:$0xf]
    %v162 = vld [vmem:[%s0 + $0x1e8] sm:$0xf]
    %v163 = vld [vmem:[%s0 + $0x1ec] sm:$0xf]
    %v164 = vld [vmem:[%s0 + $0x1f0] sm:$0xf]
    %v165 = vld [vmem:[%s0 + $0x1f4] sm:$0xf]
    %v166 = vld [vmem:[%s0 + $0x1f8] sm:$0xf]
    %v167 = vld [vmem:[%s0 + $0x1fc] sm:$0xf]
    %v168 = vld [vmem:[%s1] sm:$0xf]
    %v169 = vld [vmem:[%s1 + $0x4] sm:$0xf]
    %v170 = vld [vmem:[%s1 + $0x8] sm:$0xf]
    %v171 = vld [vmem:[%s1 + $0xc] sm:$0xf]
    %v172 = vld [vmem:[%s1 + $0x10] sm:$0xf]
    %v173 = vld [vmem:[%s1 + $0x14] sm:$0xf]
    %v174 = vld [vmem:[%s1 + $0x18] sm:$0xf]
    %v175 = vld [vmem:[%s1 + $0x1c] sm:$0xf]
    %v176 = vld [vmem:[%s2] sm:$0x1]
    %v178 = vlaneseq
    %v179 = vshrl.u32 %v178, 7
    %v180 = vsub.s32 0, %v179
    %v181 = vrot.slane %v176, %v180
    %v311 = vunpack.c.l.b16 %v40
    %v312 = vunpack.c.l.b16 %v41
    %v313 = vunpack.c.l.b16 %v42
    %v314 = vunpack.c.l.b16 %v43
    %v315 = vunpack.c.l.b16 %v44
    %v316 = vunpack.c.l.b16 %v45
    %v317 = vunpack.c.l.b16 %v46
    %v318 = vunpack.c.l.b16 %v47
    %v319 = vunpack.c.l.b16 %v48
    %v320 = vunpack.c.l.b16 %v49
    %v321 = vunpack.c.l.b16 %v50
    %v322 = vunpack.c.l.b16 %v51
    %v323 = vunpack.c.l.b16 %v52
    %v324 = vunpack.c.l.b16 %v53
    %v325 = vunpack.c.l.b16 %v54
    %v326 = vunpack.c.l.b16 %v55
    %v327 = vunpack.c.l.b16 %v56
    %v328 = vunpack.c.l.b16 %v57
    %v329 = vunpack.c.l.b16 %v58
    %v330 = vunpack.c.l.b16 %v59
    %v331 = vunpack.c.l.b16 %v60
    %v332 = vunpack.c.l.b16 %v61
    %v333 = vunpack.c.l.b16 %v62
    %v334 = vunpack.c.l.b16 %v63
    %v335 = vunpack.c.l.b16 %v64
    %v336 = vunpack.c.l.b16 %v65
    %v337 = vunpack.c.l.b16 %v66
    %v338 = vunpack.c.l.b16 %v67
    %v339 = vunpack.c.l.b16 %v68
    %v340 = vunpack.c.l.b16 %v69
    %v341 = vunpack.c.l.b16 %v70
    %v342 = vunpack.c.l.b16 %v71
    %v343 = vunpack.c.l.b16 %v72
    %v344 = vunpack.c.l.b16 %v73
    %v345 = vunpack.c.l.b16 %v74
    %v346 = vunpack.c.l.b16 %v75
    %v347 = vunpack.c.l.b16 %v76
    %v348 = vunpack.c.l.b16 %v77
    %v349 = vunpack.c.l.b16 %v78
    %v350 = vunpack.c.l.b16 %v79
    %v351 = vunpack.c.l.b16 %v80
    %v352 = vunpack.c.l.b16 %v81
    %v353 = vunpack.c.l.b16 %v82
    %v354 = vunpack.c.l.b16 %v83
    %v355 = vunpack.c.l.b16 %v84
    %v356 = vunpack.c.l.b16 %v85
    %v357 = vunpack.c.l.b16 %v86
    %v358 = vunpack.c.l.b16 %v87
    %v359 = vunpack.c.l.b16 %v88
    %v360 = vunpack.c.l.b16 %v89
    %v361 = vunpack.c.l.b16 %v90
    %v362 = vunpack.c.l.b16 %v91
    %v363 = vunpack.c.l.b16 %v92
    %v364 = vunpack.c.l.b16 %v93
    %v365 = vunpack.c.l.b16 %v94
    %v366 = vunpack.c.l.b16 %v95
    %v367 = vunpack.c.l.b16 %v96
    %v368 = vunpack.c.l.b16 %v97
    %v369 = vunpack.c.l.b16 %v98
    %v370 = vunpack.c.l.b16 %v99
    %v371 = vunpack.c.l.b16 %v100
    %v372 = vunpack.c.l.b16 %v101
    %v373 = vunpack.c.l.b16 %v102
    %v374 = vunpack.c.l.b16 %v103
    %v375 = vunpack.c.l.b16 %v104
    %v376 = vunpack.c.l.b16 %v105
    %v377 = vunpack.c.l.b16 %v106
    %v378 = vunpack.c.l.b16 %v107
    %v379 = vunpack.c.l.b16 %v108
    %v380 = vunpack.c.l.b16 %v109
    %v381 = vunpack.c.l.b16 %v110
    %v382 = vunpack.c.l.b16 %v111
    %v383 = vunpack.c.l.b16 %v112
    %v384 = vunpack.c.l.b16 %v113
    %v385 = vunpack.c.l.b16 %v114
    %v386 = vunpack.c.l.b16 %v115
    %v387 = vunpack.c.l.b16 %v116
    %v388 = vunpack.c.l.b16 %v117
    %v389 = vunpack.c.l.b16 %v118
    %v390 = vunpack.c.l.b16 %v119
    %v391 = vunpack.c.l.b16 %v120
    %v392 = vunpack.c.l.b16 %v121
    %v393 = vunpack.c.l.b16 %v122
    %v394 = vunpack.c.l.b16 %v123
    %v395 = vunpack.c.l.b16 %v124
    %v396 = vunpack.c.l.b16 %v125
    %v397 = vunpack.c.l.b16 %v126
    %v398 = vunpack.c.l.b16 %v127
    %v399 = vunpack.c.l.b16 %v128
    %v400 = vunpack.c.l.b16 %v129
    %v401 = vunpack.c.l.b16 %v130
    %v402 = vunpack.c.l.b16 %v131
    %v403 = vunpack.c.l.b16 %v132
    %v404 = vunpack.c.l.b16 %v133
    %v405 = vunpack.c.l.b16 %v134
    %v406 = vunpack.c.l.b16 %v135
    %v407 = vunpack.c.l.b16 %v136
    %v408 = vunpack.c.l.b16 %v137
    %v409 = vunpack.c.l.b16 %v138
    %v410 = vunpack.c.l.b16 %v139
    %v411 = vunpack.c.l.b16 %v140
    %v412 = vunpack.c.l.b16 %v141
    %v413 = vunpack.c.l.b16 %v142
    %v414 = vunpack.c.l.b16 %v143
    %v415 = vunpack.c.l.b16 %v144
    %v416 = vunpack.c.l.b16 %v145
    %v417 = vunpack.c.l.b16 %v146
    %v418 = vunpack.c.l.b16 %v147
    %v419 = vunpack.c.l.b16 %v148
    %v420 = vunpack.c.l.b16 %v149
    %v421 = vunpack.c.l.b16 %v150
    %v422 = vunpack.c.l.b16 %v151
    %v423 = vunpack.c.l.b16 %v152
    %v424 = vunpack.c.l.b16 %v153
    %v425 = vunpack.c.l.b16 %v154
    %v426 = vunpack.c.l.b16 %v155
    %v427 = vunpack.c.l.b16 %v156
    %v428 = vunpack.c.l.b16 %v157
    %v429 = vunpack.c.l.b16 %v158
    %v430 = vunpack.c.l.b16 %v159
    %v431 = vunpack.c.l.b16 %v160
    %v432 = vunpack.c.l.b16 %v161
    %v433 = vunpack.c.l.b16 %v162
    %v434 = vunpack.c.l.b16 %v163
    %v435 = vunpack.c.l.b16 %v164
    %v436 = vunpack.c.l.b16 %v165
    %v437 = vunpack.c.l.b16 %v166
    %v438 = vunpack.c.l.b16 %v167
    %v439 = vpack.c.b16 %v312, %v311
    %v440 = vpack.c.b16 %v314, %v313
    %v441 = vpack.c.b16 %v316, %v315
    %v442 = vpack.c.b16 %v318, %v317
    %v443 = vpack.c.b16 %v320, %v319
    %v444 = vpack.c.b16 %v322, %v321
    %v445 = vpack.c.b16 %v324, %v323
    %v446 = vpack.c.b16 %v326, %v325
    %v447 = vpack.c.b16 %v328, %v327
    %v448 = vpack.c.b16 %v330, %v329
    %v449 = vpack.c.b16 %v332, %v331
    %v450 = vpack.c.b16 %v334, %v333
    %v451 = vpack.c.b16 %v336, %v335
    %v452 = vpack.c.b16 %v338, %v337
    %v453 = vpack.c.b16 %v340, %v339
    %v454 = vpack.c.b16 %v342, %v341
    %v455 = vpack.c.b16 %v344, %v343
    %v456 = vpack.c.b16 %v346, %v345
    %v457 = vpack.c.b16 %v348, %v347
    %v458 = vpack.c.b16 %v350, %v349
    %v459 = vpack.c.b16 %v352, %v351
    %v460 = vpack.c.b16 %v354, %v353
    %v461 = vpack.c.b16 %v356, %v355
    %v462 = vpack.c.b16 %v358, %v357
    %v463 = vpack.c.b16 %v360, %v359
    %v464 = vpack.c.b16 %v362, %v361
    %v465 = vpack.c.b16 %v364, %v363
    %v466 = vpack.c.b16 %v366, %v365
    %v467 = vpack.c.b16 %v368, %v367
    %v468 = vpack.c.b16 %v370, %v369
    %v469 = vpack.c.b16 %v372, %v371
    %v470 = vpack.c.b16 %v374, %v373
    %v471 = vpack.c.b16 %v376, %v375
    %v472 = vpack.c.b16 %v378, %v377
    %v473 = vpack.c.b16 %v380, %v379
    %v474 = vpack.c.b16 %v382, %v381
    %v475 = vpack.c.b16 %v384, %v383
    %v476 = vpack.c.b16 %v386, %v385
    %v477 = vpack.c.b16 %v388, %v387
    %v478 = vpack.c.b16 %v390, %v389
    %v479 = vpack.c.b16 %v392, %v391
    %v480 = vpack.c.b16 %v394, %v393
    %v481 = vpack.c.b16 %v396, %v395
    %v482 = vpack.c.b16 %v398, %v397
    %v483 = vpack.c.b16 %v400, %v399
    %v484 = vpack.c.b16 %v402, %v401
    %v485 = vpack.c.b16 %v404, %v403
    %v486 = vpack.c.b16 %v406, %v405
    %v487 = vpack.c.b16 %v408, %v407
    %v488 = vpack.c.b16 %v410, %v409
    %v489 = vpack.c.b16 %v412, %v411
    %v490 = vpack.c.b16 %v414, %v413
    %v491 = vpack.c.b16 %v416, %v415
    %v492 = vpack.c.b16 %v418, %v417
    %v493 = vpack.c.b16 %v420, %v419
    %v494 = vpack.c.b16 %v422, %v421
    %v495 = vpack.c.b16 %v424, %v423
    %v496 = vpack.c.b16 %v426, %v425
    %v497 = vpack.c.b16 %v428, %v427
    %v498 = vpack.c.b16 %v430, %v429
    %v499 = vpack.c.b16 %v432, %v431
    %v500 = vpack.c.b16 %v434, %v433
    %v501 = vpack.c.b16 %v436, %v435
    %v502 = vpack.c.b16 %v438, %v437
    %v511 = vunpack.c.l.b16 %v168
    %v512 = vunpack.c.l.b16 %v169
    %v513 = vunpack.c.l.b16 %v170
    %v514 = vunpack.c.l.b16 %v171
    %v515 = vunpack.c.l.b16 %v172
    %v516 = vunpack.c.l.b16 %v173
    %v517 = vunpack.c.l.b16 %v174
    %v518 = vunpack.c.l.b16 %v175
    %v519 = vpack.c.b16 %v512, %v511
    %v520 = vpack.c.b16 %v514, %v513
    %v521 = vpack.c.b16 %v516, %v515
    %v522 = vpack.c.b16 %v518, %v517
    %vm527 = vcmask 523264
    %v529 = vsel %vm527, %v439, 0
    %v532 = vsel %vm527, %v440, 0
    %v535 = vsel %vm527, %v441, 0
    %v538 = vsel %vm527, %v442, 0
    %v541 = vsel %vm527, %v443, 0
    %v544 = vsel %vm527, %v444, 0
    %v547 = vsel %vm527, %v445, 0
    %v550 = vsel %vm527, %v446, 0
    %v553 = vsel %vm527, %v447, 0
    %v556 = vsel %vm527, %v448, 0
    %v559 = vsel %vm527, %v449, 0
    %v562 = vsel %vm527, %v450, 0
    %v565 = vsel %vm527, %v451, 0
    %v568 = vsel %vm527, %v452, 0
    %v571 = vsel %vm527, %v453, 0
    %v574 = vsel %vm527, %v454, 0
    %v577 = vsel %vm527, %v455, 0
    %v580 = vsel %vm527, %v456, 0
    %v583 = vsel %vm527, %v457, 0
    %v586 = vsel %vm527, %v458, 0
    %v589 = vsel %vm527, %v459, 0
    %v592 = vsel %vm527, %v460, 0
    %v595 = vsel %vm527, %v461, 0
    %v598 = vsel %vm527, %v462, 0
    %v601 = vsel %vm527, %v463, 0
    %v604 = vsel %vm527, %v464, 0
    %v607 = vsel %vm527, %v465, 0
    %v610 = vsel %vm527, %v466, 0
    %v613 = vsel %vm527, %v467, 0
    %v616 = vsel %vm527, %v468, 0
    %v619 = vsel %vm527, %v469, 0
    %v622 = vsel %vm527, %v470, 0
    %v625 = vsel %vm527, %v471, 0
    %v628 = vsel %vm527, %v472, 0
    %v631 = vsel %vm527, %v473, 0
    %v634 = vsel %vm527, %v474, 0
    %v637 = vsel %vm527, %v475, 0
    %v640 = vsel %vm527, %v476, 0
    %v643 = vsel %vm527, %v477, 0
    %v646 = vsel %vm527, %v478, 0
    %v649 = vsel %vm527, %v479, 0
    %v652 = vsel %vm527, %v480, 0
    %v655 = vsel %vm527, %v481, 0
    %v658 = vsel %vm527, %v482, 0
    %v661 = vsel %vm527, %v483, 0
    %v664 = vsel %vm527, %v484, 0
    %v667 = vsel %vm527, %v485, 0
    %v670 = vsel %vm527, %v486, 0
    %v673 = vsel %vm527, %v487, 0
    %v676 = vsel %vm527, %v488, 0
    %v679 = vsel %vm527, %v489, 0
    %v682 = vsel %vm527, %v490, 0
    %v685 = vsel %vm527, %v491, 0
    %v688 = vsel %vm527, %v492, 0
    %v691 = vsel %vm527, %v493, 0
    %v694 = vsel %vm527, %v494, 0
    %v697 = vsel %vm527, %v495, 0
    %v700 = vsel %vm527, %v496, 0
    %v703 = vsel %vm527, %v497, 0
    %v706 = vsel %vm527, %v498, 0
    %v709 = vsel %vm527, %v499, 0
    %v712 = vsel %vm527, %v500, 0
    %v715 = vsel %vm527, %v501, 0
    %v718 = vsel %vm527, %v502, 0
    %720 = vmatprep.subr.bf16.mxu0 0
    %721 = vmatpush1.bf16.msra.mxu0 %v519
    %722 = vmatprep.subr.bf16.mxu0 0
    %723 = vmatpush1.bf16.msra.mxu0 %v520
    %724 = vmatprep.subr.bf16.mxu0 0
    %725 = vmatpush1.bf16.msra.mxu0 %v521
    %726 = vmatprep.subr.bf16.mxu0 0
    %727 = vmatpush1.bf16.msra.mxu0 %v522
    %728 = vmatprep.subr.bf16.mxu0 0
    %729 = vmatpush1.bf16.msra.mxu0 0
    %730 = vmatprep.subr.bf16.mxu0 0
    %731 = vmatpush1.bf16.msra.mxu0 0
    %732 = vmatprep.subr.bf16.mxu0 0
    %733 = vmatpush1.bf16.msra.mxu0 0
    %734 = vmatprep.subr.bf16.mxu0 0
    %735 = vmatpush1.bf16.msra.mxu0 0
    %736 = vmatprep.subr.bf16.mxu0 0
    %737 = vmatpush1.bf16.msra.mxu0 0
    %738 = vmatprep.subr.bf16.mxu0 0
    %739 = vmatpush1.bf16.msra.mxu0 0
    %740 = vmatprep.subr.bf16.mxu0 0
    %741 = vmatpush1.bf16.msra.mxu0 0
    %742 = vmatprep.subr.bf16.mxu0 0
    %743 = vmatpush1.bf16.msra.mxu0 0
    %744 = vmatprep.subr.bf16.mxu0 0
    %745 = vmatpush1.bf16.msra.mxu0 0
    %746 = vmatprep.subr.bf16.mxu0 0
    %747 = vmatpush1.bf16.msra.mxu0 0
    %748 = vmatprep.subr.bf16.mxu0 0
    %749 = vmatpush1.bf16.msra.mxu0 0
    %750 = vmatprep.subr.bf16.mxu0 0
    %751 = vmatpush1.bf16.msra.mxu0 0
    %752 = vmatprep.mubr.bf16.mxu0 0
    %753 = vmatmul.mubr.bf16.gmra.mrb[0].mxu0 %v529
    %v754 = vpop.f32.mrb[0].mxu0
    %v755 = vadd.f32 %v181, %v754
    %v756 = vpop.f32.mrb[0].mxu0
    %v757 = vpop.f32.mrb[0].mxu0
    %v758 = vadd.f32 %v181, %v757
    %v759 = vpop.f32.mrb[0].mxu0
    %760 = vmatprep.mubr.bf16.mxu0 0
    %761 = vmatmul.mubr.bf16.gmra.mrb[0].mxu0 %v532
    %v762 = vpop.f32.mrb[0].mxu0
    %v763 = vadd.f32 %v181, %v762
    %v764 = vpop.f32.mrb[0].mxu0
    %v765 = vpop.f32.mrb[0].mxu0
    %v766 = vadd.f32 %v181, %v765
    %v767 = vpop.f32.mrb[0].mxu0
    %768 = vmatprep.mubr.bf16.mxu0 0
    %769 = vmatmul.mubr.bf16.gmra.mrb[0].mxu0 %v535
    %v770 = vpop.f32.mrb[0].mxu0
    %v771 = vadd.f32 %v181, %v770
    %v772 = vpop.f32.mrb[0].mxu0
    %v773 = vpop.f32.mrb[0].mxu0
    %v774 = vadd.f32 %v181, %v773
    %v775 = vpop.f32.mrb[0].mxu0
    %776 = vmatprep.mubr.bf16.mxu0 0
    %777 = vmatmul.mubr.bf16.gmra.mrb[0].mxu0 %v538
    %v778 = vpop.f32.mrb[0].mxu0
    %v779 = vadd.f32 %v181, %v778
    %v780 = vpop.f32.mrb[0].mxu0
    %v781 = vpop.f32.mrb[0].mxu0
    %v782 = vadd.f32 %v181, %v781
    %v783 = vpop.f32.mrb[0].mxu0
    %784 = vmatprep.mubr.bf16.mxu0 0
    %785 = vmatmul.mubr.bf16.gmra.mrb[0].mxu0 %v541
    %v786 = vpop.f32.mrb[0].mxu0
    %v787 = vadd.f32 %v181, %v786
    %v788 = vpop.f32.mrb[0].mxu0
    %v789 = vpop.f32.mrb[0].mxu0
    %v790 = vadd.f32 %v181, %v789
    %v791 = vpop.f32.mrb[0].mxu0
    %792 = vmatprep.mubr.bf16.mxu0 0
    %793 = vmatmul.mubr.bf16.gmra.mrb[0].mxu0 %v544
    %v794 = vpop.f32.mrb[0].mxu0
    %v795 = vadd.f32 %v181, %v794
    %v796 = vpop.f32.mrb[0].mxu0
    %v797 = vpop.f32.mrb[0].mxu0
    %v798 = vadd.f32 %v181, %v797
    %v799 = vpop.f32.mrb[0].mxu0
    %800 = vmatprep.mubr.bf16.mxu0 0
    %801 = vmatmul.mubr.bf16.gmra.mrb[0].mxu0 %v547
    %v802 = vpop.f32.mrb[0].mxu0
    %v803 = vadd.f32 %v181, %v802
    %v804 = vpop.f32.mrb[0].mxu0
    %v805 = vpop.f32.mrb[0].mxu0
    %v806 = vadd.f32 %v181, %v805
    %v807 = vpop.f32.mrb[0].mxu0
    %808 = vmatprep.mubr.bf16.mxu0 0
    %809 = vmatmul.mubr.bf16.gmra.mrb[0].mxu0 %v550
    %v810 = vpop.f32.mrb[0].mxu0
    %v811 = vadd.f32 %v181, %v810
    %v812 = vpop.f32.mrb[0].mxu0
    %v813 = vpop.f32.mrb[0].mxu0
    %v814 = vadd.f32 %v181, %v813
    %v815 = vpop.f32.mrb[0].mxu0
    %816 = vmatprep.mubr.bf16.mxu0 0
    %817 = vmatmul.mubr.bf16.gmra.mrb[0].mxu0 %v553
    %v818 = vpop.f32.mrb[0].mxu0
    %v819 = vadd.f32 %v181, %v818
    %v820 = vpop.f32.mrb[0].mxu0
    %v821 = vpop.f32.mrb[0].mxu0
    %v822 = vadd.f32 %v181, %v821
    %v823 = vpop.f32.mrb[0].mxu0
    %824 = vmatprep.mubr.bf16.mxu0 0
    %825 = vmatmul.mubr.bf16.gmra.mrb[0].mxu0 %v556
    %v826 = vpop.f32.mrb[0].mxu0
    %v827 = vadd.f32 %v181, %v826
    %v828 = vpop.f32.mrb[0].mxu0
    %v829 = vpop.f32.mrb[0].mxu0
    %v830 = vadd.f32 %v181, %v829
    %v831 = vpop.f32.mrb[0].mxu0
    %832 = vmatprep.mubr.bf16.mxu0 0
    %833 = vmatmul.mubr.bf16.gmra.mrb[0].mxu0 %v559
    %v834 = vpop.f32.mrb[0].mxu0
    %v835 = vadd.f32 %v181, %v834
    %v836 = vpop.f32.mrb[0].mxu0
    %v837 = vpop.f32.mrb[0].mxu0
    %v838 = vadd.f32 %v181, %v837
    %v839 = vpop.f32.mrb[0].mxu0
    %840 = vmatprep.mubr.bf16.mxu0 0
    %841 = vmatmul.mubr.bf16.gmra.mrb[0].mxu0 %v562
    %v842 = vpop.f32.mrb[0].mxu0
    %v843 = vadd.f32 %v181, %v842
    %v844 = vpop.f32.mrb[0].mxu0
    %v845 = vpop.f32.mrb[0].mxu0
    %v846 = vadd.f32 %v181, %v845
    %v847 = vpop.f32.mrb[0].mxu0
    %848 = vmatprep.mubr.bf16.mxu0 0
    %849 = vmatmul.mubr.bf16.gmra.mrb[0].mxu0 %v565
    %v850 = vpop.f32.mrb[0].mxu0
    %v851 = vadd.f32 %v181, %v850
    %v852 = vpop.f32.mrb[0].mxu0
    %v853 = vpop.f32.mrb[0].mxu0
    %v854 = vadd.f32 %v181, %v853
    %v855 = vpop.f32.mrb[0].mxu0
    %856 = vmatprep.mubr.bf16.mxu0 0
    %857 = vmatmul.mubr.bf16.gmra.mrb[0].mxu0 %v568
    %v858 = vpop.f32.mrb[0].mxu0
    %v859 = vadd.f32 %v181, %v858
    %v860 = vpop.f32.mrb[0].mxu0
    %v861 = vpop.f32.mrb[0].mxu0
    %v862 = vadd.f32 %v181, %v861
    %v863 = vpop.f32.mrb[0].mxu0
    %864 = vmatprep.mubr.bf16.mxu0 0
    %865 = vmatmul.mubr.bf16.gmra.mrb[0].mxu0 %v571
    %v866 = vpop.f32.mrb[0].mxu0
    %v867 = vadd.f32 %v181, %v866
    %v868 = vpop.f32.mrb[0].mxu0
    %v869 = vpop.f32.mrb[0].mxu0
    %v870 = vadd.f32 %v181, %v869
    %v871 = vpop.f32.mrb[0].mxu0
    %872 = vmatprep.mubr.bf16.mxu0 0
    %873 = vmatmul.mubr.bf16.gmra.mrb[0].mxu0 %v574
    %v874 = vpop.f32.mrb[0].mxu0
    %v875 = vadd.f32 %v181, %v874
    %v876 = vpop.f32.mrb[0].mxu0
    %v877 = vpop.f32.mrb[0].mxu0
    %v878 = vadd.f32 %v181, %v877
    %v879 = vpop.f32.mrb[0].mxu0
    %880 = vmatprep.mubr.bf16.mxu0 0
    %881 = vmatmul.mubr.bf16.gmra.mrb[0].mxu0 %v577
    %v882 = vpop.f32.mrb[0].mxu0
    %v883 = vadd.f32 %v181, %v882
    %v884 = vpop.f32.mrb[0].mxu0
    %v885 = vpop.f32.mrb[0].mxu0
    %v886 = vadd.f32 %v181, %v885
    %v887 = vpop.f32.mrb[0].mxu0
    %888 = vmatprep.mubr.bf16.mxu0 0
    %889 = vmatmul.mubr.bf16.gmra.mrb[0].mxu0 %v580
    %v890 = vpop.f32.mrb[0].mxu0
    %v891 = vadd.f32 %v181, %v890
    %v892 = vpop.f32.mrb[0].mxu0
    %v893 = vpop.f32.mrb[0].mxu0
    %v894 = vadd.f32 %v181, %v893
    %v895 = vpop.f32.mrb[0].mxu0
    %896 = vmatprep.mubr.bf16.mxu0 0
    %897 = vmatmul.mubr.bf16.gmra.mrb[0].mxu0 %v583
    %v898 = vpop.f32.mrb[0].mxu0
    %v899 = vadd.f32 %v181, %v898
    %v900 = vpop.f32.mrb[0].mxu0
    %v901 = vpop.f32.mrb[0].mxu0
    %v902 = vadd.f32 %v181, %v901
    %v903 = vpop.f32.mrb[0].mxu0
    %904 = vmatprep.mubr.bf16.mxu0 0
    %905 = vmatmul.mubr.bf16.gmra.mrb[0].mxu0 %v586
    %v906 = vpop.f32.mrb[0].mxu0
    %v907 = vadd.f32 %v181, %v906
    %v908 = vpop.f32.mrb[0].mxu0
    %v909 = vpop.f32.mrb[0].mxu0
    %v910 = vadd.f32 %v181, %v909
    %v911 = vpop.f32.mrb[0].mxu0
    %912 = vmatprep.mubr.bf16.mxu0 0
    %913 = vmatmul.mubr.bf16.gmra.mrb[0].mxu0 %v589
    %v914 = vpop.f32.mrb[0].mxu0
    %v915 = vadd.f32 %v181, %v914
    %v916 = vpop.f32.mrb[0].mxu0
    %v917 = vpop.f32.mrb[0].mxu0
    %v918 = vadd.f32 %v181, %v917
    %v919 = vpop.f32.mrb[0].mxu0
    %920 = vmatprep.mubr.bf16.mxu0 0
    %921 = vmatmul.mubr.bf16.gmra.mrb[0].mxu0 %v592
    %v922 = vpop.f32.mrb[0].mxu0
    %v923 = vadd.f32 %v181, %v922
    %v924 = vpop.f32.mrb[0].mxu0
    %v925 = vpop.f32.mrb[0].mxu0
    %v926 = vadd.f32 %v181, %v925
    %v927 = vpop.f32.mrb[0].mxu0
    %928 = vmatprep.mubr.bf16.mxu0 0
    %929 = vmatmul.mubr.bf16.gmra.mrb[0].mxu0 %v595
    %v930 = vpop.f32.mrb[0].mxu0
    %v931 = vadd.f32 %v181, %v930
    %v932 = vpop.f32.mrb[0].mxu0
    %v933 = vpop.f32.mrb[0].mxu0
    %v934 = vadd.f32 %v181, %v933
    %v935 = vpop.f32.mrb[0].mxu0
    %936 = vmatprep.mubr.bf16.mxu0 0
    %937 = vmatmul.mubr.bf16.gmra.mrb[0].mxu0 %v598
    %v938 = vpop.f32.mrb[0].mxu0
    %v939 = vadd.f32 %v181, %v938
    %v940 = vpop.f32.mrb[0].mxu0
    %v941 = vpop.f32.mrb[0].mxu0
    %v942 = vadd.f32 %v181, %v941
    %v943 = vpop.f32.mrb[0].mxu0
    %944 = vmatprep.mubr.bf16.mxu0 0
    %945 = vmatmul.mubr.bf16.gmra.mrb[0].mxu0 %v601
    %v946 = vpop.f32.mrb[0].mxu0
    %v947 = vadd.f32 %v181, %v946
    %v948 = vpop.f32.mrb[0].mxu0
    %v949 = vpop.f32.mrb[0].mxu0
    %v950 = vadd.f32 %v181, %v949
    %v951 = vpop.f32.mrb[0].mxu0
    %952 = vmatprep.mubr.bf16.mxu0 0
    %953 = vmatmul.mubr.bf16.gmra.mrb[0].mxu0 %v604
    %v954 = vpop.f32.mrb[0].mxu0
    %v955 = vadd.f32 %v181, %v954
    %v956 = vpop.f32.mrb[0].mxu0
    %v957 = vpop.f32.mrb[0].mxu0
    %v958 = vadd.f32 %v181, %v957
    %v959 = vpop.f32.mrb[0].mxu0
    %960 = vmatprep.mubr.bf16.mxu0 0
    %961 = vmatmul.mubr.bf16.gmra.mrb[0].mxu0 %v607
    %v962 = vpop.f32.mrb[0].mxu0
    %v963 = vadd.f32 %v181, %v962
    %v964 = vpop.f32.mrb[0].mxu0
    %v965 = vpop.f32.mrb[0].mxu0
    %v966 = vadd.f32 %v181, %v965
    %v967 = vpop.f32.mrb[0].mxu0
    %968 = vmatprep.mubr.bf16.mxu0 0
    %969 = vmatmul.mubr.bf16.gmra.mrb[0].mxu0 %v610
    %v970 = vpop.f32.mrb[0].mxu0
    %v971 = vadd.f32 %v181, %v970
    %v972 = vpop.f32.mrb[0].mxu0
    %v973 = vpop.f32.mrb[0].mxu0
    %v974 = vadd.f32 %v181, %v973
    %v975 = vpop.f32.mrb[0].mxu0
    %976 = vmatprep.mubr.bf16.mxu0 0
    %977 = vmatmul.mubr.bf16.gmra.mrb[0].mxu0 %v613
    %v978 = vpop.f32.mrb[0].mxu0
    %v979 = vadd.f32 %v181, %v978
    %v980 = vpop.f32.mrb[0].mxu0
    %v981 = vpop.f32.mrb[0].mxu0
    %v982 = vadd.f32 %v181, %v981
    %v983 = vpop.f32.mrb[0].mxu0
    %984 = vmatprep.mubr.bf16.mxu0 0
    %985 = vmatmul.mubr.bf16.gmra.mrb[0].mxu0 %v616
    %v986 = vpop.f32.mrb[0].mxu0
    %v987 = vadd.f32 %v181, %v986
    %v988 = vpop.f32.mrb[0].mxu0
    %v989 = vpop.f32.mrb[0].mxu0
    %v990 = vadd.f32 %v181, %v989
    %v991 = vpop.f32.mrb[0].mxu0
    %992 = vmatprep.mubr.bf16.mxu0 0
    %993 = vmatmul.mubr.bf16.gmra.mrb[0].mxu0 %v619
    %v994 = vpop.f32.mrb[0].mxu0
    %v995 = vadd.f32 %v181, %v994
    %v996 = vpop.f32.mrb[0].mxu0
    %v997 = vpop.f32.mrb[0].mxu0
    %v998 = vadd.f32 %v181, %v997
    %v999 = vpop.f32.mrb[0].mxu0
    %1000 = vmatprep.mubr.bf16.mxu0 0
    %1001 = vmatmul.mubr.bf16.gmra.mrb[0].mxu0 %v622
    %v1002 = vpop.f32.mrb[0].mxu0
    %v1003 = vadd.f32 %v181, %v1002
    %v1004 = vpop.f32.mrb[0].mxu0
    %v1005 = vpop.f32.mrb[0].mxu0
    %v1006 = vadd.f32 %v181, %v1005
    %v1007 = vpop.f32.mrb[0].mxu0
    %1008 = vmatprep.mubr.bf16.mxu0 0
    %1009 = vmatmul.mubr.bf16.gmra.mrb[0].mxu0 %v625
    %v1010 = vpop.f32.mrb[0].mxu0
    %v1011 = vadd.f32 %v181, %v1010
    %v1012 = vpop.f32.mrb[0].mxu0
    %v1013 = vpop.f32.mrb[0].mxu0
    %v1014 = vadd.f32 %v181, %v1013
    %v1015 = vpop.f32.mrb[0].mxu0
    %1016 = vmatprep.mubr.bf16.mxu0 0
    %1017 = vmatmul.mubr.bf16.gmra.mrb[0].mxu0 %v628
    %v1018 = vpop.f32.mrb[0].mxu0
    %v1019 = vadd.f32 %v181, %v1018
    %v1020 = vpop.f32.mrb[0].mxu0
    %v1021 = vpop.f32.mrb[0].mxu0
    %v1022 = vadd.f32 %v181, %v1021
    %v1023 = vpop.f32.mrb[0].mxu0
    %1024 = vmatprep.mubr.bf16.mxu0 0
    %1025 = vmatmul.mubr.bf16.gmra.mrb[0].mxu0 %v631
    %v1026 = vpop.f32.mrb[0].mxu0
    %v1027 = vadd.f32 %v181, %v1026
    %v1028 = vpop.f32.mrb[0].mxu0
    %v1029 = vpop.f32.mrb[0].mxu0
    %v1030 = vadd.f32 %v181, %v1029
    %v1031 = vpop.f32.mrb[0].mxu0
    %1032 = vmatprep.mubr.bf16.mxu0 0
    %1033 = vmatmul.mubr.bf16.gmra.mrb[0].mxu0 %v634
    %v1034 = vpop.f32.mrb[0].mxu0
    %v1035 = vadd.f32 %v181, %v1034
    %v1036 = vpop.f32.mrb[0].mxu0
    %v1037 = vpop.f32.mrb[0].mxu0
    %v1038 = vadd.f32 %v181, %v1037
    %v1039 = vpop.f32.mrb[0].mxu0
    %1040 = vmatprep.mubr.bf16.mxu0 0
    %1041 = vmatmul.mubr.bf16.gmra.mrb[0].mxu0 %v637
    %v1042 = vpop.f32.mrb[0].mxu0
    %v1043 = vadd.f32 %v181, %v1042
    %v1044 = vpop.f32.mrb[0].mxu0
    %v1045 = vpop.f32.mrb[0].mxu0
    %v1046 = vadd.f32 %v181, %v1045
    %v1047 = vpop.f32.mrb[0].mxu0
    %1048 = vmatprep.mubr.bf16.mxu0 0
    %1049 = vmatmul.mubr.bf16.gmra.mrb[0].mxu0 %v640
    %v1050 = vpop.f32.mrb[0].mxu0
    %v1051 = vadd.f32 %v181, %v1050
    %v1052 = vpop.f32.mrb[0].mxu0
    %v1053 = vpop.f32.mrb[0].mxu0
    %v1054 = vadd.f32 %v181, %v1053
    %v1055 = vpop.f32.mrb[0].mxu0
    %1056 = vmatprep.mubr.bf16.mxu0 0
    %1057 = vmatmul.mubr.bf16.gmra.mrb[0].mxu0 %v643
    %v1058 = vpop.f32.mrb[0].mxu0
    %v1059 = vadd.f32 %v181, %v1058
    %v1060 = vpop.f32.mrb[0].mxu0
    %v1061 = vpop.f32.mrb[0].mxu0
    %v1062 = vadd.f32 %v181, %v1061
    %v1063 = vpop.f32.mrb[0].mxu0
    %1064 = vmatprep.mubr.bf16.mxu0 0
    %1065 = vmatmul.mubr.bf16.gmra.mrb[0].mxu0 %v646
    %v1066 = vpop.f32.mrb[0].mxu0
    %v1067 = vadd.f32 %v181, %v1066
    %v1068 = vpop.f32.mrb[0].mxu0
    %v1069 = vpop.f32.mrb[0].mxu0
    %v1070 = vadd.f32 %v181, %v1069
    %v1071 = vpop.f32.mrb[0].mxu0
    %1072 = vmatprep.mubr.bf16.mxu0 0
    %1073 = vmatmul.mubr.bf16.gmra.mrb[0].mxu0 %v649
    %v1074 = vpop.f32.mrb[0].mxu0
    %v1075 = vadd.f32 %v181, %v1074
    %v1076 = vpop.f32.mrb[0].mxu0
    %v1077 = vpop.f32.mrb[0].mxu0
    %v1078 = vadd.f32 %v181, %v1077
    %v1079 = vpop.f32.mrb[0].mxu0
    %1080 = vmatprep.mubr.bf16.mxu0 0
    %1081 = vmatmul.mubr.bf16.gmra.mrb[0].mxu0 %v652
    %v1082 = vpop.f32.mrb[0].mxu0
    %v1083 = vadd.f32 %v181, %v1082
    %v1084 = vpop.f32.mrb[0].mxu0
    %v1085 = vpop.f32.mrb[0].mxu0
    %v1086 = vadd.f32 %v181, %v1085
    %v1087 = vpop.f32.mrb[0].mxu0
    %1088 = vmatprep.mubr.bf16.mxu0 0
    %1089 = vmatmul.mubr.bf16.gmra.mrb[0].mxu0 %v655
    %v1090 = vpop.f32.mrb[0].mxu0
    %v1091 = vadd.f32 %v181, %v1090
    %v1092 = vpop.f32.mrb[0].mxu0
    %v1093 = vpop.f32.mrb[0].mxu0
    %v1094 = vadd.f32 %v181, %v1093
    %v1095 = vpop.f32.mrb[0].mxu0
    %1096 = vmatprep.mubr.bf16.mxu0 0
    %1097 = vmatmul.mubr.bf16.gmra.mrb[0].mxu0 %v658
    %v1098 = vpop.f32.mrb[0].mxu0
    %v1099 = vadd.f32 %v181, %v1098
    %v1100 = vpop.f32.mrb[0].mxu0
    %v1101 = vpop.f32.mrb[0].mxu0
    %v1102 = vadd.f32 %v181, %v1101
    %v1103 = vpop.f32.mrb[0].mxu0
    %1104 = vmatprep.mubr.bf16.mxu0 0
    %1105 = vmatmul.mubr.bf16.gmra.mrb[0].mxu0 %v661
    %v1106 = vpop.f32.mrb[0].mxu0
    %v1107 = vadd.f32 %v181, %v1106
    %v1108 = vpop.f32.mrb[0].mxu0
    %v1109 = vpop.f32.mrb[0].mxu0
    %v1110 = vadd.f32 %v181, %v1109
    %v1111 = vpop.f32.mrb[0].mxu0
    %1112 = vmatprep.mubr.bf16.mxu0 0
    %1113 = vmatmul.mubr.bf16.gmra.mrb[0].mxu0 %v664
    %v1114 = vpop.f32.mrb[0].mxu0
    %v1115 = vadd.f32 %v181, %v1114
    %v1116 = vpop.f32.mrb[0].mxu0
    %v1117 = vpop.f32.mrb[0].mxu0
    %v1118 = vadd.f32 %v181, %v1117
    %v1119 = vpop.f32.mrb[0].mxu0
    %1120 = vmatprep.mubr.bf16.mxu0 0
    %1121 = vmatmul.mubr.bf16.gmra.mrb[0].mxu0 %v667
    %v1122 = vpop.f32.mrb[0].mxu0
    %v1123 = vadd.f32 %v181, %v1122
    %v1124 = vpop.f32.mrb[0].mxu0
    %v1125 = vpop.f32.mrb[0].mxu0
    %v1126 = vadd.f32 %v181, %v1125
    %v1127 = vpop.f32.mrb[0].mxu0
    %1128 = vmatprep.mubr.bf16.mxu0 0
    %1129 = vmatmul.mubr.bf16.gmra.mrb[0].mxu0 %v670
    %v1130 = vpop.f32.mrb[0].mxu0
    %v1131 = vadd.f32 %v181, %v1130
    %v1132 = vpop.f32.mrb[0].mxu0
    %v1133 = vpop.f32.mrb[0].mxu0
    %v1134 = vadd.f32 %v181, %v1133
    %v1135 = vpop.f32.mrb[0].mxu0
    %1136 = vmatprep.mubr.bf16.mxu0 0
    %1137 = vmatmul.mubr.bf16.gmra.mrb[0].mxu0 %v673
    %v1138 = vpop.f32.mrb[0].mxu0
    %v1139 = vadd.f32 %v181, %v1138
    %v1140 = vpop.f32.mrb[0].mxu0
    %v1141 = vpop.f32.mrb[0].mxu0
    %v1142 = vadd.f32 %v181, %v1141
    %v1143 = vpop.f32.mrb[0].mxu0
    %1144 = vmatprep.mubr.bf16.mxu0 0
    %1145 = vmatmul.mubr.bf16.gmra.mrb[0].mxu0 %v676
    %v1146 = vpop.f32.mrb[0].mxu0
    %v1147 = vadd.f32 %v181, %v1146
    %v1148 = vpop.f32.mrb[0].mxu0
    %v1149 = vpop.f32.mrb[0].mxu0
    %v1150 = vadd.f32 %v181, %v1149
    %v1151 = vpop.f32.mrb[0].mxu0
    %1152 = vmatprep.mubr.bf16.mxu0 0
    %1153 = vmatmul.mubr.bf16.gmra.mrb[0].mxu0 %v679
    %v1154 = vpop.f32.mrb[0].mxu0
    %v1155 = vadd.f32 %v181, %v1154
    %v1156 = vpop.f32.mrb[0].mxu0
    %v1157 = vpop.f32.mrb[0].mxu0
    %v1158 = vadd.f32 %v181, %v1157
    %v1159 = vpop.f32.mrb[0].mxu0
    %1160 = vmatprep.mubr.bf16.mxu0 0
    %1161 = vmatmul.mubr.bf16.gmra.mrb[0].mxu0 %v682
    %v1162 = vpop.f32.mrb[0].mxu0
    %v1163 = vadd.f32 %v181, %v1162
    %v1164 = vpop.f32.mrb[0].mxu0
    %v1165 = vpop.f32.mrb[0].mxu0
    %v1166 = vadd.f32 %v181, %v1165
    %v1167 = vpop.f32.mrb[0].mxu0
    %1168 = vmatprep.mubr.bf16.mxu0 0
    %1169 = vmatmul.mubr.bf16.gmra.mrb[0].mxu0 %v685
    %v1170 = vpop.f32.mrb[0].mxu0
    %v1171 = vadd.f32 %v181, %v1170
    %v1172 = vpop.f32.mrb[0].mxu0
    %v1173 = vpop.f32.mrb[0].mxu0
    %v1174 = vadd.f32 %v181, %v1173
    %v1175 = vpop.f32.mrb[0].mxu0
    %1176 = vmatprep.mubr.bf16.mxu0 0
    %1177 = vmatmul.mubr.bf16.gmra.mrb[0].mxu0 %v688
    %v1178 = vpop.f32.mrb[0].mxu0
    %v1179 = vadd.f32 %v181, %v1178
    %v1180 = vpop.f32.mrb[0].mxu0
    %v1181 = vpop.f32.mrb[0].mxu0
    %v1182 = vadd.f32 %v181, %v1181
    %v1183 = vpop.f32.mrb[0].mxu0
    %1184 = vmatprep.mubr.bf16.mxu0 0
    %1185 = vmatmul.mubr.bf16.gmra.mrb[0].mxu0 %v691
    %v1186 = vpop.f32.mrb[0].mxu0
    %v1187 = vadd.f32 %v181, %v1186
    %v1188 = vpop.f32.mrb[0].mxu0
    %v1189 = vpop.f32.mrb[0].mxu0
    %v1190 = vadd.f32 %v181, %v1189
    %v1191 = vpop.f32.mrb[0].mxu0
    %1192 = vmatprep.mubr.bf16.mxu0 0
    %1193 = vmatmul.mubr.bf16.gmra.mrb[0].mxu0 %v694
    %v1194 = vpop.f32.mrb[0].mxu0
    %v1195 = vadd.f32 %v181, %v1194
    %v1196 = vpop.f32.mrb[0].mxu0
    %v1197 = vpop.f32.mrb[0].mxu0
    %v1198 = vadd.f32 %v181, %v1197
    %v1199 = vpop.f32.mrb[0].mxu0
    %1200 = vmatprep.mubr.bf16.mxu0 0
    %1201 = vmatmul.mubr.bf16.gmra.mrb[0].mxu0 %v697
    %v1202 = vpop.f32.mrb[0].mxu0
    %v1203 = vadd.f32 %v181, %v1202
    %v1204 = vpop.f32.mrb[0].mxu0
    %v1205 = vpop.f32.mrb[0].mxu0
    %v1206 = vadd.f32 %v181, %v1205
    %v1207 = vpop.f32.mrb[0].mxu0
    %1208 = vmatprep.mubr.bf16.mxu0 0
    %1209 = vmatmul.mubr.bf16.gmra.mrb[0].mxu0 %v700
    %v1210 = vpop.f32.mrb[0].mxu0
    %v1211 = vadd.f32 %v181, %v1210
    %v1212 = vpop.f32.mrb[0].mxu0
    %v1213 = vpop.f32.mrb[0].mxu0
    %v1214 = vadd.f32 %v181, %v1213
    %v1215 = vpop.f32.mrb[0].mxu0
    %1216 = vmatprep.mubr.bf16.mxu0 0
    %1217 = vmatmul.mubr.bf16.gmra.mrb[0].mxu0 %v703
    %v1218 = vpop.f32.mrb[0].mxu0
    %v1219 = vadd.f32 %v181, %v1218
    %v1220 = vpop.f32.mrb[0].mxu0
    %v1221 = vpop.f32.mrb[0].mxu0
    %v1222 = vadd.f32 %v181, %v1221
    %v1223 = vpop.f32.mrb[0].mxu0
    %1224 = vmatprep.mubr.bf16.mxu0 0
    %1225 = vmatmul.mubr.bf16.gmra.mrb[0].mxu0 %v706
    %v1226 = vpop.f32.mrb[0].mxu0
    %v1227 = vadd.f32 %v181, %v1226
    %v1228 = vpop.f32.mrb[0].mxu0
    %v1229 = vpop.f32.mrb[0].mxu0
    %v1230 = vadd.f32 %v181, %v1229
    %v1231 = vpop.f32.mrb[0].mxu0
    %1232 = vmatprep.mubr.bf16.mxu0 0
    %1233 = vmatmul.mubr.bf16.gmra.mrb[0].mxu0 %v709
    %v1234 = vpop.f32.mrb[0].mxu0
    %v1235 = vadd.f32 %v181, %v1234
    %v1236 = vpop.f32.mrb[0].mxu0
    %v1237 = vpop.f32.mrb[0].mxu0
    %v1238 = vadd.f32 %v181, %v1237
    %v1239 = vpop.f32.mrb[0].mxu0
    %1240 = vmatprep.mubr.bf16.mxu0 0
    %1241 = vmatmul.mubr.bf16.gmra.mrb[0].mxu0 %v712
    %v1242 = vpop.f32.mrb[0].mxu0
    %v1243 = vadd.f32 %v181, %v1242
    %v1244 = vpop.f32.mrb[0].mxu0
    %v1245 = vpop.f32.mrb[0].mxu0
    %v1246 = vadd.f32 %v181, %v1245
    %v1247 = vpop.f32.mrb[0].mxu0
    %1248 = vmatprep.mubr.bf16.mxu0 0
    %1249 = vmatmul.mubr.bf16.gmra.mrb[0].mxu0 %v715
    %v1250 = vpop.f32.mrb[0].mxu0
    %v1251 = vadd.f32 %v181, %v1250
    %v1252 = vpop.f32.mrb[0].mxu0
    %v1253 = vpop.f32.mrb[0].mxu0
    %v1254 = vadd.f32 %v181, %v1253
    %v1255 = vpop.f32.mrb[0].mxu0
    %1256 = vmatprep.mubr.bf16.mxu0 0
    %1257 = vmatmul.mubr.bf16.gmra.mrb[0].mxu0 %v718
    %v1258 = vpop.f32.mrb[0].mxu0
    %v1259 = vadd.f32 %v181, %v1258
    %v1260 = vpop.f32.mrb[0].mxu0
    %v1261 = vpop.f32.mrb[0].mxu0
    %v1262 = vadd.f32 %v181, %v1261
    %v1263 = vpop.f32.mrb[0].mxu0
    %1264 = vdwg.mxu0
    %vm1265 = vcmp.gt.f32.partialorder %v755, 0.0
    %vm1266 = vcmp.gt.f32.partialorder %v758, 0.0
    %vm1267 = vcmp.gt.f32.partialorder %v763, 0.0
    %vm1268 = vcmp.gt.f32.partialorder %v766, 0.0
    %vm1269 = vcmp.gt.f32.partialorder %v771, 0.0
    %vm1270 = vcmp.gt.f32.partialorder %v774, 0.0
    %vm1271 = vcmp.gt.f32.partialorder %v779, 0.0
    %vm1272 = vcmp.gt.f32.partialorder %v782, 0.0
    %vm1273 = vcmp.gt.f32.partialorder %v787, 0.0
    %vm1274 = vcmp.gt.f32.partialorder %v790, 0.0
    %vm1275 = vcmp.gt.f32.partialorder %v795, 0.0
    %vm1276 = vcmp.gt.f32.partialorder %v798, 0.0
    %vm1277 = vcmp.gt.f32.partialorder %v803, 0.0
    %vm1278 = vcmp.gt.f32.partialorder %v806, 0.0
    %vm1279 = vcmp.gt.f32.partialorder %v811, 0.0
    %vm1280 = vcmp.gt.f32.partialorder %v814, 0.0
    %vm1281 = vcmp.gt.f32.partialorder %v819, 0.0
    %vm1282 = vcmp.gt.f32.partialorder %v822, 0.0
    %vm1283 = vcmp.gt.f32.partialorder %v827, 0.0
    %vm1284 = vcmp.gt.f32.partialorder %v830, 0.0
    %vm1285 = vcmp.gt.f32.partialorder %v835, 0.0
    %vm1286 = vcmp.gt.f32.partialorder %v838, 0.0
    %vm1287 = vcmp.gt.f32.partialorder %v843, 0.0
    %vm1288 = vcmp.gt.f32.partialorder %v846, 0.0
    %vm1289 = vcmp.gt.f32.partialorder %v851, 0.0
    %vm1290 = vcmp.gt.f32.partialorder %v854, 0.0
    %vm1291 = vcmp.gt.f32.partialorder %v859, 0.0
    %vm1292 = vcmp.gt.f32.partialorder %v862, 0.0
    %vm1293 = vcmp.gt.f32.partialorder %v867, 0.0
    %vm1294 = vcmp.gt.f32.partialorder %v870, 0.0
    %vm1295 = vcmp.gt.f32.partialorder %v875, 0.0
    %vm1296 = vcmp.gt.f32.partialorder %v878, 0.0
    %vm1297 = vcmp.gt.f32.partialorder %v883, 0.0
    %vm1298 = vcmp.gt.f32.partialorder %v886, 0.0
    %vm1299 = vcmp.gt.f32.partialorder %v891, 0.0
    %vm1300 = vcmp.gt.f32.partialorder %v894, 0.0
    %vm1301 = vcmp.gt.f32.partialorder %v899, 0.0
    %vm1302 = vcmp.gt.f32.partialorder %v902, 0.0
    %vm1303 = vcmp.gt.f32.partialorder %v907, 0.0
    %vm1304 = vcmp.gt.f32.partialorder %v910, 0.0
    %vm1305 = vcmp.gt.f32.partialorder %v915, 0.0
    %vm1306 = vcmp.gt.f32.partialorder %v918, 0.0
    %vm1307 = vcmp.gt.f32.partialorder %v923, 0.0
    %vm1308 = vcmp.gt.f32.partialorder %v926, 0.0
    %vm1309 = vcmp.gt.f32.partialorder %v931, 0.0
    %vm1310 = vcmp.gt.f32.partialorder %v934, 0.0
    %vm1311 = vcmp.gt.f32.partialorder %v939, 0.0
    %vm1312 = vcmp.gt.f32.partialorder %v942, 0.0
    %vm1313 = vcmp.gt.f32.partialorder %v947, 0.0
    %vm1314 = vcmp.gt.f32.partialorder %v950, 0.0
    %vm1315 = vcmp.gt.f32.partialorder %v955, 0.0
    %vm1316 = vcmp.gt.f32.partialorder %v958, 0.0
    %vm1317 = vcmp.gt.f32.partialorder %v963, 0.0
    %vm1318 = vcmp.gt.f32.partialorder %v966, 0.0
    %vm1319 = vcmp.gt.f32.partialorder %v971, 0.0
    %vm1320 = vcmp.gt.f32.partialorder %v974, 0.0
    %vm1321 = vcmp.gt.f32.partialorder %v979, 0.0
    %vm1322 = vcmp.gt.f32.partialorder %v982, 0.0
    %vm1323 = vcmp.gt.f32.partialorder %v987, 0.0
    %vm1324 = vcmp.gt.f32.partialorder %v990, 0.0
    %vm1325 = vcmp.gt.f32.partialorder %v995, 0.0
    %vm1326 = vcmp.gt.f32.partialorder %v998, 0.0
    %vm1327 = vcmp.gt.f32.partialorder %v1003, 0.0
    %vm1328 = vcmp.gt.f32.partialorder %v1006, 0.0
    %vm1329 = vcmp.gt.f32.partialorder %v1011, 0.0
    %vm1330 = vcmp.gt.f32.partialorder %v1014, 0.0
    %vm1331 = vcmp.gt.f32.partialorder %v1019, 0.0
    %vm1332 = vcmp.gt.f32.partialorder %v1022, 0.0
    %vm1333 = vcmp.gt.f32.partialorder %v1027, 0.0
    %vm1334 = vcmp.gt.f32.partialorder %v1030, 0.0
    %vm1335 = vcmp.gt.f32.partialorder %v1035, 0.0
    %vm1336 = vcmp.gt.f32.partialorder %v1038, 0.0
    %vm1337 = vcmp.gt.f32.partialorder %v1043, 0.0
    %vm1338 = vcmp.gt.f32.partialorder %v1046, 0.0
    %vm1339 = vcmp.gt.f32.partialorder %v1051, 0.0
    %vm1340 = vcmp.gt.f32.partialorder %v1054, 0.0
    %vm1341 = vcmp.gt.f32.partialorder %v1059, 0.0
    %vm1342 = vcmp.gt.f32.partialorder %v1062, 0.0
    %vm1343 = vcmp.gt.f32.partialorder %v1067, 0.0
    %vm1344 = vcmp.gt.f32.partialorder %v1070, 0.0
    %vm1345 = vcmp.gt.f32.partialorder %v1075, 0.0
    %vm1346 = vcmp.gt.f32.partialorder %v1078, 0.0
    %vm1347 = vcmp.gt.f32.partialorder %v1083, 0.0
    %vm1348 = vcmp.gt.f32.partialorder %v1086, 0.0
    %vm1349 = vcmp.gt.f32.partialorder %v1091, 0.0
    %vm1350 = vcmp.gt.f32.partialorder %v1094, 0.0
    %vm1351 = vcmp.gt.f32.partialorder %v1099, 0.0
    %vm1352 = vcmp.gt.f32.partialorder %v1102, 0.0
    %vm1353 = vcmp.gt.f32.partialorder %v1107, 0.0
    %vm1354 = vcmp.gt.f32.partialorder %v1110, 0.0
    %vm1355 = vcmp.gt.f32.partialorder %v1115, 0.0
    %vm1356 = vcmp.gt.f32.partialorder %v1118, 0.0
    %vm1357 = vcmp.gt.f32.partialorder %v1123, 0.0
    %vm1358 = vcmp.gt.f32.partialorder %v1126, 0.0
    %vm1359 = vcmp.gt.f32.partialorder %v1131, 0.0
    %vm1360 = vcmp.gt.f32.partialorder %v1134, 0.0
    %vm1361 = vcmp.gt.f32.partialorder %v1139, 0.0
    %vm1362 = vcmp.gt.f32.partialorder %v1142, 0.0
    %vm1363 = vcmp.gt.f32.partialorder %v1147, 0.0
    %vm1364 = vcmp.gt.f32.partialorder %v1150, 0.0
    %vm1365 = vcmp.gt.f32.partialorder %v1155, 0.0
    %vm1366 = vcmp.gt.f32.partialorder %v1158, 0.0
    %vm1367 = vcmp.gt.f32.partialorder %v1163, 0.0
    %vm1368 = vcmp.gt.f32.partialorder %v1166, 0.0
    %vm1369 = vcmp.gt.f32.partialorder %v1171, 0.0
    %vm1370 = vcmp.gt.f32.partialorder %v1174, 0.0
    %vm1371 = vcmp.gt.f32.partialorder %v1179, 0.0
    %vm1372 = vcmp.gt.f32.partialorder %v1182, 0.0
    %vm1373 = vcmp.gt.f32.partialorder %v1187, 0.0
    %vm1374 = vcmp.gt.f32.partialorder %v1190, 0.0
    %vm1375 = vcmp.gt.f32.partialorder %v1195, 0.0
    %vm1376 = vcmp.gt.f32.partialorder %v1198, 0.0
    %vm1377 = vcmp.gt.f32.partialorder %v1203, 0.0
    %vm1378 = vcmp.gt.f32.partialorder %v1206, 0.0
    %vm1379 = vcmp.gt.f32.partialorder %v1211, 0.0
    %vm1380 = vcmp.gt.f32.partialorder %v1214, 0.0
    %vm1381 = vcmp.gt.f32.partialorder %v1219, 0.0
    %vm1382 = vcmp.gt.f32.partialorder %v1222, 0.0
    %vm1383 = vcmp.gt.f32.partialorder %v1227, 0.0
    %vm1384 = vcmp.gt.f32.partialorder %v1230, 0.0
    %vm1385 = vcmp.gt.f32.partialorder %v1235, 0.0
    %vm1386 = vcmp.gt.f32.partialorder %v1238, 0.0
    %vm1387 = vcmp.gt.f32.partialorder %v1243, 0.0
    %vm1388 = vcmp.gt.f32.partialorder %v1246, 0.0
    %vm1389 = vcmp.gt.f32.partialorder %v1251, 0.0
    %vm1390 = vcmp.gt.f32.partialorder %v1254, 0.0
    %vm1391 = vcmp.gt.f32.partialorder %v1259, 0.0
    %vm1392 = vcmp.gt.f32.partialorder %v1262, 0.0
    %v1393 = vmin.f32 %v755, 0.0
    %v1394 = vmin.f32 %v758, 0.0
    %v1395 = vmin.f32 %v763, 0.0
    %v1396 = vmin.f32 %v766, 0.0
    %v1397 = vmin.f32 %v771, 0.0
    %v1398 = vmin.f32 %v774, 0.0
    %v1399 = vmin.f32 %v779, 0.0
    %v1400 = vmin.f32 %v782, 0.0
    %v1401 = vmin.f32 %v787, 0.0
    %v1402 = vmin.f32 %v790, 0.0
    %v1403 = vmin.f32 %v795, 0.0
    %v1404 = vmin.f32 %v798, 0.0
    %v1405 = vmin.f32 %v803, 0.0
    %v1406 = vmin.f32 %v806, 0.0
    %v1407 = vmin.f32 %v811, 0.0
    %v1408 = vmin.f32 %v814, 0.0
    %v1409 = vmin.f32 %v819, 0.0
    %v1410 = vmin.f32 %v822, 0.0
    %v1411 = vmin.f32 %v827, 0.0
    %v1412 = vmin.f32 %v830, 0.0
    %v1413 = vmin.f32 %v835, 0.0
    %v1414 = vmin.f32 %v838, 0.0
    %v1415 = vmin.f32 %v843, 0.0
    %v1416 = vmin.f32 %v846, 0.0
    %v1417 = vmin.f32 %v851, 0.0
    %v1418 = vmin.f32 %v854, 0.0
    %v1419 = vmin.f32 %v859, 0.0
    %v1420 = vmin.f32 %v862, 0.0
    %v1421 = vmin.f32 %v867, 0.0
    %v1422 = vmin.f32 %v870, 0.0
    %v1423 = vmin.f32 %v875, 0.0
    %v1424 = vmin.f32 %v878, 0.0
    %v1425 = vmin.f32 %v883, 0.0
    %v1426 = vmin.f32 %v886, 0.0
    %v1427 = vmin.f32 %v891, 0.0
    %v1428 = vmin.f32 %v894, 0.0
    %v1429 = vmin.f32 %v899, 0.0
    %v1430 = vmin.f32 %v902, 0.0
    %v1431 = vmin.f32 %v907, 0.0
    %v1432 = vmin.f32 %v910, 0.0
    %v1433 = vmin.f32 %v915, 0.0
    %v1434 = vmin.f32 %v918, 0.0
    %v1435 = vmin.f32 %v923, 0.0
    %v1436 = vmin.f32 %v926, 0.0
    %v1437 = vmin.f32 %v931, 0.0
    %v1438 = vmin.f32 %v934, 0.0
    %v1439 = vmin.f32 %v939, 0.0
    %v1440 = vmin.f32 %v942, 0.0
    %v1441 = vmin.f32 %v947, 0.0
    %v1442 = vmin.f32 %v950, 0.0
    %v1443 = vmin.f32 %v955, 0.0
    %v1444 = vmin.f32 %v958, 0.0
    %v1445 = vmin.f32 %v963, 0.0
    %v1446 = vmin.f32 %v966, 0.0
    %v1447 = vmin.f32 %v971, 0.0
    %v1448 = vmin.f32 %v974, 0.0
    %v1449 = vmin.f32 %v979, 0.0
    %v1450 = vmin.f32 %v982, 0.0
    %v1451 = vmin.f32 %v987, 0.0
    %v1452 = vmin.f32 %v990, 0.0
    %v1453 = vmin.f32 %v995, 0.0
    %v1454 = vmin.f32 %v998, 0.0
    %v1455 = vmin.f32 %v1003, 0.0
    %v1456 = vmin.f32 %v1006, 0.0
    %v1457 = vmin.f32 %v1011, 0.0
    %v1458 = vmin.f32 %v1014, 0.0
    %v1459 = vmin.f32 %v1019, 0.0
    %v1460 = vmin.f32 %v1022, 0.0
    %v1461 = vmin.f32 %v1027, 0.0
    %v1462 = vmin.f32 %v1030, 0.0
    %v1463 = vmin.f32 %v1035, 0.0
    %v1464 = vmin.f32 %v1038, 0.0
    %v1465 = vmin.f32 %v1043, 0.0
    %v1466 = vmin.f32 %v1046, 0.0
    %v1467 = vmin.f32 %v1051, 0.0
    %v1468 = vmin.f32 %v1054, 0.0
    %v1469 = vmin.f32 %v1059, 0.0
    %v1470 = vmin.f32 %v1062, 0.0
    %v1471 = vmin.f32 %v1067, 0.0
    %v1472 = vmin.f32 %v1070, 0.0
    %v1473 = vmin.f32 %v1075, 0.0
    %v1474 = vmin.f32 %v1078, 0.0
    %v1475 = vmin.f32 %v1083, 0.0
    %v1476 = vmin.f32 %v1086, 0.0
    %v1477 = vmin.f32 %v1091, 0.0
    %v1478 = vmin.f32 %v1094, 0.0
    %v1479 = vmin.f32 %v1099, 0.0
    %v1480 = vmin.f32 %v1102, 0.0
    %v1481 = vmin.f32 %v1107, 0.0
    %v1482 = vmin.f32 %v1110, 0.0
    %v1483 = vmin.f32 %v1115, 0.0
    %v1484 = vmin.f32 %v1118, 0.0
    %v1485 = vmin.f32 %v1123, 0.0
    %v1486 = vmin.f32 %v1126, 0.0
    %v1487 = vmin.f32 %v1131, 0.0
    %v1488 = vmin.f32 %v1134, 0.0
    %v1489 = vmin.f32 %v1139, 0.0
    %v1490 = vmin.f32 %v1142, 0.0
    %v1491 = vmin.f32 %v1147, 0.0
    %v1492 = vmin.f32 %v1150, 0.0
    %v1493 = vmin.f32 %v1155, 0.0
    %v1494 = vmin.f32 %v1158, 0.0
    %v1495 = vmin.f32 %v1163, 0.0
    %v1496 = vmin.f32 %v1166, 0.0
    %v1497 = vmin.f32 %v1171, 0.0
    %v1498 = vmin.f32 %v1174, 0.0
    %v1499 = vmin.f32 %v1179, 0.0
    %v1500 = vmin.f32 %v1182, 0.0
    %v1501 = vmin.f32 %v1187, 0.0
    %v1502 = vmin.f32 %v1190, 0.0
    %v1503 = vmin.f32 %v1195, 0.0
    %v1504 = vmin.f32 %v1198, 0.0
    %v1505 = vmin.f32 %v1203, 0.0
    %v1506 = vmin.f32 %v1206, 0.0
    %v1507 = vmin.f32 %v1211, 0.0
    %v1508 = vmin.f32 %v1214, 0.0
    %v1509 = vmin.f32 %v1219, 0.0
    %v1510 = vmin.f32 %v1222, 0.0
    %v1511 = vmin.f32 %v1227, 0.0
    %v1512 = vmin.f32 %v1230, 0.0
    %v1513 = vmin.f32 %v1235, 0.0
    %v1514 = vmin.f32 %v1238, 0.0
    %v1515 = vmin.f32 %v1243, 0.0
    %v1516 = vmin.f32 %v1246, 0.0
    %v1517 = vmin.f32 %v1251, 0.0
    %v1518 = vmin.f32 %v1254, 0.0
    %v1519 = vmin.f32 %v1259, 0.0
    %v1520 = vmin.f32 %v1262, 0.0
    %v1521 = vmul.f32 %v1393, 1.442695
    %v1522 = vpow.pop %v1521
    %v1523 = vmul.f32 %v1394, 1.442695
    %v1524 = vpow.pop %v1523
    %v1525 = vmul.f32 %v1395, 1.442695
    %v1526 = vpow.pop %v1525
    %v1527 = vmul.f32 %v1396, 1.442695
    %v1528 = vpow.pop %v1527
    %v1529 = vmul.f32 %v1397, 1.442695
    %v1530 = vpow.pop %v1529
    %v1531 = vmul.f32 %v1398, 1.442695
    %v1532 = vpow.pop %v1531
    %v1533 = vmul.f32 %v1399, 1.442695
    %v1534 = vpow.pop %v1533
    %v1535 = vmul.f32 %v1400, 1.442695
    %v1536 = vpow.pop %v1535
    %v1537 = vmul.f32 %v1401, 1.442695
    %v1538 = vpow.pop %v1537
    %v1539 = vmul.f32 %v1402, 1.442695
    %v1540 = vpow.pop %v1539
    %v1541 = vmul.f32 %v1403, 1.442695
    %v1542 = vpow.pop %v1541
    %v1543 = vmul.f32 %v1404, 1.442695
    %v1544 = vpow.pop %v1543
    %v1545 = vmul.f32 %v1405, 1.442695
    %v1546 = vpow.pop %v1545
    %v1547 = vmul.f32 %v1406, 1.442695
    %v1548 = vpow.pop %v1547
    %v1549 = vmul.f32 %v1407, 1.442695
    %v1550 = vpow.pop %v1549
    %v1551 = vmul.f32 %v1408, 1.442695
    %v1552 = vpow.pop %v1551
    %v1553 = vmul.f32 %v1409, 1.442695
    %v1554 = vpow.pop %v1553
    %v1555 = vmul.f32 %v1410, 1.442695
    %v1556 = vpow.pop %v1555
    %v1557 = vmul.f32 %v1411, 1.442695
    %v1558 = vpow.pop %v1557
    %v1559 = vmul.f32 %v1412, 1.442695
    %v1560 = vpow.pop %v1559
    %v1561 = vmul.f32 %v1413, 1.442695
    %v1562 = vpow.pop %v1561
    %v1563 = vmul.f32 %v1414, 1.442695
    %v1564 = vpow.pop %v1563
    %v1565 = vmul.f32 %v1415, 1.442695
    %v1566 = vpow.pop %v1565
    %v1567 = vmul.f32 %v1416, 1.442695
    %v1568 = vpow.pop %v1567
    %v1569 = vmul.f32 %v1417, 1.442695
    %v1570 = vpow.pop %v1569
    %v1571 = vmul.f32 %v1418, 1.442695
    %v1572 = vpow.pop %v1571
    %v1573 = vmul.f32 %v1419, 1.442695
    %v1574 = vpow.pop %v1573
    %v1575 = vmul.f32 %v1420, 1.442695
    %v1576 = vpow.pop %v1575
    %v1577 = vmul.f32 %v1421, 1.442695
    %v1578 = vpow.pop %v1577
    %v1579 = vmul.f32 %v1422, 1.442695
    %v1580 = vpow.pop %v1579
    %v1581 = vmul.f32 %v1423, 1.442695
    %v1582 = vpow.pop %v1581
    %v1583 = vmul.f32 %v1424, 1.442695
    %v1584 = vpow.pop %v1583
    %v1585 = vmul.f32 %v1425, 1.442695
    %v1586 = vpow.pop %v1585
    %v1587 = vmul.f32 %v1426, 1.442695
    %v1588 = vpow.pop %v1587
    %v1589 = vmul.f32 %v1427, 1.442695
    %v1590 = vpow.pop %v1589
    %v1591 = vmul.f32 %v1428, 1.442695
    %v1592 = vpow.pop %v1591
    %v1593 = vmul.f32 %v1429, 1.442695
    %v1594 = vpow.pop %v1593
    %v1595 = vmul.f32 %v1430, 1.442695
    %v1596 = vpow.pop %v1595
    %v1597 = vmul.f32 %v1431, 1.442695
    %v1598 = vpow.pop %v1597
    %v1599 = vmul.f32 %v1432, 1.442695
    %v1600 = vpow.pop %v1599
    %v1601 = vmul.f32 %v1433, 1.442695
    %v1602 = vpow.pop %v1601
    %v1603 = vmul.f32 %v1434, 1.442695
    %v1604 = vpow.pop %v1603
    %v1605 = vmul.f32 %v1435, 1.442695
    %v1606 = vpow.pop %v1605
    %v1607 = vmul.f32 %v1436, 1.442695
    %v1608 = vpow.pop %v1607
    %v1609 = vmul.f32 %v1437, 1.442695
    %v1610 = vpow.pop %v1609
    %v1611 = vmul.f32 %v1438, 1.442695
    %v1612 = vpow.pop %v1611
    %v1613 = vmul.f32 %v1439, 1.442695
    %v1614 = vpow.pop %v1613
    %v1615 = vmul.f32 %v1440, 1.442695
    %v1616 = vpow.pop %v1615
    %v1617 = vmul.f32 %v1441, 1.442695
    %v1618 = vpow.pop %v1617
    %v1619 = vmul.f32 %v1442, 1.442695
    %v1620 = vpow.pop %v1619
    %v1621 = vmul.f32 %v1443, 1.442695
    %v1622 = vpow.pop %v1621
    %v1623 = vmul.f32 %v1444, 1.442695
    %v1624 = vpow.pop %v1623
    %v1625 = vmul.f32 %v1445, 1.442695
    %v1626 = vpow.pop %v1625
    %v1627 = vmul.f32 %v1446, 1.442695
    %v1628 = vpow.pop %v1627
    %v1629 = vmul.f32 %v1447, 1.442695
    %v1630 = vpow.pop %v1629
    %v1631 = vmul.f32 %v1448, 1.442695
    %v1632 = vpow.pop %v1631
    %v1633 = vmul.f32 %v1449, 1.442695
    %v1634 = vpow.pop %v1633
    %v1635 = vmul.f32 %v1450, 1.442695
    %v1636 = vpow.pop %v1635
    %v1637 = vmul.f32 %v1451, 1.442695
    %v1638 = vpow.pop %v1637
    %v1639 = vmul.f32 %v1452, 1.442695
    %v1640 = vpow.pop %v1639
    %v1641 = vmul.f32 %v1453, 1.442695
    %v1642 = vpow.pop %v1641
    %v1643 = vmul.f32 %v1454, 1.442695
    %v1644 = vpow.pop %v1643
    %v1645 = vmul.f32 %v1455, 1.442695
    %v1646 = vpow.pop %v1645
    %v1647 = vmul.f32 %v1456, 1.442695
    %v1648 = vpow.pop %v1647
    %v1649 = vmul.f32 %v1457, 1.442695
    %v1650 = vpow.pop %v1649
    %v1651 = vmul.f32 %v1458, 1.442695
    %v1652 = vpow.pop %v1651
    %v1653 = vmul.f32 %v1459, 1.442695
    %v1654 = vpow.pop %v1653
    %v1655 = vmul.f32 %v1460, 1.442695
    %v1656 = vpow.pop %v1655
    %v1657 = vmul.f32 %v1461, 1.442695
    %v1658 = vpow.pop %v1657
    %v1659 = vmul.f32 %v1462, 1.442695
    %v1660 = vpow.pop %v1659
    %v1661 = vmul.f32 %v1463, 1.442695
    %v1662 = vpow.pop %v1661
    %v1663 = vmul.f32 %v1464, 1.442695
    %v1664 = vpow.pop %v1663
    %v1665 = vmul.f32 %v1465, 1.442695
    %v1666 = vpow.pop %v1665
    %v1667 = vmul.f32 %v1466, 1.442695
    %v1668 = vpow.pop %v1667
    %v1669 = vmul.f32 %v1467, 1.442695
    %v1670 = vpow.pop %v1669
    %v1671 = vmul.f32 %v1468, 1.442695
    %v1672 = vpow.pop %v1671
    %v1673 = vmul.f32 %v1469, 1.442695
    %v1674 = vpow.pop %v1673
    %v1675 = vmul.f32 %v1470, 1.442695
    %v1676 = vpow.pop %v1675
    %v1677 = vmul.f32 %v1471, 1.442695
    %v1678 = vpow.pop %v1677
    %v1679 = vmul.f32 %v1472, 1.442695
    %v1680 = vpow.pop %v1679
    %v1681 = vmul.f32 %v1473, 1.442695
    %v1682 = vpow.pop %v1681
    %v1683 = vmul.f32 %v1474, 1.442695
    %v1684 = vpow.pop %v1683
    %v1685 = vmul.f32 %v1475, 1.442695
    %v1686 = vpow.pop %v1685
    %v1687 = vmul.f32 %v1476, 1.442695
    %v1688 = vpow.pop %v1687
    %v1689 = vmul.f32 %v1477, 1.442695
    %v1690 = vpow.pop %v1689
    %v1691 = vmul.f32 %v1478, 1.442695
    %v1692 = vpow.pop %v1691
    %v1693 = vmul.f32 %v1479, 1.442695
    %v1694 = vpow.pop %v1693
    %v1695 = vmul.f32 %v1480, 1.442695
    %v1696 = vpow.pop %v1695
    %v1697 = vmul.f32 %v1481, 1.442695
    %v1698 = vpow.pop %v1697
    %v1699 = vmul.f32 %v1482, 1.442695
    %v1700 = vpow.pop %v1699
    %v1701 = vmul.f32 %v1483, 1.442695
    %v1702 = vpow.pop %v1701
    %v1703 = vmul.f32 %v1484, 1.442695
    %v1704 = vpow.pop %v1703
    %v1705 = vmul.f32 %v1485, 1.442695
    %v1706 = vpow.pop %v1705
    %v1707 = vmul.f32 %v1486, 1.442695
    %v1708 = vpow.pop %v1707
    %v1709 = vmul.f32 %v1487, 1.442695
    %v1710 = vpow.pop %v1709
    %v1711 = vmul.f32 %v1488, 1.442695
    %v1712 = vpow.pop %v1711
    %v1713 = vmul.f32 %v1489, 1.442695
    %v1714 = vpow.pop %v1713
    %v1715 = vmul.f32 %v1490, 1.442695
    %v1716 = vpow.pop %v1715
    %v1717 = vmul.f32 %v1491, 1.442695
    %v1718 = vpow.pop %v1717
    %v1719 = vmul.f32 %v1492, 1.442695
    %v1720 = vpow.pop %v1719
    %v1721 = vmul.f32 %v1493, 1.442695
    %v1722 = vpow.pop %v1721
    %v1723 = vmul.f32 %v1494, 1.442695
    %v1724 = vpow.pop %v1723
    %v1725 = vmul.f32 %v1495, 1.442695
    %v1726 = vpow.pop %v1725
    %v1727 = vmul.f32 %v1496, 1.442695
    %v1728 = vpow.pop %v1727
    %v1729 = vmul.f32 %v1497, 1.442695
    %v1730 = vpow.pop %v1729
    %v1731 = vmul.f32 %v1498, 1.442695
    %v1732 = vpow.pop %v1731
    %v1733 = vmul.f32 %v1499, 1.442695
    %v1734 = vpow.pop %v1733
    %v1735 = vmul.f32 %v1500, 1.442695
    %v1736 = vpow.pop %v1735
    %v1737 = vmul.f32 %v1501, 1.442695
    %v1738 = vpow.pop %v1737
    %v1739 = vmul.f32 %v1502, 1.442695
    %v1740 = vpow.pop %v1739
    %v1741 = vmul.f32 %v1503, 1.442695
    %v1742 = vpow.pop %v1741
    %v1743 = vmul.f32 %v1504, 1.442695
    %v1744 = vpow.pop %v1743
    %v1745 = vmul.f32 %v1505, 1.442695
    %v1746 = vpow.pop %v1745
    %v1747 = vmul.f32 %v1506, 1.442695
    %v1748 = vpow.pop %v1747
    %v1749 = vmul.f32 %v1507, 1.442695
    %v1750 = vpow.pop %v1749
    %v1751 = vmul.f32 %v1508, 1.442695
    %v1752 = vpow.pop %v1751
    %v1753 = vmul.f32 %v1509, 1.442695
    %v1754 = vpow.pop %v1753
    %v1755 = vmul.f32 %v1510, 1.442695
    %v1756 = vpow.pop %v1755
    %v1757 = vmul.f32 %v1511, 1.442695
    %v1758 = vpow.pop %v1757
    %v1759 = vmul.f32 %v1512, 1.442695
    %v1760 = vpow.pop %v1759
    %v1761 = vmul.f32 %v1513, 1.442695
    %v1762 = vpow.pop %v1761
    %v1763 = vmul.f32 %v1514, 1.442695
    %v1764 = vpow.pop %v1763
    %v1765 = vmul.f32 %v1515, 1.442695
    %v1766 = vpow.pop %v1765
    %v1767 = vmul.f32 %v1516, 1.442695
    %v1768 = vpow.pop %v1767
    %v1769 = vmul.f32 %v1517, 1.442695
    %v1770 = vpow.pop %v1769
    %v1771 = vmul.f32 %v1518, 1.442695
    %v1772 = vpow.pop %v1771
    %v1773 = vmul.f32 %v1519, 1.442695
    %v1774 = vpow.pop %v1773
    %v1775 = vmul.f32 %v1520, 1.442695
    %v1776 = vpow.pop %v1775
    %v1777 = vsub.f32 %v1522, 1.0
    %v1778 = vsub.f32 %v1524, 1.0
    %v1779 = vsub.f32 %v1526, 1.0
    %v1780 = vsub.f32 %v1528, 1.0
    %v1781 = vsub.f32 %v1530, 1.0
    %v1782 = vsub.f32 %v1532, 1.0
    %v1783 = vsub.f32 %v1534, 1.0
    %v1784 = vsub.f32 %v1536, 1.0
    %v1785 = vsub.f32 %v1538, 1.0
    %v1786 = vsub.f32 %v1540, 1.0
    %v1787 = vsub.f32 %v1542, 1.0
    %v1788 = vsub.f32 %v1544, 1.0
    %v1789 = vsub.f32 %v1546, 1.0
    %v1790 = vsub.f32 %v1548, 1.0
    %v1791 = vsub.f32 %v1550, 1.0
    %v1792 = vsub.f32 %v1552, 1.0
    %v1793 = vsub.f32 %v1554, 1.0
    %v1794 = vsub.f32 %v1556, 1.0
    %v1795 = vsub.f32 %v1558, 1.0
    %v1796 = vsub.f32 %v1560, 1.0
    %v1797 = vsub.f32 %v1562, 1.0
    %v1798 = vsub.f32 %v1564, 1.0
    %v1799 = vsub.f32 %v1566, 1.0
    %v1800 = vsub.f32 %v1568, 1.0
    %v1801 = vsub.f32 %v1570, 1.0
    %v1802 = vsub.f32 %v1572, 1.0
    %v1803 = vsub.f32 %v1574, 1.0
    %v1804 = vsub.f32 %v1576, 1.0
    %v1805 = vsub.f32 %v1578, 1.0
    %v1806 = vsub.f32 %v1580, 1.0
    %v1807 = vsub.f32 %v1582, 1.0
    %v1808 = vsub.f32 %v1584, 1.0
    %v1809 = vsub.f32 %v1586, 1.0
    %v1810 = vsub.f32 %v1588, 1.0
    %v1811 = vsub.f32 %v1590, 1.0
    %v1812 = vsub.f32 %v1592, 1.0
    %v1813 = vsub.f32 %v1594, 1.0
    %v1814 = vsub.f32 %v1596, 1.0
    %v1815 = vsub.f32 %v1598, 1.0
    %v1816 = vsub.f32 %v1600, 1.0
    %v1817 = vsub.f32 %v1602, 1.0
    %v1818 = vsub.f32 %v1604, 1.0
    %v1819 = vsub.f32 %v1606, 1.0
    %v1820 = vsub.f32 %v1608, 1.0
    %v1821 = vsub.f32 %v1610, 1.0
    %v1822 = vsub.f32 %v1612, 1.0
    %v1823 = vsub.f32 %v1614, 1.0
    %v1824 = vsub.f32 %v1616, 1.0
    %v1825 = vsub.f32 %v1618, 1.0
    %v1826 = vsub.f32 %v1620, 1.0
    %v1827 = vsub.f32 %v1622, 1.0
    %v1828 = vsub.f32 %v1624, 1.0
    %v1829 = vsub.f32 %v1626, 1.0
    %v1830 = vsub.f32 %v1628, 1.0
    %v1831 = vsub.f32 %v1630, 1.0
    %v1832 = vsub.f32 %v1632, 1.0
    %v1833 = vsub.f32 %v1634, 1.0
    %v1834 = vsub.f32 %v1636, 1.0
    %v1835 = vsub.f32 %v1638, 1.0
    %v1836 = vsub.f32 %v1640, 1.0
    %v1837 = vsub.f32 %v1642, 1.0
    %v1838 = vsub.f32 %v1644, 1.0
    %v1839 = vsub.f32 %v1646, 1.0
    %v1840 = vsub.f32 %v1648, 1.0
    %v1841 = vsub.f32 %v1650, 1.0
    %v1842 = vsub.f32 %v1652, 1.0
    %v1843 = vsub.f32 %v1654, 1.0
    %v1844 = vsub.f32 %v1656, 1.0
    %v1845 = vsub.f32 %v1658, 1.0
    %v1846 = vsub.f32 %v1660, 1.0
    %v1847 = vsub.f32 %v1662, 1.0
    %v1848 = vsub.f32 %v1664, 1.0
    %v1849 = vsub.f32 %v1666, 1.0
    %v1850 = vsub.f32 %v1668, 1.0
    %v1851 = vsub.f32 %v1670, 1.0
    %v1852 = vsub.f32 %v1672, 1.0
    %v1853 = vsub.f32 %v1674, 1.0
    %v1854 = vsub.f32 %v1676, 1.0
    %v1855 = vsub.f32 %v1678, 1.0
    %v1856 = vsub.f32 %v1680, 1.0
    %v1857 = vsub.f32 %v1682, 1.0
    %v1858 = vsub.f32 %v1684, 1.0
    %v1859 = vsub.f32 %v1686, 1.0
    %v1860 = vsub.f32 %v1688, 1.0
    %v1861 = vsub.f32 %v1690, 1.0
    %v1862 = vsub.f32 %v1692, 1.0
    %v1863 = vsub.f32 %v1694, 1.0
    %v1864 = vsub.f32 %v1696, 1.0
    %v1865 = vsub.f32 %v1698, 1.0
    %v1866 = vsub.f32 %v1700, 1.0
    %v1867 = vsub.f32 %v1702, 1.0
    %v1868 = vsub.f32 %v1704, 1.0
    %v1869 = vsub.f32 %v1706, 1.0
    %v1870 = vsub.f32 %v1708, 1.0
    %v1871 = vsub.f32 %v1710, 1.0
    %v1872 = vsub.f32 %v1712, 1.0
    %v1873 = vsub.f32 %v1714, 1.0
    %v1874 = vsub.f32 %v1716, 1.0
    %v1875 = vsub.f32 %v1718, 1.0
    %v1876 = vsub.f32 %v1720, 1.0
    %v1877 = vsub.f32 %v1722, 1.0
    %v1878 = vsub.f32 %v1724, 1.0
    %v1879 = vsub.f32 %v1726, 1.0
    %v1880 = vsub.f32 %v1728, 1.0
    %v1881 = vsub.f32 %v1730, 1.0
    %v1882 = vsub.f32 %v1732, 1.0
    %v1883 = vsub.f32 %v1734, 1.0
    %v1884 = vsub.f32 %v1736, 1.0
    %v1885 = vsub.f32 %v1738, 1.0
    %v1886 = vsub.f32 %v1740, 1.0
    %v1887 = vsub.f32 %v1742, 1.0
    %v1888 = vsub.f32 %v1744, 1.0
    %v1889 = vsub.f32 %v1746, 1.0
    %v1890 = vsub.f32 %v1748, 1.0
    %v1891 = vsub.f32 %v1750, 1.0
    %v1892 = vsub.f32 %v1752, 1.0
    %v1893 = vsub.f32 %v1754, 1.0
    %v1894 = vsub.f32 %v1756, 1.0
    %v1895 = vsub.f32 %v1758, 1.0
    %v1896 = vsub.f32 %v1760, 1.0
    %v1897 = vsub.f32 %v1762, 1.0
    %v1898 = vsub.f32 %v1764, 1.0
    %v1899 = vsub.f32 %v1766, 1.0
    %v1900 = vsub.f32 %v1768, 1.0
    %v1901 = vsub.f32 %v1770, 1.0
    %v1902 = vsub.f32 %v1772, 1.0
    %v1903 = vsub.f32 %v1774, 1.0
    %v1904 = vsub.f32 %v1776, 1.0
    %v1905 = vsel %vm1265, %v755, %v1777
    %v1906 = vsel %vm1266, %v758, %v1778
    %v1907 = vsel %vm1267, %v763, %v1779
    %v1908 = vsel %vm1268, %v766, %v1780
    %v1909 = vsel %vm1269, %v771, %v1781
    %v1910 = vsel %vm1270, %v774, %v1782
    %v1911 = vsel %vm1271, %v779, %v1783
    %v1912 = vsel %vm1272, %v782, %v1784
    %v1913 = vsel %vm1273, %v787, %v1785
    %v1914 = vsel %vm1274, %v790, %v1786
    %v1915 = vsel %vm1275, %v795, %v1787
    %v1916 = vsel %vm1276, %v798, %v1788
    %v1917 = vsel %vm1277, %v803, %v1789
    %v1918 = vsel %vm1278, %v806, %v1790
    %v1919 = vsel %vm1279, %v811, %v1791
    %v1920 = vsel %vm1280, %v814, %v1792
    %v1921 = vsel %vm1281, %v819, %v1793
    %v1922 = vsel %vm1282, %v822, %v1794
    %v1923 = vsel %vm1283, %v827, %v1795
    %v1924 = vsel %vm1284, %v830, %v1796
    %v1925 = vsel %vm1285, %v835, %v1797
    %v1926 = vsel %vm1286, %v838, %v1798
    %v1927 = vsel %vm1287, %v843, %v1799
    %v1928 = vsel %vm1288, %v846, %v1800
    %v1929 = vsel %vm1289, %v851, %v1801
    %v1930 = vsel %vm1290, %v854, %v1802
    %v1931 = vsel %vm1291, %v859, %v1803
    %v1932 = vsel %vm1292, %v862, %v1804
    %v1933 = vsel %vm1293, %v867, %v1805
    %v1934 = vsel %vm1294, %v870, %v1806
    %v1935 = vsel %vm1295, %v875, %v1807
    %v1936 = vsel %vm1296, %v878, %v1808
    %v1937 = vsel %vm1297, %v883, %v1809
    %v1938 = vsel %vm1298, %v886, %v1810
    %v1939 = vsel %vm1299, %v891, %v1811
    %v1940 = vsel %vm1300, %v894, %v1812
    %v1941 = vsel %vm1301, %v899, %v1813
    %v1942 = vsel %vm1302, %v902, %v1814
    %v1943 = vsel %vm1303, %v907, %v1815
    %v1944 = vsel %vm1304, %v910, %v1816
    %v1945 = vsel %vm1305, %v915, %v1817
    %v1946 = vsel %vm1306, %v918, %v1818
    %v1947 = vsel %vm1307, %v923, %v1819
    %v1948 = vsel %vm1308, %v926, %v1820
    %v1949 = vsel %vm1309, %v931, %v1821
    %v1950 = vsel %vm1310, %v934, %v1822
    %v1951 = vsel %vm1311, %v939, %v1823
    %v1952 = vsel %vm1312, %v942, %v1824
    %v1953 = vsel %vm1313, %v947, %v1825
    %v1954 = vsel %vm1314, %v950, %v1826
    %v1955 = vsel %vm1315, %v955, %v1827
    %v1956 = vsel %vm1316, %v958, %v1828
    %v1957 = vsel %vm1317, %v963, %v1829
    %v1958 = vsel %vm1318, %v966, %v1830
    %v1959 = vsel %vm1319, %v971, %v1831
    %v1960 = vsel %vm1320, %v974, %v1832
    %v1961 = vsel %vm1321, %v979, %v1833
    %v1962 = vsel %vm1322, %v982, %v1834
    %v1963 = vsel %vm1323, %v987, %v1835
    %v1964 = vsel %vm1324, %v990, %v1836
    %v1965 = vsel %vm1325, %v995, %v1837
    %v1966 = vsel %vm1326, %v998, %v1838
    %v1967 = vsel %vm1327, %v1003, %v1839
    %v1968 = vsel %vm1328, %v1006, %v1840
    %v1969 = vsel %vm1329, %v1011, %v1841
    %v1970 = vsel %vm1330, %v1014, %v1842
    %v1971 = vsel %vm1331, %v1019, %v1843
    %v1972 = vsel %vm1332, %v1022, %v1844
    %v1973 = vsel %vm1333, %v1027, %v1845
    %v1974 = vsel %vm1334, %v1030, %v1846
    %v1975 = vsel %vm1335, %v1035, %v1847
    %v1976 = vsel %vm1336, %v1038, %v1848
    %v1977 = vsel %vm1337, %v1043, %v1849
    %v1978 = vsel %vm1338, %v1046, %v1850
    %v1979 = vsel %vm1339, %v1051, %v1851
    %v1980 = vsel %vm1340, %v1054, %v1852
    %v1981 = vsel %vm1341, %v1059, %v1853
    %v1982 = vsel %vm1342, %v1062, %v1854
    %v1983 = vsel %vm1343, %v1067, %v1855
    %v1984 = vsel %vm1344, %v1070, %v1856
    %v1985 = vsel %vm1345, %v1075, %v1857
    %v1986 = vsel %vm1346, %v1078, %v1858
    %v1987 = vsel %vm1347, %v1083, %v1859
    %v1988 = vsel %vm1348, %v1086, %v1860
    %v1989 = vsel %vm1349, %v1091, %v1861
    %v1990 = vsel %vm1350, %v1094, %v1862
    %v1991 = vsel %vm1351, %v1099, %v1863
    %v1992 = vsel %vm1352, %v1102, %v1864
    %v1993 = vsel %vm1353, %v1107, %v1865
    %v1994 = vsel %vm1354, %v1110, %v1866
    %v1995 = vsel %vm1355, %v1115, %v1867
    %v1996 = vsel %vm1356, %v1118, %v1868
    %v1997 = vsel %vm1357, %v1123, %v1869
    %v1998 = vsel %vm1358, %v1126, %v1870
    %v1999 = vsel %vm1359, %v1131, %v1871
    %v2000 = vsel %vm1360, %v1134, %v1872
    %v2001 = vsel %vm1361, %v1139, %v1873
    %v2002 = vsel %vm1362, %v1142, %v1874
    %v2003 = vsel %vm1363, %v1147, %v1875
    %v2004 = vsel %vm1364, %v1150, %v1876
    %v2005 = vsel %vm1365, %v1155, %v1877
    %v2006 = vsel %vm1366, %v1158, %v1878
    %v2007 = vsel %vm1367, %v1163, %v1879
    %v2008 = vsel %vm1368, %v1166, %v1880
    %v2009 = vsel %vm1369, %v1171, %v1881
    %v2010 = vsel %vm1370, %v1174, %v1882
    %v2011 = vsel %vm1371, %v1179, %v1883
    %v2012 = vsel %vm1372, %v1182, %v1884
    %v2013 = vsel %vm1373, %v1187, %v1885
    %v2014 = vsel %vm1374, %v1190, %v1886
    %v2015 = vsel %vm1375, %v1195, %v1887
    %v2016 = vsel %vm1376, %v1198, %v1888
    %v2017 = vsel %vm1377, %v1203, %v1889
    %v2018 = vsel %vm1378, %v1206, %v1890
    %v2019 = vsel %vm1379, %v1211, %v1891
    %v2020 = vsel %vm1380, %v1214, %v1892
    %v2021 = vsel %vm1381, %v1219, %v1893
    %v2022 = vsel %vm1382, %v1222, %v1894
    %v2023 = vsel %vm1383, %v1227, %v1895
    %v2024 = vsel %vm1384, %v1230, %v1896
    %v2025 = vsel %vm1385, %v1235, %v1897
    %v2026 = vsel %vm1386, %v1238, %v1898
    %v2027 = vsel %vm1387, %v1243, %v1899
    %v2028 = vsel %vm1388, %v1246, %v1900
    %v2029 = vsel %vm1389, %v1251, %v1901
    %v2030 = vsel %vm1390, %v1254, %v1902
    %v2031 = vsel %vm1391, %v1259, %v1903
    %v2032 = vsel %vm1392, %v1262, %v1904
    %v2033 = vpack.c.bf16 %v1906, %v1905
    %v2034 = vpack.c.bf16 %v1908, %v1907
    %v2035 = vpack.c.bf16 %v1910, %v1909
    %v2036 = vpack.c.bf16 %v1912, %v1911
    %v2037 = vpack.c.bf16 %v1914, %v1913
    %v2038 = vpack.c.bf16 %v1916, %v1915
    %v2039 = vpack.c.bf16 %v1918, %v1917
    %v2040 = vpack.c.bf16 %v1920, %v1919
    %v2041 = vpack.c.bf16 %v1922, %v1921
    %v2042 = vpack.c.bf16 %v1924, %v1923
    %v2043 = vpack.c.bf16 %v1926, %v1925
    %v2044 = vpack.c.bf16 %v1928, %v1927
    %v2045 = vpack.c.bf16 %v1930, %v1929
    %v2046 = vpack.c.bf16 %v1932, %v1931
    %v2047 = vpack.c.bf16 %v1934, %v1933
    %v2048 = vpack.c.bf16 %v1936, %v1935
    %v2049 = vpack.c.bf16 %v1938, %v1937
    %v2050 = vpack.c.bf16 %v1940, %v1939
    %v2051 = vpack.c.bf16 %v1942, %v1941
    %v2052 = vpack.c.bf16 %v1944, %v1943
    %v2053 = vpack.c.bf16 %v1946, %v1945
    %v2054 = vpack.c.bf16 %v1948, %v1947
    %v2055 = vpack.c.bf16 %v1950, %v1949
    %v2056 = vpack.c.bf16 %v1952, %v1951
    %v2057 = vpack.c.bf16 %v1954, %v1953
    %v2058 = vpack.c.bf16 %v1956, %v1955
    %v2059 = vpack.c.bf16 %v1958, %v1957
    %v2060 = vpack.c.bf16 %v1960, %v1959
    %v2061 = vpack.c.bf16 %v1962, %v1961
    %v2062 = vpack.c.bf16 %v1964, %v1963
    %v2063 = vpack.c.bf16 %v1966, %v1965
    %v2064 = vpack.c.bf16 %v1968, %v1967
    %v2065 = vpack.c.bf16 %v1970, %v1969
    %v2066 = vpack.c.bf16 %v1972, %v1971
    %v2067 = vpack.c.bf16 %v1974, %v1973
    %v2068 = vpack.c.bf16 %v1976, %v1975
    %v2069 = vpack.c.bf16 %v1978, %v1977
    %v2070 = vpack.c.bf16 %v1980, %v1979
    %v2071 = vpack.c.bf16 %v1982, %v1981
    %v2072 = vpack.c.bf16 %v1984, %v1983
    %v2073 = vpack.c.bf16 %v1986, %v1985
    %v2074 = vpack.c.bf16 %v1988, %v1987
    %v2075 = vpack.c.bf16 %v1990, %v1989
    %v2076 = vpack.c.bf16 %v1992, %v1991
    %v2077 = vpack.c.bf16 %v1994, %v1993
    %v2078 = vpack.c.bf16 %v1996, %v1995
    %v2079 = vpack.c.bf16 %v1998, %v1997
    %v2080 = vpack.c.bf16 %v2000, %v1999
    %v2081 = vpack.c.bf16 %v2002, %v2001
    %v2082 = vpack.c.bf16 %v2004, %v2003
    %v2083 = vpack.c.bf16 %v2006, %v2005
    %v2084 = vpack.c.bf16 %v2008, %v2007
    %v2085 = vpack.c.bf16 %v2010, %v2009
    %v2086 = vpack.c.bf16 %v2012, %v2011
    %v2087 = vpack.c.bf16 %v2014, %v2013
    %v2088 = vpack.c.bf16 %v2016, %v2015
    %v2089 = vpack.c.bf16 %v2018, %v2017
    %v2090 = vpack.c.bf16 %v2020, %v2019
    %v2091 = vpack.c.bf16 %v2022, %v2021
    %v2092 = vpack.c.bf16 %v2024, %v2023
    %v2093 = vpack.c.bf16 %v2026, %v2025
    %v2094 = vpack.c.bf16 %v2028, %v2027
    %v2095 = vpack.c.bf16 %v2030, %v2029
    %v2096 = vpack.c.bf16 %v2032, %v2031
    %v2097 = vld [vmem:[%s3] sm:$0xf]
    %v2098 = vld [vmem:[%s3 + $0x4] sm:$0xf]
    %v2099 = vld [vmem:[%s3 + $0x8] sm:$0xf]
    %v2100 = vld [vmem:[%s3 + $0xc] sm:$0xf]
    %v2101 = vld [vmem:[%s3 + $0x10] sm:$0xf]
    %v2102 = vld [vmem:[%s3 + $0x14] sm:$0xf]
    %v2103 = vld [vmem:[%s3 + $0x18] sm:$0xf]
    %v2104 = vld [vmem:[%s3 + $0x1c] sm:$0xf]
    %v2105 = vld [vmem:[%s3 + $0x20] sm:$0xf]
    %v2106 = vld [vmem:[%s3 + $0x24] sm:$0xf]
    %v2107 = vld [vmem:[%s3 + $0x28] sm:$0xf]
    %v2108 = vld [vmem:[%s3 + $0x2c] sm:$0xf]
    %v2109 = vld [vmem:[%s3 + $0x30] sm:$0xf]
    %v2110 = vld [vmem:[%s3 + $0x34] sm:$0xf]
    %v2111 = vld [vmem:[%s3 + $0x38] sm:$0xf]
    %v2112 = vld [vmem:[%s3 + $0x3c] sm:$0xf]
    %v2113 = vld [vmem:[%s4] sm:$0x1]
    %v2115 = vlaneseq
    %v2116 = vshrl.u32 %v2115, 7
    %v2117 = vsub.s32 0, %v2116
    %v2118 = vrot.slane %v2113, %v2117
    %v2136 = vunpack.c.l.b16 %v2097
    %v2137 = vunpack.c.l.b16 %v2098
    %v2138 = vunpack.c.l.b16 %v2099
    %v2139 = vunpack.c.l.b16 %v2100
    %v2140 = vunpack.c.l.b16 %v2101
    %v2141 = vunpack.c.l.b16 %v2102
    %v2142 = vunpack.c.l.b16 %v2103
    %v2143 = vunpack.c.l.b16 %v2104
    %v2144 = vunpack.c.l.b16 %v2105
    %v2145 = vunpack.c.l.b16 %v2106
    %v2146 = vunpack.c.l.b16 %v2107
    %v2147 = vunpack.c.l.b16 %v2108
    %v2148 = vunpack.c.l.b16 %v2109
    %v2149 = vunpack.c.l.b16 %v2110
    %v2150 = vunpack.c.l.b16 %v2111
    %v2151 = vunpack.c.l.b16 %v2112
    %v2152 = vpack.c.b16 %v2137, %v2136
    %v2153 = vpack.c.b16 %v2139, %v2138
    %v2154 = vpack.c.b16 %v2141, %v2140
    %v2155 = vpack.c.b16 %v2143, %v2142
    %v2156 = vpack.c.b16 %v2145, %v2144
    %v2157 = vpack.c.b16 %v2147, %v2146
    %v2158 = vpack.c.b16 %v2149, %v2148
    %v2159 = vpack.c.b16 %v2151, %v2150
    %2168 = vmatprep.subr.bf16.mxu0 0
    %2169 = vmatpush1.bf16.msra.mxu0 %v2152
    %2170 = vmatprep.subr.bf16.mxu0 0
    %2171 = vmatpush1.bf16.msra.mxu0 %v2153
    %2172 = vmatprep.subr.bf16.mxu0 0
    %2173 = vmatpush1.bf16.msra.mxu0 %v2154
    %2174 = vmatprep.subr.bf16.mxu0 0
    %2175 = vmatpush1.bf16.msra.mxu0 %v2155
    %2176 = vmatprep.subr.bf16.mxu0 0
    %2177 = vmatpush1.bf16.msra.mxu0 %v2156
    %2178 = vmatprep.subr.bf16.mxu0 0
    %2179 = vmatpush1.bf16.msra.mxu0 %v2157
    %2180 = vmatprep.subr.bf16.mxu0 0
    %2181 = vmatpush1.bf16.msra.mxu0 %v2158
    %2182 = vmatprep.subr.bf16.mxu0 0
    %2183 = vmatpush1.bf16.msra.mxu0 %v2159
    %2184 = vmatprep.subr.bf16.mxu0 0
    %2185 = vmatpush1.bf16.msra.mxu0 0
    %2186 = vmatprep.subr.bf16.mxu0 0
    %2187 = vmatpush1.bf16.msra.mxu0 0
    %2188 = vmatprep.subr.bf16.mxu0 0
    %2189 = vmatpush1.bf16.msra.mxu0 0
    %2190 = vmatprep.subr.bf16.mxu0 0
    %2191 = vmatpush1.bf16.msra.mxu0 0
    %2192 = vmatprep.subr.bf16.mxu0 0
    %2193 = vmatpush1.bf16.msra.mxu0 0
    %2194 = vmatprep.subr.bf16.mxu0 0
    %2195 = vmatpush1.bf16.msra.mxu0 0
    %2196 = vmatprep.subr.bf16.mxu0 0
    %2197 = vmatpush1.bf16.msra.mxu0 0
    %2198 = vmatprep.subr.bf16.mxu0 0
    %2199 = vmatpush1.bf16.msra.mxu0 0
    %2200 = vmatprep.mubr.bf16.mxu0 0
    %2201 = vmatmul.mubr.bf16.gmra.mrb[0].mxu0 %v2033
    %v2202 = vpop.f32.mrb[0].mxu0
    %v2203 = vadd.f32 %v2118, %v2202
    %v2204 = vpop.f32.mrb[0].mxu0
    %v2205 = vpop.f32.mrb[0].mxu0
    %v2206 = vadd.f32 %v2118, %v2205
    %v2207 = vpop.f32.mrb[0].mxu0
    %2208 = vmatprep.mubr.bf16.mxu0 0
    %2209 = vmatmul.mubr.bf16.gmra.mrb[0].mxu0 %v2034
    %v2210 = vpop.f32.mrb[0].mxu0
    %v2211 = vadd.f32 %v2118, %v2210
    %v2212 = vpop.f32.mrb[0].mxu0
    %v2213 = vpop.f32.mrb[0].mxu0
    %v2214 = vadd.f32 %v2118, %v2213
    %v2215 = vpop.f32.mrb[0].mxu0
    %2216 = vmatprep.mubr.bf16.mxu0 0
    %2217 = vmatmul.mubr.bf16.gmra.mrb[0].mxu0 %v2035
    %v2218 = vpop.f32.mrb[0].mxu0
    %v2219 = vadd.f32 %v2118, %v2218
    %v2220 = vpop.f32.mrb[0].mxu0
    %v2221 = vpop.f32.mrb[0].mxu0
    %v2222 = vadd.f32 %v2118, %v2221
    %v2223 = vpop.f32.mrb[0].mxu0
    %2224 = vmatprep.mubr.bf16.mxu0 0
    %2225 = vmatmul.mubr.bf16.gmra.mrb[0].mxu0 %v2036
    %v2226 = vpop.f32.mrb[0].mxu0
    %v2227 = vadd.f32 %v2118, %v2226
    %v2228 = vpop.f32.mrb[0].mxu0
    %v2229 = vpop.f32.mrb[0].mxu0
    %v2230 = vadd.f32 %v2118, %v2229
    %v2231 = vpop.f32.mrb[0].mxu0
    %2232 = vmatprep.mubr.bf16.mxu0 0
    %2233 = vmatmul.mubr.bf16.gmra.mrb[0].mxu0 %v2037
    %v2234 = vpop.f32.mrb[0].mxu0
    %v2235 = vadd.f32 %v2118, %v2234
    %v2236 = vpop.f32.mrb[0].mxu0
    %v2237 = vpop.f32.mrb[0].mxu0
    %v2238 = vadd.f32 %v2118, %v2237
    %v2239 = vpop.f32.mrb[0].mxu0
    %2240 = vmatprep.mubr.bf16.mxu0 0
    %2241 = vmatmul.mubr.bf16.gmra.mrb[0].mxu0 %v2038
    %v2242 = vpop.f32.mrb[0].mxu0
    %v2243 = vadd.f32 %v2118, %v2242
    %v2244 = vpop.f32.mrb[0].mxu0
    %v2245 = vpop.f32.mrb[0].mxu0
    %v2246 = vadd.f32 %v2118, %v2245
    %v2247 = vpop.f32.mrb[0].mxu0
    %2248 = vmatprep.mubr.bf16.mxu0 0
    %2249 = vmatmul.mubr.bf16.gmra.mrb[0].mxu0 %v2039
    %v2250 = vpop.f32.mrb[0].mxu0
    %v2251 = vadd.f32 %v2118, %v2250
    %v2252 = vpop.f32.mrb[0].mxu0
    %v2253 = vpop.f32.mrb[0].mxu0
    %v2254 = vadd.f32 %v2118, %v2253
    %v2255 = vpop.f32.mrb[0].mxu0
    %2256 = vmatprep.mubr.bf16.mxu0 0
    %2257 = vmatmul.mubr.bf16.gmra.mrb[0].mxu0 %v2040
    %v2258 = vpop.f32.mrb[0].mxu0
    %v2259 = vadd.f32 %v2118, %v2258
    %v2260 = vpop.f32.mrb[0].mxu0
    %v2261 = vpop.f32.mrb[0].mxu0
    %v2262 = vadd.f32 %v2118, %v2261
    %v2263 = vpop.f32.mrb[0].mxu0
    %2264 = vmatprep.mubr.bf16.mxu0 0
    %2265 = vmatmul.mubr.bf16.gmra.mrb[0].mxu0 %v2041
    %v2266 = vpop.f32.mrb[0].mxu0
    %v2267 = vadd.f32 %v2118, %v2266
    %v2268 = vpop.f32.mrb[0].mxu0
    %v2269 = vpop.f32.mrb[0].mxu0
    %v2270 = vadd.f32 %v2118, %v2269
    %v2271 = vpop.f32.mrb[0].mxu0
    %2272 = vmatprep.mubr.bf16.mxu0 0
    %2273 = vmatmul.mubr.bf16.gmra.mrb[0].mxu0 %v2042
    %v2274 = vpop.f32.mrb[0].mxu0
    %v2275 = vadd.f32 %v2118, %v2274
    %v2276 = vpop.f32.mrb[0].mxu0
    %v2277 = vpop.f32.mrb[0].mxu0
    %v2278 = vadd.f32 %v2118, %v2277
    %v2279 = vpop.f32.mrb[0].mxu0
    %2280 = vmatprep.mubr.bf16.mxu0 0
    %2281 = vmatmul.mubr.bf16.gmra.mrb[0].mxu0 %v2043
    %v2282 = vpop.f32.mrb[0].mxu0
    %v2283 = vadd.f32 %v2118, %v2282
    %v2284 = vpop.f32.mrb[0].mxu0
    %v2285 = vpop.f32.mrb[0].mxu0
    %v2286 = vadd.f32 %v2118, %v2285
    %v2287 = vpop.f32.mrb[0].mxu0
    %2288 = vmatprep.mubr.bf16.mxu0 0
    %2289 = vmatmul.mubr.bf16.gmra.mrb[0].mxu0 %v2044
    %v2290 = vpop.f32.mrb[0].mxu0
    %v2291 = vadd.f32 %v2118, %v2290
    %v2292 = vpop.f32.mrb[0].mxu0
    %v2293 = vpop.f32.mrb[0].mxu0
    %v2294 = vadd.f32 %v2118, %v2293
    %v2295 = vpop.f32.mrb[0].mxu0
    %2296 = vmatprep.mubr.bf16.mxu0 0
    %2297 = vmatmul.mubr.bf16.gmra.mrb[0].mxu0 %v2045
    %v2298 = vpop.f32.mrb[0].mxu0
    %v2299 = vadd.f32 %v2118, %v2298
    %v2300 = vpop.f32.mrb[0].mxu0
    %v2301 = vpop.f32.mrb[0].mxu0
    %v2302 = vadd.f32 %v2118, %v2301
    %v2303 = vpop.f32.mrb[0].mxu0
    %2304 = vmatprep.mubr.bf16.mxu0 0
    %2305 = vmatmul.mubr.bf16.gmra.mrb[0].mxu0 %v2046
    %v2306 = vpop.f32.mrb[0].mxu0
    %v2307 = vadd.f32 %v2118, %v2306
    %v2308 = vpop.f32.mrb[0].mxu0
    %v2309 = vpop.f32.mrb[0].mxu0
    %v2310 = vadd.f32 %v2118, %v2309
    %v2311 = vpop.f32.mrb[0].mxu0
    %2312 = vmatprep.mubr.bf16.mxu0 0
    %2313 = vmatmul.mubr.bf16.gmra.mrb[0].mxu0 %v2047
    %v2314 = vpop.f32.mrb[0].mxu0
    %v2315 = vadd.f32 %v2118, %v2314
    %v2316 = vpop.f32.mrb[0].mxu0
    %v2317 = vpop.f32.mrb[0].mxu0
    %v2318 = vadd.f32 %v2118, %v2317
    %v2319 = vpop.f32.mrb[0].mxu0
    %2320 = vmatprep.mubr.bf16.mxu0 0
    %2321 = vmatmul.mubr.bf16.gmra.mrb[0].mxu0 %v2048
    %v2322 = vpop.f32.mrb[0].mxu0
    %v2323 = vadd.f32 %v2118, %v2322
    %v2324 = vpop.f32.mrb[0].mxu0
    %v2325 = vpop.f32.mrb[0].mxu0
    %v2326 = vadd.f32 %v2118, %v2325
    %v2327 = vpop.f32.mrb[0].mxu0
    %2328 = vmatprep.mubr.bf16.mxu0 0
    %2329 = vmatmul.mubr.bf16.gmra.mrb[0].mxu0 %v2049
    %v2330 = vpop.f32.mrb[0].mxu0
    %v2331 = vadd.f32 %v2118, %v2330
    %v2332 = vpop.f32.mrb[0].mxu0
    %v2333 = vpop.f32.mrb[0].mxu0
    %v2334 = vadd.f32 %v2118, %v2333
    %v2335 = vpop.f32.mrb[0].mxu0
    %2336 = vmatprep.mubr.bf16.mxu0 0
    %2337 = vmatmul.mubr.bf16.gmra.mrb[0].mxu0 %v2050
    %v2338 = vpop.f32.mrb[0].mxu0
    %v2339 = vadd.f32 %v2118, %v2338
    %v2340 = vpop.f32.mrb[0].mxu0
    %v2341 = vpop.f32.mrb[0].mxu0
    %v2342 = vadd.f32 %v2118, %v2341
    %v2343 = vpop.f32.mrb[0].mxu0
    %2344 = vmatprep.mubr.bf16.mxu0 0
    %2345 = vmatmul.mubr.bf16.gmra.mrb[0].mxu0 %v2051
    %v2346 = vpop.f32.mrb[0].mxu0
    %v2347 = vadd.f32 %v2118, %v2346
    %v2348 = vpop.f32.mrb[0].mxu0
    %v2349 = vpop.f32.mrb[0].mxu0
    %v2350 = vadd.f32 %v2118, %v2349
    %v2351 = vpop.f32.mrb[0].mxu0
    %2352 = vmatprep.mubr.bf16.mxu0 0
    %2353 = vmatmul.mubr.bf16.gmra.mrb[0].mxu0 %v2052
    %v2354 = vpop.f32.mrb[0].mxu0
    %v2355 = vadd.f32 %v2118, %v2354
    %v2356 = vpop.f32.mrb[0].mxu0
    %v2357 = vpop.f32.mrb[0].mxu0
    %v2358 = vadd.f32 %v2118, %v2357
    %v2359 = vpop.f32.mrb[0].mxu0
    %2360 = vmatprep.mubr.bf16.mxu0 0
    %2361 = vmatmul.mubr.bf16.gmra.mrb[0].mxu0 %v2053
    %v2362 = vpop.f32.mrb[0].mxu0
    %v2363 = vadd.f32 %v2118, %v2362
    %v2364 = vpop.f32.mrb[0].mxu0
    %v2365 = vpop.f32.mrb[0].mxu0
    %v2366 = vadd.f32 %v2118, %v2365
    %v2367 = vpop.f32.mrb[0].mxu0
    %2368 = vmatprep.mubr.bf16.mxu0 0
    %2369 = vmatmul.mubr.bf16.gmra.mrb[0].mxu0 %v2054
    %v2370 = vpop.f32.mrb[0].mxu0
    %v2371 = vadd.f32 %v2118, %v2370
    %v2372 = vpop.f32.mrb[0].mxu0
    %v2373 = vpop.f32.mrb[0].mxu0
    %v2374 = vadd.f32 %v2118, %v2373
    %v2375 = vpop.f32.mrb[0].mxu0
    %2376 = vmatprep.mubr.bf16.mxu0 0
    %2377 = vmatmul.mubr.bf16.gmra.mrb[0].mxu0 %v2055
    %v2378 = vpop.f32.mrb[0].mxu0
    %v2379 = vadd.f32 %v2118, %v2378
    %v2380 = vpop.f32.mrb[0].mxu0
    %v2381 = vpop.f32.mrb[0].mxu0
    %v2382 = vadd.f32 %v2118, %v2381
    %v2383 = vpop.f32.mrb[0].mxu0
    %2384 = vmatprep.mubr.bf16.mxu0 0
    %2385 = vmatmul.mubr.bf16.gmra.mrb[0].mxu0 %v2056
    %v2386 = vpop.f32.mrb[0].mxu0
    %v2387 = vadd.f32 %v2118, %v2386
    %v2388 = vpop.f32.mrb[0].mxu0
    %v2389 = vpop.f32.mrb[0].mxu0
    %v2390 = vadd.f32 %v2118, %v2389
    %v2391 = vpop.f32.mrb[0].mxu0
    %2392 = vmatprep.mubr.bf16.mxu0 0
    %2393 = vmatmul.mubr.bf16.gmra.mrb[0].mxu0 %v2057
    %v2394 = vpop.f32.mrb[0].mxu0
    %v2395 = vadd.f32 %v2118, %v2394
    %v2396 = vpop.f32.mrb[0].mxu0
    %v2397 = vpop.f32.mrb[0].mxu0
    %v2398 = vadd.f32 %v2118, %v2397
    %v2399 = vpop.f32.mrb[0].mxu0
    %2400 = vmatprep.mubr.bf16.mxu0 0
    %2401 = vmatmul.mubr.bf16.gmra.mrb[0].mxu0 %v2058
    %v2402 = vpop.f32.mrb[0].mxu0
    %v2403 = vadd.f32 %v2118, %v2402
    %v2404 = vpop.f32.mrb[0].mxu0
    %v2405 = vpop.f32.mrb[0].mxu0
    %v2406 = vadd.f32 %v2118, %v2405
    %v2407 = vpop.f32.mrb[0].mxu0
    %2408 = vmatprep.mubr.bf16.mxu0 0
    %2409 = vmatmul.mubr.bf16.gmra.mrb[0].mxu0 %v2059
    %v2410 = vpop.f32.mrb[0].mxu0
    %v2411 = vadd.f32 %v2118, %v2410
    %v2412 = vpop.f32.mrb[0].mxu0
    %v2413 = vpop.f32.mrb[0].mxu0
    %v2414 = vadd.f32 %v2118, %v2413
    %v2415 = vpop.f32.mrb[0].mxu0
    %2416 = vmatprep.mubr.bf16.mxu0 0
    %2417 = vmatmul.mubr.bf16.gmra.mrb[0].mxu0 %v2060
    %v2418 = vpop.f32.mrb[0].mxu0
    %v2419 = vadd.f32 %v2118, %v2418
    %v2420 = vpop.f32.mrb[0].mxu0
    %v2421 = vpop.f32.mrb[0].mxu0
    %v2422 = vadd.f32 %v2118, %v2421
    %v2423 = vpop.f32.mrb[0].mxu0
    %2424 = vmatprep.mubr.bf16.mxu0 0
    %2425 = vmatmul.mubr.bf16.gmra.mrb[0].mxu0 %v2061
    %v2426 = vpop.f32.mrb[0].mxu0
    %v2427 = vadd.f32 %v2118, %v2426
    %v2428 = vpop.f32.mrb[0].mxu0
    %v2429 = vpop.f32.mrb[0].mxu0
    %v2430 = vadd.f32 %v2118, %v2429
    %v2431 = vpop.f32.mrb[0].mxu0
    %2432 = vmatprep.mubr.bf16.mxu0 0
    %2433 = vmatmul.mubr.bf16.gmra.mrb[0].mxu0 %v2062
    %v2434 = vpop.f32.mrb[0].mxu0
    %v2435 = vadd.f32 %v2118, %v2434
    %v2436 = vpop.f32.mrb[0].mxu0
    %v2437 = vpop.f32.mrb[0].mxu0
    %v2438 = vadd.f32 %v2118, %v2437
    %v2439 = vpop.f32.mrb[0].mxu0
    %2440 = vmatprep.mubr.bf16.mxu0 0
    %2441 = vmatmul.mubr.bf16.gmra.mrb[0].mxu0 %v2063
    %v2442 = vpop.f32.mrb[0].mxu0
    %v2443 = vadd.f32 %v2118, %v2442
    %v2444 = vpop.f32.mrb[0].mxu0
    %v2445 = vpop.f32.mrb[0].mxu0
    %v2446 = vadd.f32 %v2118, %v2445
    %v2447 = vpop.f32.mrb[0].mxu0
    %2448 = vmatprep.mubr.bf16.mxu0 0
    %2449 = vmatmul.mubr.bf16.gmra.mrb[0].mxu0 %v2064
    %v2450 = vpop.f32.mrb[0].mxu0
    %v2451 = vadd.f32 %v2118, %v2450
    %v2452 = vpop.f32.mrb[0].mxu0
    %v2453 = vpop.f32.mrb[0].mxu0
    %v2454 = vadd.f32 %v2118, %v2453
    %v2455 = vpop.f32.mrb[0].mxu0
    %2456 = vmatprep.mubr.bf16.mxu0 0
    %2457 = vmatmul.mubr.bf16.gmra.mrb[0].mxu0 %v2065
    %v2458 = vpop.f32.mrb[0].mxu0
    %v2459 = vadd.f32 %v2118, %v2458
    %v2460 = vpop.f32.mrb[0].mxu0
    %v2461 = vpop.f32.mrb[0].mxu0
    %v2462 = vadd.f32 %v2118, %v2461
    %v2463 = vpop.f32.mrb[0].mxu0
    %2464 = vmatprep.mubr.bf16.mxu0 0
    %2465 = vmatmul.mubr.bf16.gmra.mrb[0].mxu0 %v2066
    %v2466 = vpop.f32.mrb[0].mxu0
    %v2467 = vadd.f32 %v2118, %v2466
    %v2468 = vpop.f32.mrb[0].mxu0
    %v2469 = vpop.f32.mrb[0].mxu0
    %v2470 = vadd.f32 %v2118, %v2469
    %v2471 = vpop.f32.mrb[0].mxu0
    %2472 = vmatprep.mubr.bf16.mxu0 0
    %2473 = vmatmul.mubr.bf16.gmra.mrb[0].mxu0 %v2067
    %v2474 = vpop.f32.mrb[0].mxu0
    %v2475 = vadd.f32 %v2118, %v2474
    %v2476 = vpop.f32.mrb[0].mxu0
    %v2477 = vpop.f32.mrb[0].mxu0
    %v2478 = vadd.f32 %v2118, %v2477
    %v2479 = vpop.f32.mrb[0].mxu0
    %2480 = vmatprep.mubr.bf16.mxu0 0
    %2481 = vmatmul.mubr.bf16.gmra.mrb[0].mxu0 %v2068
    %v2482 = vpop.f32.mrb[0].mxu0
    %v2483 = vadd.f32 %v2118, %v2482
    %v2484 = vpop.f32.mrb[0].mxu0
    %v2485 = vpop.f32.mrb[0].mxu0
    %v2486 = vadd.f32 %v2118, %v2485
    %v2487 = vpop.f32.mrb[0].mxu0
    %2488 = vmatprep.mubr.bf16.mxu0 0
    %2489 = vmatmul.mubr.bf16.gmra.mrb[0].mxu0 %v2069
    %v2490 = vpop.f32.mrb[0].mxu0
    %v2491 = vadd.f32 %v2118, %v2490
    %v2492 = vpop.f32.mrb[0].mxu0
    %v2493 = vpop.f32.mrb[0].mxu0
    %v2494 = vadd.f32 %v2118, %v2493
    %v2495 = vpop.f32.mrb[0].mxu0
    %2496 = vmatprep.mubr.bf16.mxu0 0
    %2497 = vmatmul.mubr.bf16.gmra.mrb[0].mxu0 %v2070
    %v2498 = vpop.f32.mrb[0].mxu0
    %v2499 = vadd.f32 %v2118, %v2498
    %v2500 = vpop.f32.mrb[0].mxu0
    %v2501 = vpop.f32.mrb[0].mxu0
    %v2502 = vadd.f32 %v2118, %v2501
    %v2503 = vpop.f32.mrb[0].mxu0
    %2504 = vmatprep.mubr.bf16.mxu0 0
    %2505 = vmatmul.mubr.bf16.gmra.mrb[0].mxu0 %v2071
    %v2506 = vpop.f32.mrb[0].mxu0
    %v2507 = vadd.f32 %v2118, %v2506
    %v2508 = vpop.f32.mrb[0].mxu0
    %v2509 = vpop.f32.mrb[0].mxu0
    %v2510 = vadd.f32 %v2118, %v2509
    %v2511 = vpop.f32.mrb[0].mxu0
    %2512 = vmatprep.mubr.bf16.mxu0 0
    %2513 = vmatmul.mubr.bf16.gmra.mrb[0].mxu0 %v2072
    %v2514 = vpop.f32.mrb[0].mxu0
    %v2515 = vadd.f32 %v2118, %v2514
    %v2516 = vpop.f32.mrb[0].mxu0
    %v2517 = vpop.f32.mrb[0].mxu0
    %v2518 = vadd.f32 %v2118, %v2517
    %v2519 = vpop.f32.mrb[0].mxu0
    %2520 = vmatprep.mubr.bf16.mxu0 0
    %2521 = vmatmul.mubr.bf16.gmra.mrb[0].mxu0 %v2073
    %v2522 = vpop.f32.mrb[0].mxu0
    %v2523 = vadd.f32 %v2118, %v2522
    %v2524 = vpop.f32.mrb[0].mxu0
    %v2525 = vpop.f32.mrb[0].mxu0
    %v2526 = vadd.f32 %v2118, %v2525
    %v2527 = vpop.f32.mrb[0].mxu0
    %2528 = vmatprep.mubr.bf16.mxu0 0
    %2529 = vmatmul.mubr.bf16.gmra.mrb[0].mxu0 %v2074
    %v2530 = vpop.f32.mrb[0].mxu0
    %v2531 = vadd.f32 %v2118, %v2530
    %v2532 = vpop.f32.mrb[0].mxu0
    %v2533 = vpop.f32.mrb[0].mxu0
    %v2534 = vadd.f32 %v2118, %v2533
    %v2535 = vpop.f32.mrb[0].mxu0
    %2536 = vmatprep.mubr.bf16.mxu0 0
    %2537 = vmatmul.mubr.bf16.gmra.mrb[0].mxu0 %v2075
    %v2538 = vpop.f32.mrb[0].mxu0
    %v2539 = vadd.f32 %v2118, %v2538
    %v2540 = vpop.f32.mrb[0].mxu0
    %v2541 = vpop.f32.mrb[0].mxu0
    %v2542 = vadd.f32 %v2118, %v2541
    %v2543 = vpop.f32.mrb[0].mxu0
    %2544 = vmatprep.mubr.bf16.mxu0 0
    %2545 = vmatmul.mubr.bf16.gmra.mrb[0].mxu0 %v2076
    %v2546 = vpop.f32.mrb[0].mxu0
    %v2547 = vadd.f32 %v2118, %v2546
    %v2548 = vpop.f32.mrb[0].mxu0
    %v2549 = vpop.f32.mrb[0].mxu0
    %v2550 = vadd.f32 %v2118, %v2549
    %v2551 = vpop.f32.mrb[0].mxu0
    %2552 = vmatprep.mubr.bf16.mxu0 0
    %2553 = vmatmul.mubr.bf16.gmra.mrb[0].mxu0 %v2077
    %v2554 = vpop.f32.mrb[0].mxu0
    %v2555 = vadd.f32 %v2118, %v2554
    %v2556 = vpop.f32.mrb[0].mxu0
    %v2557 = vpop.f32.mrb[0].mxu0
    %v2558 = vadd.f32 %v2118, %v2557
    %v2559 = vpop.f32.mrb[0].mxu0
    %2560 = vmatprep.mubr.bf16.mxu0 0
    %2561 = vmatmul.mubr.bf16.gmra.mrb[0].mxu0 %v2078
    %v2562 = vpop.f32.mrb[0].mxu0
    %v2563 = vadd.f32 %v2118, %v2562
    %v2564 = vpop.f32.mrb[0].mxu0
    %v2565 = vpop.f32.mrb[0].mxu0
    %v2566 = vadd.f32 %v2118, %v2565
    %v2567 = vpop.f32.mrb[0].mxu0
    %2568 = vmatprep.mubr.bf16.mxu0 0
    %2569 = vmatmul.mubr.bf16.gmra.mrb[0].mxu0 %v2079
    %v2570 = vpop.f32.mrb[0].mxu0
    %v2571 = vadd.f32 %v2118, %v2570
    %v2572 = vpop.f32.mrb[0].mxu0
    %v2573 = vpop.f32.mrb[0].mxu0
    %v2574 = vadd.f32 %v2118, %v2573
    %v2575 = vpop.f32.mrb[0].mxu0
    %2576 = vmatprep.mubr.bf16.mxu0 0
    %2577 = vmatmul.mubr.bf16.gmra.mrb[0].mxu0 %v2080
    %v2578 = vpop.f32.mrb[0].mxu0
    %v2579 = vadd.f32 %v2118, %v2578
    %v2580 = vpop.f32.mrb[0].mxu0
    %v2581 = vpop.f32.mrb[0].mxu0
    %v2582 = vadd.f32 %v2118, %v2581
    %v2583 = vpop.f32.mrb[0].mxu0
    %2584 = vmatprep.mubr.bf16.mxu0 0
    %2585 = vmatmul.mubr.bf16.gmra.mrb[0].mxu0 %v2081
    %v2586 = vpop.f32.mrb[0].mxu0
    %v2587 = vadd.f32 %v2118, %v2586
    %v2588 = vpop.f32.mrb[0].mxu0
    %v2589 = vpop.f32.mrb[0].mxu0
    %v2590 = vadd.f32 %v2118, %v2589
    %v2591 = vpop.f32.mrb[0].mxu0
    %2592 = vmatprep.mubr.bf16.mxu0 0
    %2593 = vmatmul.mubr.bf16.gmra.mrb[0].mxu0 %v2082
    %v2594 = vpop.f32.mrb[0].mxu0
    %v2595 = vadd.f32 %v2118, %v2594
    %v2596 = vpop.f32.mrb[0].mxu0
    %v2597 = vpop.f32.mrb[0].mxu0
    %v2598 = vadd.f32 %v2118, %v2597
    %v2599 = vpop.f32.mrb[0].mxu0
    %2600 = vmatprep.mubr.bf16.mxu0 0
    %2601 = vmatmul.mubr.bf16.gmra.mrb[0].mxu0 %v2083
    %v2602 = vpop.f32.mrb[0].mxu0
    %v2603 = vadd.f32 %v2118, %v2602
    %v2604 = vpop.f32.mrb[0].mxu0
    %v2605 = vpop.f32.mrb[0].mxu0
    %v2606 = vadd.f32 %v2118, %v2605
    %v2607 = vpop.f32.mrb[0].mxu0
    %2608 = vmatprep.mubr.bf16.mxu0 0
    %2609 = vmatmul.mubr.bf16.gmra.mrb[0].mxu0 %v2084
    %v2610 = vpop.f32.mrb[0].mxu0
    %v2611 = vadd.f32 %v2118, %v2610
    %v2612 = vpop.f32.mrb[0].mxu0
    %v2613 = vpop.f32.mrb[0].mxu0
    %v2614 = vadd.f32 %v2118, %v2613
    %v2615 = vpop.f32.mrb[0].mxu0
    %2616 = vmatprep.mubr.bf16.mxu0 0
    %2617 = vmatmul.mubr.bf16.gmra.mrb[0].mxu0 %v2085
    %v2618 = vpop.f32.mrb[0].mxu0
    %v2619 = vadd.f32 %v2118, %v2618
    %v2620 = vpop.f32.mrb[0].mxu0
    %v2621 = vpop.f32.mrb[0].mxu0
    %v2622 = vadd.f32 %v2118, %v2621
    %v2623 = vpop.f32.mrb[0].mxu0
    %2624 = vmatprep.mubr.bf16.mxu0 0
    %2625 = vmatmul.mubr.bf16.gmra.mrb[0].mxu0 %v2086
    %v2626 = vpop.f32.mrb[0].mxu0
    %v2627 = vadd.f32 %v2118, %v2626
    %v2628 = vpop.f32.mrb[0].mxu0
    %v2629 = vpop.f32.mrb[0].mxu0
    %v2630 = vadd.f32 %v2118, %v2629
    %v2631 = vpop.f32.mrb[0].mxu0
    %2632 = vmatprep.mubr.bf16.mxu0 0
    %2633 = vmatmul.mubr.bf16.gmra.mrb[0].mxu0 %v2087
    %v2634 = vpop.f32.mrb[0].mxu0
    %v2635 = vadd.f32 %v2118, %v2634
    %v2636 = vpop.f32.mrb[0].mxu0
    %v2637 = vpop.f32.mrb[0].mxu0
    %v2638 = vadd.f32 %v2118, %v2637
    %v2639 = vpop.f32.mrb[0].mxu0
    %2640 = vmatprep.mubr.bf16.mxu0 0
    %2641 = vmatmul.mubr.bf16.gmra.mrb[0].mxu0 %v2088
    %v2642 = vpop.f32.mrb[0].mxu0
    %v2643 = vadd.f32 %v2118, %v2642
    %v2644 = vpop.f32.mrb[0].mxu0
    %v2645 = vpop.f32.mrb[0].mxu0
    %v2646 = vadd.f32 %v2118, %v2645
    %v2647 = vpop.f32.mrb[0].mxu0
    %2648 = vmatprep.mubr.bf16.mxu0 0
    %2649 = vmatmul.mubr.bf16.gmra.mrb[0].mxu0 %v2089
    %v2650 = vpop.f32.mrb[0].mxu0
    %v2651 = vadd.f32 %v2118, %v2650
    %v2652 = vpop.f32.mrb[0].mxu0
    %v2653 = vpop.f32.mrb[0].mxu0
    %v2654 = vadd.f32 %v2118, %v2653
    %v2655 = vpop.f32.mrb[0].mxu0
    %2656 = vmatprep.mubr.bf16.mxu0 0
    %2657 = vmatmul.mubr.bf16.gmra.mrb[0].mxu0 %v2090
    %v2658 = vpop.f32.mrb[0].mxu0
    %v2659 = vadd.f32 %v2118, %v2658
    %v2660 = vpop.f32.mrb[0].mxu0
    %v2661 = vpop.f32.mrb[0].mxu0
    %v2662 = vadd.f32 %v2118, %v2661
    %v2663 = vpop.f32.mrb[0].mxu0
    %2664 = vmatprep.mubr.bf16.mxu0 0
    %2665 = vmatmul.mubr.bf16.gmra.mrb[0].mxu0 %v2091
    %v2666 = vpop.f32.mrb[0].mxu0
    %v2667 = vadd.f32 %v2118, %v2666
    %v2668 = vpop.f32.mrb[0].mxu0
    %v2669 = vpop.f32.mrb[0].mxu0
    %v2670 = vadd.f32 %v2118, %v2669
    %v2671 = vpop.f32.mrb[0].mxu0
    %2672 = vmatprep.mubr.bf16.mxu0 0
    %2673 = vmatmul.mubr.bf16.gmra.mrb[0].mxu0 %v2092
    %v2674 = vpop.f32.mrb[0].mxu0
    %v2675 = vadd.f32 %v2118, %v2674
    %v2676 = vpop.f32.mrb[0].mxu0
    %v2677 = vpop.f32.mrb[0].mxu0
    %v2678 = vadd.f32 %v2118, %v2677
    %v2679 = vpop.f32.mrb[0].mxu0
    %2680 = vmatprep.mubr.bf16.mxu0 0
    %2681 = vmatmul.mubr.bf16.gmra.mrb[0].mxu0 %v2093
    %v2682 = vpop.f32.mrb[0].mxu0
    %v2683 = vadd.f32 %v2118, %v2682
    %v2684 = vpop.f32.mrb[0].mxu0
    %v2685 = vpop.f32.mrb[0].mxu0
    %v2686 = vadd.f32 %v2118, %v2685
    %v2687 = vpop.f32.mrb[0].mxu0
    %2688 = vmatprep.mubr.bf16.mxu0 0
    %2689 = vmatmul.mubr.bf16.gmra.mrb[0].mxu0 %v2094
    %v2690 = vpop.f32.mrb[0].mxu0
    %v2691 = vadd.f32 %v2118, %v2690
    %v2692 = vpop.f32.mrb[0].mxu0
    %v2693 = vpop.f32.mrb[0].mxu0
    %v2694 = vadd.f32 %v2118, %v2693
    %v2695 = vpop.f32.mrb[0].mxu0
    %2696 = vmatprep.mubr.bf16.mxu0 0
    %2697 = vmatmul.mubr.bf16.gmra.mrb[0].mxu0 %v2095
    %v2698 = vpop.f32.mrb[0].mxu0
    %v2699 = vadd.f32 %v2118, %v2698
    %v2700 = vpop.f32.mrb[0].mxu0
    %v2701 = vpop.f32.mrb[0].mxu0
    %v2702 = vadd.f32 %v2118, %v2701
    %v2703 = vpop.f32.mrb[0].mxu0
    %2704 = vmatprep.mubr.bf16.mxu0 0
    %2705 = vmatmul.mubr.bf16.gmra.mrb[0].mxu0 %v2096
    %v2706 = vpop.f32.mrb[0].mxu0
    %v2707 = vadd.f32 %v2118, %v2706
    %v2708 = vpop.f32.mrb[0].mxu0
    %v2709 = vpop.f32.mrb[0].mxu0
    %v2710 = vadd.f32 %v2118, %v2709
    %v2711 = vpop.f32.mrb[0].mxu0
    %2712 = vdwg.mxu0
    %vm2713 = vcmp.gt.f32.partialorder %v2203, 0.0
    %vm2714 = vcmp.gt.f32.partialorder %v2206, 0.0
    %vm2715 = vcmp.gt.f32.partialorder %v2211, 0.0
    %vm2716 = vcmp.gt.f32.partialorder %v2214, 0.0
    %vm2717 = vcmp.gt.f32.partialorder %v2219, 0.0
    %vm2718 = vcmp.gt.f32.partialorder %v2222, 0.0
    %vm2719 = vcmp.gt.f32.partialorder %v2227, 0.0
    %vm2720 = vcmp.gt.f32.partialorder %v2230, 0.0
    %vm2721 = vcmp.gt.f32.partialorder %v2235, 0.0
    %vm2722 = vcmp.gt.f32.partialorder %v2238, 0.0
    %vm2723 = vcmp.gt.f32.partialorder %v2243, 0.0
    %vm2724 = vcmp.gt.f32.partialorder %v2246, 0.0
    %vm2725 = vcmp.gt.f32.partialorder %v2251, 0.0
    %vm2726 = vcmp.gt.f32.partialorder %v2254, 0.0
    %vm2727 = vcmp.gt.f32.partialorder %v2259, 0.0
    %vm2728 = vcmp.gt.f32.partialorder %v2262, 0.0
    %vm2729 = vcmp.gt.f32.partialorder %v2267, 0.0
    %vm2730 = vcmp.gt.f32.partialorder %v2270, 0.0
    %vm2731 = vcmp.gt.f32.partialorder %v2275, 0.0
    %vm2732 = vcmp.gt.f32.partialorder %v2278, 0.0
    %vm2733 = vcmp.gt.f32.partialorder %v2283, 0.0
    %vm2734 = vcmp.gt.f32.partialorder %v2286, 0.0
    %vm2735 = vcmp.gt.f32.partialorder %v2291, 0.0
    %vm2736 = vcmp.gt.f32.partialorder %v2294, 0.0
    %vm2737 = vcmp.gt.f32.partialorder %v2299, 0.0
    %vm2738 = vcmp.gt.f32.partialorder %v2302, 0.0
    %vm2739 = vcmp.gt.f32.partialorder %v2307, 0.0
    %vm2740 = vcmp.gt.f32.partialorder %v2310, 0.0
    %vm2741 = vcmp.gt.f32.partialorder %v2315, 0.0
    %vm2742 = vcmp.gt.f32.partialorder %v2318, 0.0
    %vm2743 = vcmp.gt.f32.partialorder %v2323, 0.0
    %vm2744 = vcmp.gt.f32.partialorder %v2326, 0.0
    %vm2745 = vcmp.gt.f32.partialorder %v2331, 0.0
    %vm2746 = vcmp.gt.f32.partialorder %v2334, 0.0
    %vm2747 = vcmp.gt.f32.partialorder %v2339, 0.0
    %vm2748 = vcmp.gt.f32.partialorder %v2342, 0.0
    %vm2749 = vcmp.gt.f32.partialorder %v2347, 0.0
    %vm2750 = vcmp.gt.f32.partialorder %v2350, 0.0
    %vm2751 = vcmp.gt.f32.partialorder %v2355, 0.0
    %vm2752 = vcmp.gt.f32.partialorder %v2358, 0.0
    %vm2753 = vcmp.gt.f32.partialorder %v2363, 0.0
    %vm2754 = vcmp.gt.f32.partialorder %v2366, 0.0
    %vm2755 = vcmp.gt.f32.partialorder %v2371, 0.0
    %vm2756 = vcmp.gt.f32.partialorder %v2374, 0.0
    %vm2757 = vcmp.gt.f32.partialorder %v2379, 0.0
    %vm2758 = vcmp.gt.f32.partialorder %v2382, 0.0
    %vm2759 = vcmp.gt.f32.partialorder %v2387, 0.0
    %vm2760 = vcmp.gt.f32.partialorder %v2390, 0.0
    %vm2761 = vcmp.gt.f32.partialorder %v2395, 0.0
    %vm2762 = vcmp.gt.f32.partialorder %v2398, 0.0
    %vm2763 = vcmp.gt.f32.partialorder %v2403, 0.0
    %vm2764 = vcmp.gt.f32.partialorder %v2406, 0.0
    %vm2765 = vcmp.gt.f32.partialorder %v2411, 0.0
    %vm2766 = vcmp.gt.f32.partialorder %v2414, 0.0
    %vm2767 = vcmp.gt.f32.partialorder %v2419, 0.0
    %vm2768 = vcmp.gt.f32.partialorder %v2422, 0.0
    %vm2769 = vcmp.gt.f32.partialorder %v2427, 0.0
    %vm2770 = vcmp.gt.f32.partialorder %v2430, 0.0
    %vm2771 = vcmp.gt.f32.partialorder %v2435, 0.0
    %vm2772 = vcmp.gt.f32.partialorder %v2438, 0.0
    %vm2773 = vcmp.gt.f32.partialorder %v2443, 0.0
    %vm2774 = vcmp.gt.f32.partialorder %v2446, 0.0
    %vm2775 = vcmp.gt.f32.partialorder %v2451, 0.0
    %vm2776 = vcmp.gt.f32.partialorder %v2454, 0.0
    %vm2777 = vcmp.gt.f32.partialorder %v2459, 0.0
    %vm2778 = vcmp.gt.f32.partialorder %v2462, 0.0
    %vm2779 = vcmp.gt.f32.partialorder %v2467, 0.0
    %vm2780 = vcmp.gt.f32.partialorder %v2470, 0.0
    %vm2781 = vcmp.gt.f32.partialorder %v2475, 0.0
    %vm2782 = vcmp.gt.f32.partialorder %v2478, 0.0
    %vm2783 = vcmp.gt.f32.partialorder %v2483, 0.0
    %vm2784 = vcmp.gt.f32.partialorder %v2486, 0.0
    %vm2785 = vcmp.gt.f32.partialorder %v2491, 0.0
    %vm2786 = vcmp.gt.f32.partialorder %v2494, 0.0
    %vm2787 = vcmp.gt.f32.partialorder %v2499, 0.0
    %vm2788 = vcmp.gt.f32.partialorder %v2502, 0.0
    %vm2789 = vcmp.gt.f32.partialorder %v2507, 0.0
    %vm2790 = vcmp.gt.f32.partialorder %v2510, 0.0
    %vm2791 = vcmp.gt.f32.partialorder %v2515, 0.0
    %vm2792 = vcmp.gt.f32.partialorder %v2518, 0.0
    %vm2793 = vcmp.gt.f32.partialorder %v2523, 0.0
    %vm2794 = vcmp.gt.f32.partialorder %v2526, 0.0
    %vm2795 = vcmp.gt.f32.partialorder %v2531, 0.0
    %vm2796 = vcmp.gt.f32.partialorder %v2534, 0.0
    %vm2797 = vcmp.gt.f32.partialorder %v2539, 0.0
    %vm2798 = vcmp.gt.f32.partialorder %v2542, 0.0
    %vm2799 = vcmp.gt.f32.partialorder %v2547, 0.0
    %vm2800 = vcmp.gt.f32.partialorder %v2550, 0.0
    %vm2801 = vcmp.gt.f32.partialorder %v2555, 0.0
    %vm2802 = vcmp.gt.f32.partialorder %v2558, 0.0
    %vm2803 = vcmp.gt.f32.partialorder %v2563, 0.0
    %vm2804 = vcmp.gt.f32.partialorder %v2566, 0.0
    %vm2805 = vcmp.gt.f32.partialorder %v2571, 0.0
    %vm2806 = vcmp.gt.f32.partialorder %v2574, 0.0
    %vm2807 = vcmp.gt.f32.partialorder %v2579, 0.0
    %vm2808 = vcmp.gt.f32.partialorder %v2582, 0.0
    %vm2809 = vcmp.gt.f32.partialorder %v2587, 0.0
    %vm2810 = vcmp.gt.f32.partialorder %v2590, 0.0
    %vm2811 = vcmp.gt.f32.partialorder %v2595, 0.0
    %vm2812 = vcmp.gt.f32.partialorder %v2598, 0.0
    %vm2813 = vcmp.gt.f32.partialorder %v2603, 0.0
    %vm2814 = vcmp.gt.f32.partialorder %v2606, 0.0
    %vm2815 = vcmp.gt.f32.partialorder %v2611, 0.0
    %vm2816 = vcmp.gt.f32.partialorder %v2614, 0.0
    %vm2817 = vcmp.gt.f32.partialorder %v2619, 0.0
    %vm2818 = vcmp.gt.f32.partialorder %v2622, 0.0
    %vm2819 = vcmp.gt.f32.partialorder %v2627, 0.0
    %vm2820 = vcmp.gt.f32.partialorder %v2630, 0.0
    %vm2821 = vcmp.gt.f32.partialorder %v2635, 0.0
    %vm2822 = vcmp.gt.f32.partialorder %v2638, 0.0
    %vm2823 = vcmp.gt.f32.partialorder %v2643, 0.0
    %vm2824 = vcmp.gt.f32.partialorder %v2646, 0.0
    %vm2825 = vcmp.gt.f32.partialorder %v2651, 0.0
    %vm2826 = vcmp.gt.f32.partialorder %v2654, 0.0
    %vm2827 = vcmp.gt.f32.partialorder %v2659, 0.0
    %vm2828 = vcmp.gt.f32.partialorder %v2662, 0.0
    %vm2829 = vcmp.gt.f32.partialorder %v2667, 0.0
    %vm2830 = vcmp.gt.f32.partialorder %v2670, 0.0
    %vm2831 = vcmp.gt.f32.partialorder %v2675, 0.0
    %vm2832 = vcmp.gt.f32.partialorder %v2678, 0.0
    %vm2833 = vcmp.gt.f32.partialorder %v2683, 0.0
    %vm2834 = vcmp.gt.f32.partialorder %v2686, 0.0
    %vm2835 = vcmp.gt.f32.partialorder %v2691, 0.0
    %vm2836 = vcmp.gt.f32.partialorder %v2694, 0.0
    %vm2837 = vcmp.gt.f32.partialorder %v2699, 0.0
    %vm2838 = vcmp.gt.f32.partialorder %v2702, 0.0
    %vm2839 = vcmp.gt.f32.partialorder %v2707, 0.0
    %vm2840 = vcmp.gt.f32.partialorder %v2710, 0.0
    %v2841 = vmin.f32 %v2203, 0.0
    %v2842 = vmin.f32 %v2206, 0.0
    %v2843 = vmin.f32 %v2211, 0.0
    %v2844 = vmin.f32 %v2214, 0.0
    %v2845 = vmin.f32 %v2219, 0.0
    %v2846 = vmin.f32 %v2222, 0.0
    %v2847 = vmin.f32 %v2227, 0.0
    %v2848 = vmin.f32 %v2230, 0.0
    %v2849 = vmin.f32 %v2235, 0.0
    %v2850 = vmin.f32 %v2238, 0.0
    %v2851 = vmin.f32 %v2243, 0.0
    %v2852 = vmin.f32 %v2246, 0.0
    %v2853 = vmin.f32 %v2251, 0.0
    %v2854 = vmin.f32 %v2254, 0.0
    %v2855 = vmin.f32 %v2259, 0.0
    %v2856 = vmin.f32 %v2262, 0.0
    %v2857 = vmin.f32 %v2267, 0.0
    %v2858 = vmin.f32 %v2270, 0.0
    %v2859 = vmin.f32 %v2275, 0.0
    %v2860 = vmin.f32 %v2278, 0.0
    %v2861 = vmin.f32 %v2283, 0.0
    %v2862 = vmin.f32 %v2286, 0.0
    %v2863 = vmin.f32 %v2291, 0.0
    %v2864 = vmin.f32 %v2294, 0.0
    %v2865 = vmin.f32 %v2299, 0.0
    %v2866 = vmin.f32 %v2302, 0.0
    %v2867 = vmin.f32 %v2307, 0.0
    %v2868 = vmin.f32 %v2310, 0.0
    %v2869 = vmin.f32 %v2315, 0.0
    %v2870 = vmin.f32 %v2318, 0.0
    %v2871 = vmin.f32 %v2323, 0.0
    %v2872 = vmin.f32 %v2326, 0.0
    %v2873 = vmin.f32 %v2331, 0.0
    %v2874 = vmin.f32 %v2334, 0.0
    %v2875 = vmin.f32 %v2339, 0.0
    %v2876 = vmin.f32 %v2342, 0.0
    %v2877 = vmin.f32 %v2347, 0.0
    %v2878 = vmin.f32 %v2350, 0.0
    %v2879 = vmin.f32 %v2355, 0.0
    %v2880 = vmin.f32 %v2358, 0.0
    %v2881 = vmin.f32 %v2363, 0.0
    %v2882 = vmin.f32 %v2366, 0.0
    %v2883 = vmin.f32 %v2371, 0.0
    %v2884 = vmin.f32 %v2374, 0.0
    %v2885 = vmin.f32 %v2379, 0.0
    %v2886 = vmin.f32 %v2382, 0.0
    %v2887 = vmin.f32 %v2387, 0.0
    %v2888 = vmin.f32 %v2390, 0.0
    %v2889 = vmin.f32 %v2395, 0.0
    %v2890 = vmin.f32 %v2398, 0.0
    %v2891 = vmin.f32 %v2403, 0.0
    %v2892 = vmin.f32 %v2406, 0.0
    %v2893 = vmin.f32 %v2411, 0.0
    %v2894 = vmin.f32 %v2414, 0.0
    %v2895 = vmin.f32 %v2419, 0.0
    %v2896 = vmin.f32 %v2422, 0.0
    %v2897 = vmin.f32 %v2427, 0.0
    %v2898 = vmin.f32 %v2430, 0.0
    %v2899 = vmin.f32 %v2435, 0.0
    %v2900 = vmin.f32 %v2438, 0.0
    %v2901 = vmin.f32 %v2443, 0.0
    %v2902 = vmin.f32 %v2446, 0.0
    %v2903 = vmin.f32 %v2451, 0.0
    %v2904 = vmin.f32 %v2454, 0.0
    %v2905 = vmin.f32 %v2459, 0.0
    %v2906 = vmin.f32 %v2462, 0.0
    %v2907 = vmin.f32 %v2467, 0.0
    %v2908 = vmin.f32 %v2470, 0.0
    %v2909 = vmin.f32 %v2475, 0.0
    %v2910 = vmin.f32 %v2478, 0.0
    %v2911 = vmin.f32 %v2483, 0.0
    %v2912 = vmin.f32 %v2486, 0.0
    %v2913 = vmin.f32 %v2491, 0.0
    %v2914 = vmin.f32 %v2494, 0.0
    %v2915 = vmin.f32 %v2499, 0.0
    %v2916 = vmin.f32 %v2502, 0.0
    %v2917 = vmin.f32 %v2507, 0.0
    %v2918 = vmin.f32 %v2510, 0.0
    %v2919 = vmin.f32 %v2515, 0.0
    %v2920 = vmin.f32 %v2518, 0.0
    %v2921 = vmin.f32 %v2523, 0.0
    %v2922 = vmin.f32 %v2526, 0.0
    %v2923 = vmin.f32 %v2531, 0.0
    %v2924 = vmin.f32 %v2534, 0.0
    %v2925 = vmin.f32 %v2539, 0.0
    %v2926 = vmin.f32 %v2542, 0.0
    %v2927 = vmin.f32 %v2547, 0.0
    %v2928 = vmin.f32 %v2550, 0.0
    %v2929 = vmin.f32 %v2555, 0.0
    %v2930 = vmin.f32 %v2558, 0.0
    %v2931 = vmin.f32 %v2563, 0.0
    %v2932 = vmin.f32 %v2566, 0.0
    %v2933 = vmin.f32 %v2571, 0.0
    %v2934 = vmin.f32 %v2574, 0.0
    %v2935 = vmin.f32 %v2579, 0.0
    %v2936 = vmin.f32 %v2582, 0.0
    %v2937 = vmin.f32 %v2587, 0.0
    %v2938 = vmin.f32 %v2590, 0.0
    %v2939 = vmin.f32 %v2595, 0.0
    %v2940 = vmin.f32 %v2598, 0.0
    %v2941 = vmin.f32 %v2603, 0.0
    %v2942 = vmin.f32 %v2606, 0.0
    %v2943 = vmin.f32 %v2611, 0.0
    %v2944 = vmin.f32 %v2614, 0.0
    %v2945 = vmin.f32 %v2619, 0.0
    %v2946 = vmin.f32 %v2622, 0.0
    %v2947 = vmin.f32 %v2627, 0.0
    %v2948 = vmin.f32 %v2630, 0.0
    %v2949 = vmin.f32 %v2635, 0.0
    %v2950 = vmin.f32 %v2638, 0.0
    %v2951 = vmin.f32 %v2643, 0.0
    %v2952 = vmin.f32 %v2646, 0.0
    %v2953 = vmin.f32 %v2651, 0.0
    %v2954 = vmin.f32 %v2654, 0.0
    %v2955 = vmin.f32 %v2659, 0.0
    %v2956 = vmin.f32 %v2662, 0.0
    %v2957 = vmin.f32 %v2667, 0.0
    %v2958 = vmin.f32 %v2670, 0.0
    %v2959 = vmin.f32 %v2675, 0.0
    %v2960 = vmin.f32 %v2678, 0.0
    %v2961 = vmin.f32 %v2683, 0.0
    %v2962 = vmin.f32 %v2686, 0.0
    %v2963 = vmin.f32 %v2691, 0.0
    %v2964 = vmin.f32 %v2694, 0.0
    %v2965 = vmin.f32 %v2699, 0.0
    %v2966 = vmin.f32 %v2702, 0.0
    %v2967 = vmin.f32 %v2707, 0.0
    %v2968 = vmin.f32 %v2710, 0.0
    %v2969 = vmul.f32 %v2841, 1.442695
    %v2970 = vpow.pop %v2969
    %v2971 = vmul.f32 %v2842, 1.442695
    %v2972 = vpow.pop %v2971
    %v2973 = vmul.f32 %v2843, 1.442695
    %v2974 = vpow.pop %v2973
    %v2975 = vmul.f32 %v2844, 1.442695
    %v2976 = vpow.pop %v2975
    %v2977 = vmul.f32 %v2845, 1.442695
    %v2978 = vpow.pop %v2977
    %v2979 = vmul.f32 %v2846, 1.442695
    %v2980 = vpow.pop %v2979
    %v2981 = vmul.f32 %v2847, 1.442695
    %v2982 = vpow.pop %v2981
    %v2983 = vmul.f32 %v2848, 1.442695
    %v2984 = vpow.pop %v2983
    %v2985 = vmul.f32 %v2849, 1.442695
    %v2986 = vpow.pop %v2985
    %v2987 = vmul.f32 %v2850, 1.442695
    %v2988 = vpow.pop %v2987
    %v2989 = vmul.f32 %v2851, 1.442695
    %v2990 = vpow.pop %v2989
    %v2991 = vmul.f32 %v2852, 1.442695
    %v2992 = vpow.pop %v2991
    %v2993 = vmul.f32 %v2853, 1.442695
    %v2994 = vpow.pop %v2993
    %v2995 = vmul.f32 %v2854, 1.442695
    %v2996 = vpow.pop %v2995
    %v2997 = vmul.f32 %v2855, 1.442695
    %v2998 = vpow.pop %v2997
    %v2999 = vmul.f32 %v2856, 1.442695
    %v3000 = vpow.pop %v2999
    %v3001 = vmul.f32 %v2857, 1.442695
    %v3002 = vpow.pop %v3001
    %v3003 = vmul.f32 %v2858, 1.442695
    %v3004 = vpow.pop %v3003
    %v3005 = vmul.f32 %v2859, 1.442695
    %v3006 = vpow.pop %v3005
    %v3007 = vmul.f32 %v2860, 1.442695
    %v3008 = vpow.pop %v3007
    %v3009 = vmul.f32 %v2861, 1.442695
    %v3010 = vpow.pop %v3009
    %v3011 = vmul.f32 %v2862, 1.442695
    %v3012 = vpow.pop %v3011
    %v3013 = vmul.f32 %v2863, 1.442695
    %v3014 = vpow.pop %v3013
    %v3015 = vmul.f32 %v2864, 1.442695
    %v3016 = vpow.pop %v3015
    %v3017 = vmul.f32 %v2865, 1.442695
    %v3018 = vpow.pop %v3017
    %v3019 = vmul.f32 %v2866, 1.442695
    %v3020 = vpow.pop %v3019
    %v3021 = vmul.f32 %v2867, 1.442695
    %v3022 = vpow.pop %v3021
    %v3023 = vmul.f32 %v2868, 1.442695
    %v3024 = vpow.pop %v3023
    %v3025 = vmul.f32 %v2869, 1.442695
    %v3026 = vpow.pop %v3025
    %v3027 = vmul.f32 %v2870, 1.442695
    %v3028 = vpow.pop %v3027
    %v3029 = vmul.f32 %v2871, 1.442695
    %v3030 = vpow.pop %v3029
    %v3031 = vmul.f32 %v2872, 1.442695
    %v3032 = vpow.pop %v3031
    %v3033 = vmul.f32 %v2873, 1.442695
    %v3034 = vpow.pop %v3033
    %v3035 = vmul.f32 %v2874, 1.442695
    %v3036 = vpow.pop %v3035
    %v3037 = vmul.f32 %v2875, 1.442695
    %v3038 = vpow.pop %v3037
    %v3039 = vmul.f32 %v2876, 1.442695
    %v3040 = vpow.pop %v3039
    %v3041 = vmul.f32 %v2877, 1.442695
    %v3042 = vpow.pop %v3041
    %v3043 = vmul.f32 %v2878, 1.442695
    %v3044 = vpow.pop %v3043
    %v3045 = vmul.f32 %v2879, 1.442695
    %v3046 = vpow.pop %v3045
    %v3047 = vmul.f32 %v2880, 1.442695
    %v3048 = vpow.pop %v3047
    %v3049 = vmul.f32 %v2881, 1.442695
    %v3050 = vpow.pop %v3049
    %v3051 = vmul.f32 %v2882, 1.442695
    %v3052 = vpow.pop %v3051
    %v3053 = vmul.f32 %v2883, 1.442695
    %v3054 = vpow.pop %v3053
    %v3055 = vmul.f32 %v2884, 1.442695
    %v3056 = vpow.pop %v3055
    %v3057 = vmul.f32 %v2885, 1.442695
    %v3058 = vpow.pop %v3057
    %v3059 = vmul.f32 %v2886, 1.442695
    %v3060 = vpow.pop %v3059
    %v3061 = vmul.f32 %v2887, 1.442695
    %v3062 = vpow.pop %v3061
    %v3063 = vmul.f32 %v2888, 1.442695
    %v3064 = vpow.pop %v3063
    %v3065 = vmul.f32 %v2889, 1.442695
    %v3066 = vpow.pop %v3065
    %v3067 = vmul.f32 %v2890, 1.442695
    %v3068 = vpow.pop %v3067
    %v3069 = vmul.f32 %v2891, 1.442695
    %v3070 = vpow.pop %v3069
    %v3071 = vmul.f32 %v2892, 1.442695
    %v3072 = vpow.pop %v3071
    %v3073 = vmul.f32 %v2893, 1.442695
    %v3074 = vpow.pop %v3073
    %v3075 = vmul.f32 %v2894, 1.442695
    %v3076 = vpow.pop %v3075
    %v3077 = vmul.f32 %v2895, 1.442695
    %v3078 = vpow.pop %v3077
    %v3079 = vmul.f32 %v2896, 1.442695
    %v3080 = vpow.pop %v3079
    %v3081 = vmul.f32 %v2897, 1.442695
    %v3082 = vpow.pop %v3081
    %v3083 = vmul.f32 %v2898, 1.442695
    %v3084 = vpow.pop %v3083
    %v3085 = vmul.f32 %v2899, 1.442695
    %v3086 = vpow.pop %v3085
    %v3087 = vmul.f32 %v2900, 1.442695
    %v3088 = vpow.pop %v3087
    %v3089 = vmul.f32 %v2901, 1.442695
    %v3090 = vpow.pop %v3089
    %v3091 = vmul.f32 %v2902, 1.442695
    %v3092 = vpow.pop %v3091
    %v3093 = vmul.f32 %v2903, 1.442695
    %v3094 = vpow.pop %v3093
    %v3095 = vmul.f32 %v2904, 1.442695
    %v3096 = vpow.pop %v3095
    %v3097 = vmul.f32 %v2905, 1.442695
    %v3098 = vpow.pop %v3097
    %v3099 = vmul.f32 %v2906, 1.442695
    %v3100 = vpow.pop %v3099
    %v3101 = vmul.f32 %v2907, 1.442695
    %v3102 = vpow.pop %v3101
    %v3103 = vmul.f32 %v2908, 1.442695
    %v3104 = vpow.pop %v3103
    %v3105 = vmul.f32 %v2909, 1.442695
    %v3106 = vpow.pop %v3105
    %v3107 = vmul.f32 %v2910, 1.442695
    %v3108 = vpow.pop %v3107
    %v3109 = vmul.f32 %v2911, 1.442695
    %v3110 = vpow.pop %v3109
    %v3111 = vmul.f32 %v2912, 1.442695
    %v3112 = vpow.pop %v3111
    %v3113 = vmul.f32 %v2913, 1.442695
    %v3114 = vpow.pop %v3113
    %v3115 = vmul.f32 %v2914, 1.442695
    %v3116 = vpow.pop %v3115
    %v3117 = vmul.f32 %v2915, 1.442695
    %v3118 = vpow.pop %v3117
    %v3119 = vmul.f32 %v2916, 1.442695
    %v3120 = vpow.pop %v3119
    %v3121 = vmul.f32 %v2917, 1.442695
    %v3122 = vpow.pop %v3121
    %v3123 = vmul.f32 %v2918, 1.442695
    %v3124 = vpow.pop %v3123
    %v3125 = vmul.f32 %v2919, 1.442695
    %v3126 = vpow.pop %v3125
    %v3127 = vmul.f32 %v2920, 1.442695
    %v3128 = vpow.pop %v3127
    %v3129 = vmul.f32 %v2921, 1.442695
    %v3130 = vpow.pop %v3129
    %v3131 = vmul.f32 %v2922, 1.442695
    %v3132 = vpow.pop %v3131
    %v3133 = vmul.f32 %v2923, 1.442695
    %v3134 = vpow.pop %v3133
    %v3135 = vmul.f32 %v2924, 1.442695
    %v3136 = vpow.pop %v3135
    %v3137 = vmul.f32 %v2925, 1.442695
    %v3138 = vpow.pop %v3137
    %v3139 = vmul.f32 %v2926, 1.442695
    %v3140 = vpow.pop %v3139
    %v3141 = vmul.f32 %v2927, 1.442695
    %v3142 = vpow.pop %v3141
    %v3143 = vmul.f32 %v2928, 1.442695
    %v3144 = vpow.pop %v3143
    %v3145 = vmul.f32 %v2929, 1.442695
    %v3146 = vpow.pop %v3145
    %v3147 = vmul.f32 %v2930, 1.442695
    %v3148 = vpow.pop %v3147
    %v3149 = vmul.f32 %v2931, 1.442695
    %v3150 = vpow.pop %v3149
    %v3151 = vmul.f32 %v2932, 1.442695
    %v3152 = vpow.pop %v3151
    %v3153 = vmul.f32 %v2933, 1.442695
    %v3154 = vpow.pop %v3153
    %v3155 = vmul.f32 %v2934, 1.442695
    %v3156 = vpow.pop %v3155
    %v3157 = vmul.f32 %v2935, 1.442695
    %v3158 = vpow.pop %v3157
    %v3159 = vmul.f32 %v2936, 1.442695
    %v3160 = vpow.pop %v3159
    %v3161 = vmul.f32 %v2937, 1.442695
    %v3162 = vpow.pop %v3161
    %v3163 = vmul.f32 %v2938, 1.442695
    %v3164 = vpow.pop %v3163
    %v3165 = vmul.f32 %v2939, 1.442695
    %v3166 = vpow.pop %v3165
    %v3167 = vmul.f32 %v2940, 1.442695
    %v3168 = vpow.pop %v3167
    %v3169 = vmul.f32 %v2941, 1.442695
    %v3170 = vpow.pop %v3169
    %v3171 = vmul.f32 %v2942, 1.442695
    %v3172 = vpow.pop %v3171
    %v3173 = vmul.f32 %v2943, 1.442695
    %v3174 = vpow.pop %v3173
    %v3175 = vmul.f32 %v2944, 1.442695
    %v3176 = vpow.pop %v3175
    %v3177 = vmul.f32 %v2945, 1.442695
    %v3178 = vpow.pop %v3177
    %v3179 = vmul.f32 %v2946, 1.442695
    %v3180 = vpow.pop %v3179
    %v3181 = vmul.f32 %v2947, 1.442695
    %v3182 = vpow.pop %v3181
    %v3183 = vmul.f32 %v2948, 1.442695
    %v3184 = vpow.pop %v3183
    %v3185 = vmul.f32 %v2949, 1.442695
    %v3186 = vpow.pop %v3185
    %v3187 = vmul.f32 %v2950, 1.442695
    %v3188 = vpow.pop %v3187
    %v3189 = vmul.f32 %v2951, 1.442695
    %v3190 = vpow.pop %v3189
    %v3191 = vmul.f32 %v2952, 1.442695
    %v3192 = vpow.pop %v3191
    %v3193 = vmul.f32 %v2953, 1.442695
    %v3194 = vpow.pop %v3193
    %v3195 = vmul.f32 %v2954, 1.442695
    %v3196 = vpow.pop %v3195
    %v3197 = vmul.f32 %v2955, 1.442695
    %v3198 = vpow.pop %v3197
    %v3199 = vmul.f32 %v2956, 1.442695
    %v3200 = vpow.pop %v3199
    %v3201 = vmul.f32 %v2957, 1.442695
    %v3202 = vpow.pop %v3201
    %v3203 = vmul.f32 %v2958, 1.442695
    %v3204 = vpow.pop %v3203
    %v3205 = vmul.f32 %v2959, 1.442695
    %v3206 = vpow.pop %v3205
    %v3207 = vmul.f32 %v2960, 1.442695
    %v3208 = vpow.pop %v3207
    %v3209 = vmul.f32 %v2961, 1.442695
    %v3210 = vpow.pop %v3209
    %v3211 = vmul.f32 %v2962, 1.442695
    %v3212 = vpow.pop %v3211
    %v3213 = vmul.f32 %v2963, 1.442695
    %v3214 = vpow.pop %v3213
    %v3215 = vmul.f32 %v2964, 1.442695
    %v3216 = vpow.pop %v3215
    %v3217 = vmul.f32 %v2965, 1.442695
    %v3218 = vpow.pop %v3217
    %v3219 = vmul.f32 %v2966, 1.442695
    %v3220 = vpow.pop %v3219
    %v3221 = vmul.f32 %v2967, 1.442695
    %v3222 = vpow.pop %v3221
    %v3223 = vmul.f32 %v2968, 1.442695
    %v3224 = vpow.pop %v3223
    %v3225 = vsub.f32 %v2970, 1.0
    %v3226 = vsub.f32 %v2972, 1.0
    %v3227 = vsub.f32 %v2974, 1.0
    %v3228 = vsub.f32 %v2976, 1.0
    %v3229 = vsub.f32 %v2978, 1.0
    %v3230 = vsub.f32 %v2980, 1.0
    %v3231 = vsub.f32 %v2982, 1.0
    %v3232 = vsub.f32 %v2984, 1.0
    %v3233 = vsub.f32 %v2986, 1.0
    %v3234 = vsub.f32 %v2988, 1.0
    %v3235 = vsub.f32 %v2990, 1.0
    %v3236 = vsub.f32 %v2992, 1.0
    %v3237 = vsub.f32 %v2994, 1.0
    %v3238 = vsub.f32 %v2996, 1.0
    %v3239 = vsub.f32 %v2998, 1.0
    %v3240 = vsub.f32 %v3000, 1.0
    %v3241 = vsub.f32 %v3002, 1.0
    %v3242 = vsub.f32 %v3004, 1.0
    %v3243 = vsub.f32 %v3006, 1.0
    %v3244 = vsub.f32 %v3008, 1.0
    %v3245 = vsub.f32 %v3010, 1.0
    %v3246 = vsub.f32 %v3012, 1.0
    %v3247 = vsub.f32 %v3014, 1.0
    %v3248 = vsub.f32 %v3016, 1.0
    %v3249 = vsub.f32 %v3018, 1.0
    %v3250 = vsub.f32 %v3020, 1.0
    %v3251 = vsub.f32 %v3022, 1.0
    %v3252 = vsub.f32 %v3024, 1.0
    %v3253 = vsub.f32 %v3026, 1.0
    %v3254 = vsub.f32 %v3028, 1.0
    %v3255 = vsub.f32 %v3030, 1.0
    %v3256 = vsub.f32 %v3032, 1.0
    %v3257 = vsub.f32 %v3034, 1.0
    %v3258 = vsub.f32 %v3036, 1.0
    %v3259 = vsub.f32 %v3038, 1.0
    %v3260 = vsub.f32 %v3040, 1.0
    %v3261 = vsub.f32 %v3042, 1.0
    %v3262 = vsub.f32 %v3044, 1.0
    %v3263 = vsub.f32 %v3046, 1.0
    %v3264 = vsub.f32 %v3048, 1.0
    %v3265 = vsub.f32 %v3050, 1.0
    %v3266 = vsub.f32 %v3052, 1.0
    %v3267 = vsub.f32 %v3054, 1.0
    %v3268 = vsub.f32 %v3056, 1.0
    %v3269 = vsub.f32 %v3058, 1.0
    %v3270 = vsub.f32 %v3060, 1.0
    %v3271 = vsub.f32 %v3062, 1.0
    %v3272 = vsub.f32 %v3064, 1.0
    %v3273 = vsub.f32 %v3066, 1.0
    %v3274 = vsub.f32 %v3068, 1.0
    %v3275 = vsub.f32 %v3070, 1.0
    %v3276 = vsub.f32 %v3072, 1.0
    %v3277 = vsub.f32 %v3074, 1.0
    %v3278 = vsub.f32 %v3076, 1.0
    %v3279 = vsub.f32 %v3078, 1.0
    %v3280 = vsub.f32 %v3080, 1.0
    %v3281 = vsub.f32 %v3082, 1.0
    %v3282 = vsub.f32 %v3084, 1.0
    %v3283 = vsub.f32 %v3086, 1.0
    %v3284 = vsub.f32 %v3088, 1.0
    %v3285 = vsub.f32 %v3090, 1.0
    %v3286 = vsub.f32 %v3092, 1.0
    %v3287 = vsub.f32 %v3094, 1.0
    %v3288 = vsub.f32 %v3096, 1.0
    %v3289 = vsub.f32 %v3098, 1.0
    %v3290 = vsub.f32 %v3100, 1.0
    %v3291 = vsub.f32 %v3102, 1.0
    %v3292 = vsub.f32 %v3104, 1.0
    %v3293 = vsub.f32 %v3106, 1.0
    %v3294 = vsub.f32 %v3108, 1.0
    %v3295 = vsub.f32 %v3110, 1.0
    %v3296 = vsub.f32 %v3112, 1.0
    %v3297 = vsub.f32 %v3114, 1.0
    %v3298 = vsub.f32 %v3116, 1.0
    %v3299 = vsub.f32 %v3118, 1.0
    %v3300 = vsub.f32 %v3120, 1.0
    %v3301 = vsub.f32 %v3122, 1.0
    %v3302 = vsub.f32 %v3124, 1.0
    %v3303 = vsub.f32 %v3126, 1.0
    %v3304 = vsub.f32 %v3128, 1.0
    %v3305 = vsub.f32 %v3130, 1.0
    %v3306 = vsub.f32 %v3132, 1.0
    %v3307 = vsub.f32 %v3134, 1.0
    %v3308 = vsub.f32 %v3136, 1.0
    %v3309 = vsub.f32 %v3138, 1.0
    %v3310 = vsub.f32 %v3140, 1.0
    %v3311 = vsub.f32 %v3142, 1.0
    %v3312 = vsub.f32 %v3144, 1.0
    %v3313 = vsub.f32 %v3146, 1.0
    %v3314 = vsub.f32 %v3148, 1.0
    %v3315 = vsub.f32 %v3150, 1.0
    %v3316 = vsub.f32 %v3152, 1.0
    %v3317 = vsub.f32 %v3154, 1.0
    %v3318 = vsub.f32 %v3156, 1.0
    %v3319 = vsub.f32 %v3158, 1.0
    %v3320 = vsub.f32 %v3160, 1.0
    %v3321 = vsub.f32 %v3162, 1.0
    %v3322 = vsub.f32 %v3164, 1.0
    %v3323 = vsub.f32 %v3166, 1.0
    %v3324 = vsub.f32 %v3168, 1.0
    %v3325 = vsub.f32 %v3170, 1.0
    %v3326 = vsub.f32 %v3172, 1.0
    %v3327 = vsub.f32 %v3174, 1.0
    %v3328 = vsub.f32 %v3176, 1.0
    %v3329 = vsub.f32 %v3178, 1.0
    %v3330 = vsub.f32 %v3180, 1.0
    %v3331 = vsub.f32 %v3182, 1.0
    %v3332 = vsub.f32 %v3184, 1.0
    %v3333 = vsub.f32 %v3186, 1.0
    %v3334 = vsub.f32 %v3188, 1.0
    %v3335 = vsub.f32 %v3190, 1.0
    %v3336 = vsub.f32 %v3192, 1.0
    %v3337 = vsub.f32 %v3194, 1.0
    %v3338 = vsub.f32 %v3196, 1.0
    %v3339 = vsub.f32 %v3198, 1.0
    %v3340 = vsub.f32 %v3200, 1.0
    %v3341 = vsub.f32 %v3202, 1.0
    %v3342 = vsub.f32 %v3204, 1.0
    %v3343 = vsub.f32 %v3206, 1.0
    %v3344 = vsub.f32 %v3208, 1.0
    %v3345 = vsub.f32 %v3210, 1.0
    %v3346 = vsub.f32 %v3212, 1.0
    %v3347 = vsub.f32 %v3214, 1.0
    %v3348 = vsub.f32 %v3216, 1.0
    %v3349 = vsub.f32 %v3218, 1.0
    %v3350 = vsub.f32 %v3220, 1.0
    %v3351 = vsub.f32 %v3222, 1.0
    %v3352 = vsub.f32 %v3224, 1.0
    %v3353 = vsel %vm2713, %v2203, %v3225
    %v3354 = vsel %vm2714, %v2206, %v3226
    %v3355 = vsel %vm2715, %v2211, %v3227
    %v3356 = vsel %vm2716, %v2214, %v3228
    %v3357 = vsel %vm2717, %v2219, %v3229
    %v3358 = vsel %vm2718, %v2222, %v3230
    %v3359 = vsel %vm2719, %v2227, %v3231
    %v3360 = vsel %vm2720, %v2230, %v3232
    %v3361 = vsel %vm2721, %v2235, %v3233
    %v3362 = vsel %vm2722, %v2238, %v3234
    %v3363 = vsel %vm2723, %v2243, %v3235
    %v3364 = vsel %vm2724, %v2246, %v3236
    %v3365 = vsel %vm2725, %v2251, %v3237
    %v3366 = vsel %vm2726, %v2254, %v3238
    %v3367 = vsel %vm2727, %v2259, %v3239
    %v3368 = vsel %vm2728, %v2262, %v3240
    %v3369 = vsel %vm2729, %v2267, %v3241
    %v3370 = vsel %vm2730, %v2270, %v3242
    %v3371 = vsel %vm2731, %v2275, %v3243
    %v3372 = vsel %vm2732, %v2278, %v3244
    %v3373 = vsel %vm2733, %v2283, %v3245
    %v3374 = vsel %vm2734, %v2286, %v3246
    %v3375 = vsel %vm2735, %v2291, %v3247
    %v3376 = vsel %vm2736, %v2294, %v3248
    %v3377 = vsel %vm2737, %v2299, %v3249
    %v3378 = vsel %vm2738, %v2302, %v3250
    %v3379 = vsel %vm2739, %v2307, %v3251
    %v3380 = vsel %vm2740, %v2310, %v3252
    %v3381 = vsel %vm2741, %v2315, %v3253
    %v3382 = vsel %vm2742, %v2318, %v3254
    %v3383 = vsel %vm2743, %v2323, %v3255
    %v3384 = vsel %vm2744, %v2326, %v3256
    %v3385 = vsel %vm2745, %v2331, %v3257
    %v3386 = vsel %vm2746, %v2334, %v3258
    %v3387 = vsel %vm2747, %v2339, %v3259
    %v3388 = vsel %vm2748, %v2342, %v3260
    %v3389 = vsel %vm2749, %v2347, %v3261
    %v3390 = vsel %vm2750, %v2350, %v3262
    %v3391 = vsel %vm2751, %v2355, %v3263
    %v3392 = vsel %vm2752, %v2358, %v3264
    %v3393 = vsel %vm2753, %v2363, %v3265
    %v3394 = vsel %vm2754, %v2366, %v3266
    %v3395 = vsel %vm2755, %v2371, %v3267
    %v3396 = vsel %vm2756, %v2374, %v3268
    %v3397 = vsel %vm2757, %v2379, %v3269
    %v3398 = vsel %vm2758, %v2382, %v3270
    %v3399 = vsel %vm2759, %v2387, %v3271
    %v3400 = vsel %vm2760, %v2390, %v3272
    %v3401 = vsel %vm2761, %v2395, %v3273
    %v3402 = vsel %vm2762, %v2398, %v3274
    %v3403 = vsel %vm2763, %v2403, %v3275
    %v3404 = vsel %vm2764, %v2406, %v3276
    %v3405 = vsel %vm2765, %v2411, %v3277
    %v3406 = vsel %vm2766, %v2414, %v3278
    %v3407 = vsel %vm2767, %v2419, %v3279
    %v3408 = vsel %vm2768, %v2422, %v3280
    %v3409 = vsel %vm2769, %v2427, %v3281
    %v3410 = vsel %vm2770, %v2430, %v3282
    %v3411 = vsel %vm2771, %v2435, %v3283
    %v3412 = vsel %vm2772, %v2438, %v3284
    %v3413 = vsel %vm2773, %v2443, %v3285
    %v3414 = vsel %vm2774, %v2446, %v3286
    %v3415 = vsel %vm2775, %v2451, %v3287
    %v3416 = vsel %vm2776, %v2454, %v3288
    %v3417 = vsel %vm2777, %v2459, %v3289
    %v3418 = vsel %vm2778, %v2462, %v3290
    %v3419 = vsel %vm2779, %v2467, %v3291
    %v3420 = vsel %vm2780, %v2470, %v3292
    %v3421 = vsel %vm2781, %v2475, %v3293
    %v3422 = vsel %vm2782, %v2478, %v3294
    %v3423 = vsel %vm2783, %v2483, %v3295
    %v3424 = vsel %vm2784, %v2486, %v3296
    %v3425 = vsel %vm2785, %v2491, %v3297
    %v3426 = vsel %vm2786, %v2494, %v3298
    %v3427 = vsel %vm2787, %v2499, %v3299
    %v3428 = vsel %vm2788, %v2502, %v3300
    %v3429 = vsel %vm2789, %v2507, %v3301
    %v3430 = vsel %vm2790, %v2510, %v3302
    %v3431 = vsel %vm2791, %v2515, %v3303
    %v3432 = vsel %vm2792, %v2518, %v3304
    %v3433 = vsel %vm2793, %v2523, %v3305
    %v3434 = vsel %vm2794, %v2526, %v3306
    %v3435 = vsel %vm2795, %v2531, %v3307
    %v3436 = vsel %vm2796, %v2534, %v3308
    %v3437 = vsel %vm2797, %v2539, %v3309
    %v3438 = vsel %vm2798, %v2542, %v3310
    %v3439 = vsel %vm2799, %v2547, %v3311
    %v3440 = vsel %vm2800, %v2550, %v3312
    %v3441 = vsel %vm2801, %v2555, %v3313
    %v3442 = vsel %vm2802, %v2558, %v3314
    %v3443 = vsel %vm2803, %v2563, %v3315
    %v3444 = vsel %vm2804, %v2566, %v3316
    %v3445 = vsel %vm2805, %v2571, %v3317
    %v3446 = vsel %vm2806, %v2574, %v3318
    %v3447 = vsel %vm2807, %v2579, %v3319
    %v3448 = vsel %vm2808, %v2582, %v3320
    %v3449 = vsel %vm2809, %v2587, %v3321
    %v3450 = vsel %vm2810, %v2590, %v3322
    %v3451 = vsel %vm2811, %v2595, %v3323
    %v3452 = vsel %vm2812, %v2598, %v3324
    %v3453 = vsel %vm2813, %v2603, %v3325
    %v3454 = vsel %vm2814, %v2606, %v3326
    %v3455 = vsel %vm2815, %v2611, %v3327
    %v3456 = vsel %vm2816, %v2614, %v3328
    %v3457 = vsel %vm2817, %v2619, %v3329
    %v3458 = vsel %vm2818, %v2622, %v3330
    %v3459 = vsel %vm2819, %v2627, %v3331
    %v3460 = vsel %vm2820, %v2630, %v3332
    %v3461 = vsel %vm2821, %v2635, %v3333
    %v3462 = vsel %vm2822, %v2638, %v3334
    %v3463 = vsel %vm2823, %v2643, %v3335
    %v3464 = vsel %vm2824, %v2646, %v3336
    %v3465 = vsel %vm2825, %v2651, %v3337
    %v3466 = vsel %vm2826, %v2654, %v3338
    %v3467 = vsel %vm2827, %v2659, %v3339
    %v3468 = vsel %vm2828, %v2662, %v3340
    %v3469 = vsel %vm2829, %v2667, %v3341
    %v3470 = vsel %vm2830, %v2670, %v3342
    %v3471 = vsel %vm2831, %v2675, %v3343
    %v3472 = vsel %vm2832, %v2678, %v3344
    %v3473 = vsel %vm2833, %v2683, %v3345
    %v3474 = vsel %vm2834, %v2686, %v3346
    %v3475 = vsel %vm2835, %v2691, %v3347
    %v3476 = vsel %vm2836, %v2694, %v3348
    %v3477 = vsel %vm2837, %v2699, %v3349
    %v3478 = vsel %vm2838, %v2702, %v3350
    %v3479 = vsel %vm2839, %v2707, %v3351
    %v3480 = vsel %vm2840, %v2710, %v3352
    %v3481 = vpack.c.bf16 %v3354, %v3353
    %v3482 = vpack.c.bf16 %v3356, %v3355
    %v3483 = vpack.c.bf16 %v3358, %v3357
    %v3484 = vpack.c.bf16 %v3360, %v3359
    %v3485 = vpack.c.bf16 %v3362, %v3361
    %v3486 = vpack.c.bf16 %v3364, %v3363
    %v3487 = vpack.c.bf16 %v3366, %v3365
    %v3488 = vpack.c.bf16 %v3368, %v3367
    %v3489 = vpack.c.bf16 %v3370, %v3369
    %v3490 = vpack.c.bf16 %v3372, %v3371
    %v3491 = vpack.c.bf16 %v3374, %v3373
    %v3492 = vpack.c.bf16 %v3376, %v3375
    %v3493 = vpack.c.bf16 %v3378, %v3377
    %v3494 = vpack.c.bf16 %v3380, %v3379
    %v3495 = vpack.c.bf16 %v3382, %v3381
    %v3496 = vpack.c.bf16 %v3384, %v3383
    %v3497 = vpack.c.bf16 %v3386, %v3385
    %v3498 = vpack.c.bf16 %v3388, %v3387
    %v3499 = vpack.c.bf16 %v3390, %v3389
    %v3500 = vpack.c.bf16 %v3392, %v3391
    %v3501 = vpack.c.bf16 %v3394, %v3393
    %v3502 = vpack.c.bf16 %v3396, %v3395
    %v3503 = vpack.c.bf16 %v3398, %v3397
    %v3504 = vpack.c.bf16 %v3400, %v3399
    %v3505 = vpack.c.bf16 %v3402, %v3401
    %v3506 = vpack.c.bf16 %v3404, %v3403
    %v3507 = vpack.c.bf16 %v3406, %v3405
    %v3508 = vpack.c.bf16 %v3408, %v3407
    %v3509 = vpack.c.bf16 %v3410, %v3409
    %v3510 = vpack.c.bf16 %v3412, %v3411
    %v3511 = vpack.c.bf16 %v3414, %v3413
    %v3512 = vpack.c.bf16 %v3416, %v3415
    %v3513 = vpack.c.bf16 %v3418, %v3417
    %v3514 = vpack.c.bf16 %v3420, %v3419
    %v3515 = vpack.c.bf16 %v3422, %v3421
    %v3516 = vpack.c.bf16 %v3424, %v3423
    %v3517 = vpack.c.bf16 %v3426, %v3425
    %v3518 = vpack.c.bf16 %v3428, %v3427
    %v3519 = vpack.c.bf16 %v3430, %v3429
    %v3520 = vpack.c.bf16 %v3432, %v3431
    %v3521 = vpack.c.bf16 %v3434, %v3433
    %v3522 = vpack.c.bf16 %v3436, %v3435
    %v3523 = vpack.c.bf16 %v3438, %v3437
    %v3524 = vpack.c.bf16 %v3440, %v3439
    %v3525 = vpack.c.bf16 %v3442, %v3441
    %v3526 = vpack.c.bf16 %v3444, %v3443
    %v3527 = vpack.c.bf16 %v3446, %v3445
    %v3528 = vpack.c.bf16 %v3448, %v3447
    %v3529 = vpack.c.bf16 %v3450, %v3449
    %v3530 = vpack.c.bf16 %v3452, %v3451
    %v3531 = vpack.c.bf16 %v3454, %v3453
    %v3532 = vpack.c.bf16 %v3456, %v3455
    %v3533 = vpack.c.bf16 %v3458, %v3457
    %v3534 = vpack.c.bf16 %v3460, %v3459
    %v3535 = vpack.c.bf16 %v3462, %v3461
    %v3536 = vpack.c.bf16 %v3464, %v3463
    %v3537 = vpack.c.bf16 %v3466, %v3465
    %v3538 = vpack.c.bf16 %v3468, %v3467
    %v3539 = vpack.c.bf16 %v3470, %v3469
    %v3540 = vpack.c.bf16 %v3472, %v3471
    %v3541 = vpack.c.bf16 %v3474, %v3473
    %v3542 = vpack.c.bf16 %v3476, %v3475
    %v3543 = vpack.c.bf16 %v3478, %v3477
    %v3544 = vpack.c.bf16 %v3480, %v3479
    %v3545 = vld [vmem:[%s5] sm:$0xf]
    %v3546 = vld [vmem:[%s5 + $0x4] sm:$0xf]
    %v3547 = vld [vmem:[%s5 + $0x8] sm:$0xf]
    %v3548 = vld [vmem:[%s5 + $0xc] sm:$0xf]
    %v3549 = vld [vmem:[%s5 + $0x10] sm:$0xf]
    %v3550 = vld [vmem:[%s5 + $0x14] sm:$0xf]
    %v3551 = vld [vmem:[%s5 + $0x18] sm:$0xf]
    %v3552 = vld [vmem:[%s5 + $0x1c] sm:$0xf]
    %v3553 = vld [vmem:[%s5 + $0x20] sm:$0xf]
    %v3554 = vld [vmem:[%s5 + $0x24] sm:$0xf]
    %v3555 = vld [vmem:[%s5 + $0x28] sm:$0xf]
    %v3556 = vld [vmem:[%s5 + $0x2c] sm:$0xf]
    %v3557 = vld [vmem:[%s5 + $0x30] sm:$0xf]
    %v3558 = vld [vmem:[%s5 + $0x34] sm:$0xf]
    %v3559 = vld [vmem:[%s5 + $0x38] sm:$0xf]
    %v3560 = vld [vmem:[%s5 + $0x3c] sm:$0xf]
    %v3561 = vld [vmem:[%s6] sm:$0x1]
    %v3563 = vlaneseq
    %v3564 = vshrl.u32 %v3563, 7
    %v3565 = vsub.s32 0, %v3564
    %v3566 = vrot.slane %v3561, %v3565
    %v3584 = vunpack.c.l.b16 %v3545
    %v3585 = vunpack.c.l.b16 %v3546
    %v3586 = vunpack.c.l.b16 %v3547
    %v3587 = vunpack.c.l.b16 %v3548
    %v3588 = vunpack.c.l.b16 %v3549
    %v3589 = vunpack.c.l.b16 %v3550
    %v3590 = vunpack.c.l.b16 %v3551
    %v3591 = vunpack.c.l.b16 %v3552
    %v3592 = vunpack.c.l.b16 %v3553
    %v3593 = vunpack.c.l.b16 %v3554
    %v3594 = vunpack.c.l.b16 %v3555
    %v3595 = vunpack.c.l.b16 %v3556
    %v3596 = vunpack.c.l.b16 %v3557
    %v3597 = vunpack.c.l.b16 %v3558
    %v3598 = vunpack.c.l.b16 %v3559
    %v3599 = vunpack.c.l.b16 %v3560
    %v3600 = vpack.c.b16 %v3585, %v3584
    %v3601 = vpack.c.b16 %v3587, %v3586
    %v3602 = vpack.c.b16 %v3589, %v3588
    %v3603 = vpack.c.b16 %v3591, %v3590
    %v3604 = vpack.c.b16 %v3593, %v3592
    %v3605 = vpack.c.b16 %v3595, %v3594
    %v3606 = vpack.c.b16 %v3597, %v3596
    %v3607 = vpack.c.b16 %v3599, %v3598
    %3616 = vmatprep.subr.bf16.mxu0 0
    %3617 = vmatpush1.bf16.msra.mxu0 %v3600
    %3618 = vmatprep.subr.bf16.mxu0 0
    %3619 = vmatpush1.bf16.msra.mxu0 %v3601
    %3620 = vmatprep.subr.bf16.mxu0 0
    %3621 = vmatpush1.bf16.msra.mxu0 %v3602
    %3622 = vmatprep.subr.bf16.mxu0 0
    %3623 = vmatpush1.bf16.msra.mxu0 %v3603
    %3624 = vmatprep.subr.bf16.mxu0 0
    %3625 = vmatpush1.bf16.msra.mxu0 %v3604
    %3626 = vmatprep.subr.bf16.mxu0 0
    %3627 = vmatpush1.bf16.msra.mxu0 %v3605
    %3628 = vmatprep.subr.bf16.mxu0 0
    %3629 = vmatpush1.bf16.msra.mxu0 %v3606
    %3630 = vmatprep.subr.bf16.mxu0 0
    %3631 = vmatpush1.bf16.msra.mxu0 %v3607
    %3632 = vmatprep.subr.bf16.mxu0 0
    %3633 = vmatpush1.bf16.msra.mxu0 0
    %3634 = vmatprep.subr.bf16.mxu0 0
    %3635 = vmatpush1.bf16.msra.mxu0 0
    %3636 = vmatprep.subr.bf16.mxu0 0
    %3637 = vmatpush1.bf16.msra.mxu0 0
    %3638 = vmatprep.subr.bf16.mxu0 0
    %3639 = vmatpush1.bf16.msra.mxu0 0
    %3640 = vmatprep.subr.bf16.mxu0 0
    %3641 = vmatpush1.bf16.msra.mxu0 0
    %3642 = vmatprep.subr.bf16.mxu0 0
    %3643 = vmatpush1.bf16.msra.mxu0 0
    %3644 = vmatprep.subr.bf16.mxu0 0
    %3645 = vmatpush1.bf16.msra.mxu0 0
    %3646 = vmatprep.subr.bf16.mxu0 0
    %3647 = vmatpush1.bf16.msra.mxu0 0
    %3648 = vmatprep.mubr.bf16.mxu0 0
    %3649 = vmatmul.mubr.bf16.gmra.mrb[0].mxu0 %v3481
    %v3650 = vpop.f32.mrb[0].mxu0
    %v3651 = vadd.f32 %v3566, %v3650
    %v3652 = vpop.f32.mrb[0].mxu0
    %v3653 = vpop.f32.mrb[0].mxu0
    %v3654 = vadd.f32 %v3566, %v3653
    %v3655 = vpop.f32.mrb[0].mxu0
    %3656 = vmatprep.mubr.bf16.mxu0 0
    %3657 = vmatmul.mubr.bf16.gmra.mrb[0].mxu0 %v3482
    %v3658 = vpop.f32.mrb[0].mxu0
    %v3659 = vadd.f32 %v3566, %v3658
    %v3660 = vpop.f32.mrb[0].mxu0
    %v3661 = vpop.f32.mrb[0].mxu0
    %v3662 = vadd.f32 %v3566, %v3661
    %v3663 = vpop.f32.mrb[0].mxu0
    %3664 = vmatprep.mubr.bf16.mxu0 0
    %3665 = vmatmul.mubr.bf16.gmra.mrb[0].mxu0 %v3483
    %v3666 = vpop.f32.mrb[0].mxu0
    %v3667 = vadd.f32 %v3566, %v3666
    %v3668 = vpop.f32.mrb[0].mxu0
    %v3669 = vpop.f32.mrb[0].mxu0
    %v3670 = vadd.f32 %v3566, %v3669
    %v3671 = vpop.f32.mrb[0].mxu0
    %3672 = vmatprep.mubr.bf16.mxu0 0
    %3673 = vmatmul.mubr.bf16.gmra.mrb[0].mxu0 %v3484
    %v3674 = vpop.f32.mrb[0].mxu0
    %v3675 = vadd.f32 %v3566, %v3674
    %v3676 = vpop.f32.mrb[0].mxu0
    %v3677 = vpop.f32.mrb[0].mxu0
    %v3678 = vadd.f32 %v3566, %v3677
    %v3679 = vpop.f32.mrb[0].mxu0
    %3680 = vmatprep.mubr.bf16.mxu0 0
    %3681 = vmatmul.mubr.bf16.gmra.mrb[0].mxu0 %v3485
    %v3682 = vpop.f32.mrb[0].mxu0
    %v3683 = vadd.f32 %v3566, %v3682
    %v3684 = vpop.f32.mrb[0].mxu0
    %v3685 = vpop.f32.mrb[0].mxu0
    %v3686 = vadd.f32 %v3566, %v3685
    %v3687 = vpop.f32.mrb[0].mxu0
    %3688 = vmatprep.mubr.bf16.mxu0 0
    %3689 = vmatmul.mubr.bf16.gmra.mrb[0].mxu0 %v3486
    %v3690 = vpop.f32.mrb[0].mxu0
    %v3691 = vadd.f32 %v3566, %v3690
    %v3692 = vpop.f32.mrb[0].mxu0
    %v3693 = vpop.f32.mrb[0].mxu0
    %v3694 = vadd.f32 %v3566, %v3693
    %v3695 = vpop.f32.mrb[0].mxu0
    %3696 = vmatprep.mubr.bf16.mxu0 0
    %3697 = vmatmul.mubr.bf16.gmra.mrb[0].mxu0 %v3487
    %v3698 = vpop.f32.mrb[0].mxu0
    %v3699 = vadd.f32 %v3566, %v3698
    %v3700 = vpop.f32.mrb[0].mxu0
    %v3701 = vpop.f32.mrb[0].mxu0
    %v3702 = vadd.f32 %v3566, %v3701
    %v3703 = vpop.f32.mrb[0].mxu0
    %3704 = vmatprep.mubr.bf16.mxu0 0
    %3705 = vmatmul.mubr.bf16.gmra.mrb[0].mxu0 %v3488
    %v3706 = vpop.f32.mrb[0].mxu0
    %v3707 = vadd.f32 %v3566, %v3706
    %v3708 = vpop.f32.mrb[0].mxu0
    %v3709 = vpop.f32.mrb[0].mxu0
    %v3710 = vadd.f32 %v3566, %v3709
    %v3711 = vpop.f32.mrb[0].mxu0
    %3712 = vmatprep.mubr.bf16.mxu0 0
    %3713 = vmatmul.mubr.bf16.gmra.mrb[0].mxu0 %v3489
    %v3714 = vpop.f32.mrb[0].mxu0
    %v3715 = vadd.f32 %v3566, %v3714
    %v3716 = vpop.f32.mrb[0].mxu0
    %v3717 = vpop.f32.mrb[0].mxu0
    %v3718 = vadd.f32 %v3566, %v3717
    %v3719 = vpop.f32.mrb[0].mxu0
    %3720 = vmatprep.mubr.bf16.mxu0 0
    %3721 = vmatmul.mubr.bf16.gmra.mrb[0].mxu0 %v3490
    %v3722 = vpop.f32.mrb[0].mxu0
    %v3723 = vadd.f32 %v3566, %v3722
    %v3724 = vpop.f32.mrb[0].mxu0
    %v3725 = vpop.f32.mrb[0].mxu0
    %v3726 = vadd.f32 %v3566, %v3725
    %v3727 = vpop.f32.mrb[0].mxu0
    %3728 = vmatprep.mubr.bf16.mxu0 0
    %3729 = vmatmul.mubr.bf16.gmra.mrb[0].mxu0 %v3491
    %v3730 = vpop.f32.mrb[0].mxu0
    %v3731 = vadd.f32 %v3566, %v3730
    %v3732 = vpop.f32.mrb[0].mxu0
    %v3733 = vpop.f32.mrb[0].mxu0
    %v3734 = vadd.f32 %v3566, %v3733
    %v3735 = vpop.f32.mrb[0].mxu0
    %3736 = vmatprep.mubr.bf16.mxu0 0
    %3737 = vmatmul.mubr.bf16.gmra.mrb[0].mxu0 %v3492
    %v3738 = vpop.f32.mrb[0].mxu0
    %v3739 = vadd.f32 %v3566, %v3738
    %v3740 = vpop.f32.mrb[0].mxu0
    %v3741 = vpop.f32.mrb[0].mxu0
    %v3742 = vadd.f32 %v3566, %v3741
    %v3743 = vpop.f32.mrb[0].mxu0
    %3744 = vmatprep.mubr.bf16.mxu0 0
    %3745 = vmatmul.mubr.bf16.gmra.mrb[0].mxu0 %v3493
    %v3746 = vpop.f32.mrb[0].mxu0
    %v3747 = vadd.f32 %v3566, %v3746
    %v3748 = vpop.f32.mrb[0].mxu0
    %v3749 = vpop.f32.mrb[0].mxu0
    %v3750 = vadd.f32 %v3566, %v3749
    %v3751 = vpop.f32.mrb[0].mxu0
    %3752 = vmatprep.mubr.bf16.mxu0 0
    %3753 = vmatmul.mubr.bf16.gmra.mrb[0].mxu0 %v3494
    %v3754 = vpop.f32.mrb[0].mxu0
    %v3755 = vadd.f32 %v3566, %v3754
    %v3756 = vpop.f32.mrb[0].mxu0
    %v3757 = vpop.f32.mrb[0].mxu0
    %v3758 = vadd.f32 %v3566, %v3757
    %v3759 = vpop.f32.mrb[0].mxu0
    %3760 = vmatprep.mubr.bf16.mxu0 0
    %3761 = vmatmul.mubr.bf16.gmra.mrb[0].mxu0 %v3495
    %v3762 = vpop.f32.mrb[0].mxu0
    %v3763 = vadd.f32 %v3566, %v3762
    %v3764 = vpop.f32.mrb[0].mxu0
    %v3765 = vpop.f32.mrb[0].mxu0
    %v3766 = vadd.f32 %v3566, %v3765
    %v3767 = vpop.f32.mrb[0].mxu0
    %3768 = vmatprep.mubr.bf16.mxu0 0
    %3769 = vmatmul.mubr.bf16.gmra.mrb[0].mxu0 %v3496
    %v3770 = vpop.f32.mrb[0].mxu0
    %v3771 = vadd.f32 %v3566, %v3770
    %v3772 = vpop.f32.mrb[0].mxu0
    %v3773 = vpop.f32.mrb[0].mxu0
    %v3774 = vadd.f32 %v3566, %v3773
    %v3775 = vpop.f32.mrb[0].mxu0
    %3776 = vmatprep.mubr.bf16.mxu0 0
    %3777 = vmatmul.mubr.bf16.gmra.mrb[0].mxu0 %v3497
    %v3778 = vpop.f32.mrb[0].mxu0
    %v3779 = vadd.f32 %v3566, %v3778
    %v3780 = vpop.f32.mrb[0].mxu0
    %v3781 = vpop.f32.mrb[0].mxu0
    %v3782 = vadd.f32 %v3566, %v3781
    %v3783 = vpop.f32.mrb[0].mxu0
    %3784 = vmatprep.mubr.bf16.mxu0 0
    %3785 = vmatmul.mubr.bf16.gmra.mrb[0].mxu0 %v3498
    %v3786 = vpop.f32.mrb[0].mxu0
    %v3787 = vadd.f32 %v3566, %v3786
    %v3788 = vpop.f32.mrb[0].mxu0
    %v3789 = vpop.f32.mrb[0].mxu0
    %v3790 = vadd.f32 %v3566, %v3789
    %v3791 = vpop.f32.mrb[0].mxu0
    %3792 = vmatprep.mubr.bf16.mxu0 0
    %3793 = vmatmul.mubr.bf16.gmra.mrb[0].mxu0 %v3499
    %v3794 = vpop.f32.mrb[0].mxu0
    %v3795 = vadd.f32 %v3566, %v3794
    %v3796 = vpop.f32.mrb[0].mxu0
    %v3797 = vpop.f32.mrb[0].mxu0
    %v3798 = vadd.f32 %v3566, %v3797
    %v3799 = vpop.f32.mrb[0].mxu0
    %3800 = vmatprep.mubr.bf16.mxu0 0
    %3801 = vmatmul.mubr.bf16.gmra.mrb[0].mxu0 %v3500
    %v3802 = vpop.f32.mrb[0].mxu0
    %v3803 = vadd.f32 %v3566, %v3802
    %v3804 = vpop.f32.mrb[0].mxu0
    %v3805 = vpop.f32.mrb[0].mxu0
    %v3806 = vadd.f32 %v3566, %v3805
    %v3807 = vpop.f32.mrb[0].mxu0
    %3808 = vmatprep.mubr.bf16.mxu0 0
    %3809 = vmatmul.mubr.bf16.gmra.mrb[0].mxu0 %v3501
    %v3810 = vpop.f32.mrb[0].mxu0
    %v3811 = vadd.f32 %v3566, %v3810
    %v3812 = vpop.f32.mrb[0].mxu0
    %v3813 = vpop.f32.mrb[0].mxu0
    %v3814 = vadd.f32 %v3566, %v3813
    %v3815 = vpop.f32.mrb[0].mxu0
    %3816 = vmatprep.mubr.bf16.mxu0 0
    %3817 = vmatmul.mubr.bf16.gmra.mrb[0].mxu0 %v3502
    %v3818 = vpop.f32.mrb[0].mxu0
    %v3819 = vadd.f32 %v3566, %v3818
    %v3820 = vpop.f32.mrb[0].mxu0
    %v3821 = vpop.f32.mrb[0].mxu0
    %v3822 = vadd.f32 %v3566, %v3821
    %v3823 = vpop.f32.mrb[0].mxu0
    %3824 = vmatprep.mubr.bf16.mxu0 0
    %3825 = vmatmul.mubr.bf16.gmra.mrb[0].mxu0 %v3503
    %v3826 = vpop.f32.mrb[0].mxu0
    %v3827 = vadd.f32 %v3566, %v3826
    %v3828 = vpop.f32.mrb[0].mxu0
    %v3829 = vpop.f32.mrb[0].mxu0
    %v3830 = vadd.f32 %v3566, %v3829
    %v3831 = vpop.f32.mrb[0].mxu0
    %3832 = vmatprep.mubr.bf16.mxu0 0
    %3833 = vmatmul.mubr.bf16.gmra.mrb[0].mxu0 %v3504
    %v3834 = vpop.f32.mrb[0].mxu0
    %v3835 = vadd.f32 %v3566, %v3834
    %v3836 = vpop.f32.mrb[0].mxu0
    %v3837 = vpop.f32.mrb[0].mxu0
    %v3838 = vadd.f32 %v3566, %v3837
    %v3839 = vpop.f32.mrb[0].mxu0
    %3840 = vmatprep.mubr.bf16.mxu0 0
    %3841 = vmatmul.mubr.bf16.gmra.mrb[0].mxu0 %v3505
    %v3842 = vpop.f32.mrb[0].mxu0
    %v3843 = vadd.f32 %v3566, %v3842
    %v3844 = vpop.f32.mrb[0].mxu0
    %v3845 = vpop.f32.mrb[0].mxu0
    %v3846 = vadd.f32 %v3566, %v3845
    %v3847 = vpop.f32.mrb[0].mxu0
    %3848 = vmatprep.mubr.bf16.mxu0 0
    %3849 = vmatmul.mubr.bf16.gmra.mrb[0].mxu0 %v3506
    %v3850 = vpop.f32.mrb[0].mxu0
    %v3851 = vadd.f32 %v3566, %v3850
    %v3852 = vpop.f32.mrb[0].mxu0
    %v3853 = vpop.f32.mrb[0].mxu0
    %v3854 = vadd.f32 %v3566, %v3853
    %v3855 = vpop.f32.mrb[0].mxu0
    %3856 = vmatprep.mubr.bf16.mxu0 0
    %3857 = vmatmul.mubr.bf16.gmra.mrb[0].mxu0 %v3507
    %v3858 = vpop.f32.mrb[0].mxu0
    %v3859 = vadd.f32 %v3566, %v3858
    %v3860 = vpop.f32.mrb[0].mxu0
    %v3861 = vpop.f32.mrb[0].mxu0
    %v3862 = vadd.f32 %v3566, %v3861
    %v3863 = vpop.f32.mrb[0].mxu0
    %3864 = vmatprep.mubr.bf16.mxu0 0
    %3865 = vmatmul.mubr.bf16.gmra.mrb[0].mxu0 %v3508
    %v3866 = vpop.f32.mrb[0].mxu0
    %v3867 = vadd.f32 %v3566, %v3866
    %v3868 = vpop.f32.mrb[0].mxu0
    %v3869 = vpop.f32.mrb[0].mxu0
    %v3870 = vadd.f32 %v3566, %v3869
    %v3871 = vpop.f32.mrb[0].mxu0
    %3872 = vmatprep.mubr.bf16.mxu0 0
    %3873 = vmatmul.mubr.bf16.gmra.mrb[0].mxu0 %v3509
    %v3874 = vpop.f32.mrb[0].mxu0
    %v3875 = vadd.f32 %v3566, %v3874
    %v3876 = vpop.f32.mrb[0].mxu0
    %v3877 = vpop.f32.mrb[0].mxu0
    %v3878 = vadd.f32 %v3566, %v3877
    %v3879 = vpop.f32.mrb[0].mxu0
    %3880 = vmatprep.mubr.bf16.mxu0 0
    %3881 = vmatmul.mubr.bf16.gmra.mrb[0].mxu0 %v3510
    %v3882 = vpop.f32.mrb[0].mxu0
    %v3883 = vadd.f32 %v3566, %v3882
    %v3884 = vpop.f32.mrb[0].mxu0
    %v3885 = vpop.f32.mrb[0].mxu0
    %v3886 = vadd.f32 %v3566, %v3885
    %v3887 = vpop.f32.mrb[0].mxu0
    %3888 = vmatprep.mubr.bf16.mxu0 0
    %3889 = vmatmul.mubr.bf16.gmra.mrb[0].mxu0 %v3511
    %v3890 = vpop.f32.mrb[0].mxu0
    %v3891 = vadd.f32 %v3566, %v3890
    %v3892 = vpop.f32.mrb[0].mxu0
    %v3893 = vpop.f32.mrb[0].mxu0
    %v3894 = vadd.f32 %v3566, %v3893
    %v3895 = vpop.f32.mrb[0].mxu0
    %3896 = vmatprep.mubr.bf16.mxu0 0
    %3897 = vmatmul.mubr.bf16.gmra.mrb[0].mxu0 %v3512
    %v3898 = vpop.f32.mrb[0].mxu0
    %v3899 = vadd.f32 %v3566, %v3898
    %v3900 = vpop.f32.mrb[0].mxu0
    %v3901 = vpop.f32.mrb[0].mxu0
    %v3902 = vadd.f32 %v3566, %v3901
    %v3903 = vpop.f32.mrb[0].mxu0
    %3904 = vmatprep.mubr.bf16.mxu0 0
    %3905 = vmatmul.mubr.bf16.gmra.mrb[0].mxu0 %v3513
    %v3906 = vpop.f32.mrb[0].mxu0
    %v3907 = vadd.f32 %v3566, %v3906
    %v3908 = vpop.f32.mrb[0].mxu0
    %v3909 = vpop.f32.mrb[0].mxu0
    %v3910 = vadd.f32 %v3566, %v3909
    %v3911 = vpop.f32.mrb[0].mxu0
    %3912 = vmatprep.mubr.bf16.mxu0 0
    %3913 = vmatmul.mubr.bf16.gmra.mrb[0].mxu0 %v3514
    %v3914 = vpop.f32.mrb[0].mxu0
    %v3915 = vadd.f32 %v3566, %v3914
    %v3916 = vpop.f32.mrb[0].mxu0
    %v3917 = vpop.f32.mrb[0].mxu0
    %v3918 = vadd.f32 %v3566, %v3917
    %v3919 = vpop.f32.mrb[0].mxu0
    %3920 = vmatprep.mubr.bf16.mxu0 0
    %3921 = vmatmul.mubr.bf16.gmra.mrb[0].mxu0 %v3515
    %v3922 = vpop.f32.mrb[0].mxu0
    %v3923 = vadd.f32 %v3566, %v3922
    %v3924 = vpop.f32.mrb[0].mxu0
    %v3925 = vpop.f32.mrb[0].mxu0
    %v3926 = vadd.f32 %v3566, %v3925
    %v3927 = vpop.f32.mrb[0].mxu0
    %3928 = vmatprep.mubr.bf16.mxu0 0
    %3929 = vmatmul.mubr.bf16.gmra.mrb[0].mxu0 %v3516
    %v3930 = vpop.f32.mrb[0].mxu0
    %v3931 = vadd.f32 %v3566, %v3930
    %v3932 = vpop.f32.mrb[0].mxu0
    %v3933 = vpop.f32.mrb[0].mxu0
    %v3934 = vadd.f32 %v3566, %v3933
    %v3935 = vpop.f32.mrb[0].mxu0
    %3936 = vmatprep.mubr.bf16.mxu0 0
    %3937 = vmatmul.mubr.bf16.gmra.mrb[0].mxu0 %v3517
    %v3938 = vpop.f32.mrb[0].mxu0
    %v3939 = vadd.f32 %v3566, %v3938
    %v3940 = vpop.f32.mrb[0].mxu0
    %v3941 = vpop.f32.mrb[0].mxu0
    %v3942 = vadd.f32 %v3566, %v3941
    %v3943 = vpop.f32.mrb[0].mxu0
    %3944 = vmatprep.mubr.bf16.mxu0 0
    %3945 = vmatmul.mubr.bf16.gmra.mrb[0].mxu0 %v3518
    %v3946 = vpop.f32.mrb[0].mxu0
    %v3947 = vadd.f32 %v3566, %v3946
    %v3948 = vpop.f32.mrb[0].mxu0
    %v3949 = vpop.f32.mrb[0].mxu0
    %v3950 = vadd.f32 %v3566, %v3949
    %v3951 = vpop.f32.mrb[0].mxu0
    %3952 = vmatprep.mubr.bf16.mxu0 0
    %3953 = vmatmul.mubr.bf16.gmra.mrb[0].mxu0 %v3519
    %v3954 = vpop.f32.mrb[0].mxu0
    %v3955 = vadd.f32 %v3566, %v3954
    %v3956 = vpop.f32.mrb[0].mxu0
    %v3957 = vpop.f32.mrb[0].mxu0
    %v3958 = vadd.f32 %v3566, %v3957
    %v3959 = vpop.f32.mrb[0].mxu0
    %3960 = vmatprep.mubr.bf16.mxu0 0
    %3961 = vmatmul.mubr.bf16.gmra.mrb[0].mxu0 %v3520
    %v3962 = vpop.f32.mrb[0].mxu0
    %v3963 = vadd.f32 %v3566, %v3962
    %v3964 = vpop.f32.mrb[0].mxu0
    %v3965 = vpop.f32.mrb[0].mxu0
    %v3966 = vadd.f32 %v3566, %v3965
    %v3967 = vpop.f32.mrb[0].mxu0
    %3968 = vmatprep.mubr.bf16.mxu0 0
    %3969 = vmatmul.mubr.bf16.gmra.mrb[0].mxu0 %v3521
    %v3970 = vpop.f32.mrb[0].mxu0
    %v3971 = vadd.f32 %v3566, %v3970
    %v3972 = vpop.f32.mrb[0].mxu0
    %v3973 = vpop.f32.mrb[0].mxu0
    %v3974 = vadd.f32 %v3566, %v3973
    %v3975 = vpop.f32.mrb[0].mxu0
    %3976 = vmatprep.mubr.bf16.mxu0 0
    %3977 = vmatmul.mubr.bf16.gmra.mrb[0].mxu0 %v3522
    %v3978 = vpop.f32.mrb[0].mxu0
    %v3979 = vadd.f32 %v3566, %v3978
    %v3980 = vpop.f32.mrb[0].mxu0
    %v3981 = vpop.f32.mrb[0].mxu0
    %v3982 = vadd.f32 %v3566, %v3981
    %v3983 = vpop.f32.mrb[0].mxu0
    %3984 = vmatprep.mubr.bf16.mxu0 0
    %3985 = vmatmul.mubr.bf16.gmra.mrb[0].mxu0 %v3523
    %v3986 = vpop.f32.mrb[0].mxu0
    %v3987 = vadd.f32 %v3566, %v3986
    %v3988 = vpop.f32.mrb[0].mxu0
    %v3989 = vpop.f32.mrb[0].mxu0
    %v3990 = vadd.f32 %v3566, %v3989
    %v3991 = vpop.f32.mrb[0].mxu0
    %3992 = vmatprep.mubr.bf16.mxu0 0
    %3993 = vmatmul.mubr.bf16.gmra.mrb[0].mxu0 %v3524
    %v3994 = vpop.f32.mrb[0].mxu0
    %v3995 = vadd.f32 %v3566, %v3994
    %v3996 = vpop.f32.mrb[0].mxu0
    %v3997 = vpop.f32.mrb[0].mxu0
    %v3998 = vadd.f32 %v3566, %v3997
    %v3999 = vpop.f32.mrb[0].mxu0
    %4000 = vmatprep.mubr.bf16.mxu0 0
    %4001 = vmatmul.mubr.bf16.gmra.mrb[0].mxu0 %v3525
    %v4002 = vpop.f32.mrb[0].mxu0
    %v4003 = vadd.f32 %v3566, %v4002
    %v4004 = vpop.f32.mrb[0].mxu0
    %v4005 = vpop.f32.mrb[0].mxu0
    %v4006 = vadd.f32 %v3566, %v4005
    %v4007 = vpop.f32.mrb[0].mxu0
    %4008 = vmatprep.mubr.bf16.mxu0 0
    %4009 = vmatmul.mubr.bf16.gmra.mrb[0].mxu0 %v3526
    %v4010 = vpop.f32.mrb[0].mxu0
    %v4011 = vadd.f32 %v3566, %v4010
    %v4012 = vpop.f32.mrb[0].mxu0
    %v4013 = vpop.f32.mrb[0].mxu0
    %v4014 = vadd.f32 %v3566, %v4013
    %v4015 = vpop.f32.mrb[0].mxu0
    %4016 = vmatprep.mubr.bf16.mxu0 0
    %4017 = vmatmul.mubr.bf16.gmra.mrb[0].mxu0 %v3527
    %v4018 = vpop.f32.mrb[0].mxu0
    %v4019 = vadd.f32 %v3566, %v4018
    %v4020 = vpop.f32.mrb[0].mxu0
    %v4021 = vpop.f32.mrb[0].mxu0
    %v4022 = vadd.f32 %v3566, %v4021
    %v4023 = vpop.f32.mrb[0].mxu0
    %4024 = vmatprep.mubr.bf16.mxu0 0
    %4025 = vmatmul.mubr.bf16.gmra.mrb[0].mxu0 %v3528
    %v4026 = vpop.f32.mrb[0].mxu0
    %v4027 = vadd.f32 %v3566, %v4026
    %v4028 = vpop.f32.mrb[0].mxu0
    %v4029 = vpop.f32.mrb[0].mxu0
    %v4030 = vadd.f32 %v3566, %v4029
    %v4031 = vpop.f32.mrb[0].mxu0
    %4032 = vmatprep.mubr.bf16.mxu0 0
    %4033 = vmatmul.mubr.bf16.gmra.mrb[0].mxu0 %v3529
    %v4034 = vpop.f32.mrb[0].mxu0
    %v4035 = vadd.f32 %v3566, %v4034
    %v4036 = vpop.f32.mrb[0].mxu0
    %v4037 = vpop.f32.mrb[0].mxu0
    %v4038 = vadd.f32 %v3566, %v4037
    %v4039 = vpop.f32.mrb[0].mxu0
    %4040 = vmatprep.mubr.bf16.mxu0 0
    %4041 = vmatmul.mubr.bf16.gmra.mrb[0].mxu0 %v3530
    %v4042 = vpop.f32.mrb[0].mxu0
    %v4043 = vadd.f32 %v3566, %v4042
    %v4044 = vpop.f32.mrb[0].mxu0
    %v4045 = vpop.f32.mrb[0].mxu0
    %v4046 = vadd.f32 %v3566, %v4045
    %v4047 = vpop.f32.mrb[0].mxu0
    %4048 = vmatprep.mubr.bf16.mxu0 0
    %4049 = vmatmul.mubr.bf16.gmra.mrb[0].mxu0 %v3531
    %v4050 = vpop.f32.mrb[0].mxu0
    %v4051 = vadd.f32 %v3566, %v4050
    %v4052 = vpop.f32.mrb[0].mxu0
    %v4053 = vpop.f32.mrb[0].mxu0
    %v4054 = vadd.f32 %v3566, %v4053
    %v4055 = vpop.f32.mrb[0].mxu0
    %4056 = vmatprep.mubr.bf16.mxu0 0
    %4057 = vmatmul.mubr.bf16.gmra.mrb[0].mxu0 %v3532
    %v4058 = vpop.f32.mrb[0].mxu0
    %v4059 = vadd.f32 %v3566, %v4058
    %v4060 = vpop.f32.mrb[0].mxu0
    %v4061 = vpop.f32.mrb[0].mxu0
    %v4062 = vadd.f32 %v3566, %v4061
    %v4063 = vpop.f32.mrb[0].mxu0
    %4064 = vmatprep.mubr.bf16.mxu0 0
    %4065 = vmatmul.mubr.bf16.gmra.mrb[0].mxu0 %v3533
    %v4066 = vpop.f32.mrb[0].mxu0
    %v4067 = vadd.f32 %v3566, %v4066
    %v4068 = vpop.f32.mrb[0].mxu0
    %v4069 = vpop.f32.mrb[0].mxu0
    %v4070 = vadd.f32 %v3566, %v4069
    %v4071 = vpop.f32.mrb[0].mxu0
    %4072 = vmatprep.mubr.bf16.mxu0 0
    %4073 = vmatmul.mubr.bf16.gmra.mrb[0].mxu0 %v3534
    %v4074 = vpop.f32.mrb[0].mxu0
    %v4075 = vadd.f32 %v3566, %v4074
    %v4076 = vpop.f32.mrb[0].mxu0
    %v4077 = vpop.f32.mrb[0].mxu0
    %v4078 = vadd.f32 %v3566, %v4077
    %v4079 = vpop.f32.mrb[0].mxu0
    %4080 = vmatprep.mubr.bf16.mxu0 0
    %4081 = vmatmul.mubr.bf16.gmra.mrb[0].mxu0 %v3535
    %v4082 = vpop.f32.mrb[0].mxu0
    %v4083 = vadd.f32 %v3566, %v4082
    %v4084 = vpop.f32.mrb[0].mxu0
    %v4085 = vpop.f32.mrb[0].mxu0
    %v4086 = vadd.f32 %v3566, %v4085
    %v4087 = vpop.f32.mrb[0].mxu0
    %4088 = vmatprep.mubr.bf16.mxu0 0
    %4089 = vmatmul.mubr.bf16.gmra.mrb[0].mxu0 %v3536
    %v4090 = vpop.f32.mrb[0].mxu0
    %v4091 = vadd.f32 %v3566, %v4090
    %v4092 = vpop.f32.mrb[0].mxu0
    %v4093 = vpop.f32.mrb[0].mxu0
    %v4094 = vadd.f32 %v3566, %v4093
    %v4095 = vpop.f32.mrb[0].mxu0
    %4096 = vmatprep.mubr.bf16.mxu0 0
    %4097 = vmatmul.mubr.bf16.gmra.mrb[0].mxu0 %v3537
    %v4098 = vpop.f32.mrb[0].mxu0
    %v4099 = vadd.f32 %v3566, %v4098
    %v4100 = vpop.f32.mrb[0].mxu0
    %v4101 = vpop.f32.mrb[0].mxu0
    %v4102 = vadd.f32 %v3566, %v4101
    %v4103 = vpop.f32.mrb[0].mxu0
    %4104 = vmatprep.mubr.bf16.mxu0 0
    %4105 = vmatmul.mubr.bf16.gmra.mrb[0].mxu0 %v3538
    %v4106 = vpop.f32.mrb[0].mxu0
    %v4107 = vadd.f32 %v3566, %v4106
    %v4108 = vpop.f32.mrb[0].mxu0
    %v4109 = vpop.f32.mrb[0].mxu0
    %v4110 = vadd.f32 %v3566, %v4109
    %v4111 = vpop.f32.mrb[0].mxu0
    %4112 = vmatprep.mubr.bf16.mxu0 0
    %4113 = vmatmul.mubr.bf16.gmra.mrb[0].mxu0 %v3539
    %v4114 = vpop.f32.mrb[0].mxu0
    %v4115 = vadd.f32 %v3566, %v4114
    %v4116 = vpop.f32.mrb[0].mxu0
    %v4117 = vpop.f32.mrb[0].mxu0
    %v4118 = vadd.f32 %v3566, %v4117
    %v4119 = vpop.f32.mrb[0].mxu0
    %4120 = vmatprep.mubr.bf16.mxu0 0
    %4121 = vmatmul.mubr.bf16.gmra.mrb[0].mxu0 %v3540
    %v4122 = vpop.f32.mrb[0].mxu0
    %v4123 = vadd.f32 %v3566, %v4122
    %v4124 = vpop.f32.mrb[0].mxu0
    %v4125 = vpop.f32.mrb[0].mxu0
    %v4126 = vadd.f32 %v3566, %v4125
    %v4127 = vpop.f32.mrb[0].mxu0
    %4128 = vmatprep.mubr.bf16.mxu0 0
    %4129 = vmatmul.mubr.bf16.gmra.mrb[0].mxu0 %v3541
    %v4130 = vpop.f32.mrb[0].mxu0
    %v4131 = vadd.f32 %v3566, %v4130
    %v4132 = vpop.f32.mrb[0].mxu0
    %v4133 = vpop.f32.mrb[0].mxu0
    %v4134 = vadd.f32 %v3566, %v4133
    %v4135 = vpop.f32.mrb[0].mxu0
    %4136 = vmatprep.mubr.bf16.mxu0 0
    %4137 = vmatmul.mubr.bf16.gmra.mrb[0].mxu0 %v3542
    %v4138 = vpop.f32.mrb[0].mxu0
    %v4139 = vadd.f32 %v3566, %v4138
    %v4140 = vpop.f32.mrb[0].mxu0
    %v4141 = vpop.f32.mrb[0].mxu0
    %v4142 = vadd.f32 %v3566, %v4141
    %v4143 = vpop.f32.mrb[0].mxu0
    %4144 = vmatprep.mubr.bf16.mxu0 0
    %4145 = vmatmul.mubr.bf16.gmra.mrb[0].mxu0 %v3543
    %v4146 = vpop.f32.mrb[0].mxu0
    %v4147 = vadd.f32 %v3566, %v4146
    %v4148 = vpop.f32.mrb[0].mxu0
    %v4149 = vpop.f32.mrb[0].mxu0
    %v4150 = vadd.f32 %v3566, %v4149
    %v4151 = vpop.f32.mrb[0].mxu0
    %4152 = vmatprep.mubr.bf16.mxu0 0
    %4153 = vmatmul.mubr.bf16.gmra.mrb[0].mxu0 %v3544
    %v4154 = vpop.f32.mrb[0].mxu0
    %v4155 = vadd.f32 %v3566, %v4154
    %v4156 = vpop.f32.mrb[0].mxu0
    %v4157 = vpop.f32.mrb[0].mxu0
    %v4158 = vadd.f32 %v3566, %v4157
    %v4159 = vpop.f32.mrb[0].mxu0
    %4160 = vdwg.mxu0
    %vm4161 = vcmp.gt.f32.partialorder %v3651, 0.0
    %vm4162 = vcmp.gt.f32.partialorder %v3654, 0.0
    %vm4163 = vcmp.gt.f32.partialorder %v3659, 0.0
    %vm4164 = vcmp.gt.f32.partialorder %v3662, 0.0
    %vm4165 = vcmp.gt.f32.partialorder %v3667, 0.0
    %vm4166 = vcmp.gt.f32.partialorder %v3670, 0.0
    %vm4167 = vcmp.gt.f32.partialorder %v3675, 0.0
    %vm4168 = vcmp.gt.f32.partialorder %v3678, 0.0
    %vm4169 = vcmp.gt.f32.partialorder %v3683, 0.0
    %vm4170 = vcmp.gt.f32.partialorder %v3686, 0.0
    %vm4171 = vcmp.gt.f32.partialorder %v3691, 0.0
    %vm4172 = vcmp.gt.f32.partialorder %v3694, 0.0
    %vm4173 = vcmp.gt.f32.partialorder %v3699, 0.0
    %vm4174 = vcmp.gt.f32.partialorder %v3702, 0.0
    %vm4175 = vcmp.gt.f32.partialorder %v3707, 0.0
    %vm4176 = vcmp.gt.f32.partialorder %v3710, 0.0
    %vm4177 = vcmp.gt.f32.partialorder %v3715, 0.0
    %vm4178 = vcmp.gt.f32.partialorder %v3718, 0.0
    %vm4179 = vcmp.gt.f32.partialorder %v3723, 0.0
    %vm4180 = vcmp.gt.f32.partialorder %v3726, 0.0
    %vm4181 = vcmp.gt.f32.partialorder %v3731, 0.0
    %vm4182 = vcmp.gt.f32.partialorder %v3734, 0.0
    %vm4183 = vcmp.gt.f32.partialorder %v3739, 0.0
    %vm4184 = vcmp.gt.f32.partialorder %v3742, 0.0
    %vm4185 = vcmp.gt.f32.partialorder %v3747, 0.0
    %vm4186 = vcmp.gt.f32.partialorder %v3750, 0.0
    %vm4187 = vcmp.gt.f32.partialorder %v3755, 0.0
    %vm4188 = vcmp.gt.f32.partialorder %v3758, 0.0
    %vm4189 = vcmp.gt.f32.partialorder %v3763, 0.0
    %vm4190 = vcmp.gt.f32.partialorder %v3766, 0.0
    %vm4191 = vcmp.gt.f32.partialorder %v3771, 0.0
    %vm4192 = vcmp.gt.f32.partialorder %v3774, 0.0
    %vm4193 = vcmp.gt.f32.partialorder %v3779, 0.0
    %vm4194 = vcmp.gt.f32.partialorder %v3782, 0.0
    %vm4195 = vcmp.gt.f32.partialorder %v3787, 0.0
    %vm4196 = vcmp.gt.f32.partialorder %v3790, 0.0
    %vm4197 = vcmp.gt.f32.partialorder %v3795, 0.0
    %vm4198 = vcmp.gt.f32.partialorder %v3798, 0.0
    %vm4199 = vcmp.gt.f32.partialorder %v3803, 0.0
    %vm4200 = vcmp.gt.f32.partialorder %v3806, 0.0
    %vm4201 = vcmp.gt.f32.partialorder %v3811, 0.0
    %vm4202 = vcmp.gt.f32.partialorder %v3814, 0.0
    %vm4203 = vcmp.gt.f32.partialorder %v3819, 0.0
    %vm4204 = vcmp.gt.f32.partialorder %v3822, 0.0
    %vm4205 = vcmp.gt.f32.partialorder %v3827, 0.0
    %vm4206 = vcmp.gt.f32.partialorder %v3830, 0.0
    %vm4207 = vcmp.gt.f32.partialorder %v3835, 0.0
    %vm4208 = vcmp.gt.f32.partialorder %v3838, 0.0
    %vm4209 = vcmp.gt.f32.partialorder %v3843, 0.0
    %vm4210 = vcmp.gt.f32.partialorder %v3846, 0.0
    %vm4211 = vcmp.gt.f32.partialorder %v3851, 0.0
    %vm4212 = vcmp.gt.f32.partialorder %v3854, 0.0
    %vm4213 = vcmp.gt.f32.partialorder %v3859, 0.0
    %vm4214 = vcmp.gt.f32.partialorder %v3862, 0.0
    %vm4215 = vcmp.gt.f32.partialorder %v3867, 0.0
    %vm4216 = vcmp.gt.f32.partialorder %v3870, 0.0
    %vm4217 = vcmp.gt.f32.partialorder %v3875, 0.0
    %vm4218 = vcmp.gt.f32.partialorder %v3878, 0.0
    %vm4219 = vcmp.gt.f32.partialorder %v3883, 0.0
    %vm4220 = vcmp.gt.f32.partialorder %v3886, 0.0
    %vm4221 = vcmp.gt.f32.partialorder %v3891, 0.0
    %vm4222 = vcmp.gt.f32.partialorder %v3894, 0.0
    %vm4223 = vcmp.gt.f32.partialorder %v3899, 0.0
    %vm4224 = vcmp.gt.f32.partialorder %v3902, 0.0
    %vm4225 = vcmp.gt.f32.partialorder %v3907, 0.0
    %vm4226 = vcmp.gt.f32.partialorder %v3910, 0.0
    %vm4227 = vcmp.gt.f32.partialorder %v3915, 0.0
    %vm4228 = vcmp.gt.f32.partialorder %v3918, 0.0
    %vm4229 = vcmp.gt.f32.partialorder %v3923, 0.0
    %vm4230 = vcmp.gt.f32.partialorder %v3926, 0.0
    %vm4231 = vcmp.gt.f32.partialorder %v3931, 0.0
    %vm4232 = vcmp.gt.f32.partialorder %v3934, 0.0
    %vm4233 = vcmp.gt.f32.partialorder %v3939, 0.0
    %vm4234 = vcmp.gt.f32.partialorder %v3942, 0.0
    %vm4235 = vcmp.gt.f32.partialorder %v3947, 0.0
    %vm4236 = vcmp.gt.f32.partialorder %v3950, 0.0
    %vm4237 = vcmp.gt.f32.partialorder %v3955, 0.0
    %vm4238 = vcmp.gt.f32.partialorder %v3958, 0.0
    %vm4239 = vcmp.gt.f32.partialorder %v3963, 0.0
    %vm4240 = vcmp.gt.f32.partialorder %v3966, 0.0
    %vm4241 = vcmp.gt.f32.partialorder %v3971, 0.0
    %vm4242 = vcmp.gt.f32.partialorder %v3974, 0.0
    %vm4243 = vcmp.gt.f32.partialorder %v3979, 0.0
    %vm4244 = vcmp.gt.f32.partialorder %v3982, 0.0
    %vm4245 = vcmp.gt.f32.partialorder %v3987, 0.0
    %vm4246 = vcmp.gt.f32.partialorder %v3990, 0.0
    %vm4247 = vcmp.gt.f32.partialorder %v3995, 0.0
    %vm4248 = vcmp.gt.f32.partialorder %v3998, 0.0
    %vm4249 = vcmp.gt.f32.partialorder %v4003, 0.0
    %vm4250 = vcmp.gt.f32.partialorder %v4006, 0.0
    %vm4251 = vcmp.gt.f32.partialorder %v4011, 0.0
    %vm4252 = vcmp.gt.f32.partialorder %v4014, 0.0
    %vm4253 = vcmp.gt.f32.partialorder %v4019, 0.0
    %vm4254 = vcmp.gt.f32.partialorder %v4022, 0.0
    %vm4255 = vcmp.gt.f32.partialorder %v4027, 0.0
    %vm4256 = vcmp.gt.f32.partialorder %v4030, 0.0
    %vm4257 = vcmp.gt.f32.partialorder %v4035, 0.0
    %vm4258 = vcmp.gt.f32.partialorder %v4038, 0.0
    %vm4259 = vcmp.gt.f32.partialorder %v4043, 0.0
    %vm4260 = vcmp.gt.f32.partialorder %v4046, 0.0
    %vm4261 = vcmp.gt.f32.partialorder %v4051, 0.0
    %vm4262 = vcmp.gt.f32.partialorder %v4054, 0.0
    %vm4263 = vcmp.gt.f32.partialorder %v4059, 0.0
    %vm4264 = vcmp.gt.f32.partialorder %v4062, 0.0
    %vm4265 = vcmp.gt.f32.partialorder %v4067, 0.0
    %vm4266 = vcmp.gt.f32.partialorder %v4070, 0.0
    %vm4267 = vcmp.gt.f32.partialorder %v4075, 0.0
    %vm4268 = vcmp.gt.f32.partialorder %v4078, 0.0
    %vm4269 = vcmp.gt.f32.partialorder %v4083, 0.0
    %vm4270 = vcmp.gt.f32.partialorder %v4086, 0.0
    %vm4271 = vcmp.gt.f32.partialorder %v4091, 0.0
    %vm4272 = vcmp.gt.f32.partialorder %v4094, 0.0
    %vm4273 = vcmp.gt.f32.partialorder %v4099, 0.0
    %vm4274 = vcmp.gt.f32.partialorder %v4102, 0.0
    %vm4275 = vcmp.gt.f32.partialorder %v4107, 0.0
    %vm4276 = vcmp.gt.f32.partialorder %v4110, 0.0
    %vm4277 = vcmp.gt.f32.partialorder %v4115, 0.0
    %vm4278 = vcmp.gt.f32.partialorder %v4118, 0.0
    %vm4279 = vcmp.gt.f32.partialorder %v4123, 0.0
    %vm4280 = vcmp.gt.f32.partialorder %v4126, 0.0
    %vm4281 = vcmp.gt.f32.partialorder %v4131, 0.0
    %vm4282 = vcmp.gt.f32.partialorder %v4134, 0.0
    %vm4283 = vcmp.gt.f32.partialorder %v4139, 0.0
    %vm4284 = vcmp.gt.f32.partialorder %v4142, 0.0
    %vm4285 = vcmp.gt.f32.partialorder %v4147, 0.0
    %vm4286 = vcmp.gt.f32.partialorder %v4150, 0.0
    %vm4287 = vcmp.gt.f32.partialorder %v4155, 0.0
    %vm4288 = vcmp.gt.f32.partialorder %v4158, 0.0
    %v4289 = vmin.f32 %v3651, 0.0
    %v4290 = vmin.f32 %v3654, 0.0
    %v4291 = vmin.f32 %v3659, 0.0
    %v4292 = vmin.f32 %v3662, 0.0
    %v4293 = vmin.f32 %v3667, 0.0
    %v4294 = vmin.f32 %v3670, 0.0
    %v4295 = vmin.f32 %v3675, 0.0
    %v4296 = vmin.f32 %v3678, 0.0
    %v4297 = vmin.f32 %v3683, 0.0
    %v4298 = vmin.f32 %v3686, 0.0
    %v4299 = vmin.f32 %v3691, 0.0
    %v4300 = vmin.f32 %v3694, 0.0
    %v4301 = vmin.f32 %v3699, 0.0
    %v4302 = vmin.f32 %v3702, 0.0
    %v4303 = vmin.f32 %v3707, 0.0
    %v4304 = vmin.f32 %v3710, 0.0
    %v4305 = vmin.f32 %v3715, 0.0
    %v4306 = vmin.f32 %v3718, 0.0
    %v4307 = vmin.f32 %v3723, 0.0
    %v4308 = vmin.f32 %v3726, 0.0
    %v4309 = vmin.f32 %v3731, 0.0
    %v4310 = vmin.f32 %v3734, 0.0
    %v4311 = vmin.f32 %v3739, 0.0
    %v4312 = vmin.f32 %v3742, 0.0
    %v4313 = vmin.f32 %v3747, 0.0
    %v4314 = vmin.f32 %v3750, 0.0
    %v4315 = vmin.f32 %v3755, 0.0
    %v4316 = vmin.f32 %v3758, 0.0
    %v4317 = vmin.f32 %v3763, 0.0
    %v4318 = vmin.f32 %v3766, 0.0
    %v4319 = vmin.f32 %v3771, 0.0
    %v4320 = vmin.f32 %v3774, 0.0
    %v4321 = vmin.f32 %v3779, 0.0
    %v4322 = vmin.f32 %v3782, 0.0
    %v4323 = vmin.f32 %v3787, 0.0
    %v4324 = vmin.f32 %v3790, 0.0
    %v4325 = vmin.f32 %v3795, 0.0
    %v4326 = vmin.f32 %v3798, 0.0
    %v4327 = vmin.f32 %v3803, 0.0
    %v4328 = vmin.f32 %v3806, 0.0
    %v4329 = vmin.f32 %v3811, 0.0
    %v4330 = vmin.f32 %v3814, 0.0
    %v4331 = vmin.f32 %v3819, 0.0
    %v4332 = vmin.f32 %v3822, 0.0
    %v4333 = vmin.f32 %v3827, 0.0
    %v4334 = vmin.f32 %v3830, 0.0
    %v4335 = vmin.f32 %v3835, 0.0
    %v4336 = vmin.f32 %v3838, 0.0
    %v4337 = vmin.f32 %v3843, 0.0
    %v4338 = vmin.f32 %v3846, 0.0
    %v4339 = vmin.f32 %v3851, 0.0
    %v4340 = vmin.f32 %v3854, 0.0
    %v4341 = vmin.f32 %v3859, 0.0
    %v4342 = vmin.f32 %v3862, 0.0
    %v4343 = vmin.f32 %v3867, 0.0
    %v4344 = vmin.f32 %v3870, 0.0
    %v4345 = vmin.f32 %v3875, 0.0
    %v4346 = vmin.f32 %v3878, 0.0
    %v4347 = vmin.f32 %v3883, 0.0
    %v4348 = vmin.f32 %v3886, 0.0
    %v4349 = vmin.f32 %v3891, 0.0
    %v4350 = vmin.f32 %v3894, 0.0
    %v4351 = vmin.f32 %v3899, 0.0
    %v4352 = vmin.f32 %v3902, 0.0
    %v4353 = vmin.f32 %v3907, 0.0
    %v4354 = vmin.f32 %v3910, 0.0
    %v4355 = vmin.f32 %v3915, 0.0
    %v4356 = vmin.f32 %v3918, 0.0
    %v4357 = vmin.f32 %v3923, 0.0
    %v4358 = vmin.f32 %v3926, 0.0
    %v4359 = vmin.f32 %v3931, 0.0
    %v4360 = vmin.f32 %v3934, 0.0
    %v4361 = vmin.f32 %v3939, 0.0
    %v4362 = vmin.f32 %v3942, 0.0
    %v4363 = vmin.f32 %v3947, 0.0
    %v4364 = vmin.f32 %v3950, 0.0
    %v4365 = vmin.f32 %v3955, 0.0
    %v4366 = vmin.f32 %v3958, 0.0
    %v4367 = vmin.f32 %v3963, 0.0
    %v4368 = vmin.f32 %v3966, 0.0
    %v4369 = vmin.f32 %v3971, 0.0
    %v4370 = vmin.f32 %v3974, 0.0
    %v4371 = vmin.f32 %v3979, 0.0
    %v4372 = vmin.f32 %v3982, 0.0
    %v4373 = vmin.f32 %v3987, 0.0
    %v4374 = vmin.f32 %v3990, 0.0
    %v4375 = vmin.f32 %v3995, 0.0
    %v4376 = vmin.f32 %v3998, 0.0
    %v4377 = vmin.f32 %v4003, 0.0
    %v4378 = vmin.f32 %v4006, 0.0
    %v4379 = vmin.f32 %v4011, 0.0
    %v4380 = vmin.f32 %v4014, 0.0
    %v4381 = vmin.f32 %v4019, 0.0
    %v4382 = vmin.f32 %v4022, 0.0
    %v4383 = vmin.f32 %v4027, 0.0
    %v4384 = vmin.f32 %v4030, 0.0
    %v4385 = vmin.f32 %v4035, 0.0
    %v4386 = vmin.f32 %v4038, 0.0
    %v4387 = vmin.f32 %v4043, 0.0
    %v4388 = vmin.f32 %v4046, 0.0
    %v4389 = vmin.f32 %v4051, 0.0
    %v4390 = vmin.f32 %v4054, 0.0
    %v4391 = vmin.f32 %v4059, 0.0
    %v4392 = vmin.f32 %v4062, 0.0
    %v4393 = vmin.f32 %v4067, 0.0
    %v4394 = vmin.f32 %v4070, 0.0
    %v4395 = vmin.f32 %v4075, 0.0
    %v4396 = vmin.f32 %v4078, 0.0
    %v4397 = vmin.f32 %v4083, 0.0
    %v4398 = vmin.f32 %v4086, 0.0
    %v4399 = vmin.f32 %v4091, 0.0
    %v4400 = vmin.f32 %v4094, 0.0
    %v4401 = vmin.f32 %v4099, 0.0
    %v4402 = vmin.f32 %v4102, 0.0
    %v4403 = vmin.f32 %v4107, 0.0
    %v4404 = vmin.f32 %v4110, 0.0
    %v4405 = vmin.f32 %v4115, 0.0
    %v4406 = vmin.f32 %v4118, 0.0
    %v4407 = vmin.f32 %v4123, 0.0
    %v4408 = vmin.f32 %v4126, 0.0
    %v4409 = vmin.f32 %v4131, 0.0
    %v4410 = vmin.f32 %v4134, 0.0
    %v4411 = vmin.f32 %v4139, 0.0
    %v4412 = vmin.f32 %v4142, 0.0
    %v4413 = vmin.f32 %v4147, 0.0
    %v4414 = vmin.f32 %v4150, 0.0
    %v4415 = vmin.f32 %v4155, 0.0
    %v4416 = vmin.f32 %v4158, 0.0
    %v4417 = vmul.f32 %v4289, 1.442695
    %v4418 = vpow.pop %v4417
    %v4419 = vmul.f32 %v4290, 1.442695
    %v4420 = vpow.pop %v4419
    %v4421 = vmul.f32 %v4291, 1.442695
    %v4422 = vpow.pop %v4421
    %v4423 = vmul.f32 %v4292, 1.442695
    %v4424 = vpow.pop %v4423
    %v4425 = vmul.f32 %v4293, 1.442695
    %v4426 = vpow.pop %v4425
    %v4427 = vmul.f32 %v4294, 1.442695
    %v4428 = vpow.pop %v4427
    %v4429 = vmul.f32 %v4295, 1.442695
    %v4430 = vpow.pop %v4429
    %v4431 = vmul.f32 %v4296, 1.442695
    %v4432 = vpow.pop %v4431
    %v4433 = vmul.f32 %v4297, 1.442695
    %v4434 = vpow.pop %v4433
    %v4435 = vmul.f32 %v4298, 1.442695
    %v4436 = vpow.pop %v4435
    %v4437 = vmul.f32 %v4299, 1.442695
    %v4438 = vpow.pop %v4437
    %v4439 = vmul.f32 %v4300, 1.442695
    %v4440 = vpow.pop %v4439
    %v4441 = vmul.f32 %v4301, 1.442695
    %v4442 = vpow.pop %v4441
    %v4443 = vmul.f32 %v4302, 1.442695
    %v4444 = vpow.pop %v4443
    %v4445 = vmul.f32 %v4303, 1.442695
    %v4446 = vpow.pop %v4445
    %v4447 = vmul.f32 %v4304, 1.442695
    %v4448 = vpow.pop %v4447
    %v4449 = vmul.f32 %v4305, 1.442695
    %v4450 = vpow.pop %v4449
    %v4451 = vmul.f32 %v4306, 1.442695
    %v4452 = vpow.pop %v4451
    %v4453 = vmul.f32 %v4307, 1.442695
    %v4454 = vpow.pop %v4453
    %v4455 = vmul.f32 %v4308, 1.442695
    %v4456 = vpow.pop %v4455
    %v4457 = vmul.f32 %v4309, 1.442695
    %v4458 = vpow.pop %v4457
    %v4459 = vmul.f32 %v4310, 1.442695
    %v4460 = vpow.pop %v4459
    %v4461 = vmul.f32 %v4311, 1.442695
    %v4462 = vpow.pop %v4461
    %v4463 = vmul.f32 %v4312, 1.442695
    %v4464 = vpow.pop %v4463
    %v4465 = vmul.f32 %v4313, 1.442695
    %v4466 = vpow.pop %v4465
    %v4467 = vmul.f32 %v4314, 1.442695
    %v4468 = vpow.pop %v4467
    %v4469 = vmul.f32 %v4315, 1.442695
    %v4470 = vpow.pop %v4469
    %v4471 = vmul.f32 %v4316, 1.442695
    %v4472 = vpow.pop %v4471
    %v4473 = vmul.f32 %v4317, 1.442695
    %v4474 = vpow.pop %v4473
    %v4475 = vmul.f32 %v4318, 1.442695
    %v4476 = vpow.pop %v4475
    %v4477 = vmul.f32 %v4319, 1.442695
    %v4478 = vpow.pop %v4477
    %v4479 = vmul.f32 %v4320, 1.442695
    %v4480 = vpow.pop %v4479
    %v4481 = vmul.f32 %v4321, 1.442695
    %v4482 = vpow.pop %v4481
    %v4483 = vmul.f32 %v4322, 1.442695
    %v4484 = vpow.pop %v4483
    %v4485 = vmul.f32 %v4323, 1.442695
    %v4486 = vpow.pop %v4485
    %v4487 = vmul.f32 %v4324, 1.442695
    %v4488 = vpow.pop %v4487
    %v4489 = vmul.f32 %v4325, 1.442695
    %v4490 = vpow.pop %v4489
    %v4491 = vmul.f32 %v4326, 1.442695
    %v4492 = vpow.pop %v4491
    %v4493 = vmul.f32 %v4327, 1.442695
    %v4494 = vpow.pop %v4493
    %v4495 = vmul.f32 %v4328, 1.442695
    %v4496 = vpow.pop %v4495
    %v4497 = vmul.f32 %v4329, 1.442695
    %v4498 = vpow.pop %v4497
    %v4499 = vmul.f32 %v4330, 1.442695
    %v4500 = vpow.pop %v4499
    %v4501 = vmul.f32 %v4331, 1.442695
    %v4502 = vpow.pop %v4501
    %v4503 = vmul.f32 %v4332, 1.442695
    %v4504 = vpow.pop %v4503
    %v4505 = vmul.f32 %v4333, 1.442695
    %v4506 = vpow.pop %v4505
    %v4507 = vmul.f32 %v4334, 1.442695
    %v4508 = vpow.pop %v4507
    %v4509 = vmul.f32 %v4335, 1.442695
    %v4510 = vpow.pop %v4509
    %v4511 = vmul.f32 %v4336, 1.442695
    %v4512 = vpow.pop %v4511
    %v4513 = vmul.f32 %v4337, 1.442695
    %v4514 = vpow.pop %v4513
    %v4515 = vmul.f32 %v4338, 1.442695
    %v4516 = vpow.pop %v4515
    %v4517 = vmul.f32 %v4339, 1.442695
    %v4518 = vpow.pop %v4517
    %v4519 = vmul.f32 %v4340, 1.442695
    %v4520 = vpow.pop %v4519
    %v4521 = vmul.f32 %v4341, 1.442695
    %v4522 = vpow.pop %v4521
    %v4523 = vmul.f32 %v4342, 1.442695
    %v4524 = vpow.pop %v4523
    %v4525 = vmul.f32 %v4343, 1.442695
    %v4526 = vpow.pop %v4525
    %v4527 = vmul.f32 %v4344, 1.442695
    %v4528 = vpow.pop %v4527
    %v4529 = vmul.f32 %v4345, 1.442695
    %v4530 = vpow.pop %v4529
    %v4531 = vmul.f32 %v4346, 1.442695
    %v4532 = vpow.pop %v4531
    %v4533 = vmul.f32 %v4347, 1.442695
    %v4534 = vpow.pop %v4533
    %v4535 = vmul.f32 %v4348, 1.442695
    %v4536 = vpow.pop %v4535
    %v4537 = vmul.f32 %v4349, 1.442695
    %v4538 = vpow.pop %v4537
    %v4539 = vmul.f32 %v4350, 1.442695
    %v4540 = vpow.pop %v4539
    %v4541 = vmul.f32 %v4351, 1.442695
    %v4542 = vpow.pop %v4541
    %v4543 = vmul.f32 %v4352, 1.442695
    %v4544 = vpow.pop %v4543
    %v4545 = vmul.f32 %v4353, 1.442695
    %v4546 = vpow.pop %v4545
    %v4547 = vmul.f32 %v4354, 1.442695
    %v4548 = vpow.pop %v4547
    %v4549 = vmul.f32 %v4355, 1.442695
    %v4550 = vpow.pop %v4549
    %v4551 = vmul.f32 %v4356, 1.442695
    %v4552 = vpow.pop %v4551
    %v4553 = vmul.f32 %v4357, 1.442695
    %v4554 = vpow.pop %v4553
    %v4555 = vmul.f32 %v4358, 1.442695
    %v4556 = vpow.pop %v4555
    %v4557 = vmul.f32 %v4359, 1.442695
    %v4558 = vpow.pop %v4557
    %v4559 = vmul.f32 %v4360, 1.442695
    %v4560 = vpow.pop %v4559
    %v4561 = vmul.f32 %v4361, 1.442695
    %v4562 = vpow.pop %v4561
    %v4563 = vmul.f32 %v4362, 1.442695
    %v4564 = vpow.pop %v4563
    %v4565 = vmul.f32 %v4363, 1.442695
    %v4566 = vpow.pop %v4565
    %v4567 = vmul.f32 %v4364, 1.442695
    %v4568 = vpow.pop %v4567
    %v4569 = vmul.f32 %v4365, 1.442695
    %v4570 = vpow.pop %v4569
    %v4571 = vmul.f32 %v4366, 1.442695
    %v4572 = vpow.pop %v4571
    %v4573 = vmul.f32 %v4367, 1.442695
    %v4574 = vpow.pop %v4573
    %v4575 = vmul.f32 %v4368, 1.442695
    %v4576 = vpow.pop %v4575
    %v4577 = vmul.f32 %v4369, 1.442695
    %v4578 = vpow.pop %v4577
    %v4579 = vmul.f32 %v4370, 1.442695
    %v4580 = vpow.pop %v4579
    %v4581 = vmul.f32 %v4371, 1.442695
    %v4582 = vpow.pop %v4581
    %v4583 = vmul.f32 %v4372, 1.442695
    %v4584 = vpow.pop %v4583
    %v4585 = vmul.f32 %v4373, 1.442695
    %v4586 = vpow.pop %v4585
    %v4587 = vmul.f32 %v4374, 1.442695
    %v4588 = vpow.pop %v4587
    %v4589 = vmul.f32 %v4375, 1.442695
    %v4590 = vpow.pop %v4589
    %v4591 = vmul.f32 %v4376, 1.442695
    %v4592 = vpow.pop %v4591
    %v4593 = vmul.f32 %v4377, 1.442695
    %v4594 = vpow.pop %v4593
    %v4595 = vmul.f32 %v4378, 1.442695
    %v4596 = vpow.pop %v4595
    %v4597 = vmul.f32 %v4379, 1.442695
    %v4598 = vpow.pop %v4597
    %v4599 = vmul.f32 %v4380, 1.442695
    %v4600 = vpow.pop %v4599
    %v4601 = vmul.f32 %v4381, 1.442695
    %v4602 = vpow.pop %v4601
    %v4603 = vmul.f32 %v4382, 1.442695
    %v4604 = vpow.pop %v4603
    %v4605 = vmul.f32 %v4383, 1.442695
    %v4606 = vpow.pop %v4605
    %v4607 = vmul.f32 %v4384, 1.442695
    %v4608 = vpow.pop %v4607
    %v4609 = vmul.f32 %v4385, 1.442695
    %v4610 = vpow.pop %v4609
    %v4611 = vmul.f32 %v4386, 1.442695
    %v4612 = vpow.pop %v4611
    %v4613 = vmul.f32 %v4387, 1.442695
    %v4614 = vpow.pop %v4613
    %v4615 = vmul.f32 %v4388, 1.442695
    %v4616 = vpow.pop %v4615
    %v4617 = vmul.f32 %v4389, 1.442695
    %v4618 = vpow.pop %v4617
    %v4619 = vmul.f32 %v4390, 1.442695
    %v4620 = vpow.pop %v4619
    %v4621 = vmul.f32 %v4391, 1.442695
    %v4622 = vpow.pop %v4621
    %v4623 = vmul.f32 %v4392, 1.442695
    %v4624 = vpow.pop %v4623
    %v4625 = vmul.f32 %v4393, 1.442695
    %v4626 = vpow.pop %v4625
    %v4627 = vmul.f32 %v4394, 1.442695
    %v4628 = vpow.pop %v4627
    %v4629 = vmul.f32 %v4395, 1.442695
    %v4630 = vpow.pop %v4629
    %v4631 = vmul.f32 %v4396, 1.442695
    %v4632 = vpow.pop %v4631
    %v4633 = vmul.f32 %v4397, 1.442695
    %v4634 = vpow.pop %v4633
    %v4635 = vmul.f32 %v4398, 1.442695
    %v4636 = vpow.pop %v4635
    %v4637 = vmul.f32 %v4399, 1.442695
    %v4638 = vpow.pop %v4637
    %v4639 = vmul.f32 %v4400, 1.442695
    %v4640 = vpow.pop %v4639
    %v4641 = vmul.f32 %v4401, 1.442695
    %v4642 = vpow.pop %v4641
    %v4643 = vmul.f32 %v4402, 1.442695
    %v4644 = vpow.pop %v4643
    %v4645 = vmul.f32 %v4403, 1.442695
    %v4646 = vpow.pop %v4645
    %v4647 = vmul.f32 %v4404, 1.442695
    %v4648 = vpow.pop %v4647
    %v4649 = vmul.f32 %v4405, 1.442695
    %v4650 = vpow.pop %v4649
    %v4651 = vmul.f32 %v4406, 1.442695
    %v4652 = vpow.pop %v4651
    %v4653 = vmul.f32 %v4407, 1.442695
    %v4654 = vpow.pop %v4653
    %v4655 = vmul.f32 %v4408, 1.442695
    %v4656 = vpow.pop %v4655
    %v4657 = vmul.f32 %v4409, 1.442695
    %v4658 = vpow.pop %v4657
    %v4659 = vmul.f32 %v4410, 1.442695
    %v4660 = vpow.pop %v4659
    %v4661 = vmul.f32 %v4411, 1.442695
    %v4662 = vpow.pop %v4661
    %v4663 = vmul.f32 %v4412, 1.442695
    %v4664 = vpow.pop %v4663
    %v4665 = vmul.f32 %v4413, 1.442695
    %v4666 = vpow.pop %v4665
    %v4667 = vmul.f32 %v4414, 1.442695
    %v4668 = vpow.pop %v4667
    %v4669 = vmul.f32 %v4415, 1.442695
    %v4670 = vpow.pop %v4669
    %v4671 = vmul.f32 %v4416, 1.442695
    %v4672 = vpow.pop %v4671
    %v4673 = vsub.f32 %v4418, 1.0
    %v4674 = vsub.f32 %v4420, 1.0
    %v4675 = vsub.f32 %v4422, 1.0
    %v4676 = vsub.f32 %v4424, 1.0
    %v4677 = vsub.f32 %v4426, 1.0
    %v4678 = vsub.f32 %v4428, 1.0
    %v4679 = vsub.f32 %v4430, 1.0
    %v4680 = vsub.f32 %v4432, 1.0
    %v4681 = vsub.f32 %v4434, 1.0
    %v4682 = vsub.f32 %v4436, 1.0
    %v4683 = vsub.f32 %v4438, 1.0
    %v4684 = vsub.f32 %v4440, 1.0
    %v4685 = vsub.f32 %v4442, 1.0
    %v4686 = vsub.f32 %v4444, 1.0
    %v4687 = vsub.f32 %v4446, 1.0
    %v4688 = vsub.f32 %v4448, 1.0
    %v4689 = vsub.f32 %v4450, 1.0
    %v4690 = vsub.f32 %v4452, 1.0
    %v4691 = vsub.f32 %v4454, 1.0
    %v4692 = vsub.f32 %v4456, 1.0
    %v4693 = vsub.f32 %v4458, 1.0
    %v4694 = vsub.f32 %v4460, 1.0
    %v4695 = vsub.f32 %v4462, 1.0
    %v4696 = vsub.f32 %v4464, 1.0
    %v4697 = vsub.f32 %v4466, 1.0
    %v4698 = vsub.f32 %v4468, 1.0
    %v4699 = vsub.f32 %v4470, 1.0
    %v4700 = vsub.f32 %v4472, 1.0
    %v4701 = vsub.f32 %v4474, 1.0
    %v4702 = vsub.f32 %v4476, 1.0
    %v4703 = vsub.f32 %v4478, 1.0
    %v4704 = vsub.f32 %v4480, 1.0
    %v4705 = vsub.f32 %v4482, 1.0
    %v4706 = vsub.f32 %v4484, 1.0
    %v4707 = vsub.f32 %v4486, 1.0
    %v4708 = vsub.f32 %v4488, 1.0
    %v4709 = vsub.f32 %v4490, 1.0
    %v4710 = vsub.f32 %v4492, 1.0
    %v4711 = vsub.f32 %v4494, 1.0
    %v4712 = vsub.f32 %v4496, 1.0
    %v4713 = vsub.f32 %v4498, 1.0
    %v4714 = vsub.f32 %v4500, 1.0
    %v4715 = vsub.f32 %v4502, 1.0
    %v4716 = vsub.f32 %v4504, 1.0
    %v4717 = vsub.f32 %v4506, 1.0
    %v4718 = vsub.f32 %v4508, 1.0
    %v4719 = vsub.f32 %v4510, 1.0
    %v4720 = vsub.f32 %v4512, 1.0
    %v4721 = vsub.f32 %v4514, 1.0
    %v4722 = vsub.f32 %v4516, 1.0
    %v4723 = vsub.f32 %v4518, 1.0
    %v4724 = vsub.f32 %v4520, 1.0
    %v4725 = vsub.f32 %v4522, 1.0
    %v4726 = vsub.f32 %v4524, 1.0
    %v4727 = vsub.f32 %v4526, 1.0
    %v4728 = vsub.f32 %v4528, 1.0
    %v4729 = vsub.f32 %v4530, 1.0
    %v4730 = vsub.f32 %v4532, 1.0
    %v4731 = vsub.f32 %v4534, 1.0
    %v4732 = vsub.f32 %v4536, 1.0
    %v4733 = vsub.f32 %v4538, 1.0
    %v4734 = vsub.f32 %v4540, 1.0
    %v4735 = vsub.f32 %v4542, 1.0
    %v4736 = vsub.f32 %v4544, 1.0
    %v4737 = vsub.f32 %v4546, 1.0
    %v4738 = vsub.f32 %v4548, 1.0
    %v4739 = vsub.f32 %v4550, 1.0
    %v4740 = vsub.f32 %v4552, 1.0
    %v4741 = vsub.f32 %v4554, 1.0
    %v4742 = vsub.f32 %v4556, 1.0
    %v4743 = vsub.f32 %v4558, 1.0
    %v4744 = vsub.f32 %v4560, 1.0
    %v4745 = vsub.f32 %v4562, 1.0
    %v4746 = vsub.f32 %v4564, 1.0
    %v4747 = vsub.f32 %v4566, 1.0
    %v4748 = vsub.f32 %v4568, 1.0
    %v4749 = vsub.f32 %v4570, 1.0
    %v4750 = vsub.f32 %v4572, 1.0
    %v4751 = vsub.f32 %v4574, 1.0
    %v4752 = vsub.f32 %v4576, 1.0
    %v4753 = vsub.f32 %v4578, 1.0
    %v4754 = vsub.f32 %v4580, 1.0
    %v4755 = vsub.f32 %v4582, 1.0
    %v4756 = vsub.f32 %v4584, 1.0
    %v4757 = vsub.f32 %v4586, 1.0
    %v4758 = vsub.f32 %v4588, 1.0
    %v4759 = vsub.f32 %v4590, 1.0
    %v4760 = vsub.f32 %v4592, 1.0
    %v4761 = vsub.f32 %v4594, 1.0
    %v4762 = vsub.f32 %v4596, 1.0
    %v4763 = vsub.f32 %v4598, 1.0
    %v4764 = vsub.f32 %v4600, 1.0
    %v4765 = vsub.f32 %v4602, 1.0
    %v4766 = vsub.f32 %v4604, 1.0
    %v4767 = vsub.f32 %v4606, 1.0
    %v4768 = vsub.f32 %v4608, 1.0
    %v4769 = vsub.f32 %v4610, 1.0
    %v4770 = vsub.f32 %v4612, 1.0
    %v4771 = vsub.f32 %v4614, 1.0
    %v4772 = vsub.f32 %v4616, 1.0
    %v4773 = vsub.f32 %v4618, 1.0
    %v4774 = vsub.f32 %v4620, 1.0
    %v4775 = vsub.f32 %v4622, 1.0
    %v4776 = vsub.f32 %v4624, 1.0
    %v4777 = vsub.f32 %v4626, 1.0
    %v4778 = vsub.f32 %v4628, 1.0
    %v4779 = vsub.f32 %v4630, 1.0
    %v4780 = vsub.f32 %v4632, 1.0
    %v4781 = vsub.f32 %v4634, 1.0
    %v4782 = vsub.f32 %v4636, 1.0
    %v4783 = vsub.f32 %v4638, 1.0
    %v4784 = vsub.f32 %v4640, 1.0
    %v4785 = vsub.f32 %v4642, 1.0
    %v4786 = vsub.f32 %v4644, 1.0
    %v4787 = vsub.f32 %v4646, 1.0
    %v4788 = vsub.f32 %v4648, 1.0
    %v4789 = vsub.f32 %v4650, 1.0
    %v4790 = vsub.f32 %v4652, 1.0
    %v4791 = vsub.f32 %v4654, 1.0
    %v4792 = vsub.f32 %v4656, 1.0
    %v4793 = vsub.f32 %v4658, 1.0
    %v4794 = vsub.f32 %v4660, 1.0
    %v4795 = vsub.f32 %v4662, 1.0
    %v4796 = vsub.f32 %v4664, 1.0
    %v4797 = vsub.f32 %v4666, 1.0
    %v4798 = vsub.f32 %v4668, 1.0
    %v4799 = vsub.f32 %v4670, 1.0
    %v4800 = vsub.f32 %v4672, 1.0
    %v4801 = vsel %vm4161, %v3651, %v4673
    %v4802 = vsel %vm4162, %v3654, %v4674
    %v4803 = vsel %vm4163, %v3659, %v4675
    %v4804 = vsel %vm4164, %v3662, %v4676
    %v4805 = vsel %vm4165, %v3667, %v4677
    %v4806 = vsel %vm4166, %v3670, %v4678
    %v4807 = vsel %vm4167, %v3675, %v4679
    %v4808 = vsel %vm4168, %v3678, %v4680
    %v4809 = vsel %vm4169, %v3683, %v4681
    %v4810 = vsel %vm4170, %v3686, %v4682
    %v4811 = vsel %vm4171, %v3691, %v4683
    %v4812 = vsel %vm4172, %v3694, %v4684
    %v4813 = vsel %vm4173, %v3699, %v4685
    %v4814 = vsel %vm4174, %v3702, %v4686
    %v4815 = vsel %vm4175, %v3707, %v4687
    %v4816 = vsel %vm4176, %v3710, %v4688
    %v4817 = vsel %vm4177, %v3715, %v4689
    %v4818 = vsel %vm4178, %v3718, %v4690
    %v4819 = vsel %vm4179, %v3723, %v4691
    %v4820 = vsel %vm4180, %v3726, %v4692
    %v4821 = vsel %vm4181, %v3731, %v4693
    %v4822 = vsel %vm4182, %v3734, %v4694
    %v4823 = vsel %vm4183, %v3739, %v4695
    %v4824 = vsel %vm4184, %v3742, %v4696
    %v4825 = vsel %vm4185, %v3747, %v4697
    %v4826 = vsel %vm4186, %v3750, %v4698
    %v4827 = vsel %vm4187, %v3755, %v4699
    %v4828 = vsel %vm4188, %v3758, %v4700
    %v4829 = vsel %vm4189, %v3763, %v4701
    %v4830 = vsel %vm4190, %v3766, %v4702
    %v4831 = vsel %vm4191, %v3771, %v4703
    %v4832 = vsel %vm4192, %v3774, %v4704
    %v4833 = vsel %vm4193, %v3779, %v4705
    %v4834 = vsel %vm4194, %v3782, %v4706
    %v4835 = vsel %vm4195, %v3787, %v4707
    %v4836 = vsel %vm4196, %v3790, %v4708
    %v4837 = vsel %vm4197, %v3795, %v4709
    %v4838 = vsel %vm4198, %v3798, %v4710
    %v4839 = vsel %vm4199, %v3803, %v4711
    %v4840 = vsel %vm4200, %v3806, %v4712
    %v4841 = vsel %vm4201, %v3811, %v4713
    %v4842 = vsel %vm4202, %v3814, %v4714
    %v4843 = vsel %vm4203, %v3819, %v4715
    %v4844 = vsel %vm4204, %v3822, %v4716
    %v4845 = vsel %vm4205, %v3827, %v4717
    %v4846 = vsel %vm4206, %v3830, %v4718
    %v4847 = vsel %vm4207, %v3835, %v4719
    %v4848 = vsel %vm4208, %v3838, %v4720
    %v4849 = vsel %vm4209, %v3843, %v4721
    %v4850 = vsel %vm4210, %v3846, %v4722
    %v4851 = vsel %vm4211, %v3851, %v4723
    %v4852 = vsel %vm4212, %v3854, %v4724
    %v4853 = vsel %vm4213, %v3859, %v4725
    %v4854 = vsel %vm4214, %v3862, %v4726
    %v4855 = vsel %vm4215, %v3867, %v4727
    %v4856 = vsel %vm4216, %v3870, %v4728
    %v4857 = vsel %vm4217, %v3875, %v4729
    %v4858 = vsel %vm4218, %v3878, %v4730
    %v4859 = vsel %vm4219, %v3883, %v4731
    %v4860 = vsel %vm4220, %v3886, %v4732
    %v4861 = vsel %vm4221, %v3891, %v4733
    %v4862 = vsel %vm4222, %v3894, %v4734
    %v4863 = vsel %vm4223, %v3899, %v4735
    %v4864 = vsel %vm4224, %v3902, %v4736
    %v4865 = vsel %vm4225, %v3907, %v4737
    %v4866 = vsel %vm4226, %v3910, %v4738
    %v4867 = vsel %vm4227, %v3915, %v4739
    %v4868 = vsel %vm4228, %v3918, %v4740
    %v4869 = vsel %vm4229, %v3923, %v4741
    %v4870 = vsel %vm4230, %v3926, %v4742
    %v4871 = vsel %vm4231, %v3931, %v4743
    %v4872 = vsel %vm4232, %v3934, %v4744
    %v4873 = vsel %vm4233, %v3939, %v4745
    %v4874 = vsel %vm4234, %v3942, %v4746
    %v4875 = vsel %vm4235, %v3947, %v4747
    %v4876 = vsel %vm4236, %v3950, %v4748
    %v4877 = vsel %vm4237, %v3955, %v4749
    %v4878 = vsel %vm4238, %v3958, %v4750
    %v4879 = vsel %vm4239, %v3963, %v4751
    %v4880 = vsel %vm4240, %v3966, %v4752
    %v4881 = vsel %vm4241, %v3971, %v4753
    %v4882 = vsel %vm4242, %v3974, %v4754
    %v4883 = vsel %vm4243, %v3979, %v4755
    %v4884 = vsel %vm4244, %v3982, %v4756
    %v4885 = vsel %vm4245, %v3987, %v4757
    %v4886 = vsel %vm4246, %v3990, %v4758
    %v4887 = vsel %vm4247, %v3995, %v4759
    %v4888 = vsel %vm4248, %v3998, %v4760
    %v4889 = vsel %vm4249, %v4003, %v4761
    %v4890 = vsel %vm4250, %v4006, %v4762
    %v4891 = vsel %vm4251, %v4011, %v4763
    %v4892 = vsel %vm4252, %v4014, %v4764
    %v4893 = vsel %vm4253, %v4019, %v4765
    %v4894 = vsel %vm4254, %v4022, %v4766
    %v4895 = vsel %vm4255, %v4027, %v4767
    %v4896 = vsel %vm4256, %v4030, %v4768
    %v4897 = vsel %vm4257, %v4035, %v4769
    %v4898 = vsel %vm4258, %v4038, %v4770
    %v4899 = vsel %vm4259, %v4043, %v4771
    %v4900 = vsel %vm4260, %v4046, %v4772
    %v4901 = vsel %vm4261, %v4051, %v4773
    %v4902 = vsel %vm4262, %v4054, %v4774
    %v4903 = vsel %vm4263, %v4059, %v4775
    %v4904 = vsel %vm4264, %v4062, %v4776
    %v4905 = vsel %vm4265, %v4067, %v4777
    %v4906 = vsel %vm4266, %v4070, %v4778
    %v4907 = vsel %vm4267, %v4075, %v4779
    %v4908 = vsel %vm4268, %v4078, %v4780
    %v4909 = vsel %vm4269, %v4083, %v4781
    %v4910 = vsel %vm4270, %v4086, %v4782
    %v4911 = vsel %vm4271, %v4091, %v4783
    %v4912 = vsel %vm4272, %v4094, %v4784
    %v4913 = vsel %vm4273, %v4099, %v4785
    %v4914 = vsel %vm4274, %v4102, %v4786
    %v4915 = vsel %vm4275, %v4107, %v4787
    %v4916 = vsel %vm4276, %v4110, %v4788
    %v4917 = vsel %vm4277, %v4115, %v4789
    %v4918 = vsel %vm4278, %v4118, %v4790
    %v4919 = vsel %vm4279, %v4123, %v4791
    %v4920 = vsel %vm4280, %v4126, %v4792
    %v4921 = vsel %vm4281, %v4131, %v4793
    %v4922 = vsel %vm4282, %v4134, %v4794
    %v4923 = vsel %vm4283, %v4139, %v4795
    %v4924 = vsel %vm4284, %v4142, %v4796
    %v4925 = vsel %vm4285, %v4147, %v4797
    %v4926 = vsel %vm4286, %v4150, %v4798
    %v4927 = vsel %vm4287, %v4155, %v4799
    %v4928 = vsel %vm4288, %v4158, %v4800
    %v4929 = vpack.c.bf16 %v4802, %v4801
    %v4930 = vpack.c.bf16 %v4804, %v4803
    %v4931 = vpack.c.bf16 %v4806, %v4805
    %v4932 = vpack.c.bf16 %v4808, %v4807
    %v4933 = vpack.c.bf16 %v4810, %v4809
    %v4934 = vpack.c.bf16 %v4812, %v4811
    %v4935 = vpack.c.bf16 %v4814, %v4813
    %v4936 = vpack.c.bf16 %v4816, %v4815
    %v4937 = vpack.c.bf16 %v4818, %v4817
    %v4938 = vpack.c.bf16 %v4820, %v4819
    %v4939 = vpack.c.bf16 %v4822, %v4821
    %v4940 = vpack.c.bf16 %v4824, %v4823
    %v4941 = vpack.c.bf16 %v4826, %v4825
    %v4942 = vpack.c.bf16 %v4828, %v4827
    %v4943 = vpack.c.bf16 %v4830, %v4829
    %v4944 = vpack.c.bf16 %v4832, %v4831
    %v4945 = vpack.c.bf16 %v4834, %v4833
    %v4946 = vpack.c.bf16 %v4836, %v4835
    %v4947 = vpack.c.bf16 %v4838, %v4837
    %v4948 = vpack.c.bf16 %v4840, %v4839
    %v4949 = vpack.c.bf16 %v4842, %v4841
    %v4950 = vpack.c.bf16 %v4844, %v4843
    %v4951 = vpack.c.bf16 %v4846, %v4845
    %v4952 = vpack.c.bf16 %v4848, %v4847
    %v4953 = vpack.c.bf16 %v4850, %v4849
    %v4954 = vpack.c.bf16 %v4852, %v4851
    %v4955 = vpack.c.bf16 %v4854, %v4853
    %v4956 = vpack.c.bf16 %v4856, %v4855
    %v4957 = vpack.c.bf16 %v4858, %v4857
    %v4958 = vpack.c.bf16 %v4860, %v4859
    %v4959 = vpack.c.bf16 %v4862, %v4861
    %v4960 = vpack.c.bf16 %v4864, %v4863
    %v4961 = vpack.c.bf16 %v4866, %v4865
    %v4962 = vpack.c.bf16 %v4868, %v4867
    %v4963 = vpack.c.bf16 %v4870, %v4869
    %v4964 = vpack.c.bf16 %v4872, %v4871
    %v4965 = vpack.c.bf16 %v4874, %v4873
    %v4966 = vpack.c.bf16 %v4876, %v4875
    %v4967 = vpack.c.bf16 %v4878, %v4877
    %v4968 = vpack.c.bf16 %v4880, %v4879
    %v4969 = vpack.c.bf16 %v4882, %v4881
    %v4970 = vpack.c.bf16 %v4884, %v4883
    %v4971 = vpack.c.bf16 %v4886, %v4885
    %v4972 = vpack.c.bf16 %v4888, %v4887
    %v4973 = vpack.c.bf16 %v4890, %v4889
    %v4974 = vpack.c.bf16 %v4892, %v4891
    %v4975 = vpack.c.bf16 %v4894, %v4893
    %v4976 = vpack.c.bf16 %v4896, %v4895
    %v4977 = vpack.c.bf16 %v4898, %v4897
    %v4978 = vpack.c.bf16 %v4900, %v4899
    %v4979 = vpack.c.bf16 %v4902, %v4901
    %v4980 = vpack.c.bf16 %v4904, %v4903
    %v4981 = vpack.c.bf16 %v4906, %v4905
    %v4982 = vpack.c.bf16 %v4908, %v4907
    %v4983 = vpack.c.bf16 %v4910, %v4909
    %v4984 = vpack.c.bf16 %v4912, %v4911
    %v4985 = vpack.c.bf16 %v4914, %v4913
    %v4986 = vpack.c.bf16 %v4916, %v4915
    %v4987 = vpack.c.bf16 %v4918, %v4917
    %v4988 = vpack.c.bf16 %v4920, %v4919
    %v4989 = vpack.c.bf16 %v4922, %v4921
    %v4990 = vpack.c.bf16 %v4924, %v4923
    %v4991 = vpack.c.bf16 %v4926, %v4925
    %v4992 = vpack.c.bf16 %v4928, %v4927
    %v4993 = vld [vmem:[%s7] sm:$0xf]
    %v4994 = vld [vmem:[%s7 + $0x4] sm:$0xf]
    %v4995 = vld [vmem:[%s7 + $0x8] sm:$0xf]
    %v4996 = vld [vmem:[%s7 + $0xc] sm:$0xf]
    %v4997 = vld [vmem:[%s7 + $0x10] sm:$0xf]
    %v4998 = vld [vmem:[%s7 + $0x14] sm:$0xf]
    %v4999 = vld [vmem:[%s7 + $0x18] sm:$0xf]
    %v5000 = vld [vmem:[%s7 + $0x1c] sm:$0xf]
    %v5001 = vld [vmem:[%s7 + $0x20] sm:$0xf]
    %v5002 = vld [vmem:[%s7 + $0x24] sm:$0xf]
    %v5003 = vld [vmem:[%s7 + $0x28] sm:$0xf]
    %v5004 = vld [vmem:[%s7 + $0x2c] sm:$0xf]
    %v5005 = vld [vmem:[%s7 + $0x30] sm:$0xf]
    %v5006 = vld [vmem:[%s7 + $0x34] sm:$0xf]
    %v5007 = vld [vmem:[%s7 + $0x38] sm:$0xf]
    %v5008 = vld [vmem:[%s7 + $0x3c] sm:$0xf]
    %v5009 = vld [vmem:[%s8] sm:$0x1]
    %v5011 = vlaneseq
    %v5012 = vshrl.u32 %v5011, 7
    %v5013 = vsub.s32 0, %v5012
    %v5014 = vrot.slane %v5009, %v5013
    %v5032 = vunpack.c.l.b16 %v4993
    %v5033 = vunpack.c.l.b16 %v4994
    %v5034 = vunpack.c.l.b16 %v4995
    %v5035 = vunpack.c.l.b16 %v4996
    %v5036 = vunpack.c.l.b16 %v4997
    %v5037 = vunpack.c.l.b16 %v4998
    %v5038 = vunpack.c.l.b16 %v4999
    %v5039 = vunpack.c.l.b16 %v5000
    %v5040 = vunpack.c.l.b16 %v5001
    %v5041 = vunpack.c.l.b16 %v5002
    %v5042 = vunpack.c.l.b16 %v5003
    %v5043 = vunpack.c.l.b16 %v5004
    %v5044 = vunpack.c.l.b16 %v5005
    %v5045 = vunpack.c.l.b16 %v5006
    %v5046 = vunpack.c.l.b16 %v5007
    %v5047 = vunpack.c.l.b16 %v5008
    %v5048 = vpack.c.b16 %v5033, %v5032
    %v5049 = vpack.c.b16 %v5035, %v5034
    %v5050 = vpack.c.b16 %v5037, %v5036
    %v5051 = vpack.c.b16 %v5039, %v5038
    %v5052 = vpack.c.b16 %v5041, %v5040
    %v5053 = vpack.c.b16 %v5043, %v5042
    %v5054 = vpack.c.b16 %v5045, %v5044
    %v5055 = vpack.c.b16 %v5047, %v5046
    %5064 = vmatprep.subr.bf16.mxu0 0
    %5065 = vmatpush1.bf16.msra.mxu0 %v5048
    %5066 = vmatprep.subr.bf16.mxu0 0
    %5067 = vmatpush1.bf16.msra.mxu0 %v5049
    %5068 = vmatprep.subr.bf16.mxu0 0
    %5069 = vmatpush1.bf16.msra.mxu0 %v5050
    %5070 = vmatprep.subr.bf16.mxu0 0
    %5071 = vmatpush1.bf16.msra.mxu0 %v5051
    %5072 = vmatprep.subr.bf16.mxu0 0
    %5073 = vmatpush1.bf16.msra.mxu0 %v5052
    %5074 = vmatprep.subr.bf16.mxu0 0
    %5075 = vmatpush1.bf16.msra.mxu0 %v5053
    %5076 = vmatprep.subr.bf16.mxu0 0
    %5077 = vmatpush1.bf16.msra.mxu0 %v5054
    %5078 = vmatprep.subr.bf16.mxu0 0
    %5079 = vmatpush1.bf16.msra.mxu0 %v5055
    %5080 = vmatprep.subr.bf16.mxu0 0
    %5081 = vmatpush1.bf16.msra.mxu0 0
    %5082 = vmatprep.subr.bf16.mxu0 0
    %5083 = vmatpush1.bf16.msra.mxu0 0
    %5084 = vmatprep.subr.bf16.mxu0 0
    %5085 = vmatpush1.bf16.msra.mxu0 0
    %5086 = vmatprep.subr.bf16.mxu0 0
    %5087 = vmatpush1.bf16.msra.mxu0 0
    %5088 = vmatprep.subr.bf16.mxu0 0
    %5089 = vmatpush1.bf16.msra.mxu0 0
    %5090 = vmatprep.subr.bf16.mxu0 0
    %5091 = vmatpush1.bf16.msra.mxu0 0
    %5092 = vmatprep.subr.bf16.mxu0 0
    %5093 = vmatpush1.bf16.msra.mxu0 0
    %5094 = vmatprep.subr.bf16.mxu0 0
    %5095 = vmatpush1.bf16.msra.mxu0 0
    %5096 = vmatprep.mubr.bf16.mxu0 0
    %5097 = vmatmul.mubr.bf16.gmra.mrb[0].mxu0 %v4929
    %v5098 = vpop.f32.mrb[0].mxu0
    %v5099 = vadd.f32 %v5014, %v5098
    %v5100 = vpop.f32.mrb[0].mxu0
    %v5101 = vpop.f32.mrb[0].mxu0
    %v5102 = vadd.f32 %v5014, %v5101
    %v5103 = vpop.f32.mrb[0].mxu0
    %5104 = vmatprep.mubr.bf16.mxu0 0
    %5105 = vmatmul.mubr.bf16.gmra.mrb[0].mxu0 %v4930
    %v5106 = vpop.f32.mrb[0].mxu0
    %v5107 = vadd.f32 %v5014, %v5106
    %v5108 = vpop.f32.mrb[0].mxu0
    %v5109 = vpop.f32.mrb[0].mxu0
    %v5110 = vadd.f32 %v5014, %v5109
    %v5111 = vpop.f32.mrb[0].mxu0
    %5112 = vmatprep.mubr.bf16.mxu0 0
    %5113 = vmatmul.mubr.bf16.gmra.mrb[0].mxu0 %v4931
    %v5114 = vpop.f32.mrb[0].mxu0
    %v5115 = vadd.f32 %v5014, %v5114
    %v5116 = vpop.f32.mrb[0].mxu0
    %v5117 = vpop.f32.mrb[0].mxu0
    %v5118 = vadd.f32 %v5014, %v5117
    %v5119 = vpop.f32.mrb[0].mxu0
    %5120 = vmatprep.mubr.bf16.mxu0 0
    %5121 = vmatmul.mubr.bf16.gmra.mrb[0].mxu0 %v4932
    %v5122 = vpop.f32.mrb[0].mxu0
    %v5123 = vadd.f32 %v5014, %v5122
    %v5124 = vpop.f32.mrb[0].mxu0
    %v5125 = vpop.f32.mrb[0].mxu0
    %v5126 = vadd.f32 %v5014, %v5125
    %v5127 = vpop.f32.mrb[0].mxu0
    %5128 = vmatprep.mubr.bf16.mxu0 0
    %5129 = vmatmul.mubr.bf16.gmra.mrb[0].mxu0 %v4933
    %v5130 = vpop.f32.mrb[0].mxu0
    %v5131 = vadd.f32 %v5014, %v5130
    %v5132 = vpop.f32.mrb[0].mxu0
    %v5133 = vpop.f32.mrb[0].mxu0
    %v5134 = vadd.f32 %v5014, %v5133
    %v5135 = vpop.f32.mrb[0].mxu0
    %5136 = vmatprep.mubr.bf16.mxu0 0
    %5137 = vmatmul.mubr.bf16.gmra.mrb[0].mxu0 %v4934
    %v5138 = vpop.f32.mrb[0].mxu0
    %v5139 = vadd.f32 %v5014, %v5138
    %v5140 = vpop.f32.mrb[0].mxu0
    %v5141 = vpop.f32.mrb[0].mxu0
    %v5142 = vadd.f32 %v5014, %v5141
    %v5143 = vpop.f32.mrb[0].mxu0
    %5144 = vmatprep.mubr.bf16.mxu0 0
    %5145 = vmatmul.mubr.bf16.gmra.mrb[0].mxu0 %v4935
    %v5146 = vpop.f32.mrb[0].mxu0
    %v5147 = vadd.f32 %v5014, %v5146
    %v5148 = vpop.f32.mrb[0].mxu0
    %v5149 = vpop.f32.mrb[0].mxu0
    %v5150 = vadd.f32 %v5014, %v5149
    %v5151 = vpop.f32.mrb[0].mxu0
    %5152 = vmatprep.mubr.bf16.mxu0 0
    %5153 = vmatmul.mubr.bf16.gmra.mrb[0].mxu0 %v4936
    %v5154 = vpop.f32.mrb[0].mxu0
    %v5155 = vadd.f32 %v5014, %v5154
    %v5156 = vpop.f32.mrb[0].mxu0
    %v5157 = vpop.f32.mrb[0].mxu0
    %v5158 = vadd.f32 %v5014, %v5157
    %v5159 = vpop.f32.mrb[0].mxu0
    %5160 = vmatprep.mubr.bf16.mxu0 0
    %5161 = vmatmul.mubr.bf16.gmra.mrb[0].mxu0 %v4937
    %v5162 = vpop.f32.mrb[0].mxu0
    %v5163 = vadd.f32 %v5014, %v5162
    %v5164 = vpop.f32.mrb[0].mxu0
    %v5165 = vpop.f32.mrb[0].mxu0
    %v5166 = vadd.f32 %v5014, %v5165
    %v5167 = vpop.f32.mrb[0].mxu0
    %5168 = vmatprep.mubr.bf16.mxu0 0
    %5169 = vmatmul.mubr.bf16.gmra.mrb[0].mxu0 %v4938
    %v5170 = vpop.f32.mrb[0].mxu0
    %v5171 = vadd.f32 %v5014, %v5170
    %v5172 = vpop.f32.mrb[0].mxu0
    %v5173 = vpop.f32.mrb[0].mxu0
    %v5174 = vadd.f32 %v5014, %v5173
    %v5175 = vpop.f32.mrb[0].mxu0
    %5176 = vmatprep.mubr.bf16.mxu0 0
    %5177 = vmatmul.mubr.bf16.gmra.mrb[0].mxu0 %v4939
    %v5178 = vpop.f32.mrb[0].mxu0
    %v5179 = vadd.f32 %v5014, %v5178
    %v5180 = vpop.f32.mrb[0].mxu0
    %v5181 = vpop.f32.mrb[0].mxu0
    %v5182 = vadd.f32 %v5014, %v5181
    %v5183 = vpop.f32.mrb[0].mxu0
    %5184 = vmatprep.mubr.bf16.mxu0 0
    %5185 = vmatmul.mubr.bf16.gmra.mrb[0].mxu0 %v4940
    %v5186 = vpop.f32.mrb[0].mxu0
    %v5187 = vadd.f32 %v5014, %v5186
    %v5188 = vpop.f32.mrb[0].mxu0
    %v5189 = vpop.f32.mrb[0].mxu0
    %v5190 = vadd.f32 %v5014, %v5189
    %v5191 = vpop.f32.mrb[0].mxu0
    %5192 = vmatprep.mubr.bf16.mxu0 0
    %5193 = vmatmul.mubr.bf16.gmra.mrb[0].mxu0 %v4941
    %v5194 = vpop.f32.mrb[0].mxu0
    %v5195 = vadd.f32 %v5014, %v5194
    %v5196 = vpop.f32.mrb[0].mxu0
    %v5197 = vpop.f32.mrb[0].mxu0
    %v5198 = vadd.f32 %v5014, %v5197
    %v5199 = vpop.f32.mrb[0].mxu0
    %5200 = vmatprep.mubr.bf16.mxu0 0
    %5201 = vmatmul.mubr.bf16.gmra.mrb[0].mxu0 %v4942
    %v5202 = vpop.f32.mrb[0].mxu0
    %v5203 = vadd.f32 %v5014, %v5202
    %v5204 = vpop.f32.mrb[0].mxu0
    %v5205 = vpop.f32.mrb[0].mxu0
    %v5206 = vadd.f32 %v5014, %v5205
    %v5207 = vpop.f32.mrb[0].mxu0
    %5208 = vmatprep.mubr.bf16.mxu0 0
    %5209 = vmatmul.mubr.bf16.gmra.mrb[0].mxu0 %v4943
    %v5210 = vpop.f32.mrb[0].mxu0
    %v5211 = vadd.f32 %v5014, %v5210
    %v5212 = vpop.f32.mrb[0].mxu0
    %v5213 = vpop.f32.mrb[0].mxu0
    %v5214 = vadd.f32 %v5014, %v5213
    %v5215 = vpop.f32.mrb[0].mxu0
    %5216 = vmatprep.mubr.bf16.mxu0 0
    %5217 = vmatmul.mubr.bf16.gmra.mrb[0].mxu0 %v4944
    %v5218 = vpop.f32.mrb[0].mxu0
    %v5219 = vadd.f32 %v5014, %v5218
    %v5220 = vpop.f32.mrb[0].mxu0
    %v5221 = vpop.f32.mrb[0].mxu0
    %v5222 = vadd.f32 %v5014, %v5221
    %v5223 = vpop.f32.mrb[0].mxu0
    %5224 = vmatprep.mubr.bf16.mxu0 0
    %5225 = vmatmul.mubr.bf16.gmra.mrb[0].mxu0 %v4945
    %v5226 = vpop.f32.mrb[0].mxu0
    %v5227 = vadd.f32 %v5014, %v5226
    %v5228 = vpop.f32.mrb[0].mxu0
    %v5229 = vpop.f32.mrb[0].mxu0
    %v5230 = vadd.f32 %v5014, %v5229
    %v5231 = vpop.f32.mrb[0].mxu0
    %5232 = vmatprep.mubr.bf16.mxu0 0
    %5233 = vmatmul.mubr.bf16.gmra.mrb[0].mxu0 %v4946
    %v5234 = vpop.f32.mrb[0].mxu0
    %v5235 = vadd.f32 %v5014, %v5234
    %v5236 = vpop.f32.mrb[0].mxu0
    %v5237 = vpop.f32.mrb[0].mxu0
    %v5238 = vadd.f32 %v5014, %v5237
    %v5239 = vpop.f32.mrb[0].mxu0
    %5240 = vmatprep.mubr.bf16.mxu0 0
    %5241 = vmatmul.mubr.bf16.gmra.mrb[0].mxu0 %v4947
    %v5242 = vpop.f32.mrb[0].mxu0
    %v5243 = vadd.f32 %v5014, %v5242
    %v5244 = vpop.f32.mrb[0].mxu0
    %v5245 = vpop.f32.mrb[0].mxu0
    %v5246 = vadd.f32 %v5014, %v5245
    %v5247 = vpop.f32.mrb[0].mxu0
    %5248 = vmatprep.mubr.bf16.mxu0 0
    %5249 = vmatmul.mubr.bf16.gmra.mrb[0].mxu0 %v4948
    %v5250 = vpop.f32.mrb[0].mxu0
    %v5251 = vadd.f32 %v5014, %v5250
    %v5252 = vpop.f32.mrb[0].mxu0
    %v5253 = vpop.f32.mrb[0].mxu0
    %v5254 = vadd.f32 %v5014, %v5253
    %v5255 = vpop.f32.mrb[0].mxu0
    %5256 = vmatprep.mubr.bf16.mxu0 0
    %5257 = vmatmul.mubr.bf16.gmra.mrb[0].mxu0 %v4949
    %v5258 = vpop.f32.mrb[0].mxu0
    %v5259 = vadd.f32 %v5014, %v5258
    %v5260 = vpop.f32.mrb[0].mxu0
    %v5261 = vpop.f32.mrb[0].mxu0
    %v5262 = vadd.f32 %v5014, %v5261
    %v5263 = vpop.f32.mrb[0].mxu0
    %5264 = vmatprep.mubr.bf16.mxu0 0
    %5265 = vmatmul.mubr.bf16.gmra.mrb[0].mxu0 %v4950
    %v5266 = vpop.f32.mrb[0].mxu0
    %v5267 = vadd.f32 %v5014, %v5266
    %v5268 = vpop.f32.mrb[0].mxu0
    %v5269 = vpop.f32.mrb[0].mxu0
    %v5270 = vadd.f32 %v5014, %v5269
    %v5271 = vpop.f32.mrb[0].mxu0
    %5272 = vmatprep.mubr.bf16.mxu0 0
    %5273 = vmatmul.mubr.bf16.gmra.mrb[0].mxu0 %v4951
    %v5274 = vpop.f32.mrb[0].mxu0
    %v5275 = vadd.f32 %v5014, %v5274
    %v5276 = vpop.f32.mrb[0].mxu0
    %v5277 = vpop.f32.mrb[0].mxu0
    %v5278 = vadd.f32 %v5014, %v5277
    %v5279 = vpop.f32.mrb[0].mxu0
    %5280 = vmatprep.mubr.bf16.mxu0 0
    %5281 = vmatmul.mubr.bf16.gmra.mrb[0].mxu0 %v4952
    %v5282 = vpop.f32.mrb[0].mxu0
    %v5283 = vadd.f32 %v5014, %v5282
    %v5284 = vpop.f32.mrb[0].mxu0
    %v5285 = vpop.f32.mrb[0].mxu0
    %v5286 = vadd.f32 %v5014, %v5285
    %v5287 = vpop.f32.mrb[0].mxu0
    %5288 = vmatprep.mubr.bf16.mxu0 0
    %5289 = vmatmul.mubr.bf16.gmra.mrb[0].mxu0 %v4953
    %v5290 = vpop.f32.mrb[0].mxu0
    %v5291 = vadd.f32 %v5014, %v5290
    %v5292 = vpop.f32.mrb[0].mxu0
    %v5293 = vpop.f32.mrb[0].mxu0
    %v5294 = vadd.f32 %v5014, %v5293
    %v5295 = vpop.f32.mrb[0].mxu0
    %5296 = vmatprep.mubr.bf16.mxu0 0
    %5297 = vmatmul.mubr.bf16.gmra.mrb[0].mxu0 %v4954
    %v5298 = vpop.f32.mrb[0].mxu0
    %v5299 = vadd.f32 %v5014, %v5298
    %v5300 = vpop.f32.mrb[0].mxu0
    %v5301 = vpop.f32.mrb[0].mxu0
    %v5302 = vadd.f32 %v5014, %v5301
    %v5303 = vpop.f32.mrb[0].mxu0
    %5304 = vmatprep.mubr.bf16.mxu0 0
    %5305 = vmatmul.mubr.bf16.gmra.mrb[0].mxu0 %v4955
    %v5306 = vpop.f32.mrb[0].mxu0
    %v5307 = vadd.f32 %v5014, %v5306
    %v5308 = vpop.f32.mrb[0].mxu0
    %v5309 = vpop.f32.mrb[0].mxu0
    %v5310 = vadd.f32 %v5014, %v5309
    %v5311 = vpop.f32.mrb[0].mxu0
    %5312 = vmatprep.mubr.bf16.mxu0 0
    %5313 = vmatmul.mubr.bf16.gmra.mrb[0].mxu0 %v4956
    %v5314 = vpop.f32.mrb[0].mxu0
    %v5315 = vadd.f32 %v5014, %v5314
    %v5316 = vpop.f32.mrb[0].mxu0
    %v5317 = vpop.f32.mrb[0].mxu0
    %v5318 = vadd.f32 %v5014, %v5317
    %v5319 = vpop.f32.mrb[0].mxu0
    %5320 = vmatprep.mubr.bf16.mxu0 0
    %5321 = vmatmul.mubr.bf16.gmra.mrb[0].mxu0 %v4957
    %v5322 = vpop.f32.mrb[0].mxu0
    %v5323 = vadd.f32 %v5014, %v5322
    %v5324 = vpop.f32.mrb[0].mxu0
    %v5325 = vpop.f32.mrb[0].mxu0
    %v5326 = vadd.f32 %v5014, %v5325
    %v5327 = vpop.f32.mrb[0].mxu0
    %5328 = vmatprep.mubr.bf16.mxu0 0
    %5329 = vmatmul.mubr.bf16.gmra.mrb[0].mxu0 %v4958
    %v5330 = vpop.f32.mrb[0].mxu0
    %v5331 = vadd.f32 %v5014, %v5330
    %v5332 = vpop.f32.mrb[0].mxu0
    %v5333 = vpop.f32.mrb[0].mxu0
    %v5334 = vadd.f32 %v5014, %v5333
    %v5335 = vpop.f32.mrb[0].mxu0
    %5336 = vmatprep.mubr.bf16.mxu0 0
    %5337 = vmatmul.mubr.bf16.gmra.mrb[0].mxu0 %v4959
    %v5338 = vpop.f32.mrb[0].mxu0
    %v5339 = vadd.f32 %v5014, %v5338
    %v5340 = vpop.f32.mrb[0].mxu0
    %v5341 = vpop.f32.mrb[0].mxu0
    %v5342 = vadd.f32 %v5014, %v5341
    %v5343 = vpop.f32.mrb[0].mxu0
    %5344 = vmatprep.mubr.bf16.mxu0 0
    %5345 = vmatmul.mubr.bf16.gmra.mrb[0].mxu0 %v4960
    %v5346 = vpop.f32.mrb[0].mxu0
    %v5347 = vadd.f32 %v5014, %v5346
    %v5348 = vpop.f32.mrb[0].mxu0
    %v5349 = vpop.f32.mrb[0].mxu0
    %v5350 = vadd.f32 %v5014, %v5349
    %v5351 = vpop.f32.mrb[0].mxu0
    %5352 = vmatprep.mubr.bf16.mxu0 0
    %5353 = vmatmul.mubr.bf16.gmra.mrb[0].mxu0 %v4961
    %v5354 = vpop.f32.mrb[0].mxu0
    %v5355 = vadd.f32 %v5014, %v5354
    %v5356 = vpop.f32.mrb[0].mxu0
    %v5357 = vpop.f32.mrb[0].mxu0
    %v5358 = vadd.f32 %v5014, %v5357
    %v5359 = vpop.f32.mrb[0].mxu0
    %5360 = vmatprep.mubr.bf16.mxu0 0
    %5361 = vmatmul.mubr.bf16.gmra.mrb[0].mxu0 %v4962
    %v5362 = vpop.f32.mrb[0].mxu0
    %v5363 = vadd.f32 %v5014, %v5362
    %v5364 = vpop.f32.mrb[0].mxu0
    %v5365 = vpop.f32.mrb[0].mxu0
    %v5366 = vadd.f32 %v5014, %v5365
    %v5367 = vpop.f32.mrb[0].mxu0
    %5368 = vmatprep.mubr.bf16.mxu0 0
    %5369 = vmatmul.mubr.bf16.gmra.mrb[0].mxu0 %v4963
    %v5370 = vpop.f32.mrb[0].mxu0
    %v5371 = vadd.f32 %v5014, %v5370
    %v5372 = vpop.f32.mrb[0].mxu0
    %v5373 = vpop.f32.mrb[0].mxu0
    %v5374 = vadd.f32 %v5014, %v5373
    %v5375 = vpop.f32.mrb[0].mxu0
    %5376 = vmatprep.mubr.bf16.mxu0 0
    %5377 = vmatmul.mubr.bf16.gmra.mrb[0].mxu0 %v4964
    %v5378 = vpop.f32.mrb[0].mxu0
    %v5379 = vadd.f32 %v5014, %v5378
    %v5380 = vpop.f32.mrb[0].mxu0
    %v5381 = vpop.f32.mrb[0].mxu0
    %v5382 = vadd.f32 %v5014, %v5381
    %v5383 = vpop.f32.mrb[0].mxu0
    %5384 = vmatprep.mubr.bf16.mxu0 0
    %5385 = vmatmul.mubr.bf16.gmra.mrb[0].mxu0 %v4965
    %v5386 = vpop.f32.mrb[0].mxu0
    %v5387 = vadd.f32 %v5014, %v5386
    %v5388 = vpop.f32.mrb[0].mxu0
    %v5389 = vpop.f32.mrb[0].mxu0
    %v5390 = vadd.f32 %v5014, %v5389
    %v5391 = vpop.f32.mrb[0].mxu0
    %5392 = vmatprep.mubr.bf16.mxu0 0
    %5393 = vmatmul.mubr.bf16.gmra.mrb[0].mxu0 %v4966
    %v5394 = vpop.f32.mrb[0].mxu0
    %v5395 = vadd.f32 %v5014, %v5394
    %v5396 = vpop.f32.mrb[0].mxu0
    %v5397 = vpop.f32.mrb[0].mxu0
    %v5398 = vadd.f32 %v5014, %v5397
    %v5399 = vpop.f32.mrb[0].mxu0
    %5400 = vmatprep.mubr.bf16.mxu0 0
    %5401 = vmatmul.mubr.bf16.gmra.mrb[0].mxu0 %v4967
    %v5402 = vpop.f32.mrb[0].mxu0
    %v5403 = vadd.f32 %v5014, %v5402
    %v5404 = vpop.f32.mrb[0].mxu0
    %v5405 = vpop.f32.mrb[0].mxu0
    %v5406 = vadd.f32 %v5014, %v5405
    %v5407 = vpop.f32.mrb[0].mxu0
    %5408 = vmatprep.mubr.bf16.mxu0 0
    %5409 = vmatmul.mubr.bf16.gmra.mrb[0].mxu0 %v4968
    %v5410 = vpop.f32.mrb[0].mxu0
    %v5411 = vadd.f32 %v5014, %v5410
    %v5412 = vpop.f32.mrb[0].mxu0
    %v5413 = vpop.f32.mrb[0].mxu0
    %v5414 = vadd.f32 %v5014, %v5413
    %v5415 = vpop.f32.mrb[0].mxu0
    %5416 = vmatprep.mubr.bf16.mxu0 0
    %5417 = vmatmul.mubr.bf16.gmra.mrb[0].mxu0 %v4969
    %v5418 = vpop.f32.mrb[0].mxu0
    %v5419 = vadd.f32 %v5014, %v5418
    %v5420 = vpop.f32.mrb[0].mxu0
    %v5421 = vpop.f32.mrb[0].mxu0
    %v5422 = vadd.f32 %v5014, %v5421
    %v5423 = vpop.f32.mrb[0].mxu0
    %5424 = vmatprep.mubr.bf16.mxu0 0
    %5425 = vmatmul.mubr.bf16.gmra.mrb[0].mxu0 %v4970
    %v5426 = vpop.f32.mrb[0].mxu0
    %v5427 = vadd.f32 %v5014, %v5426
    %v5428 = vpop.f32.mrb[0].mxu0
    %v5429 = vpop.f32.mrb[0].mxu0
    %v5430 = vadd.f32 %v5014, %v5429
    %v5431 = vpop.f32.mrb[0].mxu0
    %5432 = vmatprep.mubr.bf16.mxu0 0
    %5433 = vmatmul.mubr.bf16.gmra.mrb[0].mxu0 %v4971
    %v5434 = vpop.f32.mrb[0].mxu0
    %v5435 = vadd.f32 %v5014, %v5434
    %v5436 = vpop.f32.mrb[0].mxu0
    %v5437 = vpop.f32.mrb[0].mxu0
    %v5438 = vadd.f32 %v5014, %v5437
    %v5439 = vpop.f32.mrb[0].mxu0
    %5440 = vmatprep.mubr.bf16.mxu0 0
    %5441 = vmatmul.mubr.bf16.gmra.mrb[0].mxu0 %v4972
    %v5442 = vpop.f32.mrb[0].mxu0
    %v5443 = vadd.f32 %v5014, %v5442
    %v5444 = vpop.f32.mrb[0].mxu0
    %v5445 = vpop.f32.mrb[0].mxu0
    %v5446 = vadd.f32 %v5014, %v5445
    %v5447 = vpop.f32.mrb[0].mxu0
    %5448 = vmatprep.mubr.bf16.mxu0 0
    %5449 = vmatmul.mubr.bf16.gmra.mrb[0].mxu0 %v4973
    %v5450 = vpop.f32.mrb[0].mxu0
    %v5451 = vadd.f32 %v5014, %v5450
    %v5452 = vpop.f32.mrb[0].mxu0
    %v5453 = vpop.f32.mrb[0].mxu0
    %v5454 = vadd.f32 %v5014, %v5453
    %v5455 = vpop.f32.mrb[0].mxu0
    %5456 = vmatprep.mubr.bf16.mxu0 0
    %5457 = vmatmul.mubr.bf16.gmra.mrb[0].mxu0 %v4974
    %v5458 = vpop.f32.mrb[0].mxu0
    %v5459 = vadd.f32 %v5014, %v5458
    %v5460 = vpop.f32.mrb[0].mxu0
    %v5461 = vpop.f32.mrb[0].mxu0
    %v5462 = vadd.f32 %v5014, %v5461
    %v5463 = vpop.f32.mrb[0].mxu0
    %5464 = vmatprep.mubr.bf16.mxu0 0
    %5465 = vmatmul.mubr.bf16.gmra.mrb[0].mxu0 %v4975
    %v5466 = vpop.f32.mrb[0].mxu0
    %v5467 = vadd.f32 %v5014, %v5466
    %v5468 = vpop.f32.mrb[0].mxu0
    %v5469 = vpop.f32.mrb[0].mxu0
    %v5470 = vadd.f32 %v5014, %v5469
    %v5471 = vpop.f32.mrb[0].mxu0
    %5472 = vmatprep.mubr.bf16.mxu0 0
    %5473 = vmatmul.mubr.bf16.gmra.mrb[0].mxu0 %v4976
    %v5474 = vpop.f32.mrb[0].mxu0
    %v5475 = vadd.f32 %v5014, %v5474
    %v5476 = vpop.f32.mrb[0].mxu0
    %v5477 = vpop.f32.mrb[0].mxu0
    %v5478 = vadd.f32 %v5014, %v5477
    %v5479 = vpop.f32.mrb[0].mxu0
    %5480 = vmatprep.mubr.bf16.mxu0 0
    %5481 = vmatmul.mubr.bf16.gmra.mrb[0].mxu0 %v4977
    %v5482 = vpop.f32.mrb[0].mxu0
    %v5483 = vadd.f32 %v5014, %v5482
    %v5484 = vpop.f32.mrb[0].mxu0
    %v5485 = vpop.f32.mrb[0].mxu0
    %v5486 = vadd.f32 %v5014, %v5485
    %v5487 = vpop.f32.mrb[0].mxu0
    %5488 = vmatprep.mubr.bf16.mxu0 0
    %5489 = vmatmul.mubr.bf16.gmra.mrb[0].mxu0 %v4978
    %v5490 = vpop.f32.mrb[0].mxu0
    %v5491 = vadd.f32 %v5014, %v5490
    %v5492 = vpop.f32.mrb[0].mxu0
    %v5493 = vpop.f32.mrb[0].mxu0
    %v5494 = vadd.f32 %v5014, %v5493
    %v5495 = vpop.f32.mrb[0].mxu0
    %5496 = vmatprep.mubr.bf16.mxu0 0
    %5497 = vmatmul.mubr.bf16.gmra.mrb[0].mxu0 %v4979
    %v5498 = vpop.f32.mrb[0].mxu0
    %v5499 = vadd.f32 %v5014, %v5498
    %v5500 = vpop.f32.mrb[0].mxu0
    %v5501 = vpop.f32.mrb[0].mxu0
    %v5502 = vadd.f32 %v5014, %v5501
    %v5503 = vpop.f32.mrb[0].mxu0
    %5504 = vmatprep.mubr.bf16.mxu0 0
    %5505 = vmatmul.mubr.bf16.gmra.mrb[0].mxu0 %v4980
    %v5506 = vpop.f32.mrb[0].mxu0
    %v5507 = vadd.f32 %v5014, %v5506
    %v5508 = vpop.f32.mrb[0].mxu0
    %v5509 = vpop.f32.mrb[0].mxu0
    %v5510 = vadd.f32 %v5014, %v5509
    %v5511 = vpop.f32.mrb[0].mxu0
    %5512 = vmatprep.mubr.bf16.mxu0 0
    %5513 = vmatmul.mubr.bf16.gmra.mrb[0].mxu0 %v4981
    %v5514 = vpop.f32.mrb[0].mxu0
    %v5515 = vadd.f32 %v5014, %v5514
    %v5516 = vpop.f32.mrb[0].mxu0
    %v5517 = vpop.f32.mrb[0].mxu0
    %v5518 = vadd.f32 %v5014, %v5517
    %v5519 = vpop.f32.mrb[0].mxu0
    %5520 = vmatprep.mubr.bf16.mxu0 0
    %5521 = vmatmul.mubr.bf16.gmra.mrb[0].mxu0 %v4982
    %v5522 = vpop.f32.mrb[0].mxu0
    %v5523 = vadd.f32 %v5014, %v5522
    %v5524 = vpop.f32.mrb[0].mxu0
    %v5525 = vpop.f32.mrb[0].mxu0
    %v5526 = vadd.f32 %v5014, %v5525
    %v5527 = vpop.f32.mrb[0].mxu0
    %5528 = vmatprep.mubr.bf16.mxu0 0
    %5529 = vmatmul.mubr.bf16.gmra.mrb[0].mxu0 %v4983
    %v5530 = vpop.f32.mrb[0].mxu0
    %v5531 = vadd.f32 %v5014, %v5530
    %v5532 = vpop.f32.mrb[0].mxu0
    %v5533 = vpop.f32.mrb[0].mxu0
    %v5534 = vadd.f32 %v5014, %v5533
    %v5535 = vpop.f32.mrb[0].mxu0
    %5536 = vmatprep.mubr.bf16.mxu0 0
    %5537 = vmatmul.mubr.bf16.gmra.mrb[0].mxu0 %v4984
    %v5538 = vpop.f32.mrb[0].mxu0
    %v5539 = vadd.f32 %v5014, %v5538
    %v5540 = vpop.f32.mrb[0].mxu0
    %v5541 = vpop.f32.mrb[0].mxu0
    %v5542 = vadd.f32 %v5014, %v5541
    %v5543 = vpop.f32.mrb[0].mxu0
    %5544 = vmatprep.mubr.bf16.mxu0 0
    %5545 = vmatmul.mubr.bf16.gmra.mrb[0].mxu0 %v4985
    %v5546 = vpop.f32.mrb[0].mxu0
    %v5547 = vadd.f32 %v5014, %v5546
    %v5548 = vpop.f32.mrb[0].mxu0
    %v5549 = vpop.f32.mrb[0].mxu0
    %v5550 = vadd.f32 %v5014, %v5549
    %v5551 = vpop.f32.mrb[0].mxu0
    %5552 = vmatprep.mubr.bf16.mxu0 0
    %5553 = vmatmul.mubr.bf16.gmra.mrb[0].mxu0 %v4986
    %v5554 = vpop.f32.mrb[0].mxu0
    %v5555 = vadd.f32 %v5014, %v5554
    %v5556 = vpop.f32.mrb[0].mxu0
    %v5557 = vpop.f32.mrb[0].mxu0
    %v5558 = vadd.f32 %v5014, %v5557
    %v5559 = vpop.f32.mrb[0].mxu0
    %5560 = vmatprep.mubr.bf16.mxu0 0
    %5561 = vmatmul.mubr.bf16.gmra.mrb[0].mxu0 %v4987
    %v5562 = vpop.f32.mrb[0].mxu0
    %v5563 = vadd.f32 %v5014, %v5562
    %v5564 = vpop.f32.mrb[0].mxu0
    %v5565 = vpop.f32.mrb[0].mxu0
    %v5566 = vadd.f32 %v5014, %v5565
    %v5567 = vpop.f32.mrb[0].mxu0
    %5568 = vmatprep.mubr.bf16.mxu0 0
    %5569 = vmatmul.mubr.bf16.gmra.mrb[0].mxu0 %v4988
    %v5570 = vpop.f32.mrb[0].mxu0
    %v5571 = vadd.f32 %v5014, %v5570
    %v5572 = vpop.f32.mrb[0].mxu0
    %v5573 = vpop.f32.mrb[0].mxu0
    %v5574 = vadd.f32 %v5014, %v5573
    %v5575 = vpop.f32.mrb[0].mxu0
    %5576 = vmatprep.mubr.bf16.mxu0 0
    %5577 = vmatmul.mubr.bf16.gmra.mrb[0].mxu0 %v4989
    %v5578 = vpop.f32.mrb[0].mxu0
    %v5579 = vadd.f32 %v5014, %v5578
    %v5580 = vpop.f32.mrb[0].mxu0
    %v5581 = vpop.f32.mrb[0].mxu0
    %v5582 = vadd.f32 %v5014, %v5581
    %v5583 = vpop.f32.mrb[0].mxu0
    %5584 = vmatprep.mubr.bf16.mxu0 0
    %5585 = vmatmul.mubr.bf16.gmra.mrb[0].mxu0 %v4990
    %v5586 = vpop.f32.mrb[0].mxu0
    %v5587 = vadd.f32 %v5014, %v5586
    %v5588 = vpop.f32.mrb[0].mxu0
    %v5589 = vpop.f32.mrb[0].mxu0
    %v5590 = vadd.f32 %v5014, %v5589
    %v5591 = vpop.f32.mrb[0].mxu0
    %5592 = vmatprep.mubr.bf16.mxu0 0
    %5593 = vmatmul.mubr.bf16.gmra.mrb[0].mxu0 %v4991
    %v5594 = vpop.f32.mrb[0].mxu0
    %v5595 = vadd.f32 %v5014, %v5594
    %v5596 = vpop.f32.mrb[0].mxu0
    %v5597 = vpop.f32.mrb[0].mxu0
    %v5598 = vadd.f32 %v5014, %v5597
    %v5599 = vpop.f32.mrb[0].mxu0
    %5600 = vmatprep.mubr.bf16.mxu0 0
    %5601 = vmatmul.mubr.bf16.gmra.mrb[0].mxu0 %v4992
    %v5602 = vpop.f32.mrb[0].mxu0
    %v5603 = vadd.f32 %v5014, %v5602
    %v5604 = vpop.f32.mrb[0].mxu0
    %v5605 = vpop.f32.mrb[0].mxu0
    %v5606 = vadd.f32 %v5014, %v5605
    %v5607 = vpop.f32.mrb[0].mxu0
    %5608 = vdwg.mxu0
    %vm5609 = vcmp.gt.f32.partialorder %v5099, 0.0
    %vm5610 = vcmp.gt.f32.partialorder %v5102, 0.0
    %vm5611 = vcmp.gt.f32.partialorder %v5107, 0.0
    %vm5612 = vcmp.gt.f32.partialorder %v5110, 0.0
    %vm5613 = vcmp.gt.f32.partialorder %v5115, 0.0
    %vm5614 = vcmp.gt.f32.partialorder %v5118, 0.0
    %vm5615 = vcmp.gt.f32.partialorder %v5123, 0.0
    %vm5616 = vcmp.gt.f32.partialorder %v5126, 0.0
    %vm5617 = vcmp.gt.f32.partialorder %v5131, 0.0
    %vm5618 = vcmp.gt.f32.partialorder %v5134, 0.0
    %vm5619 = vcmp.gt.f32.partialorder %v5139, 0.0
    %vm5620 = vcmp.gt.f32.partialorder %v5142, 0.0
    %vm5621 = vcmp.gt.f32.partialorder %v5147, 0.0
    %vm5622 = vcmp.gt.f32.partialorder %v5150, 0.0
    %vm5623 = vcmp.gt.f32.partialorder %v5155, 0.0
    %vm5624 = vcmp.gt.f32.partialorder %v5158, 0.0
    %vm5625 = vcmp.gt.f32.partialorder %v5163, 0.0
    %vm5626 = vcmp.gt.f32.partialorder %v5166, 0.0
    %vm5627 = vcmp.gt.f32.partialorder %v5171, 0.0
    %vm5628 = vcmp.gt.f32.partialorder %v5174, 0.0
    %vm5629 = vcmp.gt.f32.partialorder %v5179, 0.0
    %vm5630 = vcmp.gt.f32.partialorder %v5182, 0.0
    %vm5631 = vcmp.gt.f32.partialorder %v5187, 0.0
    %vm5632 = vcmp.gt.f32.partialorder %v5190, 0.0
    %vm5633 = vcmp.gt.f32.partialorder %v5195, 0.0
    %vm5634 = vcmp.gt.f32.partialorder %v5198, 0.0
    %vm5635 = vcmp.gt.f32.partialorder %v5203, 0.0
    %vm5636 = vcmp.gt.f32.partialorder %v5206, 0.0
    %vm5637 = vcmp.gt.f32.partialorder %v5211, 0.0
    %vm5638 = vcmp.gt.f32.partialorder %v5214, 0.0
    %vm5639 = vcmp.gt.f32.partialorder %v5219, 0.0
    %vm5640 = vcmp.gt.f32.partialorder %v5222, 0.0
    %vm5641 = vcmp.gt.f32.partialorder %v5227, 0.0
    %vm5642 = vcmp.gt.f32.partialorder %v5230, 0.0
    %vm5643 = vcmp.gt.f32.partialorder %v5235, 0.0
    %vm5644 = vcmp.gt.f32.partialorder %v5238, 0.0
    %vm5645 = vcmp.gt.f32.partialorder %v5243, 0.0
    %vm5646 = vcmp.gt.f32.partialorder %v5246, 0.0
    %vm5647 = vcmp.gt.f32.partialorder %v5251, 0.0
    %vm5648 = vcmp.gt.f32.partialorder %v5254, 0.0
    %vm5649 = vcmp.gt.f32.partialorder %v5259, 0.0
    %vm5650 = vcmp.gt.f32.partialorder %v5262, 0.0
    %vm5651 = vcmp.gt.f32.partialorder %v5267, 0.0
    %vm5652 = vcmp.gt.f32.partialorder %v5270, 0.0
    %vm5653 = vcmp.gt.f32.partialorder %v5275, 0.0
    %vm5654 = vcmp.gt.f32.partialorder %v5278, 0.0
    %vm5655 = vcmp.gt.f32.partialorder %v5283, 0.0
    %vm5656 = vcmp.gt.f32.partialorder %v5286, 0.0
    %vm5657 = vcmp.gt.f32.partialorder %v5291, 0.0
    %vm5658 = vcmp.gt.f32.partialorder %v5294, 0.0
    %vm5659 = vcmp.gt.f32.partialorder %v5299, 0.0
    %vm5660 = vcmp.gt.f32.partialorder %v5302, 0.0
    %vm5661 = vcmp.gt.f32.partialorder %v5307, 0.0
    %vm5662 = vcmp.gt.f32.partialorder %v5310, 0.0
    %vm5663 = vcmp.gt.f32.partialorder %v5315, 0.0
    %vm5664 = vcmp.gt.f32.partialorder %v5318, 0.0
    %vm5665 = vcmp.gt.f32.partialorder %v5323, 0.0
    %vm5666 = vcmp.gt.f32.partialorder %v5326, 0.0
    %vm5667 = vcmp.gt.f32.partialorder %v5331, 0.0
    %vm5668 = vcmp.gt.f32.partialorder %v5334, 0.0
    %vm5669 = vcmp.gt.f32.partialorder %v5339, 0.0
    %vm5670 = vcmp.gt.f32.partialorder %v5342, 0.0
    %vm5671 = vcmp.gt.f32.partialorder %v5347, 0.0
    %vm5672 = vcmp.gt.f32.partialorder %v5350, 0.0
    %vm5673 = vcmp.gt.f32.partialorder %v5355, 0.0
    %vm5674 = vcmp.gt.f32.partialorder %v5358, 0.0
    %vm5675 = vcmp.gt.f32.partialorder %v5363, 0.0
    %vm5676 = vcmp.gt.f32.partialorder %v5366, 0.0
    %vm5677 = vcmp.gt.f32.partialorder %v5371, 0.0
    %vm5678 = vcmp.gt.f32.partialorder %v5374, 0.0
    %vm5679 = vcmp.gt.f32.partialorder %v5379, 0.0
    %vm5680 = vcmp.gt.f32.partialorder %v5382, 0.0
    %vm5681 = vcmp.gt.f32.partialorder %v5387, 0.0
    %vm5682 = vcmp.gt.f32.partialorder %v5390, 0.0
    %vm5683 = vcmp.gt.f32.partialorder %v5395, 0.0
    %vm5684 = vcmp.gt.f32.partialorder %v5398, 0.0
    %vm5685 = vcmp.gt.f32.partialorder %v5403, 0.0
    %vm5686 = vcmp.gt.f32.partialorder %v5406, 0.0
    %vm5687 = vcmp.gt.f32.partialorder %v5411, 0.0
    %vm5688 = vcmp.gt.f32.partialorder %v5414, 0.0
    %vm5689 = vcmp.gt.f32.partialorder %v5419, 0.0
    %vm5690 = vcmp.gt.f32.partialorder %v5422, 0.0
    %vm5691 = vcmp.gt.f32.partialorder %v5427, 0.0
    %vm5692 = vcmp.gt.f32.partialorder %v5430, 0.0
    %vm5693 = vcmp.gt.f32.partialorder %v5435, 0.0
    %vm5694 = vcmp.gt.f32.partialorder %v5438, 0.0
    %vm5695 = vcmp.gt.f32.partialorder %v5443, 0.0
    %vm5696 = vcmp.gt.f32.partialorder %v5446, 0.0
    %vm5697 = vcmp.gt.f32.partialorder %v5451, 0.0
    %vm5698 = vcmp.gt.f32.partialorder %v5454, 0.0
    %vm5699 = vcmp.gt.f32.partialorder %v5459, 0.0
    %vm5700 = vcmp.gt.f32.partialorder %v5462, 0.0
    %vm5701 = vcmp.gt.f32.partialorder %v5467, 0.0
    %vm5702 = vcmp.gt.f32.partialorder %v5470, 0.0
    %vm5703 = vcmp.gt.f32.partialorder %v5475, 0.0
    %vm5704 = vcmp.gt.f32.partialorder %v5478, 0.0
    %vm5705 = vcmp.gt.f32.partialorder %v5483, 0.0
    %vm5706 = vcmp.gt.f32.partialorder %v5486, 0.0
    %vm5707 = vcmp.gt.f32.partialorder %v5491, 0.0
    %vm5708 = vcmp.gt.f32.partialorder %v5494, 0.0
    %vm5709 = vcmp.gt.f32.partialorder %v5499, 0.0
    %vm5710 = vcmp.gt.f32.partialorder %v5502, 0.0
    %vm5711 = vcmp.gt.f32.partialorder %v5507, 0.0
    %vm5712 = vcmp.gt.f32.partialorder %v5510, 0.0
    %vm5713 = vcmp.gt.f32.partialorder %v5515, 0.0
    %vm5714 = vcmp.gt.f32.partialorder %v5518, 0.0
    %vm5715 = vcmp.gt.f32.partialorder %v5523, 0.0
    %vm5716 = vcmp.gt.f32.partialorder %v5526, 0.0
    %vm5717 = vcmp.gt.f32.partialorder %v5531, 0.0
    %vm5718 = vcmp.gt.f32.partialorder %v5534, 0.0
    %vm5719 = vcmp.gt.f32.partialorder %v5539, 0.0
    %vm5720 = vcmp.gt.f32.partialorder %v5542, 0.0
    %vm5721 = vcmp.gt.f32.partialorder %v5547, 0.0
    %vm5722 = vcmp.gt.f32.partialorder %v5550, 0.0
    %vm5723 = vcmp.gt.f32.partialorder %v5555, 0.0
    %vm5724 = vcmp.gt.f32.partialorder %v5558, 0.0
    %vm5725 = vcmp.gt.f32.partialorder %v5563, 0.0
    %vm5726 = vcmp.gt.f32.partialorder %v5566, 0.0
    %vm5727 = vcmp.gt.f32.partialorder %v5571, 0.0
    %vm5728 = vcmp.gt.f32.partialorder %v5574, 0.0
    %vm5729 = vcmp.gt.f32.partialorder %v5579, 0.0
    %vm5730 = vcmp.gt.f32.partialorder %v5582, 0.0
    %vm5731 = vcmp.gt.f32.partialorder %v5587, 0.0
    %vm5732 = vcmp.gt.f32.partialorder %v5590, 0.0
    %vm5733 = vcmp.gt.f32.partialorder %v5595, 0.0
    %vm5734 = vcmp.gt.f32.partialorder %v5598, 0.0
    %vm5735 = vcmp.gt.f32.partialorder %v5603, 0.0
    %vm5736 = vcmp.gt.f32.partialorder %v5606, 0.0
    %v5737 = vmin.f32 %v5099, 0.0
    %v5738 = vmin.f32 %v5102, 0.0
    %v5739 = vmin.f32 %v5107, 0.0
    %v5740 = vmin.f32 %v5110, 0.0
    %v5741 = vmin.f32 %v5115, 0.0
    %v5742 = vmin.f32 %v5118, 0.0
    %v5743 = vmin.f32 %v5123, 0.0
    %v5744 = vmin.f32 %v5126, 0.0
    %v5745 = vmin.f32 %v5131, 0.0
    %v5746 = vmin.f32 %v5134, 0.0
    %v5747 = vmin.f32 %v5139, 0.0
    %v5748 = vmin.f32 %v5142, 0.0
    %v5749 = vmin.f32 %v5147, 0.0
    %v5750 = vmin.f32 %v5150, 0.0
    %v5751 = vmin.f32 %v5155, 0.0
    %v5752 = vmin.f32 %v5158, 0.0
    %v5753 = vmin.f32 %v5163, 0.0
    %v5754 = vmin.f32 %v5166, 0.0
    %v5755 = vmin.f32 %v5171, 0.0
    %v5756 = vmin.f32 %v5174, 0.0
    %v5757 = vmin.f32 %v5179, 0.0
    %v5758 = vmin.f32 %v5182, 0.0
    %v5759 = vmin.f32 %v5187, 0.0
    %v5760 = vmin.f32 %v5190, 0.0
    %v5761 = vmin.f32 %v5195, 0.0
    %v5762 = vmin.f32 %v5198, 0.0
    %v5763 = vmin.f32 %v5203, 0.0
    %v5764 = vmin.f32 %v5206, 0.0
    %v5765 = vmin.f32 %v5211, 0.0
    %v5766 = vmin.f32 %v5214, 0.0
    %v5767 = vmin.f32 %v5219, 0.0
    %v5768 = vmin.f32 %v5222, 0.0
    %v5769 = vmin.f32 %v5227, 0.0
    %v5770 = vmin.f32 %v5230, 0.0
    %v5771 = vmin.f32 %v5235, 0.0
    %v5772 = vmin.f32 %v5238, 0.0
    %v5773 = vmin.f32 %v5243, 0.0
    %v5774 = vmin.f32 %v5246, 0.0
    %v5775 = vmin.f32 %v5251, 0.0
    %v5776 = vmin.f32 %v5254, 0.0
    %v5777 = vmin.f32 %v5259, 0.0
    %v5778 = vmin.f32 %v5262, 0.0
    %v5779 = vmin.f32 %v5267, 0.0
    %v5780 = vmin.f32 %v5270, 0.0
    %v5781 = vmin.f32 %v5275, 0.0
    %v5782 = vmin.f32 %v5278, 0.0
    %v5783 = vmin.f32 %v5283, 0.0
    %v5784 = vmin.f32 %v5286, 0.0
    %v5785 = vmin.f32 %v5291, 0.0
    %v5786 = vmin.f32 %v5294, 0.0
    %v5787 = vmin.f32 %v5299, 0.0
    %v5788 = vmin.f32 %v5302, 0.0
    %v5789 = vmin.f32 %v5307, 0.0
    %v5790 = vmin.f32 %v5310, 0.0
    %v5791 = vmin.f32 %v5315, 0.0
    %v5792 = vmin.f32 %v5318, 0.0
    %v5793 = vmin.f32 %v5323, 0.0
    %v5794 = vmin.f32 %v5326, 0.0
    %v5795 = vmin.f32 %v5331, 0.0
    %v5796 = vmin.f32 %v5334, 0.0
    %v5797 = vmin.f32 %v5339, 0.0
    %v5798 = vmin.f32 %v5342, 0.0
    %v5799 = vmin.f32 %v5347, 0.0
    %v5800 = vmin.f32 %v5350, 0.0
    %v5801 = vmin.f32 %v5355, 0.0
    %v5802 = vmin.f32 %v5358, 0.0
    %v5803 = vmin.f32 %v5363, 0.0
    %v5804 = vmin.f32 %v5366, 0.0
    %v5805 = vmin.f32 %v5371, 0.0
    %v5806 = vmin.f32 %v5374, 0.0
    %v5807 = vmin.f32 %v5379, 0.0
    %v5808 = vmin.f32 %v5382, 0.0
    %v5809 = vmin.f32 %v5387, 0.0
    %v5810 = vmin.f32 %v5390, 0.0
    %v5811 = vmin.f32 %v5395, 0.0
    %v5812 = vmin.f32 %v5398, 0.0
    %v5813 = vmin.f32 %v5403, 0.0
    %v5814 = vmin.f32 %v5406, 0.0
    %v5815 = vmin.f32 %v5411, 0.0
    %v5816 = vmin.f32 %v5414, 0.0
    %v5817 = vmin.f32 %v5419, 0.0
    %v5818 = vmin.f32 %v5422, 0.0
    %v5819 = vmin.f32 %v5427, 0.0
    %v5820 = vmin.f32 %v5430, 0.0
    %v5821 = vmin.f32 %v5435, 0.0
    %v5822 = vmin.f32 %v5438, 0.0
    %v5823 = vmin.f32 %v5443, 0.0
    %v5824 = vmin.f32 %v5446, 0.0
    %v5825 = vmin.f32 %v5451, 0.0
    %v5826 = vmin.f32 %v5454, 0.0
    %v5827 = vmin.f32 %v5459, 0.0
    %v5828 = vmin.f32 %v5462, 0.0
    %v5829 = vmin.f32 %v5467, 0.0
    %v5830 = vmin.f32 %v5470, 0.0
    %v5831 = vmin.f32 %v5475, 0.0
    %v5832 = vmin.f32 %v5478, 0.0
    %v5833 = vmin.f32 %v5483, 0.0
    %v5834 = vmin.f32 %v5486, 0.0
    %v5835 = vmin.f32 %v5491, 0.0
    %v5836 = vmin.f32 %v5494, 0.0
    %v5837 = vmin.f32 %v5499, 0.0
    %v5838 = vmin.f32 %v5502, 0.0
    %v5839 = vmin.f32 %v5507, 0.0
    %v5840 = vmin.f32 %v5510, 0.0
    %v5841 = vmin.f32 %v5515, 0.0
    %v5842 = vmin.f32 %v5518, 0.0
    %v5843 = vmin.f32 %v5523, 0.0
    %v5844 = vmin.f32 %v5526, 0.0
    %v5845 = vmin.f32 %v5531, 0.0
    %v5846 = vmin.f32 %v5534, 0.0
    %v5847 = vmin.f32 %v5539, 0.0
    %v5848 = vmin.f32 %v5542, 0.0
    %v5849 = vmin.f32 %v5547, 0.0
    %v5850 = vmin.f32 %v5550, 0.0
    %v5851 = vmin.f32 %v5555, 0.0
    %v5852 = vmin.f32 %v5558, 0.0
    %v5853 = vmin.f32 %v5563, 0.0
    %v5854 = vmin.f32 %v5566, 0.0
    %v5855 = vmin.f32 %v5571, 0.0
    %v5856 = vmin.f32 %v5574, 0.0
    %v5857 = vmin.f32 %v5579, 0.0
    %v5858 = vmin.f32 %v5582, 0.0
    %v5859 = vmin.f32 %v5587, 0.0
    %v5860 = vmin.f32 %v5590, 0.0
    %v5861 = vmin.f32 %v5595, 0.0
    %v5862 = vmin.f32 %v5598, 0.0
    %v5863 = vmin.f32 %v5603, 0.0
    %v5864 = vmin.f32 %v5606, 0.0
    %v5865 = vmul.f32 %v5737, 1.442695
    %v5866 = vpow.pop %v5865
    %v5867 = vmul.f32 %v5738, 1.442695
    %v5868 = vpow.pop %v5867
    %v5869 = vmul.f32 %v5739, 1.442695
    %v5870 = vpow.pop %v5869
    %v5871 = vmul.f32 %v5740, 1.442695
    %v5872 = vpow.pop %v5871
    %v5873 = vmul.f32 %v5741, 1.442695
    %v5874 = vpow.pop %v5873
    %v5875 = vmul.f32 %v5742, 1.442695
    %v5876 = vpow.pop %v5875
    %v5877 = vmul.f32 %v5743, 1.442695
    %v5878 = vpow.pop %v5877
    %v5879 = vmul.f32 %v5744, 1.442695
    %v5880 = vpow.pop %v5879
    %v5881 = vmul.f32 %v5745, 1.442695
    %v5882 = vpow.pop %v5881
    %v5883 = vmul.f32 %v5746, 1.442695
    %v5884 = vpow.pop %v5883
    %v5885 = vmul.f32 %v5747, 1.442695
    %v5886 = vpow.pop %v5885
    %v5887 = vmul.f32 %v5748, 1.442695
    %v5888 = vpow.pop %v5887
    %v5889 = vmul.f32 %v5749, 1.442695
    %v5890 = vpow.pop %v5889
    %v5891 = vmul.f32 %v5750, 1.442695
    %v5892 = vpow.pop %v5891
    %v5893 = vmul.f32 %v5751, 1.442695
    %v5894 = vpow.pop %v5893
    %v5895 = vmul.f32 %v5752, 1.442695
    %v5896 = vpow.pop %v5895
    %v5897 = vmul.f32 %v5753, 1.442695
    %v5898 = vpow.pop %v5897
    %v5899 = vmul.f32 %v5754, 1.442695
    %v5900 = vpow.pop %v5899
    %v5901 = vmul.f32 %v5755, 1.442695
    %v5902 = vpow.pop %v5901
    %v5903 = vmul.f32 %v5756, 1.442695
    %v5904 = vpow.pop %v5903
    %v5905 = vmul.f32 %v5757, 1.442695
    %v5906 = vpow.pop %v5905
    %v5907 = vmul.f32 %v5758, 1.442695
    %v5908 = vpow.pop %v5907
    %v5909 = vmul.f32 %v5759, 1.442695
    %v5910 = vpow.pop %v5909
    %v5911 = vmul.f32 %v5760, 1.442695
    %v5912 = vpow.pop %v5911
    %v5913 = vmul.f32 %v5761, 1.442695
    %v5914 = vpow.pop %v5913
    %v5915 = vmul.f32 %v5762, 1.442695
    %v5916 = vpow.pop %v5915
    %v5917 = vmul.f32 %v5763, 1.442695
    %v5918 = vpow.pop %v5917
    %v5919 = vmul.f32 %v5764, 1.442695
    %v5920 = vpow.pop %v5919
    %v5921 = vmul.f32 %v5765, 1.442695
    %v5922 = vpow.pop %v5921
    %v5923 = vmul.f32 %v5766, 1.442695
    %v5924 = vpow.pop %v5923
    %v5925 = vmul.f32 %v5767, 1.442695
    %v5926 = vpow.pop %v5925
    %v5927 = vmul.f32 %v5768, 1.442695
    %v5928 = vpow.pop %v5927
    %v5929 = vmul.f32 %v5769, 1.442695
    %v5930 = vpow.pop %v5929
    %v5931 = vmul.f32 %v5770, 1.442695
    %v5932 = vpow.pop %v5931
    %v5933 = vmul.f32 %v5771, 1.442695
    %v5934 = vpow.pop %v5933
    %v5935 = vmul.f32 %v5772, 1.442695
    %v5936 = vpow.pop %v5935
    %v5937 = vmul.f32 %v5773, 1.442695
    %v5938 = vpow.pop %v5937
    %v5939 = vmul.f32 %v5774, 1.442695
    %v5940 = vpow.pop %v5939
    %v5941 = vmul.f32 %v5775, 1.442695
    %v5942 = vpow.pop %v5941
    %v5943 = vmul.f32 %v5776, 1.442695
    %v5944 = vpow.pop %v5943
    %v5945 = vmul.f32 %v5777, 1.442695
    %v5946 = vpow.pop %v5945
    %v5947 = vmul.f32 %v5778, 1.442695
    %v5948 = vpow.pop %v5947
    %v5949 = vmul.f32 %v5779, 1.442695
    %v5950 = vpow.pop %v5949
    %v5951 = vmul.f32 %v5780, 1.442695
    %v5952 = vpow.pop %v5951
    %v5953 = vmul.f32 %v5781, 1.442695
    %v5954 = vpow.pop %v5953
    %v5955 = vmul.f32 %v5782, 1.442695
    %v5956 = vpow.pop %v5955
    %v5957 = vmul.f32 %v5783, 1.442695
    %v5958 = vpow.pop %v5957
    %v5959 = vmul.f32 %v5784, 1.442695
    %v5960 = vpow.pop %v5959
    %v5961 = vmul.f32 %v5785, 1.442695
    %v5962 = vpow.pop %v5961
    %v5963 = vmul.f32 %v5786, 1.442695
    %v5964 = vpow.pop %v5963
    %v5965 = vmul.f32 %v5787, 1.442695
    %v5966 = vpow.pop %v5965
    %v5967 = vmul.f32 %v5788, 1.442695
    %v5968 = vpow.pop %v5967
    %v5969 = vmul.f32 %v5789, 1.442695
    %v5970 = vpow.pop %v5969
    %v5971 = vmul.f32 %v5790, 1.442695
    %v5972 = vpow.pop %v5971
    %v5973 = vmul.f32 %v5791, 1.442695
    %v5974 = vpow.pop %v5973
    %v5975 = vmul.f32 %v5792, 1.442695
    %v5976 = vpow.pop %v5975
    %v5977 = vmul.f32 %v5793, 1.442695
    %v5978 = vpow.pop %v5977
    %v5979 = vmul.f32 %v5794, 1.442695
    %v5980 = vpow.pop %v5979
    %v5981 = vmul.f32 %v5795, 1.442695
    %v5982 = vpow.pop %v5981
    %v5983 = vmul.f32 %v5796, 1.442695
    %v5984 = vpow.pop %v5983
    %v5985 = vmul.f32 %v5797, 1.442695
    %v5986 = vpow.pop %v5985
    %v5987 = vmul.f32 %v5798, 1.442695
    %v5988 = vpow.pop %v5987
    %v5989 = vmul.f32 %v5799, 1.442695
    %v5990 = vpow.pop %v5989
    %v5991 = vmul.f32 %v5800, 1.442695
    %v5992 = vpow.pop %v5991
    %v5993 = vmul.f32 %v5801, 1.442695
    %v5994 = vpow.pop %v5993
    %v5995 = vmul.f32 %v5802, 1.442695
    %v5996 = vpow.pop %v5995
    %v5997 = vmul.f32 %v5803, 1.442695
    %v5998 = vpow.pop %v5997
    %v5999 = vmul.f32 %v5804, 1.442695
    %v6000 = vpow.pop %v5999
    %v6001 = vmul.f32 %v5805, 1.442695
    %v6002 = vpow.pop %v6001
    %v6003 = vmul.f32 %v5806, 1.442695
    %v6004 = vpow.pop %v6003
    %v6005 = vmul.f32 %v5807, 1.442695
    %v6006 = vpow.pop %v6005
    %v6007 = vmul.f32 %v5808, 1.442695
    %v6008 = vpow.pop %v6007
    %v6009 = vmul.f32 %v5809, 1.442695
    %v6010 = vpow.pop %v6009
    %v6011 = vmul.f32 %v5810, 1.442695
    %v6012 = vpow.pop %v6011
    %v6013 = vmul.f32 %v5811, 1.442695
    %v6014 = vpow.pop %v6013
    %v6015 = vmul.f32 %v5812, 1.442695
    %v6016 = vpow.pop %v6015
    %v6017 = vmul.f32 %v5813, 1.442695
    %v6018 = vpow.pop %v6017
    %v6019 = vmul.f32 %v5814, 1.442695
    %v6020 = vpow.pop %v6019
    %v6021 = vmul.f32 %v5815, 1.442695
    %v6022 = vpow.pop %v6021
    %v6023 = vmul.f32 %v5816, 1.442695
    %v6024 = vpow.pop %v6023
    %v6025 = vmul.f32 %v5817, 1.442695
    %v6026 = vpow.pop %v6025
    %v6027 = vmul.f32 %v5818, 1.442695
    %v6028 = vpow.pop %v6027
    %v6029 = vmul.f32 %v5819, 1.442695
    %v6030 = vpow.pop %v6029
    %v6031 = vmul.f32 %v5820, 1.442695
    %v6032 = vpow.pop %v6031
    %v6033 = vmul.f32 %v5821, 1.442695
    %v6034 = vpow.pop %v6033
    %v6035 = vmul.f32 %v5822, 1.442695
    %v6036 = vpow.pop %v6035
    %v6037 = vmul.f32 %v5823, 1.442695
    %v6038 = vpow.pop %v6037
    %v6039 = vmul.f32 %v5824, 1.442695
    %v6040 = vpow.pop %v6039
    %v6041 = vmul.f32 %v5825, 1.442695
    %v6042 = vpow.pop %v6041
    %v6043 = vmul.f32 %v5826, 1.442695
    %v6044 = vpow.pop %v6043
    %v6045 = vmul.f32 %v5827, 1.442695
    %v6046 = vpow.pop %v6045
    %v6047 = vmul.f32 %v5828, 1.442695
    %v6048 = vpow.pop %v6047
    %v6049 = vmul.f32 %v5829, 1.442695
    %v6050 = vpow.pop %v6049
    %v6051 = vmul.f32 %v5830, 1.442695
    %v6052 = vpow.pop %v6051
    %v6053 = vmul.f32 %v5831, 1.442695
    %v6054 = vpow.pop %v6053
    %v6055 = vmul.f32 %v5832, 1.442695
    %v6056 = vpow.pop %v6055
    %v6057 = vmul.f32 %v5833, 1.442695
    %v6058 = vpow.pop %v6057
    %v6059 = vmul.f32 %v5834, 1.442695
    %v6060 = vpow.pop %v6059
    %v6061 = vmul.f32 %v5835, 1.442695
    %v6062 = vpow.pop %v6061
    %v6063 = vmul.f32 %v5836, 1.442695
    %v6064 = vpow.pop %v6063
    %v6065 = vmul.f32 %v5837, 1.442695
    %v6066 = vpow.pop %v6065
    %v6067 = vmul.f32 %v5838, 1.442695
    %v6068 = vpow.pop %v6067
    %v6069 = vmul.f32 %v5839, 1.442695
    %v6070 = vpow.pop %v6069
    %v6071 = vmul.f32 %v5840, 1.442695
    %v6072 = vpow.pop %v6071
    %v6073 = vmul.f32 %v5841, 1.442695
    %v6074 = vpow.pop %v6073
    %v6075 = vmul.f32 %v5842, 1.442695
    %v6076 = vpow.pop %v6075
    %v6077 = vmul.f32 %v5843, 1.442695
    %v6078 = vpow.pop %v6077
    %v6079 = vmul.f32 %v5844, 1.442695
    %v6080 = vpow.pop %v6079
    %v6081 = vmul.f32 %v5845, 1.442695
    %v6082 = vpow.pop %v6081
    %v6083 = vmul.f32 %v5846, 1.442695
    %v6084 = vpow.pop %v6083
    %v6085 = vmul.f32 %v5847, 1.442695
    %v6086 = vpow.pop %v6085
    %v6087 = vmul.f32 %v5848, 1.442695
    %v6088 = vpow.pop %v6087
    %v6089 = vmul.f32 %v5849, 1.442695
    %v6090 = vpow.pop %v6089
    %v6091 = vmul.f32 %v5850, 1.442695
    %v6092 = vpow.pop %v6091
    %v6093 = vmul.f32 %v5851, 1.442695
    %v6094 = vpow.pop %v6093
    %v6095 = vmul.f32 %v5852, 1.442695
    %v6096 = vpow.pop %v6095
    %v6097 = vmul.f32 %v5853, 1.442695
    %v6098 = vpow.pop %v6097
    %v6099 = vmul.f32 %v5854, 1.442695
    %v6100 = vpow.pop %v6099
    %v6101 = vmul.f32 %v5855, 1.442695
    %v6102 = vpow.pop %v6101
    %v6103 = vmul.f32 %v5856, 1.442695
    %v6104 = vpow.pop %v6103
    %v6105 = vmul.f32 %v5857, 1.442695
    %v6106 = vpow.pop %v6105
    %v6107 = vmul.f32 %v5858, 1.442695
    %v6108 = vpow.pop %v6107
    %v6109 = vmul.f32 %v5859, 1.442695
    %v6110 = vpow.pop %v6109
    %v6111 = vmul.f32 %v5860, 1.442695
    %v6112 = vpow.pop %v6111
    %v6113 = vmul.f32 %v5861, 1.442695
    %v6114 = vpow.pop %v6113
    %v6115 = vmul.f32 %v5862, 1.442695
    %v6116 = vpow.pop %v6115
    %v6117 = vmul.f32 %v5863, 1.442695
    %v6118 = vpow.pop %v6117
    %v6119 = vmul.f32 %v5864, 1.442695
    %v6120 = vpow.pop %v6119
    %v6121 = vsub.f32 %v5866, 1.0
    %v6122 = vsub.f32 %v5868, 1.0
    %v6123 = vsub.f32 %v5870, 1.0
    %v6124 = vsub.f32 %v5872, 1.0
    %v6125 = vsub.f32 %v5874, 1.0
    %v6126 = vsub.f32 %v5876, 1.0
    %v6127 = vsub.f32 %v5878, 1.0
    %v6128 = vsub.f32 %v5880, 1.0
    %v6129 = vsub.f32 %v5882, 1.0
    %v6130 = vsub.f32 %v5884, 1.0
    %v6131 = vsub.f32 %v5886, 1.0
    %v6132 = vsub.f32 %v5888, 1.0
    %v6133 = vsub.f32 %v5890, 1.0
    %v6134 = vsub.f32 %v5892, 1.0
    %v6135 = vsub.f32 %v5894, 1.0
    %v6136 = vsub.f32 %v5896, 1.0
    %v6137 = vsub.f32 %v5898, 1.0
    %v6138 = vsub.f32 %v5900, 1.0
    %v6139 = vsub.f32 %v5902, 1.0
    %v6140 = vsub.f32 %v5904, 1.0
    %v6141 = vsub.f32 %v5906, 1.0
    %v6142 = vsub.f32 %v5908, 1.0
    %v6143 = vsub.f32 %v5910, 1.0
    %v6144 = vsub.f32 %v5912, 1.0
    %v6145 = vsub.f32 %v5914, 1.0
    %v6146 = vsub.f32 %v5916, 1.0
    %v6147 = vsub.f32 %v5918, 1.0
    %v6148 = vsub.f32 %v5920, 1.0
    %v6149 = vsub.f32 %v5922, 1.0
    %v6150 = vsub.f32 %v5924, 1.0
    %v6151 = vsub.f32 %v5926, 1.0
    %v6152 = vsub.f32 %v5928, 1.0
    %v6153 = vsub.f32 %v5930, 1.0
    %v6154 = vsub.f32 %v5932, 1.0
    %v6155 = vsub.f32 %v5934, 1.0
    %v6156 = vsub.f32 %v5936, 1.0
    %v6157 = vsub.f32 %v5938, 1.0
    %v6158 = vsub.f32 %v5940, 1.0
    %v6159 = vsub.f32 %v5942, 1.0
    %v6160 = vsub.f32 %v5944, 1.0
    %v6161 = vsub.f32 %v5946, 1.0
    %v6162 = vsub.f32 %v5948, 1.0
    %v6163 = vsub.f32 %v5950, 1.0
    %v6164 = vsub.f32 %v5952, 1.0
    %v6165 = vsub.f32 %v5954, 1.0
    %v6166 = vsub.f32 %v5956, 1.0
    %v6167 = vsub.f32 %v5958, 1.0
    %v6168 = vsub.f32 %v5960, 1.0
    %v6169 = vsub.f32 %v5962, 1.0
    %v6170 = vsub.f32 %v5964, 1.0
    %v6171 = vsub.f32 %v5966, 1.0
    %v6172 = vsub.f32 %v5968, 1.0
    %v6173 = vsub.f32 %v5970, 1.0
    %v6174 = vsub.f32 %v5972, 1.0
    %v6175 = vsub.f32 %v5974, 1.0
    %v6176 = vsub.f32 %v5976, 1.0
    %v6177 = vsub.f32 %v5978, 1.0
    %v6178 = vsub.f32 %v5980, 1.0
    %v6179 = vsub.f32 %v5982, 1.0
    %v6180 = vsub.f32 %v5984, 1.0
    %v6181 = vsub.f32 %v5986, 1.0
    %v6182 = vsub.f32 %v5988, 1.0
    %v6183 = vsub.f32 %v5990, 1.0
    %v6184 = vsub.f32 %v5992, 1.0
    %v6185 = vsub.f32 %v5994, 1.0
    %v6186 = vsub.f32 %v5996, 1.0
    %v6187 = vsub.f32 %v5998, 1.0
    %v6188 = vsub.f32 %v6000, 1.0
    %v6189 = vsub.f32 %v6002, 1.0
    %v6190 = vsub.f32 %v6004, 1.0
    %v6191 = vsub.f32 %v6006, 1.0
    %v6192 = vsub.f32 %v6008, 1.0
    %v6193 = vsub.f32 %v6010, 1.0
    %v6194 = vsub.f32 %v6012, 1.0
    %v6195 = vsub.f32 %v6014, 1.0
    %v6196 = vsub.f32 %v6016, 1.0
    %v6197 = vsub.f32 %v6018, 1.0
    %v6198 = vsub.f32 %v6020, 1.0
    %v6199 = vsub.f32 %v6022, 1.0
    %v6200 = vsub.f32 %v6024, 1.0
    %v6201 = vsub.f32 %v6026, 1.0
    %v6202 = vsub.f32 %v6028, 1.0
    %v6203 = vsub.f32 %v6030, 1.0
    %v6204 = vsub.f32 %v6032, 1.0
    %v6205 = vsub.f32 %v6034, 1.0
    %v6206 = vsub.f32 %v6036, 1.0
    %v6207 = vsub.f32 %v6038, 1.0
    %v6208 = vsub.f32 %v6040, 1.0
    %v6209 = vsub.f32 %v6042, 1.0
    %v6210 = vsub.f32 %v6044, 1.0
    %v6211 = vsub.f32 %v6046, 1.0
    %v6212 = vsub.f32 %v6048, 1.0
    %v6213 = vsub.f32 %v6050, 1.0
    %v6214 = vsub.f32 %v6052, 1.0
    %v6215 = vsub.f32 %v6054, 1.0
    %v6216 = vsub.f32 %v6056, 1.0
    %v6217 = vsub.f32 %v6058, 1.0
    %v6218 = vsub.f32 %v6060, 1.0
    %v6219 = vsub.f32 %v6062, 1.0
    %v6220 = vsub.f32 %v6064, 1.0
    %v6221 = vsub.f32 %v6066, 1.0
    %v6222 = vsub.f32 %v6068, 1.0
    %v6223 = vsub.f32 %v6070, 1.0
    %v6224 = vsub.f32 %v6072, 1.0
    %v6225 = vsub.f32 %v6074, 1.0
    %v6226 = vsub.f32 %v6076, 1.0
    %v6227 = vsub.f32 %v6078, 1.0
    %v6228 = vsub.f32 %v6080, 1.0
    %v6229 = vsub.f32 %v6082, 1.0
    %v6230 = vsub.f32 %v6084, 1.0
    %v6231 = vsub.f32 %v6086, 1.0
    %v6232 = vsub.f32 %v6088, 1.0
    %v6233 = vsub.f32 %v6090, 1.0
    %v6234 = vsub.f32 %v6092, 1.0
    %v6235 = vsub.f32 %v6094, 1.0
    %v6236 = vsub.f32 %v6096, 1.0
    %v6237 = vsub.f32 %v6098, 1.0
    %v6238 = vsub.f32 %v6100, 1.0
    %v6239 = vsub.f32 %v6102, 1.0
    %v6240 = vsub.f32 %v6104, 1.0
    %v6241 = vsub.f32 %v6106, 1.0
    %v6242 = vsub.f32 %v6108, 1.0
    %v6243 = vsub.f32 %v6110, 1.0
    %v6244 = vsub.f32 %v6112, 1.0
    %v6245 = vsub.f32 %v6114, 1.0
    %v6246 = vsub.f32 %v6116, 1.0
    %v6247 = vsub.f32 %v6118, 1.0
    %v6248 = vsub.f32 %v6120, 1.0
    %v6249 = vsel %vm5609, %v5099, %v6121
    %v6250 = vsel %vm5610, %v5102, %v6122
    %v6251 = vsel %vm5611, %v5107, %v6123
    %v6252 = vsel %vm5612, %v5110, %v6124
    %v6253 = vsel %vm5613, %v5115, %v6125
    %v6254 = vsel %vm5614, %v5118, %v6126
    %v6255 = vsel %vm5615, %v5123, %v6127
    %v6256 = vsel %vm5616, %v5126, %v6128
    %v6257 = vsel %vm5617, %v5131, %v6129
    %v6258 = vsel %vm5618, %v5134, %v6130
    %v6259 = vsel %vm5619, %v5139, %v6131
    %v6260 = vsel %vm5620, %v5142, %v6132
    %v6261 = vsel %vm5621, %v5147, %v6133
    %v6262 = vsel %vm5622, %v5150, %v6134
    %v6263 = vsel %vm5623, %v5155, %v6135
    %v6264 = vsel %vm5624, %v5158, %v6136
    %v6265 = vsel %vm5625, %v5163, %v6137
    %v6266 = vsel %vm5626, %v5166, %v6138
    %v6267 = vsel %vm5627, %v5171, %v6139
    %v6268 = vsel %vm5628, %v5174, %v6140
    %v6269 = vsel %vm5629, %v5179, %v6141
    %v6270 = vsel %vm5630, %v5182, %v6142
    %v6271 = vsel %vm5631, %v5187, %v6143
    %v6272 = vsel %vm5632, %v5190, %v6144
    %v6273 = vsel %vm5633, %v5195, %v6145
    %v6274 = vsel %vm5634, %v5198, %v6146
    %v6275 = vsel %vm5635, %v5203, %v6147
    %v6276 = vsel %vm5636, %v5206, %v6148
    %v6277 = vsel %vm5637, %v5211, %v6149
    %v6278 = vsel %vm5638, %v5214, %v6150
    %v6279 = vsel %vm5639, %v5219, %v6151
    %v6280 = vsel %vm5640, %v5222, %v6152
    %v6281 = vsel %vm5641, %v5227, %v6153
    %v6282 = vsel %vm5642, %v5230, %v6154
    %v6283 = vsel %vm5643, %v5235, %v6155
    %v6284 = vsel %vm5644, %v5238, %v6156
    %v6285 = vsel %vm5645, %v5243, %v6157
    %v6286 = vsel %vm5646, %v5246, %v6158
    %v6287 = vsel %vm5647, %v5251, %v6159
    %v6288 = vsel %vm5648, %v5254, %v6160
    %v6289 = vsel %vm5649, %v5259, %v6161
    %v6290 = vsel %vm5650, %v5262, %v6162
    %v6291 = vsel %vm5651, %v5267, %v6163
    %v6292 = vsel %vm5652, %v5270, %v6164
    %v6293 = vsel %vm5653, %v5275, %v6165
    %v6294 = vsel %vm5654, %v5278, %v6166
    %v6295 = vsel %vm5655, %v5283, %v6167
    %v6296 = vsel %vm5656, %v5286, %v6168
    %v6297 = vsel %vm5657, %v5291, %v6169
    %v6298 = vsel %vm5658, %v5294, %v6170
    %v6299 = vsel %vm5659, %v5299, %v6171
    %v6300 = vsel %vm5660, %v5302, %v6172
    %v6301 = vsel %vm5661, %v5307, %v6173
    %v6302 = vsel %vm5662, %v5310, %v6174
    %v6303 = vsel %vm5663, %v5315, %v6175
    %v6304 = vsel %vm5664, %v5318, %v6176
    %v6305 = vsel %vm5665, %v5323, %v6177
    %v6306 = vsel %vm5666, %v5326, %v6178
    %v6307 = vsel %vm5667, %v5331, %v6179
    %v6308 = vsel %vm5668, %v5334, %v6180
    %v6309 = vsel %vm5669, %v5339, %v6181
    %v6310 = vsel %vm5670, %v5342, %v6182
    %v6311 = vsel %vm5671, %v5347, %v6183
    %v6312 = vsel %vm5672, %v5350, %v6184
    %v6313 = vsel %vm5673, %v5355, %v6185
    %v6314 = vsel %vm5674, %v5358, %v6186
    %v6315 = vsel %vm5675, %v5363, %v6187
    %v6316 = vsel %vm5676, %v5366, %v6188
    %v6317 = vsel %vm5677, %v5371, %v6189
    %v6318 = vsel %vm5678, %v5374, %v6190
    %v6319 = vsel %vm5679, %v5379, %v6191
    %v6320 = vsel %vm5680, %v5382, %v6192
    %v6321 = vsel %vm5681, %v5387, %v6193
    %v6322 = vsel %vm5682, %v5390, %v6194
    %v6323 = vsel %vm5683, %v5395, %v6195
    %v6324 = vsel %vm5684, %v5398, %v6196
    %v6325 = vsel %vm5685, %v5403, %v6197
    %v6326 = vsel %vm5686, %v5406, %v6198
    %v6327 = vsel %vm5687, %v5411, %v6199
    %v6328 = vsel %vm5688, %v5414, %v6200
    %v6329 = vsel %vm5689, %v5419, %v6201
    %v6330 = vsel %vm5690, %v5422, %v6202
    %v6331 = vsel %vm5691, %v5427, %v6203
    %v6332 = vsel %vm5692, %v5430, %v6204
    %v6333 = vsel %vm5693, %v5435, %v6205
    %v6334 = vsel %vm5694, %v5438, %v6206
    %v6335 = vsel %vm5695, %v5443, %v6207
    %v6336 = vsel %vm5696, %v5446, %v6208
    %v6337 = vsel %vm5697, %v5451, %v6209
    %v6338 = vsel %vm5698, %v5454, %v6210
    %v6339 = vsel %vm5699, %v5459, %v6211
    %v6340 = vsel %vm5700, %v5462, %v6212
    %v6341 = vsel %vm5701, %v5467, %v6213
    %v6342 = vsel %vm5702, %v5470, %v6214
    %v6343 = vsel %vm5703, %v5475, %v6215
    %v6344 = vsel %vm5704, %v5478, %v6216
    %v6345 = vsel %vm5705, %v5483, %v6217
    %v6346 = vsel %vm5706, %v5486, %v6218
    %v6347 = vsel %vm5707, %v5491, %v6219
    %v6348 = vsel %vm5708, %v5494, %v6220
    %v6349 = vsel %vm5709, %v5499, %v6221
    %v6350 = vsel %vm5710, %v5502, %v6222
    %v6351 = vsel %vm5711, %v5507, %v6223
    %v6352 = vsel %vm5712, %v5510, %v6224
    %v6353 = vsel %vm5713, %v5515, %v6225
    %v6354 = vsel %vm5714, %v5518, %v6226
    %v6355 = vsel %vm5715, %v5523, %v6227
    %v6356 = vsel %vm5716, %v5526, %v6228
    %v6357 = vsel %vm5717, %v5531, %v6229
    %v6358 = vsel %vm5718, %v5534, %v6230
    %v6359 = vsel %vm5719, %v5539, %v6231
    %v6360 = vsel %vm5720, %v5542, %v6232
    %v6361 = vsel %vm5721, %v5547, %v6233
    %v6362 = vsel %vm5722, %v5550, %v6234
    %v6363 = vsel %vm5723, %v5555, %v6235
    %v6364 = vsel %vm5724, %v5558, %v6236
    %v6365 = vsel %vm5725, %v5563, %v6237
    %v6366 = vsel %vm5726, %v5566, %v6238
    %v6367 = vsel %vm5727, %v5571, %v6239
    %v6368 = vsel %vm5728, %v5574, %v6240
    %v6369 = vsel %vm5729, %v5579, %v6241
    %v6370 = vsel %vm5730, %v5582, %v6242
    %v6371 = vsel %vm5731, %v5587, %v6243
    %v6372 = vsel %vm5732, %v5590, %v6244
    %v6373 = vsel %vm5733, %v5595, %v6245
    %v6374 = vsel %vm5734, %v5598, %v6246
    %v6375 = vsel %vm5735, %v5603, %v6247
    %v6376 = vsel %vm5736, %v5606, %v6248
    %v6377 = vpack.c.bf16 %v6250, %v6249
    %v6378 = vpack.c.bf16 %v6252, %v6251
    %v6379 = vpack.c.bf16 %v6254, %v6253
    %v6380 = vpack.c.bf16 %v6256, %v6255
    %v6381 = vpack.c.bf16 %v6258, %v6257
    %v6382 = vpack.c.bf16 %v6260, %v6259
    %v6383 = vpack.c.bf16 %v6262, %v6261
    %v6384 = vpack.c.bf16 %v6264, %v6263
    %v6385 = vpack.c.bf16 %v6266, %v6265
    %v6386 = vpack.c.bf16 %v6268, %v6267
    %v6387 = vpack.c.bf16 %v6270, %v6269
    %v6388 = vpack.c.bf16 %v6272, %v6271
    %v6389 = vpack.c.bf16 %v6274, %v6273
    %v6390 = vpack.c.bf16 %v6276, %v6275
    %v6391 = vpack.c.bf16 %v6278, %v6277
    %v6392 = vpack.c.bf16 %v6280, %v6279
    %v6393 = vpack.c.bf16 %v6282, %v6281
    %v6394 = vpack.c.bf16 %v6284, %v6283
    %v6395 = vpack.c.bf16 %v6286, %v6285
    %v6396 = vpack.c.bf16 %v6288, %v6287
    %v6397 = vpack.c.bf16 %v6290, %v6289
    %v6398 = vpack.c.bf16 %v6292, %v6291
    %v6399 = vpack.c.bf16 %v6294, %v6293
    %v6400 = vpack.c.bf16 %v6296, %v6295
    %v6401 = vpack.c.bf16 %v6298, %v6297
    %v6402 = vpack.c.bf16 %v6300, %v6299
    %v6403 = vpack.c.bf16 %v6302, %v6301
    %v6404 = vpack.c.bf16 %v6304, %v6303
    %v6405 = vpack.c.bf16 %v6306, %v6305
    %v6406 = vpack.c.bf16 %v6308, %v6307
    %v6407 = vpack.c.bf16 %v6310, %v6309
    %v6408 = vpack.c.bf16 %v6312, %v6311
    %v6409 = vpack.c.bf16 %v6314, %v6313
    %v6410 = vpack.c.bf16 %v6316, %v6315
    %v6411 = vpack.c.bf16 %v6318, %v6317
    %v6412 = vpack.c.bf16 %v6320, %v6319
    %v6413 = vpack.c.bf16 %v6322, %v6321
    %v6414 = vpack.c.bf16 %v6324, %v6323
    %v6415 = vpack.c.bf16 %v6326, %v6325
    %v6416 = vpack.c.bf16 %v6328, %v6327
    %v6417 = vpack.c.bf16 %v6330, %v6329
    %v6418 = vpack.c.bf16 %v6332, %v6331
    %v6419 = vpack.c.bf16 %v6334, %v6333
    %v6420 = vpack.c.bf16 %v6336, %v6335
    %v6421 = vpack.c.bf16 %v6338, %v6337
    %v6422 = vpack.c.bf16 %v6340, %v6339
    %v6423 = vpack.c.bf16 %v6342, %v6341
    %v6424 = vpack.c.bf16 %v6344, %v6343
    %v6425 = vpack.c.bf16 %v6346, %v6345
    %v6426 = vpack.c.bf16 %v6348, %v6347
    %v6427 = vpack.c.bf16 %v6350, %v6349
    %v6428 = vpack.c.bf16 %v6352, %v6351
    %v6429 = vpack.c.bf16 %v6354, %v6353
    %v6430 = vpack.c.bf16 %v6356, %v6355
    %v6431 = vpack.c.bf16 %v6358, %v6357
    %v6432 = vpack.c.bf16 %v6360, %v6359
    %v6433 = vpack.c.bf16 %v6362, %v6361
    %v6434 = vpack.c.bf16 %v6364, %v6363
    %v6435 = vpack.c.bf16 %v6366, %v6365
    %v6436 = vpack.c.bf16 %v6368, %v6367
    %v6437 = vpack.c.bf16 %v6370, %v6369
    %v6438 = vpack.c.bf16 %v6372, %v6371
    %v6439 = vpack.c.bf16 %v6374, %v6373
    %v6440 = vpack.c.bf16 %v6376, %v6375
    %v6441 = vld [vmem:[%s9] sm:$0xf]
    %v6442 = vld [vmem:[%s9 + $0x4] sm:$0xf]
    %v6443 = vld [vmem:[%s9 + $0x8] sm:$0xf]
    %v6444 = vld [vmem:[%s9 + $0xc] sm:$0xf]
    %v6445 = vld [vmem:[%s9 + $0x10] sm:$0xf]
    %v6446 = vld [vmem:[%s9 + $0x14] sm:$0xf]
    %v6447 = vld [vmem:[%s9 + $0x18] sm:$0xf]
    %v6448 = vld [vmem:[%s9 + $0x1c] sm:$0xf]
    %v6449 = vld [vmem:[%s9 + $0x20] sm:$0xf]
    %v6450 = vld [vmem:[%s9 + $0x24] sm:$0xf]
    %v6451 = vld [vmem:[%s9 + $0x28] sm:$0xf]
    %v6452 = vld [vmem:[%s9 + $0x2c] sm:$0xf]
    %v6453 = vld [vmem:[%s9 + $0x30] sm:$0xf]
    %v6454 = vld [vmem:[%s9 + $0x34] sm:$0xf]
    %v6455 = vld [vmem:[%s9 + $0x38] sm:$0xf]
    %v6456 = vld [vmem:[%s9 + $0x3c] sm:$0xf]
    %v6457 = vld [vmem:[%s10] sm:$0x1]
    %v6459 = vlaneseq
    %v6460 = vshrl.u32 %v6459, 7
    %v6461 = vsub.s32 0, %v6460
    %v6462 = vrot.slane %v6457, %v6461
    %v6480 = vunpack.c.l.b16 %v6441
    %v6481 = vunpack.c.l.b16 %v6442
    %v6482 = vunpack.c.l.b16 %v6443
    %v6483 = vunpack.c.l.b16 %v6444
    %v6484 = vunpack.c.l.b16 %v6445
    %v6485 = vunpack.c.l.b16 %v6446
    %v6486 = vunpack.c.l.b16 %v6447
    %v6487 = vunpack.c.l.b16 %v6448
    %v6488 = vunpack.c.l.b16 %v6449
    %v6489 = vunpack.c.l.b16 %v6450
    %v6490 = vunpack.c.l.b16 %v6451
    %v6491 = vunpack.c.l.b16 %v6452
    %v6492 = vunpack.c.l.b16 %v6453
    %v6493 = vunpack.c.l.b16 %v6454
    %v6494 = vunpack.c.l.b16 %v6455
    %v6495 = vunpack.c.l.b16 %v6456
    %v6496 = vpack.c.b16 %v6481, %v6480
    %v6497 = vpack.c.b16 %v6483, %v6482
    %v6498 = vpack.c.b16 %v6485, %v6484
    %v6499 = vpack.c.b16 %v6487, %v6486
    %v6500 = vpack.c.b16 %v6489, %v6488
    %v6501 = vpack.c.b16 %v6491, %v6490
    %v6502 = vpack.c.b16 %v6493, %v6492
    %v6503 = vpack.c.b16 %v6495, %v6494
    %6512 = vmatprep.subr.bf16.mxu0 0
    %6513 = vmatpush1.bf16.msra.mxu0 %v6496
    %6514 = vmatprep.subr.bf16.mxu0 0
    %6515 = vmatpush1.bf16.msra.mxu0 %v6497
    %6516 = vmatprep.subr.bf16.mxu0 0
    %6517 = vmatpush1.bf16.msra.mxu0 %v6498
    %6518 = vmatprep.subr.bf16.mxu0 0
    %6519 = vmatpush1.bf16.msra.mxu0 %v6499
    %6520 = vmatprep.subr.bf16.mxu0 0
    %6521 = vmatpush1.bf16.msra.mxu0 %v6500
    %6522 = vmatprep.subr.bf16.mxu0 0
    %6523 = vmatpush1.bf16.msra.mxu0 %v6501
    %6524 = vmatprep.subr.bf16.mxu0 0
    %6525 = vmatpush1.bf16.msra.mxu0 %v6502
    %6526 = vmatprep.subr.bf16.mxu0 0
    %6527 = vmatpush1.bf16.msra.mxu0 %v6503
    %6528 = vmatprep.subr.bf16.mxu0 0
    %6529 = vmatpush1.bf16.msra.mxu0 0
    %6530 = vmatprep.subr.bf16.mxu0 0
    %6531 = vmatpush1.bf16.msra.mxu0 0
    %6532 = vmatprep.subr.bf16.mxu0 0
    %6533 = vmatpush1.bf16.msra.mxu0 0
    %6534 = vmatprep.subr.bf16.mxu0 0
    %6535 = vmatpush1.bf16.msra.mxu0 0
    %6536 = vmatprep.subr.bf16.mxu0 0
    %6537 = vmatpush1.bf16.msra.mxu0 0
    %6538 = vmatprep.subr.bf16.mxu0 0
    %6539 = vmatpush1.bf16.msra.mxu0 0
    %6540 = vmatprep.subr.bf16.mxu0 0
    %6541 = vmatpush1.bf16.msra.mxu0 0
    %6542 = vmatprep.subr.bf16.mxu0 0
    %6543 = vmatpush1.bf16.msra.mxu0 0
    %6544 = vmatprep.mubr.bf16.mxu0 0
    %6545 = vmatmul.mubr.bf16.gmra.mrb[0].mxu0 %v6377
    %v6546 = vpop.f32.mrb[0].mxu0
    %v6547 = vadd.f32 %v6462, %v6546
    %v6548 = vpop.f32.mrb[0].mxu0
    %v6549 = vpop.f32.mrb[0].mxu0
    %v6550 = vadd.f32 %v6462, %v6549
    %v6551 = vpop.f32.mrb[0].mxu0
    %6552 = vmatprep.mubr.bf16.mxu0 0
    %6553 = vmatmul.mubr.bf16.gmra.mrb[0].mxu0 %v6378
    %v6554 = vpop.f32.mrb[0].mxu0
    %v6555 = vadd.f32 %v6462, %v6554
    %v6556 = vpop.f32.mrb[0].mxu0
    %v6557 = vpop.f32.mrb[0].mxu0
    %v6558 = vadd.f32 %v6462, %v6557
    %v6559 = vpop.f32.mrb[0].mxu0
    %6560 = vmatprep.mubr.bf16.mxu0 0
    %6561 = vmatmul.mubr.bf16.gmra.mrb[0].mxu0 %v6379
    %v6562 = vpop.f32.mrb[0].mxu0
    %v6563 = vadd.f32 %v6462, %v6562
    %v6564 = vpop.f32.mrb[0].mxu0
    %v6565 = vpop.f32.mrb[0].mxu0
    %v6566 = vadd.f32 %v6462, %v6565
    %v6567 = vpop.f32.mrb[0].mxu0
    %6568 = vmatprep.mubr.bf16.mxu0 0
    %6569 = vmatmul.mubr.bf16.gmra.mrb[0].mxu0 %v6380
    %v6570 = vpop.f32.mrb[0].mxu0
    %v6571 = vadd.f32 %v6462, %v6570
    %v6572 = vpop.f32.mrb[0].mxu0
    %v6573 = vpop.f32.mrb[0].mxu0
    %v6574 = vadd.f32 %v6462, %v6573
    %v6575 = vpop.f32.mrb[0].mxu0
    %6576 = vmatprep.mubr.bf16.mxu0 0
    %6577 = vmatmul.mubr.bf16.gmra.mrb[0].mxu0 %v6381
    %v6578 = vpop.f32.mrb[0].mxu0
    %v6579 = vadd.f32 %v6462, %v6578
    %v6580 = vpop.f32.mrb[0].mxu0
    %v6581 = vpop.f32.mrb[0].mxu0
    %v6582 = vadd.f32 %v6462, %v6581
    %v6583 = vpop.f32.mrb[0].mxu0
    %6584 = vmatprep.mubr.bf16.mxu0 0
    %6585 = vmatmul.mubr.bf16.gmra.mrb[0].mxu0 %v6382
    %v6586 = vpop.f32.mrb[0].mxu0
    %v6587 = vadd.f32 %v6462, %v6586
    %v6588 = vpop.f32.mrb[0].mxu0
    %v6589 = vpop.f32.mrb[0].mxu0
    %v6590 = vadd.f32 %v6462, %v6589
    %v6591 = vpop.f32.mrb[0].mxu0
    %6592 = vmatprep.mubr.bf16.mxu0 0
    %6593 = vmatmul.mubr.bf16.gmra.mrb[0].mxu0 %v6383
    %v6594 = vpop.f32.mrb[0].mxu0
    %v6595 = vadd.f32 %v6462, %v6594
    %v6596 = vpop.f32.mrb[0].mxu0
    %v6597 = vpop.f32.mrb[0].mxu0
    %v6598 = vadd.f32 %v6462, %v6597
    %v6599 = vpop.f32.mrb[0].mxu0
    %6600 = vmatprep.mubr.bf16.mxu0 0
    %6601 = vmatmul.mubr.bf16.gmra.mrb[0].mxu0 %v6384
    %v6602 = vpop.f32.mrb[0].mxu0
    %v6603 = vadd.f32 %v6462, %v6602
    %v6604 = vpop.f32.mrb[0].mxu0
    %v6605 = vpop.f32.mrb[0].mxu0
    %v6606 = vadd.f32 %v6462, %v6605
    %v6607 = vpop.f32.mrb[0].mxu0
    %6608 = vmatprep.mubr.bf16.mxu0 0
    %6609 = vmatmul.mubr.bf16.gmra.mrb[0].mxu0 %v6385
    %v6610 = vpop.f32.mrb[0].mxu0
    %v6611 = vadd.f32 %v6462, %v6610
    %v6612 = vpop.f32.mrb[0].mxu0
    %v6613 = vpop.f32.mrb[0].mxu0
    %v6614 = vadd.f32 %v6462, %v6613
    %v6615 = vpop.f32.mrb[0].mxu0
    %6616 = vmatprep.mubr.bf16.mxu0 0
    %6617 = vmatmul.mubr.bf16.gmra.mrb[0].mxu0 %v6386
    %v6618 = vpop.f32.mrb[0].mxu0
    %v6619 = vadd.f32 %v6462, %v6618
    %v6620 = vpop.f32.mrb[0].mxu0
    %v6621 = vpop.f32.mrb[0].mxu0
    %v6622 = vadd.f32 %v6462, %v6621
    %v6623 = vpop.f32.mrb[0].mxu0
    %6624 = vmatprep.mubr.bf16.mxu0 0
    %6625 = vmatmul.mubr.bf16.gmra.mrb[0].mxu0 %v6387
    %v6626 = vpop.f32.mrb[0].mxu0
    %v6627 = vadd.f32 %v6462, %v6626
    %v6628 = vpop.f32.mrb[0].mxu0
    %v6629 = vpop.f32.mrb[0].mxu0
    %v6630 = vadd.f32 %v6462, %v6629
    %v6631 = vpop.f32.mrb[0].mxu0
    %6632 = vmatprep.mubr.bf16.mxu0 0
    %6633 = vmatmul.mubr.bf16.gmra.mrb[0].mxu0 %v6388
    %v6634 = vpop.f32.mrb[0].mxu0
    %v6635 = vadd.f32 %v6462, %v6634
    %v6636 = vpop.f32.mrb[0].mxu0
    %v6637 = vpop.f32.mrb[0].mxu0
    %v6638 = vadd.f32 %v6462, %v6637
    %v6639 = vpop.f32.mrb[0].mxu0
    %6640 = vmatprep.mubr.bf16.mxu0 0
    %6641 = vmatmul.mubr.bf16.gmra.mrb[0].mxu0 %v6389
    %v6642 = vpop.f32.mrb[0].mxu0
    %v6643 = vadd.f32 %v6462, %v6642
    %v6644 = vpop.f32.mrb[0].mxu0
    %v6645 = vpop.f32.mrb[0].mxu0
    %v6646 = vadd.f32 %v6462, %v6645
    %v6647 = vpop.f32.mrb[0].mxu0
    %6648 = vmatprep.mubr.bf16.mxu0 0
    %6649 = vmatmul.mubr.bf16.gmra.mrb[0].mxu0 %v6390
    %v6650 = vpop.f32.mrb[0].mxu0
    %v6651 = vadd.f32 %v6462, %v6650
    %v6652 = vpop.f32.mrb[0].mxu0
    %v6653 = vpop.f32.mrb[0].mxu0
    %v6654 = vadd.f32 %v6462, %v6653
    %v6655 = vpop.f32.mrb[0].mxu0
    %6656 = vmatprep.mubr.bf16.mxu0 0
    %6657 = vmatmul.mubr.bf16.gmra.mrb[0].mxu0 %v6391
    %v6658 = vpop.f32.mrb[0].mxu0
    %v6659 = vadd.f32 %v6462, %v6658
    %v6660 = vpop.f32.mrb[0].mxu0
    %v6661 = vpop.f32.mrb[0].mxu0
    %v6662 = vadd.f32 %v6462, %v6661
    %v6663 = vpop.f32.mrb[0].mxu0
    %6664 = vmatprep.mubr.bf16.mxu0 0
    %6665 = vmatmul.mubr.bf16.gmra.mrb[0].mxu0 %v6392
    %v6666 = vpop.f32.mrb[0].mxu0
    %v6667 = vadd.f32 %v6462, %v6666
    %v6668 = vpop.f32.mrb[0].mxu0
    %v6669 = vpop.f32.mrb[0].mxu0
    %v6670 = vadd.f32 %v6462, %v6669
    %v6671 = vpop.f32.mrb[0].mxu0
    %6672 = vmatprep.mubr.bf16.mxu0 0
    %6673 = vmatmul.mubr.bf16.gmra.mrb[0].mxu0 %v6393
    %v6674 = vpop.f32.mrb[0].mxu0
    %v6675 = vadd.f32 %v6462, %v6674
    %v6676 = vpop.f32.mrb[0].mxu0
    %v6677 = vpop.f32.mrb[0].mxu0
    %v6678 = vadd.f32 %v6462, %v6677
    %v6679 = vpop.f32.mrb[0].mxu0
    %6680 = vmatprep.mubr.bf16.mxu0 0
    %6681 = vmatmul.mubr.bf16.gmra.mrb[0].mxu0 %v6394
    %v6682 = vpop.f32.mrb[0].mxu0
    %v6683 = vadd.f32 %v6462, %v6682
    %v6684 = vpop.f32.mrb[0].mxu0
    %v6685 = vpop.f32.mrb[0].mxu0
    %v6686 = vadd.f32 %v6462, %v6685
    %v6687 = vpop.f32.mrb[0].mxu0
    %6688 = vmatprep.mubr.bf16.mxu0 0
    %6689 = vmatmul.mubr.bf16.gmra.mrb[0].mxu0 %v6395
    %v6690 = vpop.f32.mrb[0].mxu0
    %v6691 = vadd.f32 %v6462, %v6690
    %v6692 = vpop.f32.mrb[0].mxu0
    %v6693 = vpop.f32.mrb[0].mxu0
    %v6694 = vadd.f32 %v6462, %v6693
    %v6695 = vpop.f32.mrb[0].mxu0
    %6696 = vmatprep.mubr.bf16.mxu0 0
    %6697 = vmatmul.mubr.bf16.gmra.mrb[0].mxu0 %v6396
    %v6698 = vpop.f32.mrb[0].mxu0
    %v6699 = vadd.f32 %v6462, %v6698
    %v6700 = vpop.f32.mrb[0].mxu0
    %v6701 = vpop.f32.mrb[0].mxu0
    %v6702 = vadd.f32 %v6462, %v6701
    %v6703 = vpop.f32.mrb[0].mxu0
    %6704 = vmatprep.mubr.bf16.mxu0 0
    %6705 = vmatmul.mubr.bf16.gmra.mrb[0].mxu0 %v6397
    %v6706 = vpop.f32.mrb[0].mxu0
    %v6707 = vadd.f32 %v6462, %v6706
    %v6708 = vpop.f32.mrb[0].mxu0
    %v6709 = vpop.f32.mrb[0].mxu0
    %v6710 = vadd.f32 %v6462, %v6709
    %v6711 = vpop.f32.mrb[0].mxu0
    %6712 = vmatprep.mubr.bf16.mxu0 0
    %6713 = vmatmul.mubr.bf16.gmra.mrb[0].mxu0 %v6398
    %v6714 = vpop.f32.mrb[0].mxu0
    %v6715 = vadd.f32 %v6462, %v6714
    %v6716 = vpop.f32.mrb[0].mxu0
    %v6717 = vpop.f32.mrb[0].mxu0
    %v6718 = vadd.f32 %v6462, %v6717
    %v6719 = vpop.f32.mrb[0].mxu0
    %6720 = vmatprep.mubr.bf16.mxu0 0
    %6721 = vmatmul.mubr.bf16.gmra.mrb[0].mxu0 %v6399
    %v6722 = vpop.f32.mrb[0].mxu0
    %v6723 = vadd.f32 %v6462, %v6722
    %v6724 = vpop.f32.mrb[0].mxu0
    %v6725 = vpop.f32.mrb[0].mxu0
    %v6726 = vadd.f32 %v6462, %v6725
    %v6727 = vpop.f32.mrb[0].mxu0
    %6728 = vmatprep.mubr.bf16.mxu0 0
    %6729 = vmatmul.mubr.bf16.gmra.mrb[0].mxu0 %v6400
    %v6730 = vpop.f32.mrb[0].mxu0
    %v6731 = vadd.f32 %v6462, %v6730
    %v6732 = vpop.f32.mrb[0].mxu0
    %v6733 = vpop.f32.mrb[0].mxu0
    %v6734 = vadd.f32 %v6462, %v6733
    %v6735 = vpop.f32.mrb[0].mxu0
    %6736 = vmatprep.mubr.bf16.mxu0 0
    %6737 = vmatmul.mubr.bf16.gmra.mrb[0].mxu0 %v6401
    %v6738 = vpop.f32.mrb[0].mxu0
    %v6739 = vadd.f32 %v6462, %v6738
    %v6740 = vpop.f32.mrb[0].mxu0
    %v6741 = vpop.f32.mrb[0].mxu0
    %v6742 = vadd.f32 %v6462, %v6741
    %v6743 = vpop.f32.mrb[0].mxu0
    %6744 = vmatprep.mubr.bf16.mxu0 0
    %6745 = vmatmul.mubr.bf16.gmra.mrb[0].mxu0 %v6402
    %v6746 = vpop.f32.mrb[0].mxu0
    %v6747 = vadd.f32 %v6462, %v6746
    %v6748 = vpop.f32.mrb[0].mxu0
    %v6749 = vpop.f32.mrb[0].mxu0
    %v6750 = vadd.f32 %v6462, %v6749
    %v6751 = vpop.f32.mrb[0].mxu0
    %6752 = vmatprep.mubr.bf16.mxu0 0
    %6753 = vmatmul.mubr.bf16.gmra.mrb[0].mxu0 %v6403
    %v6754 = vpop.f32.mrb[0].mxu0
    %v6755 = vadd.f32 %v6462, %v6754
    %v6756 = vpop.f32.mrb[0].mxu0
    %v6757 = vpop.f32.mrb[0].mxu0
    %v6758 = vadd.f32 %v6462, %v6757
    %v6759 = vpop.f32.mrb[0].mxu0
    %6760 = vmatprep.mubr.bf16.mxu0 0
    %6761 = vmatmul.mubr.bf16.gmra.mrb[0].mxu0 %v6404
    %v6762 = vpop.f32.mrb[0].mxu0
    %v6763 = vadd.f32 %v6462, %v6762
    %v6764 = vpop.f32.mrb[0].mxu0
    %v6765 = vpop.f32.mrb[0].mxu0
    %v6766 = vadd.f32 %v6462, %v6765
    %v6767 = vpop.f32.mrb[0].mxu0
    %6768 = vmatprep.mubr.bf16.mxu0 0
    %6769 = vmatmul.mubr.bf16.gmra.mrb[0].mxu0 %v6405
    %v6770 = vpop.f32.mrb[0].mxu0
    %v6771 = vadd.f32 %v6462, %v6770
    %v6772 = vpop.f32.mrb[0].mxu0
    %v6773 = vpop.f32.mrb[0].mxu0
    %v6774 = vadd.f32 %v6462, %v6773
    %v6775 = vpop.f32.mrb[0].mxu0
    %6776 = vmatprep.mubr.bf16.mxu0 0
    %6777 = vmatmul.mubr.bf16.gmra.mrb[0].mxu0 %v6406
    %v6778 = vpop.f32.mrb[0].mxu0
    %v6779 = vadd.f32 %v6462, %v6778
    %v6780 = vpop.f32.mrb[0].mxu0
    %v6781 = vpop.f32.mrb[0].mxu0
    %v6782 = vadd.f32 %v6462, %v6781
    %v6783 = vpop.f32.mrb[0].mxu0
    %6784 = vmatprep.mubr.bf16.mxu0 0
    %6785 = vmatmul.mubr.bf16.gmra.mrb[0].mxu0 %v6407
    %v6786 = vpop.f32.mrb[0].mxu0
    %v6787 = vadd.f32 %v6462, %v6786
    %v6788 = vpop.f32.mrb[0].mxu0
    %v6789 = vpop.f32.mrb[0].mxu0
    %v6790 = vadd.f32 %v6462, %v6789
    %v6791 = vpop.f32.mrb[0].mxu0
    %6792 = vmatprep.mubr.bf16.mxu0 0
    %6793 = vmatmul.mubr.bf16.gmra.mrb[0].mxu0 %v6408
    %v6794 = vpop.f32.mrb[0].mxu0
    %v6795 = vadd.f32 %v6462, %v6794
    %v6796 = vpop.f32.mrb[0].mxu0
    %v6797 = vpop.f32.mrb[0].mxu0
    %v6798 = vadd.f32 %v6462, %v6797
    %v6799 = vpop.f32.mrb[0].mxu0
    %6800 = vmatprep.mubr.bf16.mxu0 0
    %6801 = vmatmul.mubr.bf16.gmra.mrb[0].mxu0 %v6409
    %v6802 = vpop.f32.mrb[0].mxu0
    %v6803 = vadd.f32 %v6462, %v6802
    %v6804 = vpop.f32.mrb[0].mxu0
    %v6805 = vpop.f32.mrb[0].mxu0
    %v6806 = vadd.f32 %v6462, %v6805
    %v6807 = vpop.f32.mrb[0].mxu0
    %6808 = vmatprep.mubr.bf16.mxu0 0
    %6809 = vmatmul.mubr.bf16.gmra.mrb[0].mxu0 %v6410
    %v6810 = vpop.f32.mrb[0].mxu0
    %v6811 = vadd.f32 %v6462, %v6810
    %v6812 = vpop.f32.mrb[0].mxu0
    %v6813 = vpop.f32.mrb[0].mxu0
    %v6814 = vadd.f32 %v6462, %v6813
    %v6815 = vpop.f32.mrb[0].mxu0
    %6816 = vmatprep.mubr.bf16.mxu0 0
    %6817 = vmatmul.mubr.bf16.gmra.mrb[0].mxu0 %v6411
    %v6818 = vpop.f32.mrb[0].mxu0
    %v6819 = vadd.f32 %v6462, %v6818
    %v6820 = vpop.f32.mrb[0].mxu0
    %v6821 = vpop.f32.mrb[0].mxu0
    %v6822 = vadd.f32 %v6462, %v6821
    %v6823 = vpop.f32.mrb[0].mxu0
    %6824 = vmatprep.mubr.bf16.mxu0 0
    %6825 = vmatmul.mubr.bf16.gmra.mrb[0].mxu0 %v6412
    %v6826 = vpop.f32.mrb[0].mxu0
    %v6827 = vadd.f32 %v6462, %v6826
    %v6828 = vpop.f32.mrb[0].mxu0
    %v6829 = vpop.f32.mrb[0].mxu0
    %v6830 = vadd.f32 %v6462, %v6829
    %v6831 = vpop.f32.mrb[0].mxu0
    %6832 = vmatprep.mubr.bf16.mxu0 0
    %6833 = vmatmul.mubr.bf16.gmra.mrb[0].mxu0 %v6413
    %v6834 = vpop.f32.mrb[0].mxu0
    %v6835 = vadd.f32 %v6462, %v6834
    %v6836 = vpop.f32.mrb[0].mxu0
    %v6837 = vpop.f32.mrb[0].mxu0
    %v6838 = vadd.f32 %v6462, %v6837
    %v6839 = vpop.f32.mrb[0].mxu0
    %6840 = vmatprep.mubr.bf16.mxu0 0
    %6841 = vmatmul.mubr.bf16.gmra.mrb[0].mxu0 %v6414
    %v6842 = vpop.f32.mrb[0].mxu0
    %v6843 = vadd.f32 %v6462, %v6842
    %v6844 = vpop.f32.mrb[0].mxu0
    %v6845 = vpop.f32.mrb[0].mxu0
    %v6846 = vadd.f32 %v6462, %v6845
    %v6847 = vpop.f32.mrb[0].mxu0
    %6848 = vmatprep.mubr.bf16.mxu0 0
    %6849 = vmatmul.mubr.bf16.gmra.mrb[0].mxu0 %v6415
    %v6850 = vpop.f32.mrb[0].mxu0
    %v6851 = vadd.f32 %v6462, %v6850
    %v6852 = vpop.f32.mrb[0].mxu0
    %v6853 = vpop.f32.mrb[0].mxu0
    %v6854 = vadd.f32 %v6462, %v6853
    %v6855 = vpop.f32.mrb[0].mxu0
    %6856 = vmatprep.mubr.bf16.mxu0 0
    %6857 = vmatmul.mubr.bf16.gmra.mrb[0].mxu0 %v6416
    %v6858 = vpop.f32.mrb[0].mxu0
    %v6859 = vadd.f32 %v6462, %v6858
    %v6860 = vpop.f32.mrb[0].mxu0
    %v6861 = vpop.f32.mrb[0].mxu0
    %v6862 = vadd.f32 %v6462, %v6861
    %v6863 = vpop.f32.mrb[0].mxu0
    %6864 = vmatprep.mubr.bf16.mxu0 0
    %6865 = vmatmul.mubr.bf16.gmra.mrb[0].mxu0 %v6417
    %v6866 = vpop.f32.mrb[0].mxu0
    %v6867 = vadd.f32 %v6462, %v6866
    %v6868 = vpop.f32.mrb[0].mxu0
    %v6869 = vpop.f32.mrb[0].mxu0
    %v6870 = vadd.f32 %v6462, %v6869
    %v6871 = vpop.f32.mrb[0].mxu0
    %6872 = vmatprep.mubr.bf16.mxu0 0
    %6873 = vmatmul.mubr.bf16.gmra.mrb[0].mxu0 %v6418
    %v6874 = vpop.f32.mrb[0].mxu0
    %v6875 = vadd.f32 %v6462, %v6874
    %v6876 = vpop.f32.mrb[0].mxu0
    %v6877 = vpop.f32.mrb[0].mxu0
    %v6878 = vadd.f32 %v6462, %v6877
    %v6879 = vpop.f32.mrb[0].mxu0
    %6880 = vmatprep.mubr.bf16.mxu0 0
    %6881 = vmatmul.mubr.bf16.gmra.mrb[0].mxu0 %v6419
    %v6882 = vpop.f32.mrb[0].mxu0
    %v6883 = vadd.f32 %v6462, %v6882
    %v6884 = vpop.f32.mrb[0].mxu0
    %v6885 = vpop.f32.mrb[0].mxu0
    %v6886 = vadd.f32 %v6462, %v6885
    %v6887 = vpop.f32.mrb[0].mxu0
    %6888 = vmatprep.mubr.bf16.mxu0 0
    %6889 = vmatmul.mubr.bf16.gmra.mrb[0].mxu0 %v6420
    %v6890 = vpop.f32.mrb[0].mxu0
    %v6891 = vadd.f32 %v6462, %v6890
    %v6892 = vpop.f32.mrb[0].mxu0
    %v6893 = vpop.f32.mrb[0].mxu0
    %v6894 = vadd.f32 %v6462, %v6893
    %v6895 = vpop.f32.mrb[0].mxu0
    %6896 = vmatprep.mubr.bf16.mxu0 0
    %6897 = vmatmul.mubr.bf16.gmra.mrb[0].mxu0 %v6421
    %v6898 = vpop.f32.mrb[0].mxu0
    %v6899 = vadd.f32 %v6462, %v6898
    %v6900 = vpop.f32.mrb[0].mxu0
    %v6901 = vpop.f32.mrb[0].mxu0
    %v6902 = vadd.f32 %v6462, %v6901
    %v6903 = vpop.f32.mrb[0].mxu0
    %6904 = vmatprep.mubr.bf16.mxu0 0
    %6905 = vmatmul.mubr.bf16.gmra.mrb[0].mxu0 %v6422
    %v6906 = vpop.f32.mrb[0].mxu0
    %v6907 = vadd.f32 %v6462, %v6906
    %v6908 = vpop.f32.mrb[0].mxu0
    %v6909 = vpop.f32.mrb[0].mxu0
    %v6910 = vadd.f32 %v6462, %v6909
    %v6911 = vpop.f32.mrb[0].mxu0
    %6912 = vmatprep.mubr.bf16.mxu0 0
    %6913 = vmatmul.mubr.bf16.gmra.mrb[0].mxu0 %v6423
    %v6914 = vpop.f32.mrb[0].mxu0
    %v6915 = vadd.f32 %v6462, %v6914
    %v6916 = vpop.f32.mrb[0].mxu0
    %v6917 = vpop.f32.mrb[0].mxu0
    %v6918 = vadd.f32 %v6462, %v6917
    %v6919 = vpop.f32.mrb[0].mxu0
    %6920 = vmatprep.mubr.bf16.mxu0 0
    %6921 = vmatmul.mubr.bf16.gmra.mrb[0].mxu0 %v6424
    %v6922 = vpop.f32.mrb[0].mxu0
    %v6923 = vadd.f32 %v6462, %v6922
    %v6924 = vpop.f32.mrb[0].mxu0
    %v6925 = vpop.f32.mrb[0].mxu0
    %v6926 = vadd.f32 %v6462, %v6925
    %v6927 = vpop.f32.mrb[0].mxu0
    %6928 = vmatprep.mubr.bf16.mxu0 0
    %6929 = vmatmul.mubr.bf16.gmra.mrb[0].mxu0 %v6425
    %v6930 = vpop.f32.mrb[0].mxu0
    %v6931 = vadd.f32 %v6462, %v6930
    %v6932 = vpop.f32.mrb[0].mxu0
    %v6933 = vpop.f32.mrb[0].mxu0
    %v6934 = vadd.f32 %v6462, %v6933
    %v6935 = vpop.f32.mrb[0].mxu0
    %6936 = vmatprep.mubr.bf16.mxu0 0
    %6937 = vmatmul.mubr.bf16.gmra.mrb[0].mxu0 %v6426
    %v6938 = vpop.f32.mrb[0].mxu0
    %v6939 = vadd.f32 %v6462, %v6938
    %v6940 = vpop.f32.mrb[0].mxu0
    %v6941 = vpop.f32.mrb[0].mxu0
    %v6942 = vadd.f32 %v6462, %v6941
    %v6943 = vpop.f32.mrb[0].mxu0
    %6944 = vmatprep.mubr.bf16.mxu0 0
    %6945 = vmatmul.mubr.bf16.gmra.mrb[0].mxu0 %v6427
    %v6946 = vpop.f32.mrb[0].mxu0
    %v6947 = vadd.f32 %v6462, %v6946
    %v6948 = vpop.f32.mrb[0].mxu0
    %v6949 = vpop.f32.mrb[0].mxu0
    %v6950 = vadd.f32 %v6462, %v6949
    %v6951 = vpop.f32.mrb[0].mxu0
    %6952 = vmatprep.mubr.bf16.mxu0 0
    %6953 = vmatmul.mubr.bf16.gmra.mrb[0].mxu0 %v6428
    %v6954 = vpop.f32.mrb[0].mxu0
    %v6955 = vadd.f32 %v6462, %v6954
    %v6956 = vpop.f32.mrb[0].mxu0
    %v6957 = vpop.f32.mrb[0].mxu0
    %v6958 = vadd.f32 %v6462, %v6957
    %v6959 = vpop.f32.mrb[0].mxu0
    %6960 = vmatprep.mubr.bf16.mxu0 0
    %6961 = vmatmul.mubr.bf16.gmra.mrb[0].mxu0 %v6429
    %v6962 = vpop.f32.mrb[0].mxu0
    %v6963 = vadd.f32 %v6462, %v6962
    %v6964 = vpop.f32.mrb[0].mxu0
    %v6965 = vpop.f32.mrb[0].mxu0
    %v6966 = vadd.f32 %v6462, %v6965
    %v6967 = vpop.f32.mrb[0].mxu0
    %6968 = vmatprep.mubr.bf16.mxu0 0
    %6969 = vmatmul.mubr.bf16.gmra.mrb[0].mxu0 %v6430
    %v6970 = vpop.f32.mrb[0].mxu0
    %v6971 = vadd.f32 %v6462, %v6970
    %v6972 = vpop.f32.mrb[0].mxu0
    %v6973 = vpop.f32.mrb[0].mxu0
    %v6974 = vadd.f32 %v6462, %v6973
    %v6975 = vpop.f32.mrb[0].mxu0
    %6976 = vmatprep.mubr.bf16.mxu0 0
    %6977 = vmatmul.mubr.bf16.gmra.mrb[0].mxu0 %v6431
    %v6978 = vpop.f32.mrb[0].mxu0
    %v6979 = vadd.f32 %v6462, %v6978
    %v6980 = vpop.f32.mrb[0].mxu0
    %v6981 = vpop.f32.mrb[0].mxu0
    %v6982 = vadd.f32 %v6462, %v6981
    %v6983 = vpop.f32.mrb[0].mxu0
    %6984 = vmatprep.mubr.bf16.mxu0 0
    %6985 = vmatmul.mubr.bf16.gmra.mrb[0].mxu0 %v6432
    %v6986 = vpop.f32.mrb[0].mxu0
    %v6987 = vadd.f32 %v6462, %v6986
    %v6988 = vpop.f32.mrb[0].mxu0
    %v6989 = vpop.f32.mrb[0].mxu0
    %v6990 = vadd.f32 %v6462, %v6989
    %v6991 = vpop.f32.mrb[0].mxu0
    %6992 = vmatprep.mubr.bf16.mxu0 0
    %6993 = vmatmul.mubr.bf16.gmra.mrb[0].mxu0 %v6433
    %v6994 = vpop.f32.mrb[0].mxu0
    %v6995 = vadd.f32 %v6462, %v6994
    %v6996 = vpop.f32.mrb[0].mxu0
    %v6997 = vpop.f32.mrb[0].mxu0
    %v6998 = vadd.f32 %v6462, %v6997
    %v6999 = vpop.f32.mrb[0].mxu0
    %7000 = vmatprep.mubr.bf16.mxu0 0
    %7001 = vmatmul.mubr.bf16.gmra.mrb[0].mxu0 %v6434
    %v7002 = vpop.f32.mrb[0].mxu0
    %v7003 = vadd.f32 %v6462, %v7002
    %v7004 = vpop.f32.mrb[0].mxu0
    %v7005 = vpop.f32.mrb[0].mxu0
    %v7006 = vadd.f32 %v6462, %v7005
    %v7007 = vpop.f32.mrb[0].mxu0
    %7008 = vmatprep.mubr.bf16.mxu0 0
    %7009 = vmatmul.mubr.bf16.gmra.mrb[0].mxu0 %v6435
    %v7010 = vpop.f32.mrb[0].mxu0
    %v7011 = vadd.f32 %v6462, %v7010
    %v7012 = vpop.f32.mrb[0].mxu0
    %v7013 = vpop.f32.mrb[0].mxu0
    %v7014 = vadd.f32 %v6462, %v7013
    %v7015 = vpop.f32.mrb[0].mxu0
    %7016 = vmatprep.mubr.bf16.mxu0 0
    %7017 = vmatmul.mubr.bf16.gmra.mrb[0].mxu0 %v6436
    %v7018 = vpop.f32.mrb[0].mxu0
    %v7019 = vadd.f32 %v6462, %v7018
    %v7020 = vpop.f32.mrb[0].mxu0
    %v7021 = vpop.f32.mrb[0].mxu0
    %v7022 = vadd.f32 %v6462, %v7021
    %v7023 = vpop.f32.mrb[0].mxu0
    %7024 = vmatprep.mubr.bf16.mxu0 0
    %7025 = vmatmul.mubr.bf16.gmra.mrb[0].mxu0 %v6437
    %v7026 = vpop.f32.mrb[0].mxu0
    %v7027 = vadd.f32 %v6462, %v7026
    %v7028 = vpop.f32.mrb[0].mxu0
    %v7029 = vpop.f32.mrb[0].mxu0
    %v7030 = vadd.f32 %v6462, %v7029
    %v7031 = vpop.f32.mrb[0].mxu0
    %7032 = vmatprep.mubr.bf16.mxu0 0
    %7033 = vmatmul.mubr.bf16.gmra.mrb[0].mxu0 %v6438
    %v7034 = vpop.f32.mrb[0].mxu0
    %v7035 = vadd.f32 %v6462, %v7034
    %v7036 = vpop.f32.mrb[0].mxu0
    %v7037 = vpop.f32.mrb[0].mxu0
    %v7038 = vadd.f32 %v6462, %v7037
    %v7039 = vpop.f32.mrb[0].mxu0
    %7040 = vmatprep.mubr.bf16.mxu0 0
    %7041 = vmatmul.mubr.bf16.gmra.mrb[0].mxu0 %v6439
    %v7042 = vpop.f32.mrb[0].mxu0
    %v7043 = vadd.f32 %v6462, %v7042
    %v7044 = vpop.f32.mrb[0].mxu0
    %v7045 = vpop.f32.mrb[0].mxu0
    %v7046 = vadd.f32 %v6462, %v7045
    %v7047 = vpop.f32.mrb[0].mxu0
    %7048 = vmatprep.mubr.bf16.mxu0 0
    %7049 = vmatmul.mubr.bf16.gmra.mrb[0].mxu0 %v6440
    %v7050 = vpop.f32.mrb[0].mxu0
    %v7051 = vadd.f32 %v6462, %v7050
    %v7052 = vpop.f32.mrb[0].mxu0
    %v7053 = vpop.f32.mrb[0].mxu0
    %v7054 = vadd.f32 %v6462, %v7053
    %v7055 = vpop.f32.mrb[0].mxu0
    %7056 = vdwg.mxu0
    %7057 = vst [vmem:[#allocation2] sm:$0xff] %v6547
    %7058 = vst [vmem:[#allocation2 + $0x8] sm:$0xff] %v6550
    %7059 = vst [vmem:[#allocation2 + $0x10] sm:$0xff] %v6555
    %7060 = vst [vmem:[#allocation2 + $0x18] sm:$0xff] %v6558
    %7061 = vst [vmem:[#allocation2 + $0x20] sm:$0xff] %v6563
    %7062 = vst [vmem:[#allocation2 + $0x28] sm:$0xff] %v6566
    %7063 = vst [vmem:[#allocation2 + $0x30] sm:$0xff] %v6571
    %7064 = vst [vmem:[#allocation2 + $0x38] sm:$0xff] %v6574
    %7065 = vst [vmem:[#allocation2 + $0x40] sm:$0xff] %v6579
    %7066 = vst [vmem:[#allocation2 + $0x48] sm:$0xff] %v6582
    %7067 = vst [vmem:[#allocation2 + $0x50] sm:$0xff] %v6587
    %7068 = vst [vmem:[#allocation2 + $0x58] sm:$0xff] %v6590
    %7069 = vst [vmem:[#allocation2 + $0x60] sm:$0xff] %v6595
    %7070 = vst [vmem:[#allocation2 + $0x68] sm:$0xff] %v6598
    %7071 = vst [vmem:[#allocation2 + $0x70] sm:$0xff] %v6603
    %7072 = vst [vmem:[#allocation2 + $0x78] sm:$0xff] %v6606
    %7073 = vst [vmem:[#allocation2 + $0x80] sm:$0xff] %v6611
    %7074 = vst [vmem:[#allocation2 + $0x88] sm:$0xff] %v6614
    %7075 = vst [vmem:[#allocation2 + $0x90] sm:$0xff] %v6619
    %7076 = vst [vmem:[#allocation2 + $0x98] sm:$0xff] %v6622
    %7077 = vst [vmem:[#allocation2 + $0xa0] sm:$0xff] %v6627
    %7078 = vst [vmem:[#allocation2 + $0xa8] sm:$0xff] %v6630
    %7079 = vst [vmem:[#allocation2 + $0xb0] sm:$0xff] %v6635
    %7080 = vst [vmem:[#allocation2 + $0xb8] sm:$0xff] %v6638
    %7081 = vst [vmem:[#allocation2 + $0xc0] sm:$0xff] %v6643
    %7082 = vst [vmem:[#allocation2 + $0xc8] sm:$0xff] %v6646
    %7083 = vst [vmem:[#allocation2 + $0xd0] sm:$0xff] %v6651
    %7084 = vst [vmem:[#allocation2 + $0xd8] sm:$0xff] %v6654
    %7085 = vst [vmem:[#allocation2 + $0xe0] sm:$0xff] %v6659
    %7086 = vst [vmem:[#allocation2 + $0xe8] sm:$0xff] %v6662
    %7087 = vst [vmem:[#allocation2 + $0xf0] sm:$0xff] %v6667
    %7088 = vst [vmem:[#allocation2 + $0xf8] sm:$0xff] %v6670
    %7089 = vst [vmem:[#allocation2 + $0x100] sm:$0xff] %v6675
    %7090 = vst [vmem:[#allocation2 + $0x108] sm:$0xff] %v6678
    %7091 = vst [vmem:[#allocation2 + $0x110] sm:$0xff] %v6683
    %7092 = vst [vmem:[#allocation2 + $0x118] sm:$0xff] %v6686
    %7093 = vst [vmem:[#allocation2 + $0x120] sm:$0xff] %v6691
    %7094 = vst [vmem:[#allocation2 + $0x128] sm:$0xff] %v6694
    %7095 = vst [vmem:[#allocation2 + $0x130] sm:$0xff] %v6699
    %7096 = vst [vmem:[#allocation2 + $0x138] sm:$0xff] %v6702
    %7097 = vst [vmem:[#allocation2 + $0x140] sm:$0xff] %v6707
    %7098 = vst [vmem:[#allocation2 + $0x148] sm:$0xff] %v6710
    %7099 = vst [vmem:[#allocation2 + $0x150] sm:$0xff] %v6715
    %7100 = vst [vmem:[#allocation2 + $0x158] sm:$0xff] %v6718
    %7101 = vst [vmem:[#allocation2 + $0x160] sm:$0xff] %v6723
    %7102 = vst [vmem:[#allocation2 + $0x168] sm:$0xff] %v6726
    %7103 = vst [vmem:[#allocation2 + $0x170] sm:$0xff] %v6731
    %7104 = vst [vmem:[#allocation2 + $0x178] sm:$0xff] %v6734
    %7105 = vst [vmem:[#allocation2 + $0x180] sm:$0xff] %v6739
    %7106 = vst [vmem:[#allocation2 + $0x188] sm:$0xff] %v6742
    %7107 = vst [vmem:[#allocation2 + $0x190] sm:$0xff] %v6747
    %7108 = vst [vmem:[#allocation2 + $0x198] sm:$0xff] %v6750
    %7109 = vst [vmem:[#allocation2 + $0x1a0] sm:$0xff] %v6755
    %7110 = vst [vmem:[#allocation2 + $0x1a8] sm:$0xff] %v6758
    %7111 = vst [vmem:[#allocation2 + $0x1b0] sm:$0xff] %v6763
    %7112 = vst [vmem:[#allocation2 + $0x1b8] sm:$0xff] %v6766
    %7113 = vst [vmem:[#allocation2 + $0x1c0] sm:$0xff] %v6771
    %7114 = vst [vmem:[#allocation2 + $0x1c8] sm:$0xff] %v6774
    %7115 = vst [vmem:[#allocation2 + $0x1d0] sm:$0xff] %v6779
    %7116 = vst [vmem:[#allocation2 + $0x1d8] sm:$0xff] %v6782
    %7117 = vst [vmem:[#allocation2 + $0x1e0] sm:$0xff] %v6787
    %7118 = vst [vmem:[#allocation2 + $0x1e8] sm:$0xff] %v6790
    %7119 = vst [vmem:[#allocation2 + $0x1f0] sm:$0xff] %v6795
    %7120 = vst [vmem:[#allocation2 + $0x1f8] sm:$0xff] %v6798
    %7121 = vst [vmem:[#allocation2 + $0x200] sm:$0xff] %v6803
    %7122 = vst [vmem:[#allocation2 + $0x208] sm:$0xff] %v6806
    %7123 = vst [vmem:[#allocation2 + $0x210] sm:$0xff] %v6811
    %7124 = vst [vmem:[#allocation2 + $0x218] sm:$0xff] %v6814
    %7125 = vst [vmem:[#allocation2 + $0x220] sm:$0xff] %v6819
    %7126 = vst [vmem:[#allocation2 + $0x228] sm:$0xff] %v6822
    %7127 = vst [vmem:[#allocation2 + $0x230] sm:$0xff] %v6827
    %7128 = vst [vmem:[#allocation2 + $0x238] sm:$0xff] %v6830
    %7129 = vst [vmem:[#allocation2 + $0x240] sm:$0xff] %v6835
    %7130 = vst [vmem:[#allocation2 + $0x248] sm:$0xff] %v6838
    %7131 = vst [vmem:[#allocation2 + $0x250] sm:$0xff] %v6843
    %7132 = vst [vmem:[#allocation2 + $0x258] sm:$0xff] %v6846
    %7133 = vst [vmem:[#allocation2 + $0x260] sm:$0xff] %v6851
    %7134 = vst [vmem:[#allocation2 + $0x268] sm:$0xff] %v6854
    %7135 = vst [vmem:[#allocation2 + $0x270] sm:$0xff] %v6859
    %7136 = vst [vmem:[#allocation2 + $0x278] sm:$0xff] %v6862
    %7137 = vst [vmem:[#allocation2 + $0x280] sm:$0xff] %v6867
    %7138 = vst [vmem:[#allocation2 + $0x288] sm:$0xff] %v6870
    %7139 = vst [vmem:[#allocation2 + $0x290] sm:$0xff] %v6875
    %7140 = vst [vmem:[#allocation2 + $0x298] sm:$0xff] %v6878
    %7141 = vst [vmem:[#allocation2 + $0x2a0] sm:$0xff] %v6883
    %7142 = vst [vmem:[#allocation2 + $0x2a8] sm:$0xff] %v6886
    %7143 = vst [vmem:[#allocation2 + $0x2b0] sm:$0xff] %v6891
    %7144 = vst [vmem:[#allocation2 + $0x2b8] sm:$0xff] %v6894
    %7145 = vst [vmem:[#allocation2 + $0x2c0] sm:$0xff] %v6899
    %7146 = vst [vmem:[#allocation2 + $0x2c8] sm:$0xff] %v6902
    %7147 = vst [vmem:[#allocation2 + $0x2d0] sm:$0xff] %v6907
    %7148 = vst [vmem:[#allocation2 + $0x2d8] sm:$0xff] %v6910
    %7149 = vst [vmem:[#allocation2 + $0x2e0] sm:$0xff] %v6915
    %7150 = vst [vmem:[#allocation2 + $0x2e8] sm:$0xff] %v6918
    %7151 = vst [vmem:[#allocation2 + $0x2f0] sm:$0xff] %v6923
    %7152 = vst [vmem:[#allocation2 + $0x2f8] sm:$0xff] %v6926
    %7153 = vst [vmem:[#allocation2 + $0x300] sm:$0xff] %v6931
    %7154 = vst [vmem:[#allocation2 + $0x308] sm:$0xff] %v6934
    %7155 = vst [vmem:[#allocation2 + $0x310] sm:$0xff] %v6939
    %7156 = vst [vmem:[#allocation2 + $0x318] sm:$0xff] %v6942
    %7157 = vst [vmem:[#allocation2 + $0x320] sm:$0xff] %v6947
    %7158 = vst [vmem:[#allocation2 + $0x328] sm:$0xff] %v6950
    %7159 = vst [vmem:[#allocation2 + $0x330] sm:$0xff] %v6955
    %7160 = vst [vmem:[#allocation2 + $0x338] sm:$0xff] %v6958
    %7161 = vst [vmem:[#allocation2 + $0x340] sm:$0xff] %v6963
    %7162 = vst [vmem:[#allocation2 + $0x348] sm:$0xff] %v6966
    %7163 = vst [vmem:[#allocation2 + $0x350] sm:$0xff] %v6971
    %7164 = vst [vmem:[#allocation2 + $0x358] sm:$0xff] %v6974
    %7165 = vst [vmem:[#allocation2 + $0x360] sm:$0xff] %v6979
    %7166 = vst [vmem:[#allocation2 + $0x368] sm:$0xff] %v6982
    %7167 = vst [vmem:[#allocation2 + $0x370] sm:$0xff] %v6987
    %7168 = vst [vmem:[#allocation2 + $0x378] sm:$0xff] %v6990
    %7169 = vst [vmem:[#allocation2 + $0x380] sm:$0xff] %v6995
    %7170 = vst [vmem:[#allocation2 + $0x388] sm:$0xff] %v6998
    %7171 = vst [vmem:[#allocation2 + $0x390] sm:$0xff] %v7003
    %7172 = vst [vmem:[#allocation2 + $0x398] sm:$0xff] %v7006
    %7173 = vst [vmem:[#allocation2 + $0x3a0] sm:$0xff] %v7011
    %7174 = vst [vmem:[#allocation2 + $0x3a8] sm:$0xff] %v7014
    %7175 = vst [vmem:[#allocation2 + $0x3b0] sm:$0xff] %v7019
    %7176 = vst [vmem:[#allocation2 + $0x3b8] sm:$0xff] %v7022
    %7177 = vst [vmem:[#allocation2 + $0x3c0] sm:$0xff] %v7027
    %7178 = vst [vmem:[#allocation2 + $0x3c8] sm:$0xff] %v7030
    %7179 = vst [vmem:[#allocation2 + $0x3d0] sm:$0xff] %v7035
    %7180 = vst [vmem:[#allocation2 + $0x3d8] sm:$0xff] %v7038
    %7181 = vst [vmem:[#allocation2 + $0x3e0] sm:$0xff] %v7043
    %7182 = vst [vmem:[#allocation2 + $0x3e8] sm:$0xff] %v7046
    %7183 = vst [vmem:[#allocation2 + $0x3f0] sm:$0xff] %v7051
    %7184 = vst [vmem:[#allocation2 + $0x3f8] sm:$0xff] %v7054
    // Predicated region
    $region46: #{tpu_custom_call.1} parent=1 // pred_check
      _
    $region47: #{tpu_custom_call.1} parent=1 // pred_check_branch
      %7186 = sbr.rel (0) target = $region49
    $region48: #{tpu_custom_call.1} parent=1 // pred_region
      %s7188 = ssub.s32 16384, 16384
      %7189 = vsyncadd [#allocation3], %s7188
      %s7190 = sshll.u32 [#allocation2], 4
      %s7191 = int_to_ptr.vmem [resolvable:$true] %s7190
      %7196 = dma.vmem_to_hbm [thread:$0]  %s7191, 16384, %s11, [#allocation3], 128, 128, 8
    $region49: #{tpu_custom_call.1} parent=1 // pred_fallthru
      _
    // Predicated region
    $region50: #{tpu_custom_call.1} parent=1 // pred_check
      _
    $region51: #{tpu_custom_call.1} parent=1 // pred_check_branch
      %7198 = sbr.rel (0) target = $region53
    $region52: #{tpu_custom_call.1} parent=1 // pred_region
      %7199 = dma.done [#allocation3], 16384
    $region53: #{tpu_custom_call.1} parent=1 // pred_fallthru
      _
    %7200 = vsyncpa [#allocation3], 1

</llo_original>
